<compile_context>
chip_gen: v6e
topology: v6e:2x2x1
jax: 0.10.0
libtpu: 0.0.40
codegen_flags: <defaults>
</compile_context>

<pallas_src>
import math

import jax
import jax.numpy as jnp
import numpy as np
from jax.experimental import pallas as pl
from jax.experimental.pallas import tpu as pltpu

LANES = 128
ROW_PAD = 16   # >= W+1 for every stage (W <= 10); keeps the scratch store sublane-aligned


# ----------------------------- Pallas kernels -----------------------------

def _stage_kernel(M, H, W, growth):
    """Fused DenseNet dense-stage kernel. One grid step == one Bottleneck block."""

    def kernel(x_ref, masks_ref, bn1s_ref, bn1b_ref, w1_ref,
               bn2s_ref, bn2b_ref, w2_ref, o_ref, act_ref, hpad_ref):
        l = pl.program_id(0)

        @pl.when(l == 0)
        def _():
            act_ref[...] = x_ref[...]

        x = act_ref[...]                                        # (M, 128) f32
        # bn1 + relu (f32 VPU math; padded lanes have scale=shift=0 -> stay exactly 0)
        a = jnp.maximum(x * bn1s_ref[...] + bn1b_ref[...], 0.0)
        # 1x1 conv (bf16 MXU, f32 accumulate) -> bn2 -> relu
        h = jnp.dot(a.astype(jnp.bfloat16), w1_ref[...],
                    preferred_element_type=jnp.float32)
        g = jnp.maximum(h * bn2s_ref[...] + bn2b_ref[...], 0.0)

        # Stage g with zero rows above/below so the 9 shifted reads below never go
        # out of bounds; border rows read as exact zeros (= conv zero padding).
        hpad_ref[...] = jnp.zeros_like(hpad_ref)
        hpad_ref[pl.ds(ROW_PAD, M), :] = g

        # 3x3 conv (padding=1) as 9 shifted MXU dots; masks_ref[:, s] kills
        # contributions whose flattened row shift crossed an image/row boundary.
        acc = jnp.zeros((M, LANES), jnp.float32)
        s = 0
        for dh in (-1, 0, 1):
            for dw in (-1, 0, 1):
                shifted = hpad_ref[pl.ds(ROW_PAD + dh * W + dw, M), :]
                part = jnp.dot(shifted.astype(jnp.bfloat16), w2_ref[s],
                               preferred_element_type=jnp.float32)
                acc = acc + part * masks_ref[:, s:s + 1]
                s += 1

        # Fused torch.cat([new, x], channel): the 12 new channels occupy lanes
        # [0, growth) of acc (weight columns padded there); roll x right by `growth`
        # lanes (its padded lanes are zero) and add -> lane-dense, no XLA concat.
        new_act = acc + pltpu.roll(x, shift=growth, axis=1)
        act_ref[...] = new_act
        o_ref[...] = new_act

    return kernel


def _shift_masks(N, H, W):
    """(M, 9) f32 validity masks for the 9 flattened-row shifts of a 3x3/pad1 conv."""
    M = N * H * W
    idx = np.arange(M)
    i = (idx // W) % H
    j = idx % W
    cols = []
    for dh in (-1, 0, 1):
        for dw in (-1, 0, 1):
            ok = (i + dh >= 0) & (i + dh < H) & (j + dw >= 0) & (j + dw < W)
            cols.append(ok.astype(np.float32))
    return jnp.asarray(np.stack(cols, axis=1))


def dense_stage(x2d, sp, N, H, W, growth):
    """Run a whole dense stage (all Bottleneck blocks) in one pallas_call."""
    M = N * H * W
    L = sp["w1"].shape[0]
    masks = _shift_masks(N, H, W)

    flops = L * 10 * 2 * M * LANES * LANES
    bytes_acc = (2 * M * LANES * 4
                 + int(sp["w1"].size + sp["w2"].size) * 2
                 + int(masks.size) * 4)

    return pl.pallas_call(
        _stage_kernel(M, H, W, growth),
        out_shape=jax.ShapeDtypeStruct((M, LANES), jnp.float32),
        grid_spec=pltpu.PrefetchScalarGridSpec(
            num_scalar_prefetch=0,
            grid=(L,),
            in_specs=[
                pl.BlockSpec((M, LANES), lambda l: (0, 0)),               # x (step 0 only)
                pl.BlockSpec((M, 9), lambda l: (0, 0)),                   # shift masks
                pl.BlockSpec((None, 1, LANES), lambda l: (l, 0, 0)),      # bn1 scale
                pl.BlockSpec((None, 1, LANES), lambda l: (l, 0, 0)),      # bn1 shift
                pl.BlockSpec((None, LANES, LANES), lambda l: (l, 0, 0)),  # w1 (1x1)
                pl.BlockSpec((None, 1, LANES), lambda l: (l, 0, 0)),      # bn2 scale
                pl.BlockSpec((None, 1, LANES), lambda l: (l, 0, 0)),      # bn2 shift
                pl.BlockSpec((None, 9, LANES, LANES), lambda l: (l, 0, 0, 0)),  # w2 (3x3)
            ],
            out_specs=pl.BlockSpec((M, LANES), lambda l: (0, 0)),
            scratch_shapes=[
                pltpu.VMEM((M, LANES), jnp.float32),                # resident activation
                pltpu.VMEM((M + 2 * ROW_PAD, LANES), jnp.float32),  # row-padded 3x3 input
            ],
        ),
        compiler_params=pltpu.CompilerParams(
            dimension_semantics=("arbitrary",)),   # blocks are sequentially dependent
        cost_estimate=pl.CostEstimate(flops=flops, transcendentals=0,
                                      bytes_accessed=bytes_acc),
    )(x2d, masks, sp["bn1s"], sp["bn1b"], sp["w1"],
      sp["bn2s"], sp["bn2b"], sp["w2"])


def _matmul_kernel(relu_in):
    def kernel(x_ref, w_ref, o_ref):
        x = x_ref[...]
        if relu_in:
            x = jnp.maximum(x, 0.0)
        o_ref[...] = jnp.dot(x.astype(jnp.bfloat16), w_ref[...],
                             preferred_element_type=jnp.float32)
    return kernel


def fused_matmul(x2d, w_pad, relu_in=False):
    """Single-block matmul (optionally relu on the LHS): conv1 / transition convs."""
    M = x2d.shape[0]
    Kp, Np = w_pad.shape
    return pl.pallas_call(
        _matmul_kernel(relu_in),
        out_shape=jax.ShapeDtypeStruct((M, Np), jnp.float32),
        grid_spec=pltpu.PrefetchScalarGridSpec(
            num_scalar_prefetch=0,
            grid=(1,),
            in_specs=[pl.BlockSpec((M, Kp), lambda i: (0, 0)),
                      pl.BlockSpec((Kp, Np), lambda i: (0, 0))],
            out_specs=pl.BlockSpec((M, Np), lambda i: (0, 0)),
        ),
        compiler_params=pltpu.CompilerParams(dimension_semantics=("arbitrary",)),
        cost_estimate=pl.CostEstimate(
            flops=2 * M * Kp * Np, transcendentals=0,
            bytes_accessed=M * Kp * 4 + Kp * Np * 2 + M * Np * 4),
    )(x2d, w_pad)


# ----------------------------- XLA glue (tiny, once per stage boundary) -----------------------------

def _im2col(x, k, stride, padding):
    """x: NHWC -> (N*Ho*Wo, k*k*C), column order (kh, kw, C) with C fastest."""
    N, H, W, C = x.shape
    if padding:
        x = jnp.pad(x, ((0, 0), (padding, padding), (padding, padding), (0, 0)))
    Ho = (H + 2 * padding - k) // stride + 1
    Wo = (W + 2 * padding - k) // stride + 1
    patches = []
    for di in range(k):
        for dj in range(k):
            patches.append(x[:, di:di + stride * Ho:stride, dj:dj + stride * Wo:stride, :])
    cols = jnp.stack(patches, axis=3)
    return cols.reshape(N * Ho * Wo, k * k * C), (N, Ho, Wo)


def _maxpool2(x2d, N, H, W):
    Ho, Wo = H // 2, W // 2
    x = x2d.reshape(N, H, W, LANES)[:, :2 * Ho, :2 * Wo, :]
    x = x.reshape(N, Ho, 2, Wo, 2, LANES).max(axis=(2, 4))
    return x.reshape(N * Ho * Wo, LANES), Ho, Wo


def _avgpool2(x2d, N, H, W):
    Ho, Wo = H // 2, W // 2
    x = x2d.reshape(N, H, W, LANES)[:, :2 * Ho, :2 * Wo, :]
    x = x.reshape(N, Ho, 2, Wo, 2, LANES).mean(axis=(2, 4))
    return x.reshape(N * Ho * Wo, LANES), Ho, Wo


# ----------------------------- Parameters (pre-padded / pre-cast) -----------------------------

def _pad_mat(w2d):
    K, Nc = w2d.shape
    return jnp.pad(w2d, ((0, LANES - K), (0, LANES - Nc))).astype(jnp.bfloat16)


def _conv_w(key, cout, cin, k):
    fan_in = cin * k * k
    return jax.random.normal(key, (cout, cin, k, k), jnp.float32) / math.sqrt(fan_in)


def _fold_bn(key, c):
    """Inference-mode BN folded into per-channel (scale, shift), zero-padded to 128."""
    k1, k2, k3, k4 = jax.random.split(key, 4)
    gamma = 1.0 + 0.1 * jax.random.normal(k1, (c,), jnp.float32)
    beta = 0.1 * jax.random.normal(k2, (c,), jnp.float32)
    mean = 0.1 * jax.random.normal(k3, (c,), jnp.float32)
    var = 1.0 + 0.1 * jax.random.uniform(k4, (c,), jnp.float32)
    scale = gamma / jnp.sqrt(var + 1e-5)
    shift = beta - mean * scale
    pad = LANES - c
    return (jnp.pad(scale, (0, pad)).reshape(1, LANES),
            jnp.pad(shift, (0, pad)).reshape(1, LANES))


def make_params(key, nblocks=(2, 2, 2), growth_rate=12, reduction=0.5):
    keys = iter(jax.random.split(key, 64))
    params = {"growth_rate": growth_rate}

    num_planes = 2 * growth_rate
    w = _conv_w(next(keys), num_planes, 1, 7)                      # conv1: 1 -> 24, 7x7/s2
    params["conv1"] = _pad_mat(jnp.transpose(w, (2, 3, 1, 0)).reshape(49, num_planes))

    def make_stage(in_planes, nblock):
        bn1s, bn1b, w1, bn2s, bn2b, w2 = [], [], [], [], [], []
        for _ in range(nblock):
            mid = 4 * growth_rate
            s, b = _fold_bn(next(keys), in_planes); bn1s.append(s); bn1b.append(b)
            wc1 = _conv_w(next(keys), mid, in_planes, 1)
            w1.append(_pad_mat(wc1[:, :, 0, 0].T))                 # (cin, mid) padded
            s, b = _fold_bn(next(keys), mid); bn2s.append(s); bn2b.append(b)
            wc2 = _conv_w(next(keys), growth_rate, mid, 3)
            w2.append(jnp.stack([_pad_mat(wc2[:, :, kh, kw].T)     # 9 x (mid, growth)
                                 for kh in range(3) for kw in range(3)]))
            in_planes += growth_rate
        stage = {"bn1s": jnp.stack(bn1s), "bn1b": jnp.stack(bn1b), "w1": jnp.stack(w1),
                 "bn2s": jnp.stack(bn2s), "bn2b": jnp.stack(bn2b), "w2": jnp.stack(w2)}
        return stage, in_planes

    def make_trans(in_planes):
        out_planes = int(math.floor(in_planes * reduction))
        wt = _conv_w(next(keys), out_planes, in_planes, 1)
        # (Transition.bn exists in the reference module but is unused in its forward.)
        return _pad_mat(wt[:, :, 0, 0].T), out_planes

    params["dense1"], num_planes = make_stage(num_planes, nblocks[0])
    params["trans1"], num_planes = make_trans(num_planes)
    params["dense2"], num_planes = make_stage(num_planes, nblocks[1])
    params["trans2"], num_planes = make_trans(num_planes)
    params["dense3"], num_planes = make_stage(num_planes, nblocks[2])
    params["out_planes"] = num_planes
    return params


# ----------------------------- Forward -----------------------------

def densenet_forward(x_nchw, params):
    g = params["growth_rate"]
    x = jnp.transpose(x_nchw, (0, 2, 3, 1))                    # NCHW -> NHWC
    cols, (N, H, W) = _im2col(x, 7, 2, 0)                      # conv1 im2col (once)
    cols = jnp.pad(cols, ((0, 0), (0, LANES - cols.shape[1])))
    act = fused_matmul(cols, params["conv1"])                  # (N*21*21, 128)
    act, H, W = _maxpool2(act, N, H, W)                        # MaxPool2d(2) -> 10x10

    act = dense_stage(act, params["dense1"], N, H, W, g)
    act = fused_matmul(act, params["trans1"], relu_in=True)    # Transition: conv(relu(x))
    act, H, W = _avgpool2(act, N, H, W)                        #   then avg_pool2d(., 2)

    act = dense_stage(act, params["dense2"], N, H, W, g)
    act = fused_matmul(act, params["trans2"], relu_in=True)
    act, H, W = _avgpool2(act, N, H, W)

    act = dense_stage(act, params["dense3"], N, H, W, g)

    out = act.reshape(N, H, W, LANES)[..., :params["out_planes"]]
    return jnp.transpose(out, (0, 3, 1, 2))                    # NHWC -> NCHW


# ----------------------------- Main -----------------------------

if __name__ == "__main__":
    key = jax.random.PRNGKey(0)
    kx, kp = jax.random.split(key)

    # batch=2, 1 input channel (conv1 expects 1), 48x48 spatial.
    x = jax.random.normal(kx, (2, 1, 48, 48), jnp.float32)
    params = make_params(kp, nblocks=(2, 2, 2), growth_rate=12, reduction=0.5)

    out = jax.jit(lambda a: densenet_forward(a, params))(x)
    out = jax.block_until_ready(out)

    # Expected: (2, 48, 2, 2)  -> 48 = final num_planes, spatial 48 -> 21 -> 10 -> 5 -> 2
    assert out.shape == (2, params["out_planes"], 2, 2), out.shape
    assert bool(jnp.all(jnp.isfinite(out)))
    print("KERNEL_OK")
</pallas_src>

<mosaic_0001>
module attributes {stable_mosaic.version = 11 : i64} {
  func.func @kernel(%arg0: i32, %arg1: memref<882x128xf32, #tpu.memory_space<vmem>>, %arg2: memref<128x128xbf16, #tpu.memory_space<vmem>>, %arg3: memref<882x128xf32, #tpu.memory_space<vmem>>) attributes {dimension_semantics = [#tpu.dimension_semantics<arbitrary>], iteration_bounds = array<i64: 1>, scalar_prefetch = 0 : i64, scratch_operands = 0 : i64, tpu.core_type = #tpu.core_type<tc>, window_params = [{pipeline_mode = #tpu.pipeline_mode<synchronous>, transform_indices = @transform_0, window_bounds = array<i64: 882, 128>}, {pipeline_mode = #tpu.pipeline_mode<synchronous>, transform_indices = @transform_1, window_bounds = array<i64: 128, 128>}, {pipeline_mode = #tpu.pipeline_mode<synchronous>, transform_indices = @transform_2, window_bounds = array<i64: 882, 128>}]} {
    %c0 = arith.constant 0 : index
    %c0_0 = arith.constant 0 : index
    %0 = vector.load %arg1[%c0, %c0_0] : memref<882x128xf32, #tpu.memory_space<vmem>>, vector<882x128xf32>
    %1 = arith.truncf %0 : vector<882x128xf32> to vector<882x128xbf16>
    %c0_1 = arith.constant 0 : index
    %c0_2 = arith.constant 0 : index
    %2 = vector.load %arg2[%c0_1, %c0_2] : memref<128x128xbf16, #tpu.memory_space<vmem>>, vector<128x128xbf16>
    %cst = arith.constant dense<0.000000e+00> : vector<882x128xf32>
    %3 = tpu.matmul %1, %2, %cst {dimension_numbers = #tpu.dot_dimension_numbers<[1], [0], [0], [1], [0, 0, 1, 1], [], []>} : vector<882x128xbf16>, vector<128x128xbf16>, vector<882x128xf32> -> vector<882x128xf32>
    %c0_3 = arith.constant 0 : index
    %c0_4 = arith.constant 0 : index
    %4 = vector.load %arg3[%c0_3, %c0_4] : memref<882x128xf32, #tpu.memory_space<vmem>>, vector<882x128xf32>
    tpu.vector_store %arg3[%c0_3, %c0_4], %3 {strides = array<i32>} : memref<882x128xf32, #tpu.memory_space<vmem>>, vector<882x128xf32>,
    return
  }
  func.func @transform_0(%arg0: i32) -> (i32, i32) {
    %c0_i32 = arith.constant 0 : i32
    %c0_i32_0 = arith.constant 0 : i32
    %c0_i32_1 = arith.constant 0 : i32
    return %c0_i32, %c0_i32_0 : i32, i32
  }
  func.func @transform_1(%arg0: i32) -> (i32, i32) {
    %c0_i32 = arith.constant 0 : i32
    %c0_i32_0 = arith.constant 0 : i32
    %c0_i32_1 = arith.constant 0 : i32
    return %c0_i32, %c0_i32_0 : i32, i32
  }
  func.func @transform_2(%arg0: i32) -> (i32, i32) {
    %c0_i32 = arith.constant 0 : i32
    %c0_i32_0 = arith.constant 0 : i32
    %c0_i32_1 = arith.constant 0 : i32
    return %c0_i32, %c0_i32_0 : i32, i32
  }
}

module attributes {stable_mosaic.version = 11 : i64} {
  func.func @kernel(%arg0: i32, %arg1: memref<200x128xf32, #tpu.memory_space<vmem>>, %arg2: memref<200x9xf32, #tpu.memory_space<vmem>>, %arg3: memref<1x1x128xf32, #tpu.memory_space<vmem>>, %arg4: memref<1x1x128xf32, #tpu.memory_space<vmem>>, %arg5: memref<1x128x128xbf16, #tpu.memory_space<vmem>>, %arg6: memref<1x1x128xf32, #tpu.memory_space<vmem>>, %arg7: memref<1x1x128xf32, #tpu.memory_space<vmem>>, %arg8: memref<1x9x128x128xbf16, #tpu.memory_space<vmem>>, %arg9: memref<200x128xf32, #tpu.memory_space<vmem>>, %arg10: memref<200x128xf32, #tpu.memory_space<vmem>>, %arg11: memref<232x128xf32, #tpu.memory_space<vmem>>) attributes {dimension_semantics = [#tpu.dimension_semantics<arbitrary>], iteration_bounds = array<i64: 2>, scalar_prefetch = 0 : i64, scratch_operands = 2 : i64, tpu.core_type = #tpu.core_type<tc>, window_params = [{pipeline_mode = #tpu.pipeline_mode<synchronous>, transform_indices = @transform_0, window_bounds = array<i64: 200, 128>}, {pipeline_mode = #tpu.pipeline_mode<synchronous>, transform_indices = @transform_1, window_bounds = array<i64: 200, 9>}, {transform_indices = @transform_2, window_bounds = array<i64: 1, 1, 128>}, {transform_indices = @transform_3, window_bounds = array<i64: 1, 1, 128>}, {transform_indices = @transform_4, window_bounds = array<i64: 1, 128, 128>}, {transform_indices = @transform_5, window_bounds = array<i64: 1, 1, 128>}, {transform_indices = @transform_6, window_bounds = array<i64: 1, 1, 128>}, {transform_indices = @transform_7, window_bounds = array<i64: 1, 9, 128, 128>}, {pipeline_mode = #tpu.pipeline_mode<synchronous>, transform_indices = @transform_8, window_bounds = array<i64: 200, 128>}]} {
    %c0_i32 = arith.constant 0 : i32
    %0 = arith.cmpi eq, %arg0, %c0_i32 : i32
    %1 = arith.extui %0 : i1 to i32
    %c0_i32_0 = arith.constant 0 : i32
    %2 = arith.cmpi ne, %1, %c0_i32_0 : i32
    scf.if %2 {
      %c0_96 = arith.constant 0 : index
      %c0_97 = arith.constant 0 : index
      %117 = vector.load %arg1[%c0_96, %c0_97] : memref<200x128xf32, #tpu.memory_space<vmem>>, vector<200x128xf32>
      %c0_98 = arith.constant 0 : index
      %c0_99 = arith.constant 0 : index
      %118 = vector.load %arg10[%c0_98, %c0_99] : memref<200x128xf32, #tpu.memory_space<vmem>>, vector<200x128xf32>
      tpu.vector_store %arg10[%c0_98, %c0_99], %117 {strides = array<i32>} : memref<200x128xf32, #tpu.memory_space<vmem>>, vector<200x128xf32>,
    } else {
    }
    %c0 = arith.constant 0 : index
    %c0_1 = arith.constant 0 : index
    %3 = vector.load %arg10[%c0, %c0_1] : memref<200x128xf32, #tpu.memory_space<vmem>>, vector<200x128xf32>
    %c0_2 = arith.constant 0 : index
    %c0_3 = arith.constant 0 : index
    %c0_4 = arith.constant 0 : index
    %4 = vector.load %arg3[%c0_2, %c0_3, %c0_4] : memref<1x1x128xf32, #tpu.memory_space<vmem>>, vector<1x1x128xf32>
    %5 = vector.shape_cast %4 : vector<1x1x128xf32> to vector<1x128xf32>
    %6 = vector.broadcast %5 : vector<1x128xf32> to vector<200x128xf32>
    %7 = arith.mulf %3, %6 : vector<200x128xf32>
    %c0_5 = arith.constant 0 : index
    %c0_6 = arith.constant 0 : index
    %c0_7 = arith.constant 0 : index
    %8 = vector.load %arg4[%c0_5, %c0_6, %c0_7] : memref<1x1x128xf32, #tpu.memory_space<vmem>>, vector<1x1x128xf32>
    %9 = vector.shape_cast %8 : vector<1x1x128xf32> to vector<1x128xf32>
    %10 = vector.broadcast %9 : vector<1x128xf32> to vector<200x128xf32>
    %11 = arith.addf %7, %10 : vector<200x128xf32>
    %cst = arith.constant 0.000000e+00 : f32
    %12 = vector.broadcast %cst : f32 to vector<200x128xf32>
    %13 = arith.maximumf %11, %12 : vector<200x128xf32>
    %14 = arith.truncf %13 : vector<200x128xf32> to vector<200x128xbf16>
    %c0_8 = arith.constant 0 : index
    %c0_9 = arith.constant 0 : index
    %c0_10 = arith.constant 0 : index
    %15 = vector.load %arg5[%c0_8, %c0_9, %c0_10] : memref<1x128x128xbf16, #tpu.memory_space<vmem>>, vector<1x128x128xbf16>
    %16 = vector.shape_cast %15 : vector<1x128x128xbf16> to vector<128x128xbf16>
    %cst_11 = arith.constant dense<0.000000e+00> : vector<200x128xf32>
    %17 = tpu.matmul %14, %16, %cst_11 {dimension_numbers = #tpu.dot_dimension_numbers<[1], [0], [0], [1], [0, 0, 1, 1], [], []>} : vector<200x128xbf16>, vector<128x128xbf16>, vector<200x128xf32> -> vector<200x128xf32>
    %c0_12 = arith.constant 0 : index
    %c0_13 = arith.constant 0 : index
    %c0_14 = arith.constant 0 : index
    %18 = vector.load %arg6[%c0_12, %c0_13, %c0_14] : memref<1x1x128xf32, #tpu.memory_space<vmem>>, vector<1x1x128xf32>
    %19 = vector.shape_cast %18 : vector<1x1x128xf32> to vector<1x128xf32>
    %20 = vector.broadcast %19 : vector<1x128xf32> to vector<200x128xf32>
    %21 = arith.mulf %17, %20 : vector<200x128xf32>
    %c0_15 = arith.constant 0 : index
    %c0_16 = arith.constant 0 : index
    %c0_17 = arith.constant 0 : index
    %22 = vector.load %arg7[%c0_15, %c0_16, %c0_17] : memref<1x1x128xf32, #tpu.memory_space<vmem>>, vector<1x1x128xf32>
    %23 = vector.shape_cast %22 : vector<1x1x128xf32> to vector<1x128xf32>
    %24 = vector.broadcast %23 : vector<1x128xf32> to vector<200x128xf32>
    %25 = arith.addf %21, %24 : vector<200x128xf32>
    %cst_18 = arith.constant 0.000000e+00 : f32
    %26 = vector.broadcast %cst_18 : f32 to vector<200x128xf32>
    %27 = arith.maximumf %25, %26 : vector<200x128xf32>
    %cst_19 = arith.constant 0.000000e+00 : f32
    %28 = vector.broadcast %cst_19 : f32 to vector<232x128xf32>
    %c0_20 = arith.constant 0 : index
    %c0_21 = arith.constant 0 : index
    %29 = vector.load %arg11[%c0_20, %c0_21] : memref<232x128xf32, #tpu.memory_space<vmem>>, vector<232x128xf32>
    tpu.vector_store %arg11[%c0_20, %c0_21], %28 {strides = array<i32>} : memref<232x128xf32, #tpu.memory_space<vmem>>, vector<232x128xf32>,
    %c16 = arith.constant 16 : index
    %c0_22 = arith.constant 0 : index
    %30 = vector.load %arg11[%c16, %c0_22] : memref<232x128xf32, #tpu.memory_space<vmem>>, vector<200x128xf32>
    tpu.vector_store %arg11[%c16, %c0_22], %27 {strides = array<i32>} : memref<232x128xf32, #tpu.memory_space<vmem>>, vector<200x128xf32>,
    %cst_23 = arith.constant 0.000000e+00 : f32
    %31 = vector.broadcast %cst_23 : f32 to vector<200x128xf32>
    %c5 = arith.constant 5 : index
    %c0_24 = arith.constant 0 : index
    %32 = vector.load %arg11[%c5, %c0_24] : memref<232x128xf32, #tpu.memory_space<vmem>>, vector<200x128xf32>
    %33 = arith.truncf %32 : vector<200x128xf32> to vector<200x128xbf16>
    %c0_25 = arith.constant 0 : index
    %c0_26 = arith.constant 0 : index
    %c0_27 = arith.constant 0 : index
    %c0_28 = arith.constant 0 : index
    %34 = vector.load %arg8[%c0_25, %c0_26, %c0_27, %c0_28] : memref<1x9x128x128xbf16, #tpu.memory_space<vmem>>, vector<1x1x128x128xbf16>
    %35 = vector.shape_cast %34 : vector<1x1x128x128xbf16> to vector<128x128xbf16>
    %cst_29 = arith.constant dense<0.000000e+00> : vector<200x128xf32>
    %36 = tpu.matmul %33, %35, %cst_29 {dimension_numbers = #tpu.dot_dimension_numbers<[1], [0], [0], [1], [0, 0, 1, 1], [], []>} : vector<200x128xbf16>, vector<128x128xbf16>, vector<200x128xf32> -> vector<200x128xf32>
    %c0_30 = arith.constant 0 : index
    %c0_31 = arith.constant 0 : index
    %37 = vector.load %arg2[%c0_30, %c0_31] : memref<200x9xf32, #tpu.memory_space<vmem>>, vector<200x1xf32>
    %38 = vector.broadcast %37 : vector<200x1xf32> to vector<200x128xf32>
    %39 = arith.mulf %36, %38 : vector<200x128xf32>
    %40 = arith.addf %31, %39 : vector<200x128xf32>
    %c6 = arith.constant 6 : index
    %c0_32 = arith.constant 0 : index
    %41 = vector.load %arg11[%c6, %c0_32] : memref<232x128xf32, #tpu.memory_space<vmem>>, vector<200x128xf32>
    %42 = arith.truncf %41 : vector<200x128xf32> to vector<200x128xbf16>
    %c0_33 = arith.constant 0 : index
    %c1 = arith.constant 1 : index
    %c0_34 = arith.constant 0 : index
    %c0_35 = arith.constant 0 : index
    %43 = vector.load %arg8[%c0_33, %c1, %c0_34, %c0_35] : memref<1x9x128x128xbf16, #tpu.memory_space<vmem>>, vector<1x1x128x128xbf16>
    %44 = vector.shape_cast %43 : vector<1x1x128x128xbf16> to vector<128x128xbf16>
    %cst_36 = arith.constant dense<0.000000e+00> : vector<200x128xf32>
    %45 = tpu.matmul %42, %44, %cst_36 {dimension_numbers = #tpu.dot_dimension_numbers<[1], [0], [0], [1], [0, 0, 1, 1], [], []>} : vector<200x128xbf16>, vector<128x128xbf16>, vector<200x128xf32> -> vector<200x128xf32>
    %c0_37 = arith.constant 0 : index
    %c1_38 = arith.constant 1 : index
    %46 = vector.load %arg2[%c0_37, %c1_38] : memref<200x9xf32, #tpu.memory_space<vmem>>, vector<200x1xf32>
    %47 = vector.broadcast %46 : vector<200x1xf32> to vector<200x128xf32>
    %48 = arith.mulf %45, %47 : vector<200x128xf32>
    %49 = arith.addf %40, %48 : vector<200x128xf32>
    %c7 = arith.constant 7 : index
    %c0_39 = arith.constant 0 : index
    %50 = vector.load %arg11[%c7, %c0_39] : memref<232x128xf32, #tpu.memory_space<vmem>>, vector<200x128xf32>
    %51 = arith.truncf %50 : vector<200x128xf32> to vector<200x128xbf16>
    %c0_40 = arith.constant 0 : index
    %c2 = arith.constant 2 : index
    %c0_41 = arith.constant 0 : index
    %c0_42 = arith.constant 0 : index
    %52 = vector.load %arg8[%c0_40, %c2, %c0_41, %c0_42] : memref<1x9x128x128xbf16, #tpu.memory_space<vmem>>, vector<1x1x128x128xbf16>
    %53 = vector.shape_cast %52 : vector<1x1x128x128xbf16> to vector<128x128xbf16>
    %cst_43 = arith.constant dense<0.000000e+00> : vector<200x128xf32>
    %54 = tpu.matmul %51, %53, %cst_43 {dimension_numbers = #tpu.dot_dimension_numbers<[1], [0], [0], [1], [0, 0, 1, 1], [], []>} : vector<200x128xbf16>, vector<128x128xbf16>, vector<200x128xf32> -> vector<200x128xf32>
    %c0_44 = arith.constant 0 : index
    %c2_45 = arith.constant 2 : index
    %55 = vector.load %arg2[%c0_44, %c2_45] : memref<200x9xf32, #tpu.memory_space<vmem>>, vector<200x1xf32>
    %56 = vector.broadcast %55 : vector<200x1xf32> to vector<200x128xf32>
    %57 = arith.mulf %54, %56 : vector<200x128xf32>
    %58 = arith.addf %49, %57 : vector<200x128xf32>
    %c15 = arith.constant 15 : index
    %c0_46 = arith.constant 0 : index
    %59 = vector.load %arg11[%c15, %c0_46] : memref<232x128xf32, #tpu.memory_space<vmem>>, vector<200x128xf32>
    %60 = arith.truncf %59 : vector<200x128xf32> to vector<200x128xbf16>
    %c0_47 = arith.constant 0 : index
    %c3 = arith.constant 3 : index
    %c0_48 = arith.constant 0 : index
    %c0_49 = arith.constant 0 : index
    %61 = vector.load %arg8[%c0_47, %c3, %c0_48, %c0_49] : memref<1x9x128x128xbf16, #tpu.memory_space<vmem>>, vector<1x1x128x128xbf16>
    %62 = vector.shape_cast %61 : vector<1x1x128x128xbf16> to vector<128x128xbf16>
    %cst_50 = arith.constant dense<0.000000e+00> : vector<200x128xf32>
    %63 = tpu.matmul %60, %62, %cst_50 {dimension_numbers = #tpu.dot_dimension_numbers<[1], [0], [0], [1], [0, 0, 1, 1], [], []>} : vector<200x128xbf16>, vector<128x128xbf16>, vector<200x128xf32> -> vector<200x128xf32>
    %c0_51 = arith.constant 0 : index
    %c3_52 = arith.constant 3 : index
    %64 = vector.load %arg2[%c0_51, %c3_52] : memref<200x9xf32, #tpu.memory_space<vmem>>, vector<200x1xf32>
    %65 = vector.broadcast %64 : vector<200x1xf32> to vector<200x128xf32>
    %66 = arith.mulf %63, %65 : vector<200x128xf32>
    %67 = arith.addf %58, %66 : vector<200x128xf32>
    %c16_53 = arith.constant 16 : index
    %c0_54 = arith.constant 0 : index
    %68 = vector.load %arg11[%c16_53, %c0_54] : memref<232x128xf32, #tpu.memory_space<vmem>>, vector<200x128xf32>
    %69 = arith.truncf %68 : vector<200x128xf32> to vector<200x128xbf16>
    %c0_55 = arith.constant 0 : index
    %c4 = arith.constant 4 : index
    %c0_56 = arith.constant 0 : index
    %c0_57 = arith.constant 0 : index
    %70 = vector.load %arg8[%c0_55, %c4, %c0_56, %c0_57] : memref<1x9x128x128xbf16, #tpu.memory_space<vmem>>, vector<1x1x128x128xbf16>
    %71 = vector.shape_cast %70 : vector<1x1x128x128xbf16> to vector<128x128xbf16>
    %cst_58 = arith.constant dense<0.000000e+00> : vector<200x128xf32>
    %72 = tpu.matmul %69, %71, %cst_58 {dimension_numbers = #tpu.dot_dimension_numbers<[1], [0], [0], [1], [0, 0, 1, 1], [], []>} : vector<200x128xbf16>, vector<128x128xbf16>, vector<200x128xf32> -> vector<200x128xf32>
    %c0_59 = arith.constant 0 : index
    %c4_60 = arith.constant 4 : index
    %73 = vector.load %arg2[%c0_59, %c4_60] : memref<200x9xf32, #tpu.memory_space<vmem>>, vector<200x1xf32>
    %74 = vector.broadcast %73 : vector<200x1xf32> to vector<200x128xf32>
    %75 = arith.mulf %72, %74 : vector<200x128xf32>
    %76 = arith.addf %67, %75 : vector<200x128xf32>
    %c17 = arith.constant 17 : index
    %c0_61 = arith.constant 0 : index
    %77 = vector.load %arg11[%c17, %c0_61] : memref<232x128xf32, #tpu.memory_space<vmem>>, vector<200x128xf32>
    %78 = arith.truncf %77 : vector<200x128xf32> to vector<200x128xbf16>
    %c0_62 = arith.constant 0 : index
    %c5_63 = arith.constant 5 : index
    %c0_64 = arith.constant 0 : index
    %c0_65 = arith.constant 0 : index
    %79 = vector.load %arg8[%c0_62, %c5_63, %c0_64, %c0_65] : memref<1x9x128x128xbf16, #tpu.memory_space<vmem>>, vector<1x1x128x128xbf16>
    %80 = vector.shape_cast %79 : vector<1x1x128x128xbf16> to vector<128x128xbf16>
    %cst_66 = arith.constant dense<0.000000e+00> : vector<200x128xf32>
    %81 = tpu.matmul %78, %80, %cst_66 {dimension_numbers = #tpu.dot_dimension_numbers<[1], [0], [0], [1], [0, 0, 1, 1], [], []>} : vector<200x128xbf16>, vector<128x128xbf16>, vector<200x128xf32> -> vector<200x128xf32>
    %c0_67 = arith.constant 0 : index
    %c5_68 = arith.constant 5 : index
    %82 = vector.load %arg2[%c0_67, %c5_68] : memref<200x9xf32, #tpu.memory_space<vmem>>, vector<200x1xf32>
    %83 = vector.broadcast %82 : vector<200x1xf32> to vector<200x128xf32>
    %84 = arith.mulf %81, %83 : vector<200x128xf32>
    %85 = arith.addf %76, %84 : vector<200x128xf32>
    %c25 = arith.constant 25 : index
    %c0_69 = arith.constant 0 : index
    %86 = vector.load %arg11[%c25, %c0_69] : memref<232x128xf32, #tpu.memory_space<vmem>>, vector<200x128xf32>
    %87 = arith.truncf %86 : vector<200x128xf32> to vector<200x128xbf16>
    %c0_70 = arith.constant 0 : index
    %c6_71 = arith.constant 6 : index
    %c0_72 = arith.constant 0 : index
    %c0_73 = arith.constant 0 : index
    %88 = vector.load %arg8[%c0_70, %c6_71, %c0_72, %c0_73] : memref<1x9x128x128xbf16, #tpu.memory_space<vmem>>, vector<1x1x128x128xbf16>
    %89 = vector.shape_cast %88 : vector<1x1x128x128xbf16> to vector<128x128xbf16>
    %cst_74 = arith.constant dense<0.000000e+00> : vector<200x128xf32>
    %90 = tpu.matmul %87, %89, %cst_74 {dimension_numbers = #tpu.dot_dimension_numbers<[1], [0], [0], [1], [0, 0, 1, 1], [], []>} : vector<200x128xbf16>, vector<128x128xbf16>, vector<200x128xf32> -> vector<200x128xf32>
    %c0_75 = arith.constant 0 : index
    %c6_76 = arith.constant 6 : index
    %91 = vector.load %arg2[%c0_75, %c6_76] : memref<200x9xf32, #tpu.memory_space<vmem>>, vector<200x1xf32>
    %92 = vector.broadcast %91 : vector<200x1xf32> to vector<200x128xf32>
    %93 = arith.mulf %90, %92 : vector<200x128xf32>
    %94 = arith.addf %85, %93 : vector<200x128xf32>
    %c26 = arith.constant 26 : index
    %c0_77 = arith.constant 0 : index
    %95 = vector.load %arg11[%c26, %c0_77] : memref<232x128xf32, #tpu.memory_space<vmem>>, vector<200x128xf32>
    %96 = arith.truncf %95 : vector<200x128xf32> to vector<200x128xbf16>
    %c0_78 = arith.constant 0 : index
    %c7_79 = arith.constant 7 : index
    %c0_80 = arith.constant 0 : index
    %c0_81 = arith.constant 0 : index
    %97 = vector.load %arg8[%c0_78, %c7_79, %c0_80, %c0_81] : memref<1x9x128x128xbf16, #tpu.memory_space<vmem>>, vector<1x1x128x128xbf16>
    %98 = vector.shape_cast %97 : vector<1x1x128x128xbf16> to vector<128x128xbf16>
    %cst_82 = arith.constant dense<0.000000e+00> : vector<200x128xf32>
    %99 = tpu.matmul %96, %98, %cst_82 {dimension_numbers = #tpu.dot_dimension_numbers<[1], [0], [0], [1], [0, 0, 1, 1], [], []>} : vector<200x128xbf16>, vector<128x128xbf16>, vector<200x128xf32> -> vector<200x128xf32>
    %c0_83 = arith.constant 0 : index
    %c7_84 = arith.constant 7 : index
    %100 = vector.load %arg2[%c0_83, %c7_84] : memref<200x9xf32, #tpu.memory_space<vmem>>, vector<200x1xf32>
    %101 = vector.broadcast %100 : vector<200x1xf32> to vector<200x128xf32>
    %102 = arith.mulf %99, %101 : vector<200x128xf32>
    %103 = arith.addf %94, %102 : vector<200x128xf32>
    %c27 = arith.constant 27 : index
    %c0_85 = arith.constant 0 : index
    %104 = vector.load %arg11[%c27, %c0_85] : memref<232x128xf32, #tpu.memory_space<vmem>>, vector<200x128xf32>
    %105 = arith.truncf %104 : vector<200x128xf32> to vector<200x128xbf16>
    %c0_86 = arith.constant 0 : index
    %c8 = arith.constant 8 : index
    %c0_87 = arith.constant 0 : index
    %c0_88 = arith.constant 0 : index
    %106 = vector.load %arg8[%c0_86, %c8, %c0_87, %c0_88] : memref<1x9x128x128xbf16, #tpu.memory_space<vmem>>, vector<1x1x128x128xbf16>
    %107 = vector.shape_cast %106 : vector<1x1x128x128xbf16> to vector<128x128xbf16>
    %cst_89 = arith.constant dense<0.000000e+00> : vector<200x128xf32>
    %108 = tpu.matmul %105, %107, %cst_89 {dimension_numbers = #tpu.dot_dimension_numbers<[1], [0], [0], [1], [0, 0, 1, 1], [], []>} : vector<200x128xbf16>, vector<128x128xbf16>, vector<200x128xf32> -> vector<200x128xf32>
    %c0_90 = arith.constant 0 : index
    %c8_91 = arith.constant 8 : index
    %109 = vector.load %arg2[%c0_90, %c8_91] : memref<200x9xf32, #tpu.memory_space<vmem>>, vector<200x1xf32>
    %110 = vector.broadcast %109 : vector<200x1xf32> to vector<200x128xf32>
    %111 = arith.mulf %108, %110 : vector<200x128xf32>
    %112 = arith.addf %103, %111 : vector<200x128xf32>
    %c12_i32 = arith.constant 12 : i32
    %113 = tpu.dynamic_rotate %3 by %c12_i32 dim 1 : vector<200x128xf32>, i32 -> vector<200x128xf32>
    %114 = arith.addf %112, %113 : vector<200x128xf32>
    %c0_92 = arith.constant 0 : index
    %c0_93 = arith.constant 0 : index
    %115 = vector.load %arg10[%c0_92, %c0_93] : memref<200x128xf32, #tpu.memory_space<vmem>>, vector<200x128xf32>
    tpu.vector_store %arg10[%c0_92, %c0_93], %114 {strides = array<i32>} : memref<200x128xf32, #tpu.memory_space<vmem>>, vector<200x128xf32>,
    %c0_94 = arith.constant 0 : index
    %c0_95 = arith.constant 0 : index
    %116 = vector.load %arg9[%c0_94, %c0_95] : memref<200x128xf32, #tpu.memory_space<vmem>>, vector<200x128xf32>
    tpu.vector_store %arg9[%c0_94, %c0_95], %114 {strides = array<i32>} : memref<200x128xf32, #tpu.memory_space<vmem>>, vector<200x128xf32>,
    return
  }
  func.func @transform_0(%arg0: i32) -> (i32, i32) {
    %c0_i32 = arith.constant 0 : i32
    %c0_i32_0 = arith.constant 0 : i32
    %c0_i32_1 = arith.constant 0 : i32
    return %c0_i32, %c0_i32_0 : i32, i32
  }
  func.func @transform_1(%arg0: i32) -> (i32, i32) {
    %c0_i32 = arith.constant 0 : i32
    %c0_i32_0 = arith.constant 0 : i32
    %c0_i32_1 = arith.constant 0 : i32
    return %c0_i32, %c0_i32_0 : i32, i32
  }
  func.func @transform_2(%arg0: i32) -> (i32, i32, i32) {
    %c0_i32 = arith.constant 0 : i32
    %c0_i32_0 = arith.constant 0 : i32
    %c0_i32_1 = arith.constant 0 : i32
    return %arg0, %c0_i32, %c0_i32_0 : i32, i32, i32
  }
  func.func @transform_3(%arg0: i32) -> (i32, i32, i32) {
    %c0_i32 = arith.constant 0 : i32
    %c0_i32_0 = arith.constant 0 : i32
    %c0_i32_1 = arith.constant 0 : i32
    return %arg0, %c0_i32, %c0_i32_0 : i32, i32, i32
  }
  func.func @transform_4(%arg0: i32) -> (i32, i32, i32) {
    %c0_i32 = arith.constant 0 : i32
    %c0_i32_0 = arith.constant 0 : i32
    %c0_i32_1 = arith.constant 0 : i32
    return %arg0, %c0_i32, %c0_i32_0 : i32, i32, i32
  }
  func.func @transform_5(%arg0: i32) -> (i32, i32, i32) {
    %c0_i32 = arith.constant 0 : i32
    %c0_i32_0 = arith.constant 0 : i32
    %c0_i32_1 = arith.constant 0 : i32
    return %arg0, %c0_i32, %c0_i32_0 : i32, i32, i32
  }
  func.func @transform_6(%arg0: i32) -> (i32, i32, i32) {
    %c0_i32 = arith.constant 0 : i32
    %c0_i32_0 = arith.constant 0 : i32
    %c0_i32_1 = arith.constant 0 : i32
    return %arg0, %c0_i32, %c0_i32_0 : i32, i32, i32
  }
  func.func @transform_7(%arg0: i32) -> (i32, i32, i32, i32) {
    %c0_i32 = arith.constant 0 : i32
    %c0_i32_0 = arith.constant 0 : i32
    %c0_i32_1 = arith.constant 0 : i32
    %c0_i32_2 = arith.constant 0 : i32
    return %arg0, %c0_i32, %c0_i32_0, %c0_i32_1 : i32, i32, i32, i32
  }
  func.func @transform_8(%arg0: i32) -> (i32, i32) {
    %c0_i32 = arith.constant 0 : i32
    %c0_i32_0 = arith.constant 0 : i32
    %c0_i32_1 = arith.constant 0 : i32
    return %c0_i32, %c0_i32_0 : i32, i32
  }
}

module attributes {stable_mosaic.version = 11 : i64} {
  func.func @kernel(%arg0: i32, %arg1: memref<200x128xf32, #tpu.memory_space<vmem>>, %arg2: memref<128x128xbf16, #tpu.memory_space<vmem>>, %arg3: memref<200x128xf32, #tpu.memory_space<vmem>>) attributes {dimension_semantics = [#tpu.dimension_semantics<arbitrary>], iteration_bounds = array<i64: 1>, scalar_prefetch = 0 : i64, scratch_operands = 0 : i64, tpu.core_type = #tpu.core_type<tc>, window_params = [{pipeline_mode = #tpu.pipeline_mode<synchronous>, transform_indices = @transform_0, window_bounds = array<i64: 200, 128>}, {pipeline_mode = #tpu.pipeline_mode<synchronous>, transform_indices = @transform_1, window_bounds = array<i64: 128, 128>}, {pipeline_mode = #tpu.pipeline_mode<synchronous>, transform_indices = @transform_2, window_bounds = array<i64: 200, 128>}]} {
    %c0 = arith.constant 0 : index
    %c0_0 = arith.constant 0 : index
    %0 = vector.load %arg1[%c0, %c0_0] : memref<200x128xf32, #tpu.memory_space<vmem>>, vector<200x128xf32>
    %cst = arith.constant 0.000000e+00 : f32
    %1 = vector.broadcast %cst : f32 to vector<200x128xf32>
    %2 = arith.maximumf %0, %1 : vector<200x128xf32>
    %3 = arith.truncf %2 : vector<200x128xf32> to vector<200x128xbf16>
    %c0_1 = arith.constant 0 : index
    %c0_2 = arith.constant 0 : index
    %4 = vector.load %arg2[%c0_1, %c0_2] : memref<128x128xbf16, #tpu.memory_space<vmem>>, vector<128x128xbf16>
    %cst_3 = arith.constant dense<0.000000e+00> : vector<200x128xf32>
    %5 = tpu.matmul %3, %4, %cst_3 {dimension_numbers = #tpu.dot_dimension_numbers<[1], [0], [0], [1], [0, 0, 1, 1], [], []>} : vector<200x128xbf16>, vector<128x128xbf16>, vector<200x128xf32> -> vector<200x128xf32>
    %c0_4 = arith.constant 0 : index
    %c0_5 = arith.constant 0 : index
    %6 = vector.load %arg3[%c0_4, %c0_5] : memref<200x128xf32, #tpu.memory_space<vmem>>, vector<200x128xf32>
    tpu.vector_store %arg3[%c0_4, %c0_5], %5 {strides = array<i32>} : memref<200x128xf32, #tpu.memory_space<vmem>>, vector<200x128xf32>,
    return
  }
  func.func @transform_0(%arg0: i32) -> (i32, i32) {
    %c0_i32 = arith.constant 0 : i32
    %c0_i32_0 = arith.constant 0 : i32
    %c0_i32_1 = arith.constant 0 : i32
    return %c0_i32, %c0_i32_0 : i32, i32
  }
  func.func @transform_1(%arg0: i32) -> (i32, i32) {
    %c0_i32 = arith.constant 0 : i32
    %c0_i32_0 = arith.constant 0 : i32
    %c0_i32_1 = arith.constant 0 : i32
    return %c0_i32, %c0_i32_0 : i32, i32
  }
  func.func @transform_2(%arg0: i32) -> (i32, i32) {
    %c0_i32 = arith.constant 0 : i32
    %c0_i32_0 = arith.constant 0 : i32
    %c0_i32_1 = arith.constant 0 : i32
    return %c0_i32, %c0_i32_0 : i32, i32
  }
}

module attributes {stable_mosaic.version = 11 : i64} {
  func.func @kernel(%arg0: i32, %arg1: memref<50x128xf32, #tpu.memory_space<vmem>>, %arg2: memref<50x9xf32, #tpu.memory_space<vmem>>, %arg3: memref<1x1x128xf32, #tpu.memory_space<vmem>>, %arg4: memref<1x1x128xf32, #tpu.memory_space<vmem>>, %arg5: memref<1x128x128xbf16, #tpu.memory_space<vmem>>, %arg6: memref<1x1x128xf32, #tpu.memory_space<vmem>>, %arg7: memref<1x1x128xf32, #tpu.memory_space<vmem>>, %arg8: memref<1x9x128x128xbf16, #tpu.memory_space<vmem>>, %arg9: memref<50x128xf32, #tpu.memory_space<vmem>>, %arg10: memref<50x128xf32, #tpu.memory_space<vmem>>, %arg11: memref<82x128xf32, #tpu.memory_space<vmem>>) attributes {dimension_semantics = [#tpu.dimension_semantics<arbitrary>], iteration_bounds = array<i64: 2>, scalar_prefetch = 0 : i64, scratch_operands = 2 : i64, tpu.core_type = #tpu.core_type<tc>, window_params = [{pipeline_mode = #tpu.pipeline_mode<synchronous>, transform_indices = @transform_0, window_bounds = array<i64: 50, 128>}, {pipeline_mode = #tpu.pipeline_mode<synchronous>, transform_indices = @transform_1, window_bounds = array<i64: 50, 9>}, {transform_indices = @transform_2, window_bounds = array<i64: 1, 1, 128>}, {transform_indices = @transform_3, window_bounds = array<i64: 1, 1, 128>}, {transform_indices = @transform_4, window_bounds = array<i64: 1, 128, 128>}, {transform_indices = @transform_5, window_bounds = array<i64: 1, 1, 128>}, {transform_indices = @transform_6, window_bounds = array<i64: 1, 1, 128>}, {transform_indices = @transform_7, window_bounds = array<i64: 1, 9, 128, 128>}, {pipeline_mode = #tpu.pipeline_mode<synchronous>, transform_indices = @transform_8, window_bounds = array<i64: 50, 128>}]} {
    %c0_i32 = arith.constant 0 : i32
    %0 = arith.cmpi eq, %arg0, %c0_i32 : i32
    %1 = arith.extui %0 : i1 to i32
    %c0_i32_0 = arith.constant 0 : i32
    %2 = arith.cmpi ne, %1, %c0_i32_0 : i32
    scf.if %2 {
      %c0_93 = arith.constant 0 : index
      %c0_94 = arith.constant 0 : index
      %117 = vector.load %arg1[%c0_93, %c0_94] : memref<50x128xf32, #tpu.memory_space<vmem>>, vector<50x128xf32>
      %c0_95 = arith.constant 0 : index
      %c0_96 = arith.constant 0 : index
      %118 = vector.load %arg10[%c0_95, %c0_96] : memref<50x128xf32, #tpu.memory_space<vmem>>, vector<50x128xf32>
      tpu.vector_store %arg10[%c0_95, %c0_96], %117 {strides = array<i32>} : memref<50x128xf32, #tpu.memory_space<vmem>>, vector<50x128xf32>,
    } else {
    }
    %c0 = arith.constant 0 : index
    %c0_1 = arith.constant 0 : index
    %3 = vector.load %arg10[%c0, %c0_1] : memref<50x128xf32, #tpu.memory_space<vmem>>, vector<50x128xf32>
    %c0_2 = arith.constant 0 : index
    %c0_3 = arith.constant 0 : index
    %c0_4 = arith.constant 0 : index
    %4 = vector.load %arg3[%c0_2, %c0_3, %c0_4] : memref<1x1x128xf32, #tpu.memory_space<vmem>>, vector<1x1x128xf32>
    %5 = vector.shape_cast %4 : vector<1x1x128xf32> to vector<1x128xf32>
    %6 = vector.broadcast %5 : vector<1x128xf32> to vector<50x128xf32>
    %7 = arith.mulf %3, %6 : vector<50x128xf32>
    %c0_5 = arith.constant 0 : index
    %c0_6 = arith.constant 0 : index
    %c0_7 = arith.constant 0 : index
    %8 = vector.load %arg4[%c0_5, %c0_6, %c0_7] : memref<1x1x128xf32, #tpu.memory_space<vmem>>, vector<1x1x128xf32>
    %9 = vector.shape_cast %8 : vector<1x1x128xf32> to vector<1x128xf32>
    %10 = vector.broadcast %9 : vector<1x128xf32> to vector<50x128xf32>
    %11 = arith.addf %7, %10 : vector<50x128xf32>
    %cst = arith.constant 0.000000e+00 : f32
    %12 = vector.broadcast %cst : f32 to vector<50x128xf32>
    %13 = arith.maximumf %11, %12 : vector<50x128xf32>
    %14 = arith.truncf %13 : vector<50x128xf32> to vector<50x128xbf16>
    %c0_8 = arith.constant 0 : index
    %c0_9 = arith.constant 0 : index
    %c0_10 = arith.constant 0 : index
    %15 = vector.load %arg5[%c0_8, %c0_9, %c0_10] : memref<1x128x128xbf16, #tpu.memory_space<vmem>>, vector<1x128x128xbf16>
    %16 = vector.shape_cast %15 : vector<1x128x128xbf16> to vector<128x128xbf16>
    %cst_11 = arith.constant dense<0.000000e+00> : vector<50x128xf32>
    %17 = tpu.matmul %14, %16, %cst_11 {dimension_numbers = #tpu.dot_dimension_numbers<[1], [0], [0], [1], [0, 0, 1, 1], [], []>} : vector<50x128xbf16>, vector<128x128xbf16>, vector<50x128xf32> -> vector<50x128xf32>
    %c0_12 = arith.constant 0 : index
    %c0_13 = arith.constant 0 : index
    %c0_14 = arith.constant 0 : index
    %18 = vector.load %arg6[%c0_12, %c0_13, %c0_14] : memref<1x1x128xf32, #tpu.memory_space<vmem>>, vector<1x1x128xf32>
    %19 = vector.shape_cast %18 : vector<1x1x128xf32> to vector<1x128xf32>
    %20 = vector.broadcast %19 : vector<1x128xf32> to vector<50x128xf32>
    %21 = arith.mulf %17, %20 : vector<50x128xf32>
    %c0_15 = arith.constant 0 : index
    %c0_16 = arith.constant 0 : index
    %c0_17 = arith.constant 0 : index
    %22 = vector.load %arg7[%c0_15, %c0_16, %c0_17] : memref<1x1x128xf32, #tpu.memory_space<vmem>>, vector<1x1x128xf32>
    %23 = vector.shape_cast %22 : vector<1x1x128xf32> to vector<1x128xf32>
    %24 = vector.broadcast %23 : vector<1x128xf32> to vector<50x128xf32>
    %25 = arith.addf %21, %24 : vector<50x128xf32>
    %cst_18 = arith.constant 0.000000e+00 : f32
    %26 = vector.broadcast %cst_18 : f32 to vector<50x128xf32>
    %27 = arith.maximumf %25, %26 : vector<50x128xf32>
    %cst_19 = arith.constant 0.000000e+00 : f32
    %28 = vector.broadcast %cst_19 : f32 to vector<82x128xf32>
    %c0_20 = arith.constant 0 : index
    %c0_21 = arith.constant 0 : index
    %29 = vector.load %arg11[%c0_20, %c0_21] : memref<82x128xf32, #tpu.memory_space<vmem>>, vector<82x128xf32>
    tpu.vector_store %arg11[%c0_20, %c0_21], %28 {strides = array<i32>} : memref<82x128xf32, #tpu.memory_space<vmem>>, vector<82x128xf32>,
    %c16 = arith.constant 16 : index
    %c0_22 = arith.constant 0 : index
    %30 = vector.load %arg11[%c16, %c0_22] : memref<82x128xf32, #tpu.memory_space<vmem>>, vector<50x128xf32>
    tpu.vector_store %arg11[%c16, %c0_22], %27 {strides = array<i32>} : memref<82x128xf32, #tpu.memory_space<vmem>>, vector<50x128xf32>,
    %cst_23 = arith.constant 0.000000e+00 : f32
    %31 = vector.broadcast %cst_23 : f32 to vector<50x128xf32>
    %c10 = arith.constant 10 : index
    %c0_24 = arith.constant 0 : index
    %32 = vector.load %arg11[%c10, %c0_24] : memref<82x128xf32, #tpu.memory_space<vmem>>, vector<50x128xf32>
    %33 = arith.truncf %32 : vector<50x128xf32> to vector<50x128xbf16>
    %c0_25 = arith.constant 0 : index
    %c0_26 = arith.constant 0 : index
    %c0_27 = arith.constant 0 : index
    %c0_28 = arith.constant 0 : index
    %34 = vector.load %arg8[%c0_25, %c0_26, %c0_27, %c0_28] : memref<1x9x128x128xbf16, #tpu.memory_space<vmem>>, vector<1x1x128x128xbf16>
    %35 = vector.shape_cast %34 : vector<1x1x128x128xbf16> to vector<128x128xbf16>
    %cst_29 = arith.constant dense<0.000000e+00> : vector<50x128xf32>
    %36 = tpu.matmul %33, %35, %cst_29 {dimension_numbers = #tpu.dot_dimension_numbers<[1], [0], [0], [1], [0, 0, 1, 1], [], []>} : vector<50x128xbf16>, vector<128x128xbf16>, vector<50x128xf32> -> vector<50x128xf32>
    %c0_30 = arith.constant 0 : index
    %c0_31 = arith.constant 0 : index
    %37 = vector.load %arg2[%c0_30, %c0_31] : memref<50x9xf32, #tpu.memory_space<vmem>>, vector<50x1xf32>
    %38 = vector.broadcast %37 : vector<50x1xf32> to vector<50x128xf32>
    %39 = arith.mulf %36, %38 : vector<50x128xf32>
    %40 = arith.addf %31, %39 : vector<50x128xf32>
    %c11 = arith.constant 11 : index
    %c0_32 = arith.constant 0 : index
    %41 = vector.load %arg11[%c11, %c0_32] : memref<82x128xf32, #tpu.memory_space<vmem>>, vector<50x128xf32>
    %42 = arith.truncf %41 : vector<50x128xf32> to vector<50x128xbf16>
    %c0_33 = arith.constant 0 : index
    %c1 = arith.constant 1 : index
    %c0_34 = arith.constant 0 : index
    %c0_35 = arith.constant 0 : index
    %43 = vector.load %arg8[%c0_33, %c1, %c0_34, %c0_35] : memref<1x9x128x128xbf16, #tpu.memory_space<vmem>>, vector<1x1x128x128xbf16>
    %44 = vector.shape_cast %43 : vector<1x1x128x128xbf16> to vector<128x128xbf16>
    %cst_36 = arith.constant dense<0.000000e+00> : vector<50x128xf32>
    %45 = tpu.matmul %42, %44, %cst_36 {dimension_numbers = #tpu.dot_dimension_numbers<[1], [0], [0], [1], [0, 0, 1, 1], [], []>} : vector<50x128xbf16>, vector<128x128xbf16>, vector<50x128xf32> -> vector<50x128xf32>
    %c0_37 = arith.constant 0 : index
    %c1_38 = arith.constant 1 : index
    %46 = vector.load %arg2[%c0_37, %c1_38] : memref<50x9xf32, #tpu.memory_space<vmem>>, vector<50x1xf32>
    %47 = vector.broadcast %46 : vector<50x1xf32> to vector<50x128xf32>
    %48 = arith.mulf %45, %47 : vector<50x128xf32>
    %49 = arith.addf %40, %48 : vector<50x128xf32>
    %c12 = arith.constant 12 : index
    %c0_39 = arith.constant 0 : index
    %50 = vector.load %arg11[%c12, %c0_39] : memref<82x128xf32, #tpu.memory_space<vmem>>, vector<50x128xf32>
    %51 = arith.truncf %50 : vector<50x128xf32> to vector<50x128xbf16>
    %c0_40 = arith.constant 0 : index
    %c2 = arith.constant 2 : index
    %c0_41 = arith.constant 0 : index
    %c0_42 = arith.constant 0 : index
    %52 = vector.load %arg8[%c0_40, %c2, %c0_41, %c0_42] : memref<1x9x128x128xbf16, #tpu.memory_space<vmem>>, vector<1x1x128x128xbf16>
    %53 = vector.shape_cast %52 : vector<1x1x128x128xbf16> to vector<128x128xbf16>
    %cst_43 = arith.constant dense<0.000000e+00> : vector<50x128xf32>
    %54 = tpu.matmul %51, %53, %cst_43 {dimension_numbers = #tpu.dot_dimension_numbers<[1], [0], [0], [1], [0, 0, 1, 1], [], []>} : vector<50x128xbf16>, vector<128x128xbf16>, vector<50x128xf32> -> vector<50x128xf32>
    %c0_44 = arith.constant 0 : index
    %c2_45 = arith.constant 2 : index
    %55 = vector.load %arg2[%c0_44, %c2_45] : memref<50x9xf32, #tpu.memory_space<vmem>>, vector<50x1xf32>
    %56 = vector.broadcast %55 : vector<50x1xf32> to vector<50x128xf32>
    %57 = arith.mulf %54, %56 : vector<50x128xf32>
    %58 = arith.addf %49, %57 : vector<50x128xf32>
    %c15 = arith.constant 15 : index
    %c0_46 = arith.constant 0 : index
    %59 = vector.load %arg11[%c15, %c0_46] : memref<82x128xf32, #tpu.memory_space<vmem>>, vector<50x128xf32>
    %60 = arith.truncf %59 : vector<50x128xf32> to vector<50x128xbf16>
    %c0_47 = arith.constant 0 : index
    %c3 = arith.constant 3 : index
    %c0_48 = arith.constant 0 : index
    %c0_49 = arith.constant 0 : index
    %61 = vector.load %arg8[%c0_47, %c3, %c0_48, %c0_49] : memref<1x9x128x128xbf16, #tpu.memory_space<vmem>>, vector<1x1x128x128xbf16>
    %62 = vector.shape_cast %61 : vector<1x1x128x128xbf16> to vector<128x128xbf16>
    %cst_50 = arith.constant dense<0.000000e+00> : vector<50x128xf32>
    %63 = tpu.matmul %60, %62, %cst_50 {dimension_numbers = #tpu.dot_dimension_numbers<[1], [0], [0], [1], [0, 0, 1, 1], [], []>} : vector<50x128xbf16>, vector<128x128xbf16>, vector<50x128xf32> -> vector<50x128xf32>
    %c0_51 = arith.constant 0 : index
    %c3_52 = arith.constant 3 : index
    %64 = vector.load %arg2[%c0_51, %c3_52] : memref<50x9xf32, #tpu.memory_space<vmem>>, vector<50x1xf32>
    %65 = vector.broadcast %64 : vector<50x1xf32> to vector<50x128xf32>
    %66 = arith.mulf %63, %65 : vector<50x128xf32>
    %67 = arith.addf %58, %66 : vector<50x128xf32>
    %c16_53 = arith.constant 16 : index
    %c0_54 = arith.constant 0 : index
    %68 = vector.load %arg11[%c16_53, %c0_54] : memref<82x128xf32, #tpu.memory_space<vmem>>, vector<50x128xf32>
    %69 = arith.truncf %68 : vector<50x128xf32> to vector<50x128xbf16>
    %c0_55 = arith.constant 0 : index
    %c4 = arith.constant 4 : index
    %c0_56 = arith.constant 0 : index
    %c0_57 = arith.constant 0 : index
    %70 = vector.load %arg8[%c0_55, %c4, %c0_56, %c0_57] : memref<1x9x128x128xbf16, #tpu.memory_space<vmem>>, vector<1x1x128x128xbf16>
    %71 = vector.shape_cast %70 : vector<1x1x128x128xbf16> to vector<128x128xbf16>
    %cst_58 = arith.constant dense<0.000000e+00> : vector<50x128xf32>
    %72 = tpu.matmul %69, %71, %cst_58 {dimension_numbers = #tpu.dot_dimension_numbers<[1], [0], [0], [1], [0, 0, 1, 1], [], []>} : vector<50x128xbf16>, vector<128x128xbf16>, vector<50x128xf32> -> vector<50x128xf32>
    %c0_59 = arith.constant 0 : index
    %c4_60 = arith.constant 4 : index
    %73 = vector.load %arg2[%c0_59, %c4_60] : memref<50x9xf32, #tpu.memory_space<vmem>>, vector<50x1xf32>
    %74 = vector.broadcast %73 : vector<50x1xf32> to vector<50x128xf32>
    %75 = arith.mulf %72, %74 : vector<50x128xf32>
    %76 = arith.addf %67, %75 : vector<50x128xf32>
    %c17 = arith.constant 17 : index
    %c0_61 = arith.constant 0 : index
    %77 = vector.load %arg11[%c17, %c0_61] : memref<82x128xf32, #tpu.memory_space<vmem>>, vector<50x128xf32>
    %78 = arith.truncf %77 : vector<50x128xf32> to vector<50x128xbf16>
    %c0_62 = arith.constant 0 : index
    %c5 = arith.constant 5 : index
    %c0_63 = arith.constant 0 : index
    %c0_64 = arith.constant 0 : index
    %79 = vector.load %arg8[%c0_62, %c5, %c0_63, %c0_64] : memref<1x9x128x128xbf16, #tpu.memory_space<vmem>>, vector<1x1x128x128xbf16>
    %80 = vector.shape_cast %79 : vector<1x1x128x128xbf16> to vector<128x128xbf16>
    %cst_65 = arith.constant dense<0.000000e+00> : vector<50x128xf32>
    %81 = tpu.matmul %78, %80, %cst_65 {dimension_numbers = #tpu.dot_dimension_numbers<[1], [0], [0], [1], [0, 0, 1, 1], [], []>} : vector<50x128xbf16>, vector<128x128xbf16>, vector<50x128xf32> -> vector<50x128xf32>
    %c0_66 = arith.constant 0 : index
    %c5_67 = arith.constant 5 : index
    %82 = vector.load %arg2[%c0_66, %c5_67] : memref<50x9xf32, #tpu.memory_space<vmem>>, vector<50x1xf32>
    %83 = vector.broadcast %82 : vector<50x1xf32> to vector<50x128xf32>
    %84 = arith.mulf %81, %83 : vector<50x128xf32>
    %85 = arith.addf %76, %84 : vector<50x128xf32>
    %c20 = arith.constant 20 : index
    %c0_68 = arith.constant 0 : index
    %86 = vector.load %arg11[%c20, %c0_68] : memref<82x128xf32, #tpu.memory_space<vmem>>, vector<50x128xf32>
    %87 = arith.truncf %86 : vector<50x128xf32> to vector<50x128xbf16>
    %c0_69 = arith.constant 0 : index
    %c6 = arith.constant 6 : index
    %c0_70 = arith.constant 0 : index
    %c0_71 = arith.constant 0 : index
    %88 = vector.load %arg8[%c0_69, %c6, %c0_70, %c0_71] : memref<1x9x128x128xbf16, #tpu.memory_space<vmem>>, vector<1x1x128x128xbf16>
    %89 = vector.shape_cast %88 : vector<1x1x128x128xbf16> to vector<128x128xbf16>
    %cst_72 = arith.constant dense<0.000000e+00> : vector<50x128xf32>
    %90 = tpu.matmul %87, %89, %cst_72 {dimension_numbers = #tpu.dot_dimension_numbers<[1], [0], [0], [1], [0, 0, 1, 1], [], []>} : vector<50x128xbf16>, vector<128x128xbf16>, vector<50x128xf32> -> vector<50x128xf32>
    %c0_73 = arith.constant 0 : index
    %c6_74 = arith.constant 6 : index
    %91 = vector.load %arg2[%c0_73, %c6_74] : memref<50x9xf32, #tpu.memory_space<vmem>>, vector<50x1xf32>
    %92 = vector.broadcast %91 : vector<50x1xf32> to vector<50x128xf32>
    %93 = arith.mulf %90, %92 : vector<50x128xf32>
    %94 = arith.addf %85, %93 : vector<50x128xf32>
    %c21 = arith.constant 21 : index
    %c0_75 = arith.constant 0 : index
    %95 = vector.load %arg11[%c21, %c0_75] : memref<82x128xf32, #tpu.memory_space<vmem>>, vector<50x128xf32>
    %96 = arith.truncf %95 : vector<50x128xf32> to vector<50x128xbf16>
    %c0_76 = arith.constant 0 : index
    %c7 = arith.constant 7 : index
    %c0_77 = arith.constant 0 : index
    %c0_78 = arith.constant 0 : index
    %97 = vector.load %arg8[%c0_76, %c7, %c0_77, %c0_78] : memref<1x9x128x128xbf16, #tpu.memory_space<vmem>>, vector<1x1x128x128xbf16>
    %98 = vector.shape_cast %97 : vector<1x1x128x128xbf16> to vector<128x128xbf16>
    %cst_79 = arith.constant dense<0.000000e+00> : vector<50x128xf32>
    %99 = tpu.matmul %96, %98, %cst_79 {dimension_numbers = #tpu.dot_dimension_numbers<[1], [0], [0], [1], [0, 0, 1, 1], [], []>} : vector<50x128xbf16>, vector<128x128xbf16>, vector<50x128xf32> -> vector<50x128xf32>
    %c0_80 = arith.constant 0 : index
    %c7_81 = arith.constant 7 : index
    %100 = vector.load %arg2[%c0_80, %c7_81] : memref<50x9xf32, #tpu.memory_space<vmem>>, vector<50x1xf32>
    %101 = vector.broadcast %100 : vector<50x1xf32> to vector<50x128xf32>
    %102 = arith.mulf %99, %101 : vector<50x128xf32>
    %103 = arith.addf %94, %102 : vector<50x128xf32>
    %c22 = arith.constant 22 : index
    %c0_82 = arith.constant 0 : index
    %104 = vector.load %arg11[%c22, %c0_82] : memref<82x128xf32, #tpu.memory_space<vmem>>, vector<50x128xf32>
    %105 = arith.truncf %104 : vector<50x128xf32> to vector<50x128xbf16>
    %c0_83 = arith.constant 0 : index
    %c8 = arith.constant 8 : index
    %c0_84 = arith.constant 0 : index
    %c0_85 = arith.constant 0 : index
    %106 = vector.load %arg8[%c0_83, %c8, %c0_84, %c0_85] : memref<1x9x128x128xbf16, #tpu.memory_space<vmem>>, vector<1x1x128x128xbf16>
    %107 = vector.shape_cast %106 : vector<1x1x128x128xbf16> to vector<128x128xbf16>
    %cst_86 = arith.constant dense<0.000000e+00> : vector<50x128xf32>
    %108 = tpu.matmul %105, %107, %cst_86 {dimension_numbers = #tpu.dot_dimension_numbers<[1], [0], [0], [1], [0, 0, 1, 1], [], []>} : vector<50x128xbf16>, vector<128x128xbf16>, vector<50x128xf32> -> vector<50x128xf32>
    %c0_87 = arith.constant 0 : index
    %c8_88 = arith.constant 8 : index
    %109 = vector.load %arg2[%c0_87, %c8_88] : memref<50x9xf32, #tpu.memory_space<vmem>>, vector<50x1xf32>
    %110 = vector.broadcast %109 : vector<50x1xf32> to vector<50x128xf32>
    %111 = arith.mulf %108, %110 : vector<50x128xf32>
    %112 = arith.addf %103, %111 : vector<50x128xf32>
    %c12_i32 = arith.constant 12 : i32
    %113 = tpu.dynamic_rotate %3 by %c12_i32 dim 1 : vector<50x128xf32>, i32 -> vector<50x128xf32>
    %114 = arith.addf %112, %113 : vector<50x128xf32>
    %c0_89 = arith.constant 0 : index
    %c0_90 = arith.constant 0 : index
    %115 = vector.load %arg10[%c0_89, %c0_90] : memref<50x128xf32, #tpu.memory_space<vmem>>, vector<50x128xf32>
    tpu.vector_store %arg10[%c0_89, %c0_90], %114 {strides = array<i32>} : memref<50x128xf32, #tpu.memory_space<vmem>>, vector<50x128xf32>,
    %c0_91 = arith.constant 0 : index
    %c0_92 = arith.constant 0 : index
    %116 = vector.load %arg9[%c0_91, %c0_92] : memref<50x128xf32, #tpu.memory_space<vmem>>, vector<50x128xf32>
    tpu.vector_store %arg9[%c0_91, %c0_92], %114 {strides = array<i32>} : memref<50x128xf32, #tpu.memory_space<vmem>>, vector<50x128xf32>,
    return
  }
  func.func @transform_0(%arg0: i32) -> (i32, i32) {
    %c0_i32 = arith.constant 0 : i32
    %c0_i32_0 = arith.constant 0 : i32
    %c0_i32_1 = arith.constant 0 : i32
    return %c0_i32, %c0_i32_0 : i32, i32
  }
  func.func @transform_1(%arg0: i32) -> (i32, i32) {
    %c0_i32 = arith.constant 0 : i32
    %c0_i32_0 = arith.constant 0 : i32
    %c0_i32_1 = arith.constant 0 : i32
    return %c0_i32, %c0_i32_0 : i32, i32
  }
  func.func @transform_2(%arg0: i32) -> (i32, i32, i32) {
    %c0_i32 = arith.constant 0 : i32
    %c0_i32_0 = arith.constant 0 : i32
    %c0_i32_1 = arith.constant 0 : i32
    return %arg0, %c0_i32, %c0_i32_0 : i32, i32, i32
  }
  func.func @transform_3(%arg0: i32) -> (i32, i32, i32) {
    %c0_i32 = arith.constant 0 : i32
    %c0_i32_0 = arith.constant 0 : i32
    %c0_i32_1 = arith.constant 0 : i32
    return %arg0, %c0_i32, %c0_i32_0 : i32, i32, i32
  }
  func.func @transform_4(%arg0: i32) -> (i32, i32, i32) {
    %c0_i32 = arith.constant 0 : i32
    %c0_i32_0 = arith.constant 0 : i32
    %c0_i32_1 = arith.constant 0 : i32
    return %arg0, %c0_i32, %c0_i32_0 : i32, i32, i32
  }
  func.func @transform_5(%arg0: i32) -> (i32, i32, i32) {
    %c0_i32 = arith.constant 0 : i32
    %c0_i32_0 = arith.constant 0 : i32
    %c0_i32_1 = arith.constant 0 : i32
    return %arg0, %c0_i32, %c0_i32_0 : i32, i32, i32
  }
  func.func @transform_6(%arg0: i32) -> (i32, i32, i32) {
    %c0_i32 = arith.constant 0 : i32
    %c0_i32_0 = arith.constant 0 : i32
    %c0_i32_1 = arith.constant 0 : i32
    return %arg0, %c0_i32, %c0_i32_0 : i32, i32, i32
  }
  func.func @transform_7(%arg0: i32) -> (i32, i32, i32, i32) {
    %c0_i32 = arith.constant 0 : i32
    %c0_i32_0 = arith.constant 0 : i32
    %c0_i32_1 = arith.constant 0 : i32
    %c0_i32_2 = arith.constant 0 : i32
    return %arg0, %c0_i32, %c0_i32_0, %c0_i32_1 : i32, i32, i32, i32
  }
  func.func @transform_8(%arg0: i32) -> (i32, i32) {
    %c0_i32 = arith.constant 0 : i32
    %c0_i32_0 = arith.constant 0 : i32
    %c0_i32_1 = arith.constant 0 : i32
    return %c0_i32, %c0_i32_0 : i32, i32
  }
}

module attributes {stable_mosaic.version = 11 : i64} {
  func.func @kernel(%arg0: i32, %arg1: memref<50x128xf32, #tpu.memory_space<vmem>>, %arg2: memref<128x128xbf16, #tpu.memory_space<vmem>>, %arg3: memref<50x128xf32, #tpu.memory_space<vmem>>) attributes {dimension_semantics = [#tpu.dimension_semantics<arbitrary>], iteration_bounds = array<i64: 1>, scalar_prefetch = 0 : i64, scratch_operands = 0 : i64, tpu.core_type = #tpu.core_type<tc>, window_params = [{pipeline_mode = #tpu.pipeline_mode<synchronous>, transform_indices = @transform_0, window_bounds = array<i64: 50, 128>}, {pipeline_mode = #tpu.pipeline_mode<synchronous>, transform_indices = @transform_1, window_bounds = array<i64: 128, 128>}, {pipeline_mode = #tpu.pipeline_mode<synchronous>, transform_indices = @transform_2, window_bounds = array<i64: 50, 128>}]} {
    %c0 = arith.constant 0 : index
    %c0_0 = arith.constant 0 : index
    %0 = vector.load %arg1[%c0, %c0_0] : memref<50x128xf32, #tpu.memory_space<vmem>>, vector<50x128xf32>
    %cst = arith.constant 0.000000e+00 : f32
    %1 = vector.broadcast %cst : f32 to vector<50x128xf32>
    %2 = arith.maximumf %0, %1 : vector<50x128xf32>
    %3 = arith.truncf %2 : vector<50x128xf32> to vector<50x128xbf16>
    %c0_1 = arith.constant 0 : index
    %c0_2 = arith.constant 0 : index
    %4 = vector.load %arg2[%c0_1, %c0_2] : memref<128x128xbf16, #tpu.memory_space<vmem>>, vector<128x128xbf16>
    %cst_3 = arith.constant dense<0.000000e+00> : vector<50x128xf32>
    %5 = tpu.matmul %3, %4, %cst_3 {dimension_numbers = #tpu.dot_dimension_numbers<[1], [0], [0], [1], [0, 0, 1, 1], [], []>} : vector<50x128xbf16>, vector<128x128xbf16>, vector<50x128xf32> -> vector<50x128xf32>
    %c0_4 = arith.constant 0 : index
    %c0_5 = arith.constant 0 : index
    %6 = vector.load %arg3[%c0_4, %c0_5] : memref<50x128xf32, #tpu.memory_space<vmem>>, vector<50x128xf32>
    tpu.vector_store %arg3[%c0_4, %c0_5], %5 {strides = array<i32>} : memref<50x128xf32, #tpu.memory_space<vmem>>, vector<50x128xf32>,
    return
  }
  func.func @transform_0(%arg0: i32) -> (i32, i32) {
    %c0_i32 = arith.constant 0 : i32
    %c0_i32_0 = arith.constant 0 : i32
    %c0_i32_1 = arith.constant 0 : i32
    return %c0_i32, %c0_i32_0 : i32, i32
  }
  func.func @transform_1(%arg0: i32) -> (i32, i32) {
    %c0_i32 = arith.constant 0 : i32
    %c0_i32_0 = arith.constant 0 : i32
    %c0_i32_1 = arith.constant 0 : i32
    return %c0_i32, %c0_i32_0 : i32, i32
  }
  func.func @transform_2(%arg0: i32) -> (i32, i32) {
    %c0_i32 = arith.constant 0 : i32
    %c0_i32_0 = arith.constant 0 : i32
    %c0_i32_1 = arith.constant 0 : i32
    return %c0_i32, %c0_i32_0 : i32, i32
  }
}

module attributes {stable_mosaic.version = 11 : i64} {
  func.func @kernel(%arg0: i32, %arg1: memref<8x128xf32, #tpu.memory_space<vmem>>, %arg2: memref<8x9xf32, #tpu.memory_space<vmem>>, %arg3: memref<1x1x128xf32, #tpu.memory_space<vmem>>, %arg4: memref<1x1x128xf32, #tpu.memory_space<vmem>>, %arg5: memref<1x128x128xbf16, #tpu.memory_space<vmem>>, %arg6: memref<1x1x128xf32, #tpu.memory_space<vmem>>, %arg7: memref<1x1x128xf32, #tpu.memory_space<vmem>>, %arg8: memref<1x9x128x128xbf16, #tpu.memory_space<vmem>>, %arg9: memref<8x128xf32, #tpu.memory_space<vmem>>, %arg10: memref<8x128xf32, #tpu.memory_space<vmem>>, %arg11: memref<40x128xf32, #tpu.memory_space<vmem>>) attributes {dimension_semantics = [#tpu.dimension_semantics<arbitrary>], iteration_bounds = array<i64: 2>, scalar_prefetch = 0 : i64, scratch_operands = 2 : i64, tpu.core_type = #tpu.core_type<tc>, window_params = [{pipeline_mode = #tpu.pipeline_mode<synchronous>, transform_indices = @transform_0, window_bounds = array<i64: 8, 128>}, {pipeline_mode = #tpu.pipeline_mode<synchronous>, transform_indices = @transform_1, window_bounds = array<i64: 8, 9>}, {transform_indices = @transform_2, window_bounds = array<i64: 1, 1, 128>}, {transform_indices = @transform_3, window_bounds = array<i64: 1, 1, 128>}, {transform_indices = @transform_4, window_bounds = array<i64: 1, 128, 128>}, {transform_indices = @transform_5, window_bounds = array<i64: 1, 1, 128>}, {transform_indices = @transform_6, window_bounds = array<i64: 1, 1, 128>}, {transform_indices = @transform_7, window_bounds = array<i64: 1, 9, 128, 128>}, {pipeline_mode = #tpu.pipeline_mode<synchronous>, transform_indices = @transform_8, window_bounds = array<i64: 8, 128>}]} {
    %c0_i32 = arith.constant 0 : i32
    %0 = arith.cmpi eq, %arg0, %c0_i32 : i32
    %1 = arith.extui %0 : i1 to i32
    %c0_i32_0 = arith.constant 0 : i32
    %2 = arith.cmpi ne, %1, %c0_i32_0 : i32
    scf.if %2 {
      %c0_95 = arith.constant 0 : index
      %c0_96 = arith.constant 0 : index
      %117 = vector.load %arg1[%c0_95, %c0_96] : memref<8x128xf32, #tpu.memory_space<vmem>>, vector<8x128xf32>
      %c0_97 = arith.constant 0 : index
      %c0_98 = arith.constant 0 : index
      %118 = vector.load %arg10[%c0_97, %c0_98] : memref<8x128xf32, #tpu.memory_space<vmem>>, vector<8x128xf32>
      tpu.vector_store %arg10[%c0_97, %c0_98], %117 {strides = array<i32>} : memref<8x128xf32, #tpu.memory_space<vmem>>, vector<8x128xf32>,
    } else {
    }
    %c0 = arith.constant 0 : index
    %c0_1 = arith.constant 0 : index
    %3 = vector.load %arg10[%c0, %c0_1] : memref<8x128xf32, #tpu.memory_space<vmem>>, vector<8x128xf32>
    %c0_2 = arith.constant 0 : index
    %c0_3 = arith.constant 0 : index
    %c0_4 = arith.constant 0 : index
    %4 = vector.load %arg3[%c0_2, %c0_3, %c0_4] : memref<1x1x128xf32, #tpu.memory_space<vmem>>, vector<1x1x128xf32>
    %5 = vector.shape_cast %4 : vector<1x1x128xf32> to vector<1x128xf32>
    %6 = vector.broadcast %5 : vector<1x128xf32> to vector<8x128xf32>
    %7 = arith.mulf %3, %6 : vector<8x128xf32>
    %c0_5 = arith.constant 0 : index
    %c0_6 = arith.constant 0 : index
    %c0_7 = arith.constant 0 : index
    %8 = vector.load %arg4[%c0_5, %c0_6, %c0_7] : memref<1x1x128xf32, #tpu.memory_space<vmem>>, vector<1x1x128xf32>
    %9 = vector.shape_cast %8 : vector<1x1x128xf32> to vector<1x128xf32>
    %10 = vector.broadcast %9 : vector<1x128xf32> to vector<8x128xf32>
    %11 = arith.addf %7, %10 : vector<8x128xf32>
    %cst = arith.constant 0.000000e+00 : f32
    %12 = vector.broadcast %cst : f32 to vector<8x128xf32>
    %13 = arith.maximumf %11, %12 : vector<8x128xf32>
    %14 = arith.truncf %13 : vector<8x128xf32> to vector<8x128xbf16>
    %c0_8 = arith.constant 0 : index
    %c0_9 = arith.constant 0 : index
    %c0_10 = arith.constant 0 : index
    %15 = vector.load %arg5[%c0_8, %c0_9, %c0_10] : memref<1x128x128xbf16, #tpu.memory_space<vmem>>, vector<1x128x128xbf16>
    %16 = vector.shape_cast %15 : vector<1x128x128xbf16> to vector<128x128xbf16>
    %cst_11 = arith.constant dense<0.000000e+00> : vector<8x128xf32>
    %17 = tpu.matmul %14, %16, %cst_11 {dimension_numbers = #tpu.dot_dimension_numbers<[1], [0], [0], [1], [0, 0, 1, 1], [], []>} : vector<8x128xbf16>, vector<128x128xbf16>, vector<8x128xf32> -> vector<8x128xf32>
    %c0_12 = arith.constant 0 : index
    %c0_13 = arith.constant 0 : index
    %c0_14 = arith.constant 0 : index
    %18 = vector.load %arg6[%c0_12, %c0_13, %c0_14] : memref<1x1x128xf32, #tpu.memory_space<vmem>>, vector<1x1x128xf32>
    %19 = vector.shape_cast %18 : vector<1x1x128xf32> to vector<1x128xf32>
    %20 = vector.broadcast %19 : vector<1x128xf32> to vector<8x128xf32>
    %21 = arith.mulf %17, %20 : vector<8x128xf32>
    %c0_15 = arith.constant 0 : index
    %c0_16 = arith.constant 0 : index
    %c0_17 = arith.constant 0 : index
    %22 = vector.load %arg7[%c0_15, %c0_16, %c0_17] : memref<1x1x128xf32, #tpu.memory_space<vmem>>, vector<1x1x128xf32>
    %23 = vector.shape_cast %22 : vector<1x1x128xf32> to vector<1x128xf32>
    %24 = vector.broadcast %23 : vector<1x128xf32> to vector<8x128xf32>
    %25 = arith.addf %21, %24 : vector<8x128xf32>
    %cst_18 = arith.constant 0.000000e+00 : f32
    %26 = vector.broadcast %cst_18 : f32 to vector<8x128xf32>
    %27 = arith.maximumf %25, %26 : vector<8x128xf32>
    %cst_19 = arith.constant 0.000000e+00 : f32
    %28 = vector.broadcast %cst_19 : f32 to vector<40x128xf32>
    %c0_20 = arith.constant 0 : index
    %c0_21 = arith.constant 0 : index
    %29 = vector.load %arg11[%c0_20, %c0_21] : memref<40x128xf32, #tpu.memory_space<vmem>>, vector<40x128xf32>
    tpu.vector_store %arg11[%c0_20, %c0_21], %28 {strides = array<i32>} : memref<40x128xf32, #tpu.memory_space<vmem>>, vector<40x128xf32>,
    %c16 = arith.constant 16 : index
    %c0_22 = arith.constant 0 : index
    %30 = vector.load %arg11[%c16, %c0_22] : memref<40x128xf32, #tpu.memory_space<vmem>>, vector<8x128xf32>
    tpu.vector_store %arg11[%c16, %c0_22], %27 {strides = array<i32>} : memref<40x128xf32, #tpu.memory_space<vmem>>, vector<8x128xf32>,
    %cst_23 = arith.constant 0.000000e+00 : f32
    %31 = vector.broadcast %cst_23 : f32 to vector<8x128xf32>
    %c13 = arith.constant 13 : index
    %c0_24 = arith.constant 0 : index
    %32 = vector.load %arg11[%c13, %c0_24] : memref<40x128xf32, #tpu.memory_space<vmem>>, vector<8x128xf32>
    %33 = arith.truncf %32 : vector<8x128xf32> to vector<8x128xbf16>
    %c0_25 = arith.constant 0 : index
    %c0_26 = arith.constant 0 : index
    %c0_27 = arith.constant 0 : index
    %c0_28 = arith.constant 0 : index
    %34 = vector.load %arg8[%c0_25, %c0_26, %c0_27, %c0_28] : memref<1x9x128x128xbf16, #tpu.memory_space<vmem>>, vector<1x1x128x128xbf16>
    %35 = vector.shape_cast %34 : vector<1x1x128x128xbf16> to vector<128x128xbf16>
    %cst_29 = arith.constant dense<0.000000e+00> : vector<8x128xf32>
    %36 = tpu.matmul %33, %35, %cst_29 {dimension_numbers = #tpu.dot_dimension_numbers<[1], [0], [0], [1], [0, 0, 1, 1], [], []>} : vector<8x128xbf16>, vector<128x128xbf16>, vector<8x128xf32> -> vector<8x128xf32>
    %c0_30 = arith.constant 0 : index
    %c0_31 = arith.constant 0 : index
    %37 = vector.load %arg2[%c0_30, %c0_31] : memref<8x9xf32, #tpu.memory_space<vmem>>, vector<8x1xf32>
    %38 = vector.broadcast %37 : vector<8x1xf32> to vector<8x128xf32>
    %39 = arith.mulf %36, %38 : vector<8x128xf32>
    %40 = arith.addf %31, %39 : vector<8x128xf32>
    %c14 = arith.constant 14 : index
    %c0_32 = arith.constant 0 : index
    %41 = vector.load %arg11[%c14, %c0_32] : memref<40x128xf32, #tpu.memory_space<vmem>>, vector<8x128xf32>
    %42 = arith.truncf %41 : vector<8x128xf32> to vector<8x128xbf16>
    %c0_33 = arith.constant 0 : index
    %c1 = arith.constant 1 : index
    %c0_34 = arith.constant 0 : index
    %c0_35 = arith.constant 0 : index
    %43 = vector.load %arg8[%c0_33, %c1, %c0_34, %c0_35] : memref<1x9x128x128xbf16, #tpu.memory_space<vmem>>, vector<1x1x128x128xbf16>
    %44 = vector.shape_cast %43 : vector<1x1x128x128xbf16> to vector<128x128xbf16>
    %cst_36 = arith.constant dense<0.000000e+00> : vector<8x128xf32>
    %45 = tpu.matmul %42, %44, %cst_36 {dimension_numbers = #tpu.dot_dimension_numbers<[1], [0], [0], [1], [0, 0, 1, 1], [], []>} : vector<8x128xbf16>, vector<128x128xbf16>, vector<8x128xf32> -> vector<8x128xf32>
    %c0_37 = arith.constant 0 : index
    %c1_38 = arith.constant 1 : index
    %46 = vector.load %arg2[%c0_37, %c1_38] : memref<8x9xf32, #tpu.memory_space<vmem>>, vector<8x1xf32>
    %47 = vector.broadcast %46 : vector<8x1xf32> to vector<8x128xf32>
    %48 = arith.mulf %45, %47 : vector<8x128xf32>
    %49 = arith.addf %40, %48 : vector<8x128xf32>
    %c15 = arith.constant 15 : index
    %c0_39 = arith.constant 0 : index
    %50 = vector.load %arg11[%c15, %c0_39] : memref<40x128xf32, #tpu.memory_space<vmem>>, vector<8x128xf32>
    %51 = arith.truncf %50 : vector<8x128xf32> to vector<8x128xbf16>
    %c0_40 = arith.constant 0 : index
    %c2 = arith.constant 2 : index
    %c0_41 = arith.constant 0 : index
    %c0_42 = arith.constant 0 : index
    %52 = vector.load %arg8[%c0_40, %c2, %c0_41, %c0_42] : memref<1x9x128x128xbf16, #tpu.memory_space<vmem>>, vector<1x1x128x128xbf16>
    %53 = vector.shape_cast %52 : vector<1x1x128x128xbf16> to vector<128x128xbf16>
    %cst_43 = arith.constant dense<0.000000e+00> : vector<8x128xf32>
    %54 = tpu.matmul %51, %53, %cst_43 {dimension_numbers = #tpu.dot_dimension_numbers<[1], [0], [0], [1], [0, 0, 1, 1], [], []>} : vector<8x128xbf16>, vector<128x128xbf16>, vector<8x128xf32> -> vector<8x128xf32>
    %c0_44 = arith.constant 0 : index
    %c2_45 = arith.constant 2 : index
    %55 = vector.load %arg2[%c0_44, %c2_45] : memref<8x9xf32, #tpu.memory_space<vmem>>, vector<8x1xf32>
    %56 = vector.broadcast %55 : vector<8x1xf32> to vector<8x128xf32>
    %57 = arith.mulf %54, %56 : vector<8x128xf32>
    %58 = arith.addf %49, %57 : vector<8x128xf32>
    %c15_46 = arith.constant 15 : index
    %c0_47 = arith.constant 0 : index
    %59 = vector.load %arg11[%c15_46, %c0_47] : memref<40x128xf32, #tpu.memory_space<vmem>>, vector<8x128xf32>
    %60 = arith.truncf %59 : vector<8x128xf32> to vector<8x128xbf16>
    %c0_48 = arith.constant 0 : index
    %c3 = arith.constant 3 : index
    %c0_49 = arith.constant 0 : index
    %c0_50 = arith.constant 0 : index
    %61 = vector.load %arg8[%c0_48, %c3, %c0_49, %c0_50] : memref<1x9x128x128xbf16, #tpu.memory_space<vmem>>, vector<1x1x128x128xbf16>
    %62 = vector.shape_cast %61 : vector<1x1x128x128xbf16> to vector<128x128xbf16>
    %cst_51 = arith.constant dense<0.000000e+00> : vector<8x128xf32>
    %63 = tpu.matmul %60, %62, %cst_51 {dimension_numbers = #tpu.dot_dimension_numbers<[1], [0], [0], [1], [0, 0, 1, 1], [], []>} : vector<8x128xbf16>, vector<128x128xbf16>, vector<8x128xf32> -> vector<8x128xf32>
    %c0_52 = arith.constant 0 : index
    %c3_53 = arith.constant 3 : index
    %64 = vector.load %arg2[%c0_52, %c3_53] : memref<8x9xf32, #tpu.memory_space<vmem>>, vector<8x1xf32>
    %65 = vector.broadcast %64 : vector<8x1xf32> to vector<8x128xf32>
    %66 = arith.mulf %63, %65 : vector<8x128xf32>
    %67 = arith.addf %58, %66 : vector<8x128xf32>
    %c16_54 = arith.constant 16 : index
    %c0_55 = arith.constant 0 : index
    %68 = vector.load %arg11[%c16_54, %c0_55] : memref<40x128xf32, #tpu.memory_space<vmem>>, vector<8x128xf32>
    %69 = arith.truncf %68 : vector<8x128xf32> to vector<8x128xbf16>
    %c0_56 = arith.constant 0 : index
    %c4 = arith.constant 4 : index
    %c0_57 = arith.constant 0 : index
    %c0_58 = arith.constant 0 : index
    %70 = vector.load %arg8[%c0_56, %c4, %c0_57, %c0_58] : memref<1x9x128x128xbf16, #tpu.memory_space<vmem>>, vector<1x1x128x128xbf16>
    %71 = vector.shape_cast %70 : vector<1x1x128x128xbf16> to vector<128x128xbf16>
    %cst_59 = arith.constant dense<0.000000e+00> : vector<8x128xf32>
    %72 = tpu.matmul %69, %71, %cst_59 {dimension_numbers = #tpu.dot_dimension_numbers<[1], [0], [0], [1], [0, 0, 1, 1], [], []>} : vector<8x128xbf16>, vector<128x128xbf16>, vector<8x128xf32> -> vector<8x128xf32>
    %c0_60 = arith.constant 0 : index
    %c4_61 = arith.constant 4 : index
    %73 = vector.load %arg2[%c0_60, %c4_61] : memref<8x9xf32, #tpu.memory_space<vmem>>, vector<8x1xf32>
    %74 = vector.broadcast %73 : vector<8x1xf32> to vector<8x128xf32>
    %75 = arith.mulf %72, %74 : vector<8x128xf32>
    %76 = arith.addf %67, %75 : vector<8x128xf32>
    %c17 = arith.constant 17 : index
    %c0_62 = arith.constant 0 : index
    %77 = vector.load %arg11[%c17, %c0_62] : memref<40x128xf32, #tpu.memory_space<vmem>>, vector<8x128xf32>
    %78 = arith.truncf %77 : vector<8x128xf32> to vector<8x128xbf16>
    %c0_63 = arith.constant 0 : index
    %c5 = arith.constant 5 : index
    %c0_64 = arith.constant 0 : index
    %c0_65 = arith.constant 0 : index
    %79 = vector.load %arg8[%c0_63, %c5, %c0_64, %c0_65] : memref<1x9x128x128xbf16, #tpu.memory_space<vmem>>, vector<1x1x128x128xbf16>
    %80 = vector.shape_cast %79 : vector<1x1x128x128xbf16> to vector<128x128xbf16>
    %cst_66 = arith.constant dense<0.000000e+00> : vector<8x128xf32>
    %81 = tpu.matmul %78, %80, %cst_66 {dimension_numbers = #tpu.dot_dimension_numbers<[1], [0], [0], [1], [0, 0, 1, 1], [], []>} : vector<8x128xbf16>, vector<128x128xbf16>, vector<8x128xf32> -> vector<8x128xf32>
    %c0_67 = arith.constant 0 : index
    %c5_68 = arith.constant 5 : index
    %82 = vector.load %arg2[%c0_67, %c5_68] : memref<8x9xf32, #tpu.memory_space<vmem>>, vector<8x1xf32>
    %83 = vector.broadcast %82 : vector<8x1xf32> to vector<8x128xf32>
    %84 = arith.mulf %81, %83 : vector<8x128xf32>
    %85 = arith.addf %76, %84 : vector<8x128xf32>
    %c17_69 = arith.constant 17 : index
    %c0_70 = arith.constant 0 : index
    %86 = vector.load %arg11[%c17_69, %c0_70] : memref<40x128xf32, #tpu.memory_space<vmem>>, vector<8x128xf32>
    %87 = arith.truncf %86 : vector<8x128xf32> to vector<8x128xbf16>
    %c0_71 = arith.constant 0 : index
    %c6 = arith.constant 6 : index
    %c0_72 = arith.constant 0 : index
    %c0_73 = arith.constant 0 : index
    %88 = vector.load %arg8[%c0_71, %c6, %c0_72, %c0_73] : memref<1x9x128x128xbf16, #tpu.memory_space<vmem>>, vector<1x1x128x128xbf16>
    %89 = vector.shape_cast %88 : vector<1x1x128x128xbf16> to vector<128x128xbf16>
    %cst_74 = arith.constant dense<0.000000e+00> : vector<8x128xf32>
    %90 = tpu.matmul %87, %89, %cst_74 {dimension_numbers = #tpu.dot_dimension_numbers<[1], [0], [0], [1], [0, 0, 1, 1], [], []>} : vector<8x128xbf16>, vector<128x128xbf16>, vector<8x128xf32> -> vector<8x128xf32>
    %c0_75 = arith.constant 0 : index
    %c6_76 = arith.constant 6 : index
    %91 = vector.load %arg2[%c0_75, %c6_76] : memref<8x9xf32, #tpu.memory_space<vmem>>, vector<8x1xf32>
    %92 = vector.broadcast %91 : vector<8x1xf32> to vector<8x128xf32>
    %93 = arith.mulf %90, %92 : vector<8x128xf32>
    %94 = arith.addf %85, %93 : vector<8x128xf32>
    %c18 = arith.constant 18 : index
    %c0_77 = arith.constant 0 : index
    %95 = vector.load %arg11[%c18, %c0_77] : memref<40x128xf32, #tpu.memory_space<vmem>>, vector<8x128xf32>
    %96 = arith.truncf %95 : vector<8x128xf32> to vector<8x128xbf16>
    %c0_78 = arith.constant 0 : index
    %c7 = arith.constant 7 : index
    %c0_79 = arith.constant 0 : index
    %c0_80 = arith.constant 0 : index
    %97 = vector.load %arg8[%c0_78, %c7, %c0_79, %c0_80] : memref<1x9x128x128xbf16, #tpu.memory_space<vmem>>, vector<1x1x128x128xbf16>
    %98 = vector.shape_cast %97 : vector<1x1x128x128xbf16> to vector<128x128xbf16>
    %cst_81 = arith.constant dense<0.000000e+00> : vector<8x128xf32>
    %99 = tpu.matmul %96, %98, %cst_81 {dimension_numbers = #tpu.dot_dimension_numbers<[1], [0], [0], [1], [0, 0, 1, 1], [], []>} : vector<8x128xbf16>, vector<128x128xbf16>, vector<8x128xf32> -> vector<8x128xf32>
    %c0_82 = arith.constant 0 : index
    %c7_83 = arith.constant 7 : index
    %100 = vector.load %arg2[%c0_82, %c7_83] : memref<8x9xf32, #tpu.memory_space<vmem>>, vector<8x1xf32>
    %101 = vector.broadcast %100 : vector<8x1xf32> to vector<8x128xf32>
    %102 = arith.mulf %99, %101 : vector<8x128xf32>
    %103 = arith.addf %94, %102 : vector<8x128xf32>
    %c19 = arith.constant 19 : index
    %c0_84 = arith.constant 0 : index
    %104 = vector.load %arg11[%c19, %c0_84] : memref<40x128xf32, #tpu.memory_space<vmem>>, vector<8x128xf32>
    %105 = arith.truncf %104 : vector<8x128xf32> to vector<8x128xbf16>
    %c0_85 = arith.constant 0 : index
    %c8 = arith.constant 8 : index
    %c0_86 = arith.constant 0 : index
    %c0_87 = arith.constant 0 : index
    %106 = vector.load %arg8[%c0_85, %c8, %c0_86, %c0_87] : memref<1x9x128x128xbf16, #tpu.memory_space<vmem>>, vector<1x1x128x128xbf16>
    %107 = vector.shape_cast %106 : vector<1x1x128x128xbf16> to vector<128x128xbf16>
    %cst_88 = arith.constant dense<0.000000e+00> : vector<8x128xf32>
    %108 = tpu.matmul %105, %107, %cst_88 {dimension_numbers = #tpu.dot_dimension_numbers<[1], [0], [0], [1], [0, 0, 1, 1], [], []>} : vector<8x128xbf16>, vector<128x128xbf16>, vector<8x128xf32> -> vector<8x128xf32>
    %c0_89 = arith.constant 0 : index
    %c8_90 = arith.constant 8 : index
    %109 = vector.load %arg2[%c0_89, %c8_90] : memref<8x9xf32, #tpu.memory_space<vmem>>, vector<8x1xf32>
    %110 = vector.broadcast %109 : vector<8x1xf32> to vector<8x128xf32>
    %111 = arith.mulf %108, %110 : vector<8x128xf32>
    %112 = arith.addf %103, %111 : vector<8x128xf32>
    %c12_i32 = arith.constant 12 : i32
    %113 = tpu.dynamic_rotate %3 by %c12_i32 dim 1 : vector<8x128xf32>, i32 -> vector<8x128xf32>
    %114 = arith.addf %112, %113 : vector<8x128xf32>
    %c0_91 = arith.constant 0 : index
    %c0_92 = arith.constant 0 : index
    %115 = vector.load %arg10[%c0_91, %c0_92] : memref<8x128xf32, #tpu.memory_space<vmem>>, vector<8x128xf32>
    tpu.vector_store %arg10[%c0_91, %c0_92], %114 {strides = array<i32>} : memref<8x128xf32, #tpu.memory_space<vmem>>, vector<8x128xf32>,
    %c0_93 = arith.constant 0 : index
    %c0_94 = arith.constant 0 : index
    %116 = vector.load %arg9[%c0_93, %c0_94] : memref<8x128xf32, #tpu.memory_space<vmem>>, vector<8x128xf32>
    tpu.vector_store %arg9[%c0_93, %c0_94], %114 {strides = array<i32>} : memref<8x128xf32, #tpu.memory_space<vmem>>, vector<8x128xf32>,
    return
  }
  func.func @transform_0(%arg0: i32) -> (i32, i32) {
    %c0_i32 = arith.constant 0 : i32
    %c0_i32_0 = arith.constant 0 : i32
    %c0_i32_1 = arith.constant 0 : i32
    return %c0_i32, %c0_i32_0 : i32, i32
  }
  func.func @transform_1(%arg0: i32) -> (i32, i32) {
    %c0_i32 = arith.constant 0 : i32
    %c0_i32_0 = arith.constant 0 : i32
    %c0_i32_1 = arith.constant 0 : i32
    return %c0_i32, %c0_i32_0 : i32, i32
  }
  func.func @transform_2(%arg0: i32) -> (i32, i32, i32) {
    %c0_i32 = arith.constant 0 : i32
    %c0_i32_0 = arith.constant 0 : i32
    %c0_i32_1 = arith.constant 0 : i32
    return %arg0, %c0_i32, %c0_i32_0 : i32, i32, i32
  }
  func.func @transform_3(%arg0: i32) -> (i32, i32, i32) {
    %c0_i32 = arith.constant 0 : i32
    %c0_i32_0 = arith.constant 0 : i32
    %c0_i32_1 = arith.constant 0 : i32
    return %arg0, %c0_i32, %c0_i32_0 : i32, i32, i32
  }
  func.func @transform_4(%arg0: i32) -> (i32, i32, i32) {
    %c0_i32 = arith.constant 0 : i32
    %c0_i32_0 = arith.constant 0 : i32
    %c0_i32_1 = arith.constant 0 : i32
    return %arg0, %c0_i32, %c0_i32_0 : i32, i32, i32
  }
  func.func @transform_5(%arg0: i32) -> (i32, i32, i32) {
    %c0_i32 = arith.constant 0 : i32
    %c0_i32_0 = arith.constant 0 : i32
    %c0_i32_1 = arith.constant 0 : i32
    return %arg0, %c0_i32, %c0_i32_0 : i32, i32, i32
  }
  func.func @transform_6(%arg0: i32) -> (i32, i32, i32) {
    %c0_i32 = arith.constant 0 : i32
    %c0_i32_0 = arith.constant 0 : i32
    %c0_i32_1 = arith.constant 0 : i32
    return %arg0, %c0_i32, %c0_i32_0 : i32, i32, i32
  }
  func.func @transform_7(%arg0: i32) -> (i32, i32, i32, i32) {
    %c0_i32 = arith.constant 0 : i32
    %c0_i32_0 = arith.constant 0 : i32
    %c0_i32_1 = arith.constant 0 : i32
    %c0_i32_2 = arith.constant 0 : i32
    return %arg0, %c0_i32, %c0_i32_0, %c0_i32_1 : i32, i32, i32, i32
  }
  func.func @transform_8(%arg0: i32) -> (i32, i32) {
    %c0_i32 = arith.constant 0 : i32
    %c0_i32_0 = arith.constant 0 : i32
    %c0_i32_1 = arith.constant 0 : i32
    return %c0_i32, %c0_i32_0 : i32, i32
  }
}

</mosaic_0001>

<llo_original>
// kernel: _lambda_.6
$region0: #{_lambda_.6}
  #allocation0 [shape = 'u32[]', space=smem, size = 0x4, offset = 0x4, fixed_abs, tag = 'smem constant byte address 0x4 - core index']
  #allocation1 [shape = 'u32[144,128]{1,0:T(1,128)}', space=vmem, size = 0x12000, scoped, tag = 'internal scratch']
  %s0 = inlined_call_operand.vmem [shape: f32[882,128], index: 0, kind: input, shape index: {}]
  %s1 = inlined_call_operand.vmem [shape: bf16[128,128], index: 1, kind: input, shape index: {}]
  %s2 = inlined_call_operand.vmem [shape: f32[882,128], index: 2, kind: output, shape index: {}]
  %s3 = sld [smem:[#allocation0]]
  $region18: #{_lambda_.6} parent=0
    _
  %s5 = ssub.s32 1, %s3
  %s6 = scalar_select 0, %s5, %s3
  // Predicated region
  $region2: #{_lambda_.6} parent=0 // pred_check
    _
  $region3: #{_lambda_.6} parent=0 // pred_check_branch
    %8 = sbr.rel (0) target = $region5
  $region4: #{_lambda_.6} parent=0 // pred_region
    _
  $region5: #{_lambda_.6} parent=0 // pred_fallthru
    _
  // Predicated region
  $region6: #{_lambda_.6} parent=0 // pred_check
    _
  $region7: #{_lambda_.6} parent=0 // pred_check_branch
    %10 = sbr.rel (0) target = $region9
  $region8: #{_lambda_.6} parent=0 // pred_region
    _
  $region9: #{_lambda_.6} parent=0 // pred_fallthru
    _
  %v12 = vld [vmem:[%s0] sm:$0xff]
  %v13 = vld [vmem:[%s0 + $0x8] sm:$0xff]
  %v14 = vld [vmem:[%s0 + $0x10] sm:$0xff]
  %v15 = vld [vmem:[%s0 + $0x18] sm:$0xff]
  %v16 = vld [vmem:[%s0 + $0x20] sm:$0xff]
  %v17 = vld [vmem:[%s0 + $0x28] sm:$0xff]
  %v18 = vld [vmem:[%s0 + $0x30] sm:$0xff]
  %v19 = vld [vmem:[%s0 + $0x38] sm:$0xff]
  %v20 = vld [vmem:[%s0 + $0x40] sm:$0xff]
  %v21 = vld [vmem:[%s0 + $0x48] sm:$0xff]
  %v22 = vld [vmem:[%s0 + $0x50] sm:$0xff]
  %v23 = vld [vmem:[%s0 + $0x58] sm:$0xff]
  %v24 = vld [vmem:[%s0 + $0x60] sm:$0xff]
  %v25 = vld [vmem:[%s0 + $0x68] sm:$0xff]
  %v26 = vld [vmem:[%s0 + $0x70] sm:$0xff]
  %v27 = vld [vmem:[%s0 + $0x78] sm:$0xff]
  %v28 = vld [vmem:[%s0 + $0x80] sm:$0xff]
  %v29 = vld [vmem:[%s0 + $0x88] sm:$0xff]
  %v30 = vld [vmem:[%s0 + $0x90] sm:$0xff]
  %v31 = vld [vmem:[%s0 + $0x98] sm:$0xff]
  %v32 = vld [vmem:[%s0 + $0xa0] sm:$0xff]
  %v33 = vld [vmem:[%s0 + $0xa8] sm:$0xff]
  %v34 = vld [vmem:[%s0 + $0xb0] sm:$0xff]
  %v35 = vld [vmem:[%s0 + $0xb8] sm:$0xff]
  %v36 = vld [vmem:[%s0 + $0xc0] sm:$0xff]
  %v37 = vld [vmem:[%s0 + $0xc8] sm:$0xff]
  %v38 = vld [vmem:[%s0 + $0xd0] sm:$0xff]
  %v39 = vld [vmem:[%s0 + $0xd8] sm:$0xff]
  %v40 = vld [vmem:[%s0 + $0xe0] sm:$0xff]
  %v41 = vld [vmem:[%s0 + $0xe8] sm:$0xff]
  %v42 = vld [vmem:[%s0 + $0xf0] sm:$0xff]
  %v43 = vld [vmem:[%s0 + $0xf8] sm:$0xff]
  %v44 = vld [vmem:[%s0 + $0x100] sm:$0xff]
  %v45 = vld [vmem:[%s0 + $0x108] sm:$0xff]
  %v46 = vld [vmem:[%s0 + $0x110] sm:$0xff]
  %v47 = vld [vmem:[%s0 + $0x118] sm:$0xff]
  %v48 = vld [vmem:[%s0 + $0x120] sm:$0xff]
  %v49 = vld [vmem:[%s0 + $0x128] sm:$0xff]
  %v50 = vld [vmem:[%s0 + $0x130] sm:$0xff]
  %v51 = vld [vmem:[%s0 + $0x138] sm:$0xff]
  %v52 = vld [vmem:[%s0 + $0x140] sm:$0xff]
  %v53 = vld [vmem:[%s0 + $0x148] sm:$0xff]
  %v54 = vld [vmem:[%s0 + $0x150] sm:$0xff]
  %v55 = vld [vmem:[%s0 + $0x158] sm:$0xff]
  %v56 = vld [vmem:[%s0 + $0x160] sm:$0xff]
  %v57 = vld [vmem:[%s0 + $0x168] sm:$0xff]
  %v58 = vld [vmem:[%s0 + $0x170] sm:$0xff]
  %v59 = vld [vmem:[%s0 + $0x178] sm:$0xff]
  %v60 = vld [vmem:[%s0 + $0x180] sm:$0xff]
  %v61 = vld [vmem:[%s0 + $0x188] sm:$0xff]
  %v62 = vld [vmem:[%s0 + $0x190] sm:$0xff]
  %v63 = vld [vmem:[%s0 + $0x198] sm:$0xff]
  %v64 = vld [vmem:[%s0 + $0x1a0] sm:$0xff]
  %v65 = vld [vmem:[%s0 + $0x1a8] sm:$0xff]
  %v66 = vld [vmem:[%s0 + $0x1b0] sm:$0xff]
  %v67 = vld [vmem:[%s0 + $0x1b8] sm:$0xff]
  %v68 = vld [vmem:[%s0 + $0x1c0] sm:$0xff]
  %v69 = vld [vmem:[%s0 + $0x1c8] sm:$0xff]
  %v70 = vld [vmem:[%s0 + $0x1d0] sm:$0xff]
  %v71 = vld [vmem:[%s0 + $0x1d8] sm:$0xff]
  %v72 = vld [vmem:[%s0 + $0x1e0] sm:$0xff]
  %v73 = vld [vmem:[%s0 + $0x1e8] sm:$0xff]
  %v74 = vld [vmem:[%s0 + $0x1f0] sm:$0xff]
  %v75 = vld [vmem:[%s0 + $0x1f8] sm:$0xff]
  %v76 = vld [vmem:[%s0 + $0x200] sm:$0xff]
  %v77 = vld [vmem:[%s0 + $0x208] sm:$0xff]
  %v78 = vld [vmem:[%s0 + $0x210] sm:$0xff]
  %v79 = vld [vmem:[%s0 + $0x218] sm:$0xff]
  %v80 = vld [vmem:[%s0 + $0x220] sm:$0xff]
  %v81 = vld [vmem:[%s0 + $0x228] sm:$0xff]
  %v82 = vld [vmem:[%s0 + $0x230] sm:$0xff]
  %v83 = vld [vmem:[%s0 + $0x238] sm:$0xff]
  %v84 = vld [vmem:[%s0 + $0x240] sm:$0xff]
  %v85 = vld [vmem:[%s0 + $0x248] sm:$0xff]
  %v86 = vld [vmem:[%s0 + $0x250] sm:$0xff]
  %v87 = vld [vmem:[%s0 + $0x258] sm:$0xff]
  %v88 = vld [vmem:[%s0 + $0x260] sm:$0xff]
  %v89 = vld [vmem:[%s0 + $0x268] sm:$0xff]
  %v90 = vld [vmem:[%s0 + $0x270] sm:$0xff]
  %v91 = vld [vmem:[%s0 + $0x278] sm:$0xff]
  %v92 = vld [vmem:[%s0 + $0x280] sm:$0xff]
  %v93 = vld [vmem:[%s0 + $0x288] sm:$0xff]
  %v94 = vld [vmem:[%s0 + $0x290] sm:$0xff]
  %v95 = vld [vmem:[%s0 + $0x298] sm:$0xff]
  %v96 = vld [vmem:[%s0 + $0x2a0] sm:$0xff]
  %v97 = vld [vmem:[%s0 + $0x2a8] sm:$0xff]
  %v98 = vld [vmem:[%s0 + $0x2b0] sm:$0xff]
  %v99 = vld [vmem:[%s0 + $0x2b8] sm:$0xff]
  %v100 = vld [vmem:[%s0 + $0x2c0] sm:$0xff]
  %v101 = vld [vmem:[%s0 + $0x2c8] sm:$0xff]
  %v102 = vld [vmem:[%s0 + $0x2d0] sm:$0xff]
  %v103 = vld [vmem:[%s0 + $0x2d8] sm:$0xff]
  %v104 = vld [vmem:[%s0 + $0x2e0] sm:$0xff]
  %v105 = vld [vmem:[%s0 + $0x2e8] sm:$0xff]
  %v106 = vld [vmem:[%s0 + $0x2f0] sm:$0xff]
  %v107 = vld [vmem:[%s0 + $0x2f8] sm:$0xff]
  %v108 = vld [vmem:[%s0 + $0x300] sm:$0xff]
  %v109 = vld [vmem:[%s0 + $0x308] sm:$0xff]
  %v110 = vld [vmem:[%s0 + $0x310] sm:$0xff]
  %v111 = vld [vmem:[%s0 + $0x318] sm:$0xff]
  %v112 = vld [vmem:[%s0 + $0x320] sm:$0xff]
  %v113 = vld [vmem:[%s0 + $0x328] sm:$0xff]
  %v114 = vld [vmem:[%s0 + $0x330] sm:$0xff]
  %v115 = vld [vmem:[%s0 + $0x338] sm:$0xff]
  %v116 = vld [vmem:[%s0 + $0x340] sm:$0xff]
  %v117 = vld [vmem:[%s0 + $0x348] sm:$0xff]
  %v118 = vld [vmem:[%s0 + $0x350] sm:$0xff]
  %v119 = vld [vmem:[%s0 + $0x358] sm:$0xff]
  %v120 = vld [vmem:[%s0 + $0x360] sm:$0xff]
  %v121 = vld [vmem:[%s0 + $0x368] sm:$0xff]
  %v122 = vld [vmem:[%s0 + $0x370] sm:$0x3]
  %v123 = vpack.c.bf16 %v13, %v12
  %v124 = vpack.c.bf16 %v15, %v14
  %v125 = vpack.c.bf16 %v17, %v16
  %v126 = vpack.c.bf16 %v19, %v18
  %v127 = vpack.c.bf16 %v21, %v20
  %v128 = vpack.c.bf16 %v23, %v22
  %v129 = vpack.c.bf16 %v25, %v24
  %v130 = vpack.c.bf16 %v27, %v26
  %v131 = vpack.c.bf16 %v29, %v28
  %v132 = vpack.c.bf16 %v31, %v30
  %v133 = vpack.c.bf16 %v33, %v32
  %v134 = vpack.c.bf16 %v35, %v34
  %v135 = vpack.c.bf16 %v37, %v36
  %v136 = vpack.c.bf16 %v39, %v38
  %v137 = vpack.c.bf16 %v41, %v40
  %v138 = vpack.c.bf16 %v43, %v42
  %v139 = vpack.c.bf16 %v45, %v44
  %v140 = vpack.c.bf16 %v47, %v46
  %v141 = vpack.c.bf16 %v49, %v48
  %v142 = vpack.c.bf16 %v51, %v50
  %v143 = vpack.c.bf16 %v53, %v52
  %v144 = vpack.c.bf16 %v55, %v54
  %v145 = vpack.c.bf16 %v57, %v56
  %v146 = vpack.c.bf16 %v59, %v58
  %v147 = vpack.c.bf16 %v61, %v60
  %v148 = vpack.c.bf16 %v63, %v62
  %v149 = vpack.c.bf16 %v65, %v64
  %v150 = vpack.c.bf16 %v67, %v66
  %v151 = vpack.c.bf16 %v69, %v68
  %v152 = vpack.c.bf16 %v71, %v70
  %v153 = vpack.c.bf16 %v73, %v72
  %v154 = vpack.c.bf16 %v75, %v74
  %v155 = vpack.c.bf16 %v77, %v76
  %v156 = vpack.c.bf16 %v79, %v78
  %v157 = vpack.c.bf16 %v81, %v80
  %v158 = vpack.c.bf16 %v83, %v82
  %v159 = vpack.c.bf16 %v85, %v84
  %v160 = vpack.c.bf16 %v87, %v86
  %v161 = vpack.c.bf16 %v89, %v88
  %v162 = vpack.c.bf16 %v91, %v90
  %v163 = vpack.c.bf16 %v93, %v92
  %v164 = vpack.c.bf16 %v95, %v94
  %v165 = vpack.c.bf16 %v97, %v96
  %v166 = vpack.c.bf16 %v99, %v98
  %v167 = vpack.c.bf16 %v101, %v100
  %v168 = vpack.c.bf16 %v103, %v102
  %v169 = vpack.c.bf16 %v105, %v104
  %v170 = vpack.c.bf16 %v107, %v106
  %v171 = vpack.c.bf16 %v109, %v108
  %v172 = vpack.c.bf16 %v111, %v110
  %v173 = vpack.c.bf16 %v113, %v112
  %v174 = vpack.c.bf16 %v115, %v114
  %v175 = vpack.c.bf16 %v117, %v116
  %v176 = vpack.c.bf16 %v119, %v118
  %v177 = vpack.c.bf16 %v121, %v120
  %v178 = vpack.c.bf16 %v122, %v122
  %v179 = vld [vmem:[%s1] sm:$0xf]
  %v180 = vld [vmem:[%s1 + $0x4] sm:$0xf]
  %v181 = vld [vmem:[%s1 + $0x8] sm:$0xf]
  %v182 = vld [vmem:[%s1 + $0xc] sm:$0xf]
  %v183 = vld [vmem:[%s1 + $0x10] sm:$0xf]
  %v184 = vld [vmem:[%s1 + $0x14] sm:$0xf]
  %v185 = vld [vmem:[%s1 + $0x18] sm:$0xf]
  %v186 = vld [vmem:[%s1 + $0x1c] sm:$0xf]
  %v187 = vld [vmem:[%s1 + $0x20] sm:$0xf]
  %v188 = vld [vmem:[%s1 + $0x24] sm:$0xf]
  %v189 = vld [vmem:[%s1 + $0x28] sm:$0xf]
  %v190 = vld [vmem:[%s1 + $0x2c] sm:$0xf]
  %v191 = vld [vmem:[%s1 + $0x30] sm:$0xf]
  %v192 = vld [vmem:[%s1 + $0x34] sm:$0xf]
  %v193 = vld [vmem:[%s1 + $0x38] sm:$0xf]
  %v194 = vld [vmem:[%s1 + $0x3c] sm:$0xf]
  %v211 = vunpack.c.l.b16 %v179
  %v212 = vunpack.c.l.b16 %v180
  %v213 = vunpack.c.l.b16 %v181
  %v214 = vunpack.c.l.b16 %v182
  %v215 = vunpack.c.l.b16 %v183
  %v216 = vunpack.c.l.b16 %v184
  %v217 = vunpack.c.l.b16 %v185
  %v218 = vunpack.c.l.b16 %v186
  %v219 = vunpack.c.l.b16 %v187
  %v220 = vunpack.c.l.b16 %v188
  %v221 = vunpack.c.l.b16 %v189
  %v222 = vunpack.c.l.b16 %v190
  %v223 = vunpack.c.l.b16 %v191
  %v224 = vunpack.c.l.b16 %v192
  %v225 = vunpack.c.l.b16 %v193
  %v226 = vunpack.c.l.b16 %v194
  %v227 = vpack.c.b16 %v212, %v211
  %v228 = vpack.c.b16 %v214, %v213
  %v229 = vpack.c.b16 %v216, %v215
  %v230 = vpack.c.b16 %v218, %v217
  %v231 = vpack.c.b16 %v220, %v219
  %v232 = vpack.c.b16 %v222, %v221
  %v233 = vpack.c.b16 %v224, %v223
  %v234 = vpack.c.b16 %v226, %v225
  %243 = vmatprep.subr.bf16.mxu0 0
  %244 = vmatpush1.bf16.msra.mxu0 %v234
  %245 = vmatprep.subr.bf16.mxu0 0
  %246 = vmatpush1.bf16.msra.mxu0 %v233
  %247 = vmatprep.subr.bf16.mxu0 0
  %248 = vmatpush1.bf16.msra.mxu0 %v232
  %249 = vmatprep.subr.bf16.mxu0 0
  %250 = vmatpush1.bf16.msra.mxu0 %v231
  %251 = vmatprep.subr.bf16.mxu0 0
  %252 = vmatpush1.bf16.msra.mxu0 %v230
  %253 = vmatprep.subr.bf16.mxu0 0
  %254 = vmatpush1.bf16.msra.mxu0 %v229
  %255 = vmatprep.subr.bf16.mxu0 0
  %256 = vmatpush1.bf16.msra.mxu0 %v228
  %257 = vmatprep.subr.bf16.mxu0 0
  %258 = vmatpush1.bf16.msra.mxu0 %v227
  %259 = vmatprep.subr.bf16.mxu0 0
  %260 = vmatpush2.bf16.msra.mxu0 0
  %261 = vmatprep.subr.bf16.mxu0 0
  %262 = vmatpush2.bf16.msra.mxu0 0
  %263 = vmatprep.subr.bf16.mxu0 0
  %264 = vmatpush2.bf16.msra.mxu0 0
  %265 = vmatprep.subr.bf16.mxu0 0
  %266 = vmatpush2.bf16.msra.mxu0 0
  %267 = vmatprep.subr.bf16.mxu0 0
  %268 = vmatpush2.bf16.msra.mxu0 0
  %269 = vmatprep.subr.bf16.mxu0 0
  %270 = vmatpush2.bf16.msra.mxu0 0
  %271 = vmatprep.subr.bf16.mxu0 0
  %272 = vmatpush2.bf16.msra.mxu0 0
  %273 = vmatprep.subr.bf16.mxu0 0
  %274 = vmatpush2.bf16.msra.mxu0 0
  %275 = vmatprep.mubr.bf16.mxu0 0
  %276 = vmatmul.mubr.bf16.gmra.mxu0 %v123
  %v277 = vpop.f32.mrf.mxu0
  %v278 = vadd.f32 0.0, %v277
  %v279 = vpop.f32.mrf.mxu0
  %v280 = vpop.f32.mrf.mxu0
  %v281 = vadd.f32 0.0, %v280
  %v282 = vpop.f32.mrf.mxu0
  %283 = vmatprep.mubr.bf16.mxu0 0
  %284 = vmatmul.mubr.bf16.gmra.mxu0 %v124
  %v285 = vpop.f32.mrf.mxu0
  %v286 = vadd.f32 0.0, %v285
  %v287 = vpop.f32.mrf.mxu0
  %v288 = vpop.f32.mrf.mxu0
  %v289 = vadd.f32 0.0, %v288
  %v290 = vpop.f32.mrf.mxu0
  %291 = vmatprep.mubr.bf16.mxu0 0
  %292 = vmatmul.mubr.bf16.gmra.mxu0 %v125
  %v293 = vpop.f32.mrf.mxu0
  %v294 = vadd.f32 0.0, %v293
  %v295 = vpop.f32.mrf.mxu0
  %v296 = vpop.f32.mrf.mxu0
  %v297 = vadd.f32 0.0, %v296
  %v298 = vpop.f32.mrf.mxu0
  %299 = vmatprep.mubr.bf16.mxu0 0
  %300 = vmatmul.mubr.bf16.gmra.mxu0 %v126
  %v301 = vpop.f32.mrf.mxu0
  %v302 = vadd.f32 0.0, %v301
  %v303 = vpop.f32.mrf.mxu0
  %v304 = vpop.f32.mrf.mxu0
  %v305 = vadd.f32 0.0, %v304
  %v306 = vpop.f32.mrf.mxu0
  %307 = vmatprep.mubr.bf16.mxu0 0
  %308 = vmatmul.mubr.bf16.gmra.mxu0 %v127
  %v309 = vpop.f32.mrf.mxu0
  %v310 = vadd.f32 0.0, %v309
  %v311 = vpop.f32.mrf.mxu0
  %v312 = vpop.f32.mrf.mxu0
  %v313 = vadd.f32 0.0, %v312
  %v314 = vpop.f32.mrf.mxu0
  %315 = vmatprep.mubr.bf16.mxu0 0
  %316 = vmatmul.mubr.bf16.gmra.mxu0 %v128
  %v317 = vpop.f32.mrf.mxu0
  %v318 = vadd.f32 0.0, %v317
  %v319 = vpop.f32.mrf.mxu0
  %v320 = vpop.f32.mrf.mxu0
  %v321 = vadd.f32 0.0, %v320
  %v322 = vpop.f32.mrf.mxu0
  %323 = vmatprep.mubr.bf16.mxu0 0
  %324 = vmatmul.mubr.bf16.gmra.mxu0 %v129
  %v325 = vpop.f32.mrf.mxu0
  %v326 = vadd.f32 0.0, %v325
  %v327 = vpop.f32.mrf.mxu0
  %v328 = vpop.f32.mrf.mxu0
  %v329 = vadd.f32 0.0, %v328
  %v330 = vpop.f32.mrf.mxu0
  %331 = vmatprep.mubr.bf16.mxu0 0
  %332 = vmatmul.mubr.bf16.gmra.mxu0 %v130
  %v333 = vpop.f32.mrf.mxu0
  %v334 = vadd.f32 0.0, %v333
  %v335 = vpop.f32.mrf.mxu0
  %v336 = vpop.f32.mrf.mxu0
  %v337 = vadd.f32 0.0, %v336
  %v338 = vpop.f32.mrf.mxu0
  %339 = vmatprep.mubr.bf16.mxu0 0
  %340 = vmatmul.mubr.bf16.gmra.mxu0 %v131
  %v341 = vpop.f32.mrf.mxu0
  %v342 = vadd.f32 0.0, %v341
  %v343 = vpop.f32.mrf.mxu0
  %v344 = vpop.f32.mrf.mxu0
  %v345 = vadd.f32 0.0, %v344
  %v346 = vpop.f32.mrf.mxu0
  %347 = vmatprep.mubr.bf16.mxu0 0
  %348 = vmatmul.mubr.bf16.gmra.mxu0 %v132
  %v349 = vpop.f32.mrf.mxu0
  %v350 = vadd.f32 0.0, %v349
  %v351 = vpop.f32.mrf.mxu0
  %v352 = vpop.f32.mrf.mxu0
  %v353 = vadd.f32 0.0, %v352
  %v354 = vpop.f32.mrf.mxu0
  %355 = vmatprep.mubr.bf16.mxu0 0
  %356 = vmatmul.mubr.bf16.gmra.mxu0 %v133
  %v357 = vpop.f32.mrf.mxu0
  %v358 = vadd.f32 0.0, %v357
  %v359 = vpop.f32.mrf.mxu0
  %v360 = vpop.f32.mrf.mxu0
  %v361 = vadd.f32 0.0, %v360
  %v362 = vpop.f32.mrf.mxu0
  %363 = vmatprep.mubr.bf16.mxu0 0
  %364 = vmatmul.mubr.bf16.gmra.mxu0 %v134
  %v365 = vpop.f32.mrf.mxu0
  %v366 = vadd.f32 0.0, %v365
  %v367 = vpop.f32.mrf.mxu0
  %v368 = vpop.f32.mrf.mxu0
  %v369 = vadd.f32 0.0, %v368
  %v370 = vpop.f32.mrf.mxu0
  %371 = vmatprep.mubr.bf16.mxu0 0
  %372 = vmatmul.mubr.bf16.gmra.mxu0 %v135
  %v373 = vpop.f32.mrf.mxu0
  %v374 = vadd.f32 0.0, %v373
  %v375 = vpop.f32.mrf.mxu0
  %v376 = vpop.f32.mrf.mxu0
  %v377 = vadd.f32 0.0, %v376
  %v378 = vpop.f32.mrf.mxu0
  %379 = vmatprep.mubr.bf16.mxu0 0
  %380 = vmatmul.mubr.bf16.gmra.mxu0 %v136
  %v381 = vpop.f32.mrf.mxu0
  %v382 = vadd.f32 0.0, %v381
  %v383 = vpop.f32.mrf.mxu0
  %v384 = vpop.f32.mrf.mxu0
  %v385 = vadd.f32 0.0, %v384
  %v386 = vpop.f32.mrf.mxu0
  %387 = vmatprep.mubr.bf16.mxu0 0
  %388 = vmatmul.mubr.bf16.gmra.mxu0 %v137
  %v389 = vpop.f32.mrf.mxu0
  %v390 = vadd.f32 0.0, %v389
  %v391 = vpop.f32.mrf.mxu0
  %v392 = vpop.f32.mrf.mxu0
  %v393 = vadd.f32 0.0, %v392
  %v394 = vpop.f32.mrf.mxu0
  %395 = vmatprep.mubr.bf16.mxu0 0
  %396 = vmatmul.mubr.bf16.gmra.mxu0 %v138
  %v397 = vpop.f32.mrf.mxu0
  %v398 = vadd.f32 0.0, %v397
  %v399 = vpop.f32.mrf.mxu0
  %v400 = vpop.f32.mrf.mxu0
  %v401 = vadd.f32 0.0, %v400
  %v402 = vpop.f32.mrf.mxu0
  %403 = vmatprep.mubr.bf16.mxu0 0
  %404 = vmatmul.mubr.bf16.gmra.mxu0 %v139
  %v405 = vpop.f32.mrf.mxu0
  %v406 = vadd.f32 0.0, %v405
  %v407 = vpop.f32.mrf.mxu0
  %v408 = vpop.f32.mrf.mxu0
  %v409 = vadd.f32 0.0, %v408
  %v410 = vpop.f32.mrf.mxu0
  %411 = vmatprep.mubr.bf16.mxu0 0
  %412 = vmatmul.mubr.bf16.gmra.mxu0 %v140
  %v413 = vpop.f32.mrf.mxu0
  %v414 = vadd.f32 0.0, %v413
  %v415 = vpop.f32.mrf.mxu0
  %v416 = vpop.f32.mrf.mxu0
  %v417 = vadd.f32 0.0, %v416
  %v418 = vpop.f32.mrf.mxu0
  %419 = vmatprep.mubr.bf16.mxu0 0
  %420 = vmatmul.mubr.bf16.gmra.mxu0 %v141
  %v421 = vpop.f32.mrf.mxu0
  %v422 = vadd.f32 0.0, %v421
  %v423 = vpop.f32.mrf.mxu0
  %v424 = vpop.f32.mrf.mxu0
  %v425 = vadd.f32 0.0, %v424
  %v426 = vpop.f32.mrf.mxu0
  %427 = vmatprep.mubr.bf16.mxu0 0
  %428 = vmatmul.mubr.bf16.gmra.mxu0 %v142
  %v429 = vpop.f32.mrf.mxu0
  %v430 = vadd.f32 0.0, %v429
  %v431 = vpop.f32.mrf.mxu0
  %v432 = vpop.f32.mrf.mxu0
  %v433 = vadd.f32 0.0, %v432
  %v434 = vpop.f32.mrf.mxu0
  %435 = vmatprep.mubr.bf16.mxu0 0
  %436 = vmatmul.mubr.bf16.gmra.mxu0 %v143
  %v437 = vpop.f32.mrf.mxu0
  %v438 = vadd.f32 0.0, %v437
  %v439 = vpop.f32.mrf.mxu0
  %v440 = vpop.f32.mrf.mxu0
  %v441 = vadd.f32 0.0, %v440
  %v442 = vpop.f32.mrf.mxu0
  %443 = vmatprep.mubr.bf16.mxu0 0
  %444 = vmatmul.mubr.bf16.gmra.mxu0 %v144
  %v445 = vpop.f32.mrf.mxu0
  %v446 = vadd.f32 0.0, %v445
  %v447 = vpop.f32.mrf.mxu0
  %v448 = vpop.f32.mrf.mxu0
  %v449 = vadd.f32 0.0, %v448
  %v450 = vpop.f32.mrf.mxu0
  %451 = vmatprep.mubr.bf16.mxu0 0
  %452 = vmatmul.mubr.bf16.gmra.mxu0 %v145
  %v453 = vpop.f32.mrf.mxu0
  %v454 = vadd.f32 0.0, %v453
  %v455 = vpop.f32.mrf.mxu0
  %v456 = vpop.f32.mrf.mxu0
  %v457 = vadd.f32 0.0, %v456
  %v458 = vpop.f32.mrf.mxu0
  %459 = vmatprep.mubr.bf16.mxu0 0
  %460 = vmatmul.mubr.bf16.gmra.mxu0 %v146
  %v461 = vpop.f32.mrf.mxu0
  %v462 = vadd.f32 0.0, %v461
  %v463 = vpop.f32.mrf.mxu0
  %v464 = vpop.f32.mrf.mxu0
  %v465 = vadd.f32 0.0, %v464
  %v466 = vpop.f32.mrf.mxu0
  %467 = vmatprep.mubr.bf16.mxu0 0
  %468 = vmatmul.mubr.bf16.gmra.mxu0 %v147
  %v469 = vpop.f32.mrf.mxu0
  %v470 = vadd.f32 0.0, %v469
  %v471 = vpop.f32.mrf.mxu0
  %v472 = vpop.f32.mrf.mxu0
  %v473 = vadd.f32 0.0, %v472
  %v474 = vpop.f32.mrf.mxu0
  %475 = vmatprep.mubr.bf16.mxu0 0
  %476 = vmatmul.mubr.bf16.gmra.mxu0 %v148
  %v477 = vpop.f32.mrf.mxu0
  %v478 = vadd.f32 0.0, %v477
  %v479 = vpop.f32.mrf.mxu0
  %v480 = vpop.f32.mrf.mxu0
  %v481 = vadd.f32 0.0, %v480
  %v482 = vpop.f32.mrf.mxu0
  %483 = vmatprep.mubr.bf16.mxu0 0
  %484 = vmatmul.mubr.bf16.gmra.mxu0 %v149
  %v485 = vpop.f32.mrf.mxu0
  %v486 = vadd.f32 0.0, %v485
  %v487 = vpop.f32.mrf.mxu0
  %v488 = vpop.f32.mrf.mxu0
  %v489 = vadd.f32 0.0, %v488
  %v490 = vpop.f32.mrf.mxu0
  %491 = vmatprep.mubr.bf16.mxu0 0
  %492 = vmatmul.mubr.bf16.gmra.mxu0 %v150
  %v493 = vpop.f32.mrf.mxu0
  %v494 = vadd.f32 0.0, %v493
  %v495 = vpop.f32.mrf.mxu0
  %v496 = vpop.f32.mrf.mxu0
  %v497 = vadd.f32 0.0, %v496
  %v498 = vpop.f32.mrf.mxu0
  %499 = vmatprep.mubr.bf16.mxu0 0
  %500 = vmatmul.mubr.bf16.gmra.mxu0 %v151
  %v501 = vpop.f32.mrf.mxu0
  %v502 = vadd.f32 0.0, %v501
  %v503 = vpop.f32.mrf.mxu0
  %v504 = vpop.f32.mrf.mxu0
  %v505 = vadd.f32 0.0, %v504
  %v506 = vpop.f32.mrf.mxu0
  %507 = vmatprep.mubr.bf16.mxu0 0
  %508 = vmatmul.mubr.bf16.gmra.mxu0 %v152
  %v509 = vpop.f32.mrf.mxu0
  %v510 = vadd.f32 0.0, %v509
  %v511 = vpop.f32.mrf.mxu0
  %v512 = vpop.f32.mrf.mxu0
  %v513 = vadd.f32 0.0, %v512
  %v514 = vpop.f32.mrf.mxu0
  %515 = vmatprep.mubr.bf16.mxu0 0
  %516 = vmatmul.mubr.bf16.gmra.mxu0 %v153
  %v517 = vpop.f32.mrf.mxu0
  %v518 = vadd.f32 0.0, %v517
  %v519 = vpop.f32.mrf.mxu0
  %v520 = vpop.f32.mrf.mxu0
  %v521 = vadd.f32 0.0, %v520
  %v522 = vpop.f32.mrf.mxu0
  %523 = vmatprep.mubr.bf16.mxu0 0
  %524 = vmatmul.mubr.bf16.gmra.mxu0 %v154
  %v525 = vpop.f32.mrf.mxu0
  %v526 = vadd.f32 0.0, %v525
  %v527 = vpop.f32.mrf.mxu0
  %v528 = vpop.f32.mrf.mxu0
  %v529 = vadd.f32 0.0, %v528
  %v530 = vpop.f32.mrf.mxu0
  %531 = vmatprep.mubr.bf16.mxu0 0
  %532 = vmatmul.mubr.bf16.gmra.mxu0 %v155
  %v533 = vpop.f32.mrf.mxu0
  %v534 = vadd.f32 0.0, %v533
  %v535 = vpop.f32.mrf.mxu0
  %v536 = vpop.f32.mrf.mxu0
  %v537 = vadd.f32 0.0, %v536
  %v538 = vpop.f32.mrf.mxu0
  %539 = vmatprep.mubr.bf16.mxu0 0
  %540 = vmatmul.mubr.bf16.gmra.mxu0 %v156
  %v541 = vpop.f32.mrf.mxu0
  %v542 = vadd.f32 0.0, %v541
  %v543 = vpop.f32.mrf.mxu0
  %v544 = vpop.f32.mrf.mxu0
  %v545 = vadd.f32 0.0, %v544
  %v546 = vpop.f32.mrf.mxu0
  %547 = vmatprep.mubr.bf16.mxu0 0
  %548 = vmatmul.mubr.bf16.gmra.mxu0 %v157
  %v549 = vpop.f32.mrf.mxu0
  %v550 = vadd.f32 0.0, %v549
  %v551 = vpop.f32.mrf.mxu0
  %v552 = vpop.f32.mrf.mxu0
  %v553 = vadd.f32 0.0, %v552
  %v554 = vpop.f32.mrf.mxu0
  %555 = vmatprep.mubr.bf16.mxu0 0
  %556 = vmatmul.mubr.bf16.gmra.mxu0 %v158
  %v557 = vpop.f32.mrf.mxu0
  %v558 = vadd.f32 0.0, %v557
  %v559 = vpop.f32.mrf.mxu0
  %v560 = vpop.f32.mrf.mxu0
  %v561 = vadd.f32 0.0, %v560
  %v562 = vpop.f32.mrf.mxu0
  %563 = vmatprep.mubr.bf16.mxu0 0
  %564 = vmatmul.mubr.bf16.gmra.mxu0 %v159
  %v565 = vpop.f32.mrf.mxu0
  %v566 = vadd.f32 0.0, %v565
  %v567 = vpop.f32.mrf.mxu0
  %v568 = vpop.f32.mrf.mxu0
  %v569 = vadd.f32 0.0, %v568
  %v570 = vpop.f32.mrf.mxu0
  %571 = vmatprep.mubr.bf16.mxu0 0
  %572 = vmatmul.mubr.bf16.gmra.mxu0 %v160
  %v573 = vpop.f32.mrf.mxu0
  %v574 = vadd.f32 0.0, %v573
  %v575 = vpop.f32.mrf.mxu0
  %v576 = vpop.f32.mrf.mxu0
  %v577 = vadd.f32 0.0, %v576
  %v578 = vpop.f32.mrf.mxu0
  %579 = vmatprep.mubr.bf16.mxu0 0
  %580 = vmatmul.mubr.bf16.gmra.mxu0 %v161
  %v581 = vpop.f32.mrf.mxu0
  %v582 = vadd.f32 0.0, %v581
  %v583 = vpop.f32.mrf.mxu0
  %v584 = vpop.f32.mrf.mxu0
  %v585 = vadd.f32 0.0, %v584
  %v586 = vpop.f32.mrf.mxu0
  %587 = vmatprep.mubr.bf16.mxu0 0
  %588 = vmatmul.mubr.bf16.gmra.mxu0 %v162
  %v589 = vpop.f32.mrf.mxu0
  %v590 = vadd.f32 0.0, %v589
  %v591 = vpop.f32.mrf.mxu0
  %v592 = vpop.f32.mrf.mxu0
  %v593 = vadd.f32 0.0, %v592
  %v594 = vpop.f32.mrf.mxu0
  %595 = vmatprep.mubr.bf16.mxu0 0
  %596 = vmatmul.mubr.bf16.gmra.mxu0 %v163
  %v597 = vpop.f32.mrf.mxu0
  %v598 = vadd.f32 0.0, %v597
  %v599 = vpop.f32.mrf.mxu0
  %v600 = vpop.f32.mrf.mxu0
  %v601 = vadd.f32 0.0, %v600
  %v602 = vpop.f32.mrf.mxu0
  %603 = vmatprep.mubr.bf16.mxu0 0
  %604 = vmatmul.mubr.bf16.gmra.mxu0 %v164
  %v605 = vpop.f32.mrf.mxu0
  %v606 = vadd.f32 0.0, %v605
  %v607 = vpop.f32.mrf.mxu0
  %v608 = vpop.f32.mrf.mxu0
  %v609 = vadd.f32 0.0, %v608
  %v610 = vpop.f32.mrf.mxu0
  %611 = vmatprep.mubr.bf16.mxu0 0
  %612 = vmatmul.mubr.bf16.gmra.mxu0 %v165
  %v613 = vpop.f32.mrf.mxu0
  %v614 = vadd.f32 0.0, %v613
  %v615 = vpop.f32.mrf.mxu0
  %v616 = vpop.f32.mrf.mxu0
  %v617 = vadd.f32 0.0, %v616
  %v618 = vpop.f32.mrf.mxu0
  %619 = vmatprep.mubr.bf16.mxu0 0
  %620 = vmatmul.mubr.bf16.gmra.mxu0 %v166
  %v621 = vpop.f32.mrf.mxu0
  %v622 = vadd.f32 0.0, %v621
  %v623 = vpop.f32.mrf.mxu0
  %v624 = vpop.f32.mrf.mxu0
  %v625 = vadd.f32 0.0, %v624
  %v626 = vpop.f32.mrf.mxu0
  %627 = vmatprep.mubr.bf16.mxu0 0
  %628 = vmatmul.mubr.bf16.gmra.mxu0 %v167
  %v629 = vpop.f32.mrf.mxu0
  %v630 = vadd.f32 0.0, %v629
  %v631 = vpop.f32.mrf.mxu0
  %v632 = vpop.f32.mrf.mxu0
  %v633 = vadd.f32 0.0, %v632
  %v634 = vpop.f32.mrf.mxu0
  %635 = vmatprep.mubr.bf16.mxu0 0
  %636 = vmatmul.mubr.bf16.gmra.mxu0 %v168
  %v637 = vpop.f32.mrf.mxu0
  %v638 = vadd.f32 0.0, %v637
  %v639 = vpop.f32.mrf.mxu0
  %v640 = vpop.f32.mrf.mxu0
  %v641 = vadd.f32 0.0, %v640
  %v642 = vpop.f32.mrf.mxu0
  %643 = vmatprep.mubr.bf16.mxu0 0
  %644 = vmatmul.mubr.bf16.gmra.mxu0 %v169
  %v645 = vpop.f32.mrf.mxu0
  %v646 = vadd.f32 0.0, %v645
  %v647 = vpop.f32.mrf.mxu0
  %v648 = vpop.f32.mrf.mxu0
  %v649 = vadd.f32 0.0, %v648
  %v650 = vpop.f32.mrf.mxu0
  %651 = vmatprep.mubr.bf16.mxu0 0
  %652 = vmatmul.mubr.bf16.gmra.mxu0 %v170
  %v653 = vpop.f32.mrf.mxu0
  %v654 = vadd.f32 0.0, %v653
  %v655 = vpop.f32.mrf.mxu0
  %v656 = vpop.f32.mrf.mxu0
  %v657 = vadd.f32 0.0, %v656
  %v658 = vpop.f32.mrf.mxu0
  %659 = vmatprep.mubr.bf16.mxu0 0
  %660 = vmatmul.mubr.bf16.gmra.mxu0 %v171
  %v661 = vpop.f32.mrf.mxu0
  %v662 = vadd.f32 0.0, %v661
  %v663 = vpop.f32.mrf.mxu0
  %v664 = vpop.f32.mrf.mxu0
  %v665 = vadd.f32 0.0, %v664
  %v666 = vpop.f32.mrf.mxu0
  %667 = vmatprep.mubr.bf16.mxu0 0
  %668 = vmatmul.mubr.bf16.gmra.mxu0 %v172
  %v669 = vpop.f32.mrf.mxu0
  %v670 = vadd.f32 0.0, %v669
  %v671 = vpop.f32.mrf.mxu0
  %v672 = vpop.f32.mrf.mxu0
  %v673 = vadd.f32 0.0, %v672
  %v674 = vpop.f32.mrf.mxu0
  %675 = vmatprep.mubr.bf16.mxu0 0
  %676 = vmatmul.mubr.bf16.gmra.mxu0 %v173
  %v677 = vpop.f32.mrf.mxu0
  %v678 = vadd.f32 0.0, %v677
  %v679 = vpop.f32.mrf.mxu0
  %v680 = vpop.f32.mrf.mxu0
  %v681 = vadd.f32 0.0, %v680
  %v682 = vpop.f32.mrf.mxu0
  %683 = vmatprep.mubr.bf16.mxu0 0
  %684 = vmatmul.mubr.bf16.gmra.mxu0 %v174
  %v685 = vpop.f32.mrf.mxu0
  %v686 = vadd.f32 0.0, %v685
  %v687 = vpop.f32.mrf.mxu0
  %v688 = vpop.f32.mrf.mxu0
  %v689 = vadd.f32 0.0, %v688
  %v690 = vpop.f32.mrf.mxu0
  %691 = vmatprep.mubr.bf16.mxu0 0
  %692 = vmatmul.mubr.bf16.gmra.mxu0 %v175
  %v693 = vpop.f32.mrf.mxu0
  %v694 = vadd.f32 0.0, %v693
  %v695 = vpop.f32.mrf.mxu0
  %v696 = vpop.f32.mrf.mxu0
  %v697 = vadd.f32 0.0, %v696
  %v698 = vpop.f32.mrf.mxu0
  %699 = vmatprep.mubr.bf16.mxu0 0
  %700 = vmatmul.mubr.bf16.gmra.mxu0 %v176
  %v701 = vpop.f32.mrf.mxu0
  %v702 = vadd.f32 0.0, %v701
  %v703 = vpop.f32.mrf.mxu0
  %v704 = vpop.f32.mrf.mxu0
  %v705 = vadd.f32 0.0, %v704
  %v706 = vpop.f32.mrf.mxu0
  %707 = vmatprep.mubr.bf16.mxu0 0
  %708 = vmatmul.mubr.bf16.gmra.mxu0 %v177
  %v709 = vpop.f32.mrf.mxu0
  %v710 = vadd.f32 0.0, %v709
  %v711 = vpop.f32.mrf.mxu0
  %v712 = vpop.f32.mrf.mxu0
  %v713 = vadd.f32 0.0, %v712
  %v714 = vpop.f32.mrf.mxu0
  %715 = vmatprep.mubr.bf16.mxu0 0
  %716 = vmatmul.mubr.bf16.gmra.mxu0 %v178
  %v717 = vpop.f32.mrf.mxu0
  %v718 = vadd.f32 0.0, %v717
  %v719 = vpop.f32.mrf.mxu0
  %v720 = vpop.f32.mrf.mxu0
  %v721 = vpop.f32.mrf.mxu0
  %722 = vdwg.mxu0
  %723 = vst [vmem:[%s2] sm:$0xff] %v278
  %724 = vst [vmem:[%s2 + $0x8] sm:$0xff] %v281
  %725 = vst [vmem:[%s2 + $0x10] sm:$0xff] %v286
  %726 = vst [vmem:[%s2 + $0x18] sm:$0xff] %v289
  %727 = vst [vmem:[%s2 + $0x20] sm:$0xff] %v294
  %728 = vst [vmem:[%s2 + $0x28] sm:$0xff] %v297
  %729 = vst [vmem:[%s2 + $0x30] sm:$0xff] %v302
  %730 = vst [vmem:[%s2 + $0x38] sm:$0xff] %v305
  %731 = vst [vmem:[%s2 + $0x40] sm:$0xff] %v310
  %732 = vst [vmem:[%s2 + $0x48] sm:$0xff] %v313
  %733 = vst [vmem:[%s2 + $0x50] sm:$0xff] %v318
  %734 = vst [vmem:[%s2 + $0x58] sm:$0xff] %v321
  %735 = vst [vmem:[%s2 + $0x60] sm:$0xff] %v326
  %736 = vst [vmem:[%s2 + $0x68] sm:$0xff] %v329
  %737 = vst [vmem:[%s2 + $0x70] sm:$0xff] %v334
  %738 = vst [vmem:[%s2 + $0x78] sm:$0xff] %v337
  %739 = vst [vmem:[%s2 + $0x80] sm:$0xff] %v342
  %740 = vst [vmem:[%s2 + $0x88] sm:$0xff] %v345
  %741 = vst [vmem:[%s2 + $0x90] sm:$0xff] %v350
  %742 = vst [vmem:[%s2 + $0x98] sm:$0xff] %v353
  %743 = vst [vmem:[%s2 + $0xa0] sm:$0xff] %v358
  %744 = vst [vmem:[%s2 + $0xa8] sm:$0xff] %v361
  %745 = vst [vmem:[%s2 + $0xb0] sm:$0xff] %v366
  %746 = vst [vmem:[%s2 + $0xb8] sm:$0xff] %v369
  %747 = vst [vmem:[%s2 + $0xc0] sm:$0xff] %v374
  %748 = vst [vmem:[%s2 + $0xc8] sm:$0xff] %v377
  %749 = vst [vmem:[%s2 + $0xd0] sm:$0xff] %v382
  %750 = vst [vmem:[%s2 + $0xd8] sm:$0xff] %v385
  %751 = vst [vmem:[%s2 + $0xe0] sm:$0xff] %v390
  %752 = vst [vmem:[%s2 + $0xe8] sm:$0xff] %v393
  %753 = vst [vmem:[%s2 + $0xf0] sm:$0xff] %v398
  %754 = vst [vmem:[%s2 + $0xf8] sm:$0xff] %v401
  %755 = vst [vmem:[%s2 + $0x100] sm:$0xff] %v406
  %756 = vst [vmem:[%s2 + $0x108] sm:$0xff] %v409
  %757 = vst [vmem:[%s2 + $0x110] sm:$0xff] %v414
  %758 = vst [vmem:[%s2 + $0x118] sm:$0xff] %v417
  %759 = vst [vmem:[%s2 + $0x120] sm:$0xff] %v422
  %760 = vst [vmem:[%s2 + $0x128] sm:$0xff] %v425
  %761 = vst [vmem:[%s2 + $0x130] sm:$0xff] %v430
  %762 = vst [vmem:[%s2 + $0x138] sm:$0xff] %v433
  %763 = vst [vmem:[%s2 + $0x140] sm:$0xff] %v438
  %764 = vst [vmem:[%s2 + $0x148] sm:$0xff] %v441
  %765 = vst [vmem:[%s2 + $0x150] sm:$0xff] %v446
  %766 = vst [vmem:[%s2 + $0x158] sm:$0xff] %v449
  %767 = vst [vmem:[%s2 + $0x160] sm:$0xff] %v454
  %768 = vst [vmem:[%s2 + $0x168] sm:$0xff] %v457
  %769 = vst [vmem:[%s2 + $0x170] sm:$0xff] %v462
  %770 = vst [vmem:[%s2 + $0x178] sm:$0xff] %v465
  %771 = vst [vmem:[%s2 + $0x180] sm:$0xff] %v470
  %772 = vst [vmem:[%s2 + $0x188] sm:$0xff] %v473
  %773 = vst [vmem:[%s2 + $0x190] sm:$0xff] %v478
  %774 = vst [vmem:[%s2 + $0x198] sm:$0xff] %v481
  %775 = vst [vmem:[%s2 + $0x1a0] sm:$0xff] %v486
  %776 = vst [vmem:[%s2 + $0x1a8] sm:$0xff] %v489
  %777 = vst [vmem:[%s2 + $0x1b0] sm:$0xff] %v494
  %778 = vst [vmem:[%s2 + $0x1b8] sm:$0xff] %v497
  %779 = vst [vmem:[%s2 + $0x1c0] sm:$0xff] %v502
  %780 = vst [vmem:[%s2 + $0x1c8] sm:$0xff] %v505
  %781 = vst [vmem:[%s2 + $0x1d0] sm:$0xff] %v510
  %782 = vst [vmem:[%s2 + $0x1d8] sm:$0xff] %v513
  %783 = vst [vmem:[%s2 + $0x1e0] sm:$0xff] %v518
  %784 = vst [vmem:[%s2 + $0x1e8] sm:$0xff] %v521
  %785 = vst [vmem:[%s2 + $0x1f0] sm:$0xff] %v526
  %786 = vst [vmem:[%s2 + $0x1f8] sm:$0xff] %v529
  %787 = vst [vmem:[%s2 + $0x200] sm:$0xff] %v534
  %788 = vst [vmem:[%s2 + $0x208] sm:$0xff] %v537
  %789 = vst [vmem:[%s2 + $0x210] sm:$0xff] %v542
  %790 = vst [vmem:[%s2 + $0x218] sm:$0xff] %v545
  %791 = vst [vmem:[%s2 + $0x220] sm:$0xff] %v550
  %792 = vst [vmem:[%s2 + $0x228] sm:$0xff] %v553
  %793 = vst [vmem:[%s2 + $0x230] sm:$0xff] %v558
  %794 = vst [vmem:[%s2 + $0x238] sm:$0xff] %v561
  %795 = vst [vmem:[%s2 + $0x240] sm:$0xff] %v566
  %796 = vst [vmem:[%s2 + $0x248] sm:$0xff] %v569
  %797 = vst [vmem:[%s2 + $0x250] sm:$0xff] %v574
  %798 = vst [vmem:[%s2 + $0x258] sm:$0xff] %v577
  %799 = vst [vmem:[%s2 + $0x260] sm:$0xff] %v582
  %800 = vst [vmem:[%s2 + $0x268] sm:$0xff] %v585
  %801 = vst [vmem:[%s2 + $0x270] sm:$0xff] %v590
  %802 = vst [vmem:[%s2 + $0x278] sm:$0xff] %v593
  %803 = vst [vmem:[%s2 + $0x280] sm:$0xff] %v598
  %804 = vst [vmem:[%s2 + $0x288] sm:$0xff] %v601
  %805 = vst [vmem:[%s2 + $0x290] sm:$0xff] %v606
  %806 = vst [vmem:[%s2 + $0x298] sm:$0xff] %v609
  %807 = vst [vmem:[%s2 + $0x2a0] sm:$0xff] %v614
  %808 = vst [vmem:[%s2 + $0x2a8] sm:$0xff] %v617
  %809 = vst [vmem:[%s2 + $0x2b0] sm:$0xff] %v622
  %810 = vst [vmem:[%s2 + $0x2b8] sm:$0xff] %v625
  %811 = vst [vmem:[%s2 + $0x2c0] sm:$0xff] %v630
  %812 = vst [vmem:[%s2 + $0x2c8] sm:$0xff] %v633
  %813 = vst [vmem:[%s2 + $0x2d0] sm:$0xff] %v638
  %814 = vst [vmem:[%s2 + $0x2d8] sm:$0xff] %v641
  %815 = vst [vmem:[%s2 + $0x2e0] sm:$0xff] %v646
  %816 = vst [vmem:[%s2 + $0x2e8] sm:$0xff] %v649
  %817 = vst [vmem:[%s2 + $0x2f0] sm:$0xff] %v654
  %818 = vst [vmem:[%s2 + $0x2f8] sm:$0xff] %v657
  %819 = vst [vmem:[%s2 + $0x300] sm:$0xff] %v662
  %820 = vst [vmem:[%s2 + $0x308] sm:$0xff] %v665
  %821 = vst [vmem:[%s2 + $0x310] sm:$0xff] %v670
  %822 = vst [vmem:[%s2 + $0x318] sm:$0xff] %v673
  %823 = vst [vmem:[%s2 + $0x320] sm:$0xff] %v678
  %824 = vst [vmem:[%s2 + $0x328] sm:$0xff] %v681
  %825 = vst [vmem:[%s2 + $0x330] sm:$0xff] %v686
  %826 = vst [vmem:[%s2 + $0x338] sm:$0xff] %v689
  %827 = vst [vmem:[%s2 + $0x340] sm:$0xff] %v694
  %828 = vst [vmem:[%s2 + $0x348] sm:$0xff] %v697
  %829 = vst [vmem:[%s2 + $0x350] sm:$0xff] %v702
  %830 = vst [vmem:[%s2 + $0x358] sm:$0xff] %v705
  %831 = vst [vmem:[%s2 + $0x360] sm:$0xff] %v710
  %832 = vst [vmem:[%s2 + $0x368] sm:$0xff] %v713
  %833 = vst [vmem:[%s2 + $0x370] sm:$0x3] %v718
  // Predicated region
  $region10: #{_lambda_.6} parent=0 // pred_check
    _
  $region11: #{_lambda_.6} parent=0 // pred_check_branch
    %835 = sbr.rel (0) target = $region13
  $region12: #{_lambda_.6} parent=0 // pred_region
    _
  $region13: #{_lambda_.6} parent=0 // pred_fallthru
    _
  // Predicated region
  $region14: #{_lambda_.6} parent=0 // pred_check
    _
  $region15: #{_lambda_.6} parent=0 // pred_check_branch
    %837 = sbr.rel (0) target = $region17
  $region16: #{_lambda_.6} parent=0 // pred_region
    _
  $region17: #{_lambda_.6} parent=0 // pred_fallthru
    _

// kernel: _lambda_.8
$region0: #{_lambda_.8}
  #allocation0 [shape = 'u32[]', space=smem, size = 0x4, offset = 0x4, fixed_abs, tag = 'smem constant byte address 0x4 - core index']
  #allocation1 [shape = 'u32[144,128]{1,0:T(1,128)}', space=vmem, size = 0x12000, scoped, tag = 'internal scratch']
  %s0 = inlined_call_operand.vmem [shape: f32[200,128], index: 0, kind: input, shape index: {}]
  %s1 = inlined_call_operand.vmem [shape: bf16[128,128], index: 1, kind: input, shape index: {}]
  %s2 = inlined_call_operand.vmem [shape: f32[200,128], index: 2, kind: output, shape index: {}]
  %s3 = sld [smem:[#allocation0]]
  $region18: #{_lambda_.8} parent=0
    _
  %s5 = ssub.s32 1, %s3
  %s6 = scalar_select 0, %s5, %s3
  // Predicated region
  $region2: #{_lambda_.8} parent=0 // pred_check
    _
  $region3: #{_lambda_.8} parent=0 // pred_check_branch
    %8 = sbr.rel (0) target = $region5
  $region4: #{_lambda_.8} parent=0 // pred_region
    _
  $region5: #{_lambda_.8} parent=0 // pred_fallthru
    _
  // Predicated region
  $region6: #{_lambda_.8} parent=0 // pred_check
    _
  $region7: #{_lambda_.8} parent=0 // pred_check_branch
    %10 = sbr.rel (0) target = $region9
  $region8: #{_lambda_.8} parent=0 // pred_region
    _
  $region9: #{_lambda_.8} parent=0 // pred_fallthru
    _
  %v12 = vld [vmem:[%s0] sm:$0xff]
  %v13 = vld [vmem:[%s0 + $0x8] sm:$0xff]
  %v14 = vld [vmem:[%s0 + $0x10] sm:$0xff]
  %v15 = vld [vmem:[%s0 + $0x18] sm:$0xff]
  %v16 = vld [vmem:[%s0 + $0x20] sm:$0xff]
  %v17 = vld [vmem:[%s0 + $0x28] sm:$0xff]
  %v18 = vld [vmem:[%s0 + $0x30] sm:$0xff]
  %v19 = vld [vmem:[%s0 + $0x38] sm:$0xff]
  %v20 = vld [vmem:[%s0 + $0x40] sm:$0xff]
  %v21 = vld [vmem:[%s0 + $0x48] sm:$0xff]
  %v22 = vld [vmem:[%s0 + $0x50] sm:$0xff]
  %v23 = vld [vmem:[%s0 + $0x58] sm:$0xff]
  %v24 = vld [vmem:[%s0 + $0x60] sm:$0xff]
  %v25 = vld [vmem:[%s0 + $0x68] sm:$0xff]
  %v26 = vld [vmem:[%s0 + $0x70] sm:$0xff]
  %v27 = vld [vmem:[%s0 + $0x78] sm:$0xff]
  %v28 = vld [vmem:[%s0 + $0x80] sm:$0xff]
  %v29 = vld [vmem:[%s0 + $0x88] sm:$0xff]
  %v30 = vld [vmem:[%s0 + $0x90] sm:$0xff]
  %v31 = vld [vmem:[%s0 + $0x98] sm:$0xff]
  %v32 = vld [vmem:[%s0 + $0xa0] sm:$0xff]
  %v33 = vld [vmem:[%s0 + $0xa8] sm:$0xff]
  %v34 = vld [vmem:[%s0 + $0xb0] sm:$0xff]
  %v35 = vld [vmem:[%s0 + $0xb8] sm:$0xff]
  %v36 = vld [vmem:[%s0 + $0xc0] sm:$0xff]
  %v37 = vmax.f32 %v12, 0.0
  %v38 = vmax.f32 %v13, 0.0
  %v39 = vmax.f32 %v14, 0.0
  %v40 = vmax.f32 %v15, 0.0
  %v41 = vmax.f32 %v16, 0.0
  %v42 = vmax.f32 %v17, 0.0
  %v43 = vmax.f32 %v18, 0.0
  %v44 = vmax.f32 %v19, 0.0
  %v45 = vmax.f32 %v20, 0.0
  %v46 = vmax.f32 %v21, 0.0
  %v47 = vmax.f32 %v22, 0.0
  %v48 = vmax.f32 %v23, 0.0
  %v49 = vmax.f32 %v24, 0.0
  %v50 = vmax.f32 %v25, 0.0
  %v51 = vmax.f32 %v26, 0.0
  %v52 = vmax.f32 %v27, 0.0
  %v53 = vmax.f32 %v28, 0.0
  %v54 = vmax.f32 %v29, 0.0
  %v55 = vmax.f32 %v30, 0.0
  %v56 = vmax.f32 %v31, 0.0
  %v57 = vmax.f32 %v32, 0.0
  %v58 = vmax.f32 %v33, 0.0
  %v59 = vmax.f32 %v34, 0.0
  %v60 = vmax.f32 %v35, 0.0
  %v61 = vmax.f32 %v36, 0.0
  %v62 = vpack.c.bf16 %v38, %v37
  %v63 = vpack.c.bf16 %v40, %v39
  %v64 = vpack.c.bf16 %v42, %v41
  %v65 = vpack.c.bf16 %v44, %v43
  %v66 = vpack.c.bf16 %v46, %v45
  %v67 = vpack.c.bf16 %v48, %v47
  %v68 = vpack.c.bf16 %v50, %v49
  %v69 = vpack.c.bf16 %v52, %v51
  %v70 = vpack.c.bf16 %v54, %v53
  %v71 = vpack.c.bf16 %v56, %v55
  %v72 = vpack.c.bf16 %v58, %v57
  %v73 = vpack.c.bf16 %v60, %v59
  %v74 = vpack.c.bf16 %v61, %v61
  %v75 = vld [vmem:[%s1] sm:$0xf]
  %v76 = vld [vmem:[%s1 + $0x4] sm:$0xf]
  %v77 = vld [vmem:[%s1 + $0x8] sm:$0xf]
  %v78 = vld [vmem:[%s1 + $0xc] sm:$0xf]
  %v79 = vld [vmem:[%s1 + $0x10] sm:$0xf]
  %v80 = vld [vmem:[%s1 + $0x14] sm:$0xf]
  %v81 = vld [vmem:[%s1 + $0x18] sm:$0xf]
  %v82 = vld [vmem:[%s1 + $0x1c] sm:$0xf]
  %v83 = vld [vmem:[%s1 + $0x20] sm:$0xf]
  %v84 = vld [vmem:[%s1 + $0x24] sm:$0xf]
  %v85 = vld [vmem:[%s1 + $0x28] sm:$0xf]
  %v86 = vld [vmem:[%s1 + $0x2c] sm:$0xf]
  %v87 = vld [vmem:[%s1 + $0x30] sm:$0xf]
  %v88 = vld [vmem:[%s1 + $0x34] sm:$0xf]
  %v89 = vld [vmem:[%s1 + $0x38] sm:$0xf]
  %v90 = vld [vmem:[%s1 + $0x3c] sm:$0xf]
  %v107 = vunpack.c.l.b16 %v75
  %v108 = vunpack.c.l.b16 %v76
  %v109 = vunpack.c.l.b16 %v77
  %v110 = vunpack.c.l.b16 %v78
  %v111 = vunpack.c.l.b16 %v79
  %v112 = vunpack.c.l.b16 %v80
  %v113 = vunpack.c.l.b16 %v81
  %v114 = vunpack.c.l.b16 %v82
  %v115 = vunpack.c.l.b16 %v83
  %v116 = vunpack.c.l.b16 %v84
  %v117 = vunpack.c.l.b16 %v85
  %v118 = vunpack.c.l.b16 %v86
  %v119 = vunpack.c.l.b16 %v87
  %v120 = vunpack.c.l.b16 %v88
  %v121 = vunpack.c.l.b16 %v89
  %v122 = vunpack.c.l.b16 %v90
  %v123 = vpack.c.b16 %v108, %v107
  %v124 = vpack.c.b16 %v110, %v109
  %v125 = vpack.c.b16 %v112, %v111
  %v126 = vpack.c.b16 %v114, %v113
  %v127 = vpack.c.b16 %v116, %v115
  %v128 = vpack.c.b16 %v118, %v117
  %v129 = vpack.c.b16 %v120, %v119
  %v130 = vpack.c.b16 %v122, %v121
  %139 = vmatprep.subr.bf16.mxu0 0
  %140 = vmatpush1.bf16.msra.mxu0 %v130
  %141 = vmatprep.subr.bf16.mxu0 0
  %142 = vmatpush1.bf16.msra.mxu0 %v129
  %143 = vmatprep.subr.bf16.mxu0 0
  %144 = vmatpush1.bf16.msra.mxu0 %v128
  %145 = vmatprep.subr.bf16.mxu0 0
  %146 = vmatpush1.bf16.msra.mxu0 %v127
  %147 = vmatprep.subr.bf16.mxu0 0
  %148 = vmatpush1.bf16.msra.mxu0 %v126
  %149 = vmatprep.subr.bf16.mxu0 0
  %150 = vmatpush1.bf16.msra.mxu0 %v125
  %151 = vmatprep.subr.bf16.mxu0 0
  %152 = vmatpush1.bf16.msra.mxu0 %v124
  %153 = vmatprep.subr.bf16.mxu0 0
  %154 = vmatpush1.bf16.msra.mxu0 %v123
  %155 = vmatprep.subr.bf16.mxu0 0
  %156 = vmatpush2.bf16.msra.mxu0 0
  %157 = vmatprep.subr.bf16.mxu0 0
  %158 = vmatpush2.bf16.msra.mxu0 0
  %159 = vmatprep.subr.bf16.mxu0 0
  %160 = vmatpush2.bf16.msra.mxu0 0
  %161 = vmatprep.subr.bf16.mxu0 0
  %162 = vmatpush2.bf16.msra.mxu0 0
  %163 = vmatprep.subr.bf16.mxu0 0
  %164 = vmatpush2.bf16.msra.mxu0 0
  %165 = vmatprep.subr.bf16.mxu0 0
  %166 = vmatpush2.bf16.msra.mxu0 0
  %167 = vmatprep.subr.bf16.mxu0 0
  %168 = vmatpush2.bf16.msra.mxu0 0
  %169 = vmatprep.subr.bf16.mxu0 0
  %170 = vmatpush2.bf16.msra.mxu0 0
  %171 = vmatprep.mubr.bf16.mxu0 0
  %172 = vmatmul.mubr.bf16.gmra.mxu0 %v62
  %v173 = vpop.f32.mrf.mxu0
  %v174 = vadd.f32 0.0, %v173
  %v175 = vpop.f32.mrf.mxu0
  %v176 = vpop.f32.mrf.mxu0
  %v177 = vadd.f32 0.0, %v176
  %v178 = vpop.f32.mrf.mxu0
  %179 = vmatprep.mubr.bf16.mxu0 0
  %180 = vmatmul.mubr.bf16.gmra.mxu0 %v63
  %v181 = vpop.f32.mrf.mxu0
  %v182 = vadd.f32 0.0, %v181
  %v183 = vpop.f32.mrf.mxu0
  %v184 = vpop.f32.mrf.mxu0
  %v185 = vadd.f32 0.0, %v184
  %v186 = vpop.f32.mrf.mxu0
  %187 = vmatprep.mubr.bf16.mxu0 0
  %188 = vmatmul.mubr.bf16.gmra.mxu0 %v64
  %v189 = vpop.f32.mrf.mxu0
  %v190 = vadd.f32 0.0, %v189
  %v191 = vpop.f32.mrf.mxu0
  %v192 = vpop.f32.mrf.mxu0
  %v193 = vadd.f32 0.0, %v192
  %v194 = vpop.f32.mrf.mxu0
  %195 = vmatprep.mubr.bf16.mxu0 0
  %196 = vmatmul.mubr.bf16.gmra.mxu0 %v65
  %v197 = vpop.f32.mrf.mxu0
  %v198 = vadd.f32 0.0, %v197
  %v199 = vpop.f32.mrf.mxu0
  %v200 = vpop.f32.mrf.mxu0
  %v201 = vadd.f32 0.0, %v200
  %v202 = vpop.f32.mrf.mxu0
  %203 = vmatprep.mubr.bf16.mxu0 0
  %204 = vmatmul.mubr.bf16.gmra.mxu0 %v66
  %v205 = vpop.f32.mrf.mxu0
  %v206 = vadd.f32 0.0, %v205
  %v207 = vpop.f32.mrf.mxu0
  %v208 = vpop.f32.mrf.mxu0
  %v209 = vadd.f32 0.0, %v208
  %v210 = vpop.f32.mrf.mxu0
  %211 = vmatprep.mubr.bf16.mxu0 0
  %212 = vmatmul.mubr.bf16.gmra.mxu0 %v67
  %v213 = vpop.f32.mrf.mxu0
  %v214 = vadd.f32 0.0, %v213
  %v215 = vpop.f32.mrf.mxu0
  %v216 = vpop.f32.mrf.mxu0
  %v217 = vadd.f32 0.0, %v216
  %v218 = vpop.f32.mrf.mxu0
  %219 = vmatprep.mubr.bf16.mxu0 0
  %220 = vmatmul.mubr.bf16.gmra.mxu0 %v68
  %v221 = vpop.f32.mrf.mxu0
  %v222 = vadd.f32 0.0, %v221
  %v223 = vpop.f32.mrf.mxu0
  %v224 = vpop.f32.mrf.mxu0
  %v225 = vadd.f32 0.0, %v224
  %v226 = vpop.f32.mrf.mxu0
  %227 = vmatprep.mubr.bf16.mxu0 0
  %228 = vmatmul.mubr.bf16.gmra.mxu0 %v69
  %v229 = vpop.f32.mrf.mxu0
  %v230 = vadd.f32 0.0, %v229
  %v231 = vpop.f32.mrf.mxu0
  %v232 = vpop.f32.mrf.mxu0
  %v233 = vadd.f32 0.0, %v232
  %v234 = vpop.f32.mrf.mxu0
  %235 = vmatprep.mubr.bf16.mxu0 0
  %236 = vmatmul.mubr.bf16.gmra.mxu0 %v70
  %v237 = vpop.f32.mrf.mxu0
  %v238 = vadd.f32 0.0, %v237
  %v239 = vpop.f32.mrf.mxu0
  %v240 = vpop.f32.mrf.mxu0
  %v241 = vadd.f32 0.0, %v240
  %v242 = vpop.f32.mrf.mxu0
  %243 = vmatprep.mubr.bf16.mxu0 0
  %244 = vmatmul.mubr.bf16.gmra.mxu0 %v71
  %v245 = vpop.f32.mrf.mxu0
  %v246 = vadd.f32 0.0, %v245
  %v247 = vpop.f32.mrf.mxu0
  %v248 = vpop.f32.mrf.mxu0
  %v249 = vadd.f32 0.0, %v248
  %v250 = vpop.f32.mrf.mxu0
  %251 = vmatprep.mubr.bf16.mxu0 0
  %252 = vmatmul.mubr.bf16.gmra.mxu0 %v72
  %v253 = vpop.f32.mrf.mxu0
  %v254 = vadd.f32 0.0, %v253
  %v255 = vpop.f32.mrf.mxu0
  %v256 = vpop.f32.mrf.mxu0
  %v257 = vadd.f32 0.0, %v256
  %v258 = vpop.f32.mrf.mxu0
  %259 = vmatprep.mubr.bf16.mxu0 0
  %260 = vmatmul.mubr.bf16.gmra.mxu0 %v73
  %v261 = vpop.f32.mrf.mxu0
  %v262 = vadd.f32 0.0, %v261
  %v263 = vpop.f32.mrf.mxu0
  %v264 = vpop.f32.mrf.mxu0
  %v265 = vadd.f32 0.0, %v264
  %v266 = vpop.f32.mrf.mxu0
  %267 = vmatprep.mubr.bf16.mxu0 0
  %268 = vmatmul.mubr.bf16.gmra.mxu0 %v74
  %v269 = vpop.f32.mrf.mxu0
  %v270 = vadd.f32 0.0, %v269
  %v271 = vpop.f32.mrf.mxu0
  %v272 = vpop.f32.mrf.mxu0
  %v273 = vpop.f32.mrf.mxu0
  %274 = vdwg.mxu0
  %275 = vst [vmem:[%s2] sm:$0xff] %v174
  %276 = vst [vmem:[%s2 + $0x8] sm:$0xff] %v177
  %277 = vst [vmem:[%s2 + $0x10] sm:$0xff] %v182
  %278 = vst [vmem:[%s2 + $0x18] sm:$0xff] %v185
  %279 = vst [vmem:[%s2 + $0x20] sm:$0xff] %v190
  %280 = vst [vmem:[%s2 + $0x28] sm:$0xff] %v193
  %281 = vst [vmem:[%s2 + $0x30] sm:$0xff] %v198
  %282 = vst [vmem:[%s2 + $0x38] sm:$0xff] %v201
  %283 = vst [vmem:[%s2 + $0x40] sm:$0xff] %v206
  %284 = vst [vmem:[%s2 + $0x48] sm:$0xff] %v209
  %285 = vst [vmem:[%s2 + $0x50] sm:$0xff] %v214
  %286 = vst [vmem:[%s2 + $0x58] sm:$0xff] %v217
  %287 = vst [vmem:[%s2 + $0x60] sm:$0xff] %v222
  %288 = vst [vmem:[%s2 + $0x68] sm:$0xff] %v225
  %289 = vst [vmem:[%s2 + $0x70] sm:$0xff] %v230
  %290 = vst [vmem:[%s2 + $0x78] sm:$0xff] %v233
  %291 = vst [vmem:[%s2 + $0x80] sm:$0xff] %v238
  %292 = vst [vmem:[%s2 + $0x88] sm:$0xff] %v241
  %293 = vst [vmem:[%s2 + $0x90] sm:$0xff] %v246
  %294 = vst [vmem:[%s2 + $0x98] sm:$0xff] %v249
  %295 = vst [vmem:[%s2 + $0xa0] sm:$0xff] %v254
  %296 = vst [vmem:[%s2 + $0xa8] sm:$0xff] %v257
  %297 = vst [vmem:[%s2 + $0xb0] sm:$0xff] %v262
  %298 = vst [vmem:[%s2 + $0xb8] sm:$0xff] %v265
  %299 = vst [vmem:[%s2 + $0xc0] sm:$0xff] %v270
  // Predicated region
  $region10: #{_lambda_.8} parent=0 // pred_check
    _
  $region11: #{_lambda_.8} parent=0 // pred_check_branch
    %301 = sbr.rel (0) target = $region13
  $region12: #{_lambda_.8} parent=0 // pred_region
    _
  $region13: #{_lambda_.8} parent=0 // pred_fallthru
    _
  // Predicated region
  $region14: #{_lambda_.8} parent=0 // pred_check
    _
  $region15: #{_lambda_.8} parent=0 // pred_check_branch
    %303 = sbr.rel (0) target = $region17
  $region16: #{_lambda_.8} parent=0 // pred_region
    _
  $region17: #{_lambda_.8} parent=0 // pred_fallthru
    _

// kernel: _lambda_.10
$region0: #{_lambda_.10}
  #allocation0 [shape = 'u32[]', space=smem, size = 0x4, offset = 0x4, fixed_abs, tag = 'smem constant byte address 0x4 - core index']
  #allocation1 [shape = 'u32[144,128]{1,0:T(1,128)}', space=vmem, size = 0x12000, scoped, tag = 'internal scratch']
  %s0 = inlined_call_operand.vmem [shape: f32[50,128], index: 0, kind: input, shape index: {}]
  %s1 = inlined_call_operand.vmem [shape: bf16[128,128], index: 1, kind: input, shape index: {}]
  %s2 = inlined_call_operand.vmem [shape: f32[50,128], index: 2, kind: output, shape index: {}]
  %s3 = sld [smem:[#allocation0]]
  $region18: #{_lambda_.10} parent=0
    _
  %s5 = ssub.s32 1, %s3
  %s6 = scalar_select 0, %s5, %s3
  // Predicated region
  $region2: #{_lambda_.10} parent=0 // pred_check
    _
  $region3: #{_lambda_.10} parent=0 // pred_check_branch
    %8 = sbr.rel (0) target = $region5
  $region4: #{_lambda_.10} parent=0 // pred_region
    _
  $region5: #{_lambda_.10} parent=0 // pred_fallthru
    _
  // Predicated region
  $region6: #{_lambda_.10} parent=0 // pred_check
    _
  $region7: #{_lambda_.10} parent=0 // pred_check_branch
    %10 = sbr.rel (0) target = $region9
  $region8: #{_lambda_.10} parent=0 // pred_region
    _
  $region9: #{_lambda_.10} parent=0 // pred_fallthru
    _
  %v12 = vld [vmem:[%s0] sm:$0xff]
  %v13 = vld [vmem:[%s0 + $0x8] sm:$0xff]
  %v14 = vld [vmem:[%s0 + $0x10] sm:$0xff]
  %v15 = vld [vmem:[%s0 + $0x18] sm:$0xff]
  %v16 = vld [vmem:[%s0 + $0x20] sm:$0xff]
  %v17 = vld [vmem:[%s0 + $0x28] sm:$0xff]
  %v18 = vld [vmem:[%s0 + $0x30] sm:$0x3]
  %v19 = vmax.f32 %v12, 0.0
  %v20 = vmax.f32 %v13, 0.0
  %v21 = vmax.f32 %v14, 0.0
  %v22 = vmax.f32 %v15, 0.0
  %v23 = vmax.f32 %v16, 0.0
  %v24 = vmax.f32 %v17, 0.0
  %v25 = vmax.f32 %v18, 0.0
  %v26 = vpack.c.bf16 %v20, %v19
  %v27 = vpack.c.bf16 %v22, %v21
  %v28 = vpack.c.bf16 %v24, %v23
  %v29 = vpack.c.bf16 %v25, %v25
  %v30 = vld [vmem:[%s1] sm:$0xf]
  %v31 = vld [vmem:[%s1 + $0x4] sm:$0xf]
  %v32 = vld [vmem:[%s1 + $0x8] sm:$0xf]
  %v33 = vld [vmem:[%s1 + $0xc] sm:$0xf]
  %v34 = vld [vmem:[%s1 + $0x10] sm:$0xf]
  %v35 = vld [vmem:[%s1 + $0x14] sm:$0xf]
  %v36 = vld [vmem:[%s1 + $0x18] sm:$0xf]
  %v37 = vld [vmem:[%s1 + $0x1c] sm:$0xf]
  %v38 = vld [vmem:[%s1 + $0x20] sm:$0xf]
  %v39 = vld [vmem:[%s1 + $0x24] sm:$0xf]
  %v40 = vld [vmem:[%s1 + $0x28] sm:$0xf]
  %v41 = vld [vmem:[%s1 + $0x2c] sm:$0xf]
  %v42 = vld [vmem:[%s1 + $0x30] sm:$0xf]
  %v43 = vld [vmem:[%s1 + $0x34] sm:$0xf]
  %v44 = vld [vmem:[%s1 + $0x38] sm:$0xf]
  %v45 = vld [vmem:[%s1 + $0x3c] sm:$0xf]
  %v62 = vunpack.c.l.b16 %v30
  %v63 = vunpack.c.l.b16 %v31
  %v64 = vunpack.c.l.b16 %v32
  %v65 = vunpack.c.l.b16 %v33
  %v66 = vunpack.c.l.b16 %v34
  %v67 = vunpack.c.l.b16 %v35
  %v68 = vunpack.c.l.b16 %v36
  %v69 = vunpack.c.l.b16 %v37
  %v70 = vunpack.c.l.b16 %v38
  %v71 = vunpack.c.l.b16 %v39
  %v72 = vunpack.c.l.b16 %v40
  %v73 = vunpack.c.l.b16 %v41
  %v74 = vunpack.c.l.b16 %v42
  %v75 = vunpack.c.l.b16 %v43
  %v76 = vunpack.c.l.b16 %v44
  %v77 = vunpack.c.l.b16 %v45
  %v78 = vpack.c.b16 %v63, %v62
  %v79 = vpack.c.b16 %v65, %v64
  %v80 = vpack.c.b16 %v67, %v66
  %v81 = vpack.c.b16 %v69, %v68
  %v82 = vpack.c.b16 %v71, %v70
  %v83 = vpack.c.b16 %v73, %v72
  %v84 = vpack.c.b16 %v75, %v74
  %v85 = vpack.c.b16 %v77, %v76
  %94 = vmatprep.subr.bf16.mxu0 0
  %95 = vmatpush1.bf16.msra.mxu0 %v85
  %96 = vmatprep.subr.bf16.mxu0 0
  %97 = vmatpush1.bf16.msra.mxu0 %v84
  %98 = vmatprep.subr.bf16.mxu0 0
  %99 = vmatpush1.bf16.msra.mxu0 %v83
  %100 = vmatprep.subr.bf16.mxu0 0
  %101 = vmatpush1.bf16.msra.mxu0 %v82
  %102 = vmatprep.subr.bf16.mxu0 0
  %103 = vmatpush1.bf16.msra.mxu0 %v81
  %104 = vmatprep.subr.bf16.mxu0 0
  %105 = vmatpush1.bf16.msra.mxu0 %v80
  %106 = vmatprep.subr.bf16.mxu0 0
  %107 = vmatpush1.bf16.msra.mxu0 %v79
  %108 = vmatprep.subr.bf16.mxu0 0
  %109 = vmatpush1.bf16.msra.mxu0 %v78
  %110 = vmatprep.subr.bf16.mxu0 0
  %111 = vmatpush2.bf16.msra.mxu0 0
  %112 = vmatprep.subr.bf16.mxu0 0
  %113 = vmatpush2.bf16.msra.mxu0 0
  %114 = vmatprep.subr.bf16.mxu0 0
  %115 = vmatpush2.bf16.msra.mxu0 0
  %116 = vmatprep.subr.bf16.mxu0 0
  %117 = vmatpush2.bf16.msra.mxu0 0
  %118 = vmatprep.subr.bf16.mxu0 0
  %119 = vmatpush2.bf16.msra.mxu0 0
  %120 = vmatprep.subr.bf16.mxu0 0
  %121 = vmatpush2.bf16.msra.mxu0 0
  %122 = vmatprep.subr.bf16.mxu0 0
  %123 = vmatpush2.bf16.msra.mxu0 0
  %124 = vmatprep.subr.bf16.mxu0 0
  %125 = vmatpush2.bf16.msra.mxu0 0
  %126 = vmatprep.mubr.bf16.mxu0 0
  %127 = vmatmul.mubr.bf16.gmra.mxu0 %v26
  %v128 = vpop.f32.mrf.mxu0
  %v129 = vadd.f32 0.0, %v128
  %v130 = vpop.f32.mrf.mxu0
  %v131 = vpop.f32.mrf.mxu0
  %v132 = vadd.f32 0.0, %v131
  %v133 = vpop.f32.mrf.mxu0
  %134 = vmatprep.mubr.bf16.mxu0 0
  %135 = vmatmul.mubr.bf16.gmra.mxu0 %v27
  %v136 = vpop.f32.mrf.mxu0
  %v137 = vadd.f32 0.0, %v136
  %v138 = vpop.f32.mrf.mxu0
  %v139 = vpop.f32.mrf.mxu0
  %v140 = vadd.f32 0.0, %v139
  %v141 = vpop.f32.mrf.mxu0
  %142 = vmatprep.mubr.bf16.mxu0 0
  %143 = vmatmul.mubr.bf16.gmra.mxu0 %v28
  %v144 = vpop.f32.mrf.mxu0
  %v145 = vadd.f32 0.0, %v144
  %v146 = vpop.f32.mrf.mxu0
  %v147 = vpop.f32.mrf.mxu0
  %v148 = vadd.f32 0.0, %v147
  %v149 = vpop.f32.mrf.mxu0
  %150 = vmatprep.mubr.bf16.mxu0 0
  %151 = vmatmul.mubr.bf16.gmra.mxu0 %v29
  %v152 = vpop.f32.mrf.mxu0
  %v153 = vadd.f32 0.0, %v152
  %v154 = vpop.f32.mrf.mxu0
  %v155 = vpop.f32.mrf.mxu0
  %v156 = vpop.f32.mrf.mxu0
  %157 = vdwg.mxu0
  %158 = vst [vmem:[%s2] sm:$0xff] %v129
  %159 = vst [vmem:[%s2 + $0x8] sm:$0xff] %v132
  %160 = vst [vmem:[%s2 + $0x10] sm:$0xff] %v137
  %161 = vst [vmem:[%s2 + $0x18] sm:$0xff] %v140
  %162 = vst [vmem:[%s2 + $0x20] sm:$0xff] %v145
  %163 = vst [vmem:[%s2 + $0x28] sm:$0xff] %v148
  %164 = vst [vmem:[%s2 + $0x30] sm:$0x3] %v153
  // Predicated region
  $region10: #{_lambda_.10} parent=0 // pred_check
    _
  $region11: #{_lambda_.10} parent=0 // pred_check_branch
    %166 = sbr.rel (0) target = $region13
  $region12: #{_lambda_.10} parent=0 // pred_region
    _
  $region13: #{_lambda_.10} parent=0 // pred_fallthru
    _
  // Predicated region
  $region14: #{_lambda_.10} parent=0 // pred_check
    _
  $region15: #{_lambda_.10} parent=0 // pred_check_branch
    %168 = sbr.rel (0) target = $region17
  $region16: #{_lambda_.10} parent=0 // pred_region
    _
  $region17: #{_lambda_.10} parent=0 // pred_fallthru
    _

// kernel: _lambda_.11
$region0: #{_lambda_.11}
  #allocation0 [shape = 'u32[]', space=smem, size = 0x4, offset = 0x4, fixed_abs, tag = 'smem constant byte address 0x4 - core index']
  #allocation1 [shape = 'u32[144,128]{1,0:T(1,128)}', space=vmem, size = 0x12000, scoped, tag = 'internal scratch']
  #allocation2 [shape = 'f32[8,128]{1,0:T(8,128)}', space=vmem, size = 0x1000, scoped, tag = 'scratch operand']
  #allocation3 [shape = 'f32[40,128]{1,0:T(8,128)}', space=vmem, size = 0x5000, scoped, tag = 'scratch operand']
  %s0 = inlined_call_operand.vmem [shape: f32[8,128], index: 0, kind: input, shape index: {}]
  %s1 = inlined_call_operand.vmem [shape: f32[8,9], index: 1, kind: input, shape index: {}]
  %s2 = inlined_call_operand.vmem [shape: f32[2,1,128], index: 2, kind: input, shape index: {}]
  %s3 = inlined_call_operand.vmem [shape: f32[2,1,128], index: 3, kind: input, shape index: {}]
  %s4 = inlined_call_operand.vmem [shape: bf16[2,128,128], index: 4, kind: input, shape index: {}]
  %s5 = inlined_call_operand.vmem [shape: f32[2,1,128], index: 5, kind: input, shape index: {}]
  %s6 = inlined_call_operand.vmem [shape: f32[2,1,128], index: 6, kind: input, shape index: {}]
  %s7 = inlined_call_operand.vmem [shape: bf16[2,9,128,128], index: 7, kind: input, shape index: {}]
  %s8 = inlined_call_operand.vmem [shape: f32[8,128], index: 8, kind: output, shape index: {}]
  %s9 = sld [smem:[#allocation0]]
  $region69: #{_lambda_.11} parent=0
    _
  %s11 = ssub.s32 1, %s9
  %s12 = scalar_select 0, %s11, %s9
  loop: start=0, step=1, limit=4
  $region2: #{_lambda_.11} parent=0 // loop_pre_header
    _
  $region3: #{_lambda_.11} parent=0 // loop_header
    %s14 = sphi 0, %s18
    %p15 = scmp.ge.s32.totalorder %s14, 4
    %s22 = sphi 0, %s22
    %s24 = sphi 0, %s22
    %s25 = sphi 0, %s24
    %s39 = sphi 0, %s25
    %s43 = sphi 0, %s43
    %s45 = sphi 0, %s43
    %s46 = sphi 0, %s45
    %s60 = sphi 0, %s46
    %s66 = sphi 0, %s68
    %s69 = sphi 0, %s66
    %s70 = sphi 0, %s69
    %s86 = sphi 0, %s70
    %s92 = sphi 0, %s94
    %s95 = sphi 0, %s92
    %s96 = sphi 0, %s95
    %s112 = sphi 0, %s96
    %s118 = sphi 0, %s120
    %s121 = sphi 0, %s118
    %s122 = sphi 0, %s121
    %s138 = sphi 0, %s122
    %s144 = sphi 0, %s146
    %s147 = sphi 0, %s144
    %s148 = sphi 0, %s147
    %s164 = sphi 0, %s148
    %s170 = sphi 0, %s172
    %s173 = sphi 0, %s170
    %s174 = sphi 0, %s173
    %s190 = sphi 0, %s174
    %s196 = sphi 0, %s198
    %s199 = sphi 0, %s196
    %s200 = sphi 0, %s199
    %s216 = sphi 0, %s200
    %s220 = sphi 0, %s220
    %s222 = sphi 0, %s220
    %s223 = sphi 0, %s222
    %s237 = sphi 0, %s223
  $region4: #{_lambda_.11} parent=0 // loop_header_branch
    %17 = sbr.rel (%p15) target = $region8
  $region5: #{_lambda_.11} parent=0 // loop_body
    %s19 = ssub.s32 %s14, 1
    %s20 = ssub.s32 %s14, 2
    %s21 = sadd.s32 %s14, 1
    %s23 = sadd.s32 %s22, 1
    %p26 = scmp.eq.s32.totalorder %s14, 1
    %p27 = scmp.ne.s32.totalorder %s22, %s24
    %p28 = scmp.eq.s32.totalorder %s14, 0
    %p29 = por %p27, %p28
    %p30 = scmp.ne.s32.totalorder %s22, %s24
    %p31 = scmp.eq.s32.totalorder %s19, 1
    %p32 = por %p30, %p31
    %p33 = scmp.ne.s32.totalorder %s24, %s25
    %p34 = scmp.eq.s32.totalorder %s19, 0
    %p35 = por %p33, %p34
    %p36 = scmp.ne.s32.totalorder %s24, %s25
    %p37 = scmp.eq.s32.totalorder %s20, 1
    %p38 = por %p36, %p37
    %p40 = scmp.ne.s32.totalorder %s25, %s39
    %p41 = scmp.eq.s32.totalorder %s20, 0
    %p42 = por %p40, %p41
    %s44 = sadd.s32 %s43, 1
    %p47 = scmp.eq.s32.totalorder %s14, 1
    %p48 = scmp.ne.s32.totalorder %s43, %s45
    %p49 = scmp.eq.s32.totalorder %s14, 0
    %p50 = por %p48, %p49
    %p51 = scmp.ne.s32.totalorder %s43, %s45
    %p52 = scmp.eq.s32.totalorder %s19, 1
    %p53 = por %p51, %p52
    %p54 = scmp.ne.s32.totalorder %s45, %s46
    %p55 = scmp.eq.s32.totalorder %s19, 0
    %p56 = por %p54, %p55
    %p57 = scmp.ne.s32.totalorder %s45, %s46
    %p58 = scmp.eq.s32.totalorder %s20, 1
    %p59 = por %p57, %p58
    %p61 = scmp.ne.s32.totalorder %s46, %s60
    %p62 = scmp.eq.s32.totalorder %s20, 0
    %p63 = por %p61, %p62
    %s64 = ssub.s32 %s14, %s21
    %p65 = scmp.eq.s32.totalorder %s64, 0
    %s67 = sadd.s32 %s66, 1
    %s68 = scalar_select %p65, %s66, %s67
    %p71 = pneg %p65
    %p72 = scmp.eq.s32.totalorder %s14, 1
    %p73 = por %p71, %p72
    %p74 = scmp.ne.s32.totalorder %s66, %s69
    %p75 = scmp.eq.s32.totalorder %s14, 0
    %p76 = por %p74, %p75
    %p77 = scmp.ne.s32.totalorder %s66, %s69
    %p78 = scmp.eq.s32.totalorder %s19, 1
    %p79 = por %p77, %p78
    %p80 = scmp.ne.s32.totalorder %s69, %s70
    %p81 = scmp.eq.s32.totalorder %s19, 0
    %p82 = por %p80, %p81
    %p83 = scmp.ne.s32.totalorder %s69, %s70
    %p84 = scmp.eq.s32.totalorder %s20, 1
    %p85 = por %p83, %p84
    %p87 = scmp.ne.s32.totalorder %s70, %s86
    %p88 = scmp.eq.s32.totalorder %s20, 0
    %p89 = por %p87, %p88
    %s90 = ssub.s32 %s14, %s21
    %p91 = scmp.eq.s32.totalorder %s90, 0
    %s93 = sadd.s32 %s92, 1
    %s94 = scalar_select %p91, %s92, %s93
    %p97 = pneg %p91
    %p98 = scmp.eq.s32.totalorder %s14, 1
    %p99 = por %p97, %p98
    %p100 = scmp.ne.s32.totalorder %s92, %s95
    %p101 = scmp.eq.s32.totalorder %s14, 0
    %p102 = por %p100, %p101
    %p103 = scmp.ne.s32.totalorder %s92, %s95
    %p104 = scmp.eq.s32.totalorder %s19, 1
    %p105 = por %p103, %p104
    %p106 = scmp.ne.s32.totalorder %s95, %s96
    %p107 = scmp.eq.s32.totalorder %s19, 0
    %p108 = por %p106, %p107
    %p109 = scmp.ne.s32.totalorder %s95, %s96
    %p110 = scmp.eq.s32.totalorder %s20, 1
    %p111 = por %p109, %p110
    %p113 = scmp.ne.s32.totalorder %s96, %s112
    %p114 = scmp.eq.s32.totalorder %s20, 0
    %p115 = por %p113, %p114
    %s116 = ssub.s32 %s14, %s21
    %p117 = scmp.eq.s32.totalorder %s116, 0
    %s119 = sadd.s32 %s118, 1
    %s120 = scalar_select %p117, %s118, %s119
    %p123 = pneg %p117
    %p124 = scmp.eq.s32.totalorder %s14, 1
    %p125 = por %p123, %p124
    %p126 = scmp.ne.s32.totalorder %s118, %s121
    %p127 = scmp.eq.s32.totalorder %s14, 0
    %p128 = por %p126, %p127
    %p129 = scmp.ne.s32.totalorder %s118, %s121
    %p130 = scmp.eq.s32.totalorder %s19, 1
    %p131 = por %p129, %p130
    %p132 = scmp.ne.s32.totalorder %s121, %s122
    %p133 = scmp.eq.s32.totalorder %s19, 0
    %p134 = por %p132, %p133
    %p135 = scmp.ne.s32.totalorder %s121, %s122
    %p136 = scmp.eq.s32.totalorder %s20, 1
    %p137 = por %p135, %p136
    %p139 = scmp.ne.s32.totalorder %s122, %s138
    %p140 = scmp.eq.s32.totalorder %s20, 0
    %p141 = por %p139, %p140
    %s142 = ssub.s32 %s14, %s21
    %p143 = scmp.eq.s32.totalorder %s142, 0
    %s145 = sadd.s32 %s144, 1
    %s146 = scalar_select %p143, %s144, %s145
    %p149 = pneg %p143
    %p150 = scmp.eq.s32.totalorder %s14, 1
    %p151 = por %p149, %p150
    %p152 = scmp.ne.s32.totalorder %s144, %s147
    %p153 = scmp.eq.s32.totalorder %s14, 0
    %p154 = por %p152, %p153
    %p155 = scmp.ne.s32.totalorder %s144, %s147
    %p156 = scmp.eq.s32.totalorder %s19, 1
    %p157 = por %p155, %p156
    %p158 = scmp.ne.s32.totalorder %s147, %s148
    %p159 = scmp.eq.s32.totalorder %s19, 0
    %p160 = por %p158, %p159
    %p161 = scmp.ne.s32.totalorder %s147, %s148
    %p162 = scmp.eq.s32.totalorder %s20, 1
    %p163 = por %p161, %p162
    %p165 = scmp.ne.s32.totalorder %s148, %s164
    %p166 = scmp.eq.s32.totalorder %s20, 0
    %p167 = por %p165, %p166
    %s168 = ssub.s32 %s14, %s21
    %p169 = scmp.eq.s32.totalorder %s168, 0
    %s171 = sadd.s32 %s170, 1
    %s172 = scalar_select %p169, %s170, %s171
    %p175 = pneg %p169
    %p176 = scmp.eq.s32.totalorder %s14, 1
    %p177 = por %p175, %p176
    %p178 = scmp.ne.s32.totalorder %s170, %s173
    %p179 = scmp.eq.s32.totalorder %s14, 0
    %p180 = por %p178, %p179
    %p181 = scmp.ne.s32.totalorder %s170, %s173
    %p182 = scmp.eq.s32.totalorder %s19, 1
    %p183 = por %p181, %p182
    %p184 = scmp.ne.s32.totalorder %s173, %s174
    %p185 = scmp.eq.s32.totalorder %s19, 0
    %p186 = por %p184, %p185
    %p187 = scmp.ne.s32.totalorder %s173, %s174
    %p188 = scmp.eq.s32.totalorder %s20, 1
    %p189 = por %p187, %p188
    %p191 = scmp.ne.s32.totalorder %s174, %s190
    %p192 = scmp.eq.s32.totalorder %s20, 0
    %p193 = por %p191, %p192
    %s194 = ssub.s32 %s14, %s21
    %p195 = scmp.eq.s32.totalorder %s194, 0
    %s197 = sadd.s32 %s196, 1
    %s198 = scalar_select %p195, %s196, %s197
    %p201 = pneg %p195
    %p202 = scmp.eq.s32.totalorder %s14, 1
    %p203 = por %p201, %p202
    %p204 = scmp.ne.s32.totalorder %s196, %s199
    %p205 = scmp.eq.s32.totalorder %s14, 0
    %p206 = por %p204, %p205
    %p207 = scmp.ne.s32.totalorder %s196, %s199
    %p208 = scmp.eq.s32.totalorder %s19, 1
    %p209 = por %p207, %p208
    %p210 = scmp.ne.s32.totalorder %s199, %s200
    %p211 = scmp.eq.s32.totalorder %s19, 0
    %p212 = por %p210, %p211
    %p213 = scmp.ne.s32.totalorder %s199, %s200
    %p214 = scmp.eq.s32.totalorder %s20, 1
    %p215 = por %p213, %p214
    %p217 = scmp.ne.s32.totalorder %s200, %s216
    %p218 = scmp.eq.s32.totalorder %s20, 0
    %p219 = por %p217, %p218
    %s221 = sadd.s32 %s220, 1
    %p224 = scmp.eq.s32.totalorder %s14, 1
    %p225 = scmp.ne.s32.totalorder %s220, %s222
    %p226 = scmp.eq.s32.totalorder %s14, 0
    %p227 = por %p225, %p226
    %p228 = scmp.ne.s32.totalorder %s220, %s222
    %p229 = scmp.eq.s32.totalorder %s19, 1
    %p230 = por %p228, %p229
    %p231 = scmp.ne.s32.totalorder %s222, %s223
    %p232 = scmp.eq.s32.totalorder %s19, 0
    %p233 = por %p231, %p232
    %p234 = scmp.ne.s32.totalorder %s222, %s223
    %p235 = scmp.eq.s32.totalorder %s20, 1
    %p236 = por %p234, %p235
    %p238 = scmp.ne.s32.totalorder %s223, %s237
    %p239 = scmp.eq.s32.totalorder %s20, 0
    %p240 = por %p238, %p239
    %p241 = scmp.le.s32.totalorder 1, %s14
    %p242 = scmp.lt.s32.totalorder %s14, 3
    %p243 = pnand %p241, %p242
    %p244 = pneg %p243
    // Predicated region
    $region9: #{_lambda_.11} parent=5 // pred_check
      _
    $region10: #{_lambda_.11} parent=5 // pred_check_branch
      %246 = sbr.rel (%p243) target = $region12
    $region11: #{_lambda_.11} parent=5 // pred_region
      %s247 = ssub.s32 %s14, 1
      // Predicated region
      $region13: #{_lambda_.11} parent=11 // pred_check
        %p248 = pneg %p35
      $region14: #{_lambda_.11} parent=11 // pred_check_branch
        %250 = sbr.rel (%p248) target = $region16
      $region15: #{_lambda_.11} parent=11 // pred_region
        _
      $region16: #{_lambda_.11} parent=11 // pred_fallthru
        _
      // Predicated region
      $region17: #{_lambda_.11} parent=11 // pred_check
        %p251 = pneg %p56
      $region18: #{_lambda_.11} parent=11 // pred_check_branch
        %253 = sbr.rel (%p251) target = $region20
      $region19: #{_lambda_.11} parent=11 // pred_region
        _
      $region20: #{_lambda_.11} parent=11 // pred_fallthru
        _
    $region12: #{_lambda_.11} parent=5 // pred_fallthru
      _
    %p254 = scmp.lt.s32.totalorder %s14, 2
    // Predicated region
    $region21: #{_lambda_.11} parent=5 // pred_check
      %p255 = pneg %p254
    $region22: #{_lambda_.11} parent=5 // pred_check_branch
      %257 = sbr.rel (%p255) target = $region24
    $region23: #{_lambda_.11} parent=5 // pred_region
      // Predicated region
      $region25: #{_lambda_.11} parent=23 // pred_check
        %p258 = pneg %p76
      $region26: #{_lambda_.11} parent=23 // pred_check_branch
        %260 = sbr.rel (%p258) target = $region28
      $region27: #{_lambda_.11} parent=23 // pred_region
        %p261 = scmp.lt.s32.totalorder %s14, 1
        %s262 = scalar_select %p261, %s14, 1
        %s263 = scalar_lea.vmem %s2, %s262
      $region28: #{_lambda_.11} parent=23 // pred_fallthru
        _
      // Predicated region
      $region29: #{_lambda_.11} parent=23 // pred_check
        %p264 = pneg %p102
      $region30: #{_lambda_.11} parent=23 // pred_check_branch
        %266 = sbr.rel (%p264) target = $region32
      $region31: #{_lambda_.11} parent=23 // pred_region
        %p267 = scmp.lt.s32.totalorder %s14, 1
        %s268 = scalar_select %p267, %s14, 1
        %s269 = scalar_lea.vmem %s3, %s268
      $region32: #{_lambda_.11} parent=23 // pred_fallthru
        _
      // Predicated region
      $region33: #{_lambda_.11} parent=23 // pred_check
        %p270 = pneg %p128
      $region34: #{_lambda_.11} parent=23 // pred_check_branch
        %272 = sbr.rel (%p270) target = $region36
      $region35: #{_lambda_.11} parent=23 // pred_region
        %p273 = scmp.lt.s32.totalorder %s14, 1
        %s274 = scalar_select %p273, %s14, 1
        %s275 = smul.addr %s274, 16
        %s276 = smul.addr %s275, 4
        %s277 = scalar_lea.vmem %s4, %s276
      $region36: #{_lambda_.11} parent=23 // pred_fallthru
        _
      // Predicated region
      $region37: #{_lambda_.11} parent=23 // pred_check
        %p278 = pneg %p154
      $region38: #{_lambda_.11} parent=23 // pred_check_branch
        %280 = sbr.rel (%p278) target = $region40
      $region39: #{_lambda_.11} parent=23 // pred_region
        %p281 = scmp.lt.s32.totalorder %s14, 1
        %s282 = scalar_select %p281, %s14, 1
        %s283 = scalar_lea.vmem %s5, %s282
      $region40: #{_lambda_.11} parent=23 // pred_fallthru
        _
      // Predicated region
      $region41: #{_lambda_.11} parent=23 // pred_check
        %p284 = pneg %p180
      $region42: #{_lambda_.11} parent=23 // pred_check_branch
        %286 = sbr.rel (%p284) target = $region44
      $region43: #{_lambda_.11} parent=23 // pred_region
        %p287 = scmp.lt.s32.totalorder %s14, 1
        %s288 = scalar_select %p287, %s14, 1
        %s289 = scalar_lea.vmem %s6, %s288
      $region44: #{_lambda_.11} parent=23 // pred_fallthru
        _
      // Predicated region
      $region45: #{_lambda_.11} parent=23 // pred_check
        %p290 = pneg %p206
      $region46: #{_lambda_.11} parent=23 // pred_check_branch
        %292 = sbr.rel (%p290) target = $region48
      $region47: #{_lambda_.11} parent=23 // pred_region
        %p293 = scmp.lt.s32.totalorder %s14, 1
        %s294 = scalar_select %p293, %s14, 1
        %s295 = smul.addr %s294, 144
        %s296 = smul.addr %s295, 4
        %s297 = scalar_lea.vmem %s7, %s296
      $region48: #{_lambda_.11} parent=23 // pred_fallthru
        _
    $region24: #{_lambda_.11} parent=5 // pred_fallthru
      _
    %p298 = scmp.le.s32.totalorder 1, %s14
    %p299 = scmp.lt.s32.totalorder %s14, 3
    %p300 = pnand %p298, %p299
    %p301 = pneg %p300
    // Predicated region
    $region49: #{_lambda_.11} parent=5 // pred_check
      _
    $region50: #{_lambda_.11} parent=5 // pred_check_branch
      %303 = sbr.rel (%p300) target = $region52
    $region51: #{_lambda_.11} parent=5 // pred_region
      %s304 = ssub.s32 %s14, 1
      %p305 = pneg %p35
      %p306 = pneg %p32
      %p307 = pneg %p56
      %p308 = pneg %p53
      %p309 = scmp.lt.s32.totalorder %s19, 1
      %s310 = scalar_select %p309, %s19, 1
      %s311 = scalar_lea.vmem %s2, %s310
      %p312 = pneg %p82
      %p313 = pneg %p79
      %p314 = scmp.lt.s32.totalorder %s19, 1
      %s315 = scalar_select %p314, %s19, 1
      %s316 = scalar_lea.vmem %s3, %s315
      %p317 = pneg %p108
      %p318 = pneg %p105
      %p319 = scmp.lt.s32.totalorder %s19, 1
      %s320 = scalar_select %p319, %s19, 1
      %s321 = smul.addr %s320, 16
      %s322 = smul.addr %s321, 4
      %s323 = scalar_lea.vmem %s4, %s322
      %p324 = pneg %p134
      %p325 = pneg %p131
      %p326 = scmp.lt.s32.totalorder %s19, 1
      %s327 = scalar_select %p326, %s19, 1
      %s328 = scalar_lea.vmem %s5, %s327
      %p329 = pneg %p160
      %p330 = pneg %p157
      %p331 = scmp.lt.s32.totalorder %s19, 1
      %s332 = scalar_select %p331, %s19, 1
      %s333 = scalar_lea.vmem %s6, %s332
      %p334 = pneg %p186
      %p335 = pneg %p183
      %p336 = scmp.lt.s32.totalorder %s19, 1
      %s337 = scalar_select %p336, %s19, 1
      %s338 = smul.addr %s337, 144
      %s339 = smul.addr %s338, 4
      %s340 = scalar_lea.vmem %s7, %s339
      %p341 = pneg %p212
      %p342 = pneg %p209
      %p343 = pneg %p233
      %p344 = pneg %p230
      %p345 = scmp.lt.s32.totalorder %s19, 1
      %s346 = scalar_select %p345, %s19, 1
      %s347 = scalar_lea.vmem %s2, %s346
      %p348 = scmp.lt.s32.totalorder %s19, 1
      %s349 = scalar_select %p348, %s19, 1
      %s350 = scalar_lea.vmem %s3, %s349
      %p351 = scmp.lt.s32.totalorder %s19, 1
      %s352 = scalar_select %p351, %s19, 1
      %s353 = smul.addr %s352, 16
      %s354 = smul.addr %s353, 4
      %s355 = scalar_lea.vmem %s4, %s354
      %p356 = scmp.lt.s32.totalorder %s19, 1
      %s357 = scalar_select %p356, %s19, 1
      %s358 = scalar_lea.vmem %s5, %s357
      %p359 = scmp.lt.s32.totalorder %s19, 1
      %s360 = scalar_select %p359, %s19, 1
      %s361 = scalar_lea.vmem %s6, %s360
      %p362 = scmp.lt.s32.totalorder %s19, 1
      %s363 = scalar_select %p362, %s19, 1
      %s364 = smul.addr %s363, 144
      %s365 = smul.addr %s364, 4
      %s366 = scalar_lea.vmem %s7, %s365
      %p368 = scmp.eq.s32.totalorder %s19, 0
      // Predicated region
      $region53: #{_lambda_.11} parent=51 // pred_check
        %p369 = pneg %p368
      $region54: #{_lambda_.11} parent=51 // pred_check_branch
        %371 = sbr.rel (%p369) target = $region56
      $region55: #{_lambda_.11} parent=51 // pred_region
        %v372 = vld [vmem:[%s0] sm:$0xff]
        %373 = vst [vmem:[#allocation2] sm:$0xff] %v372
      $region56: #{_lambda_.11} parent=51 // pred_fallthru
        _
      %v374 = vld [vmem:[#allocation2] sm:$0xff]
      %v375 = vld [vmem:[%s347] sm:$0x1]
      %v377 = vlaneseq
      %v378 = vshrl.u32 %v377, 7
      %v379 = vsub.s32 0, %v378
      %v380 = vrot.slane %v375, %v379
      %v382 = vmul.f32 %v374, %v380
      %v383 = vld [vmem:[%s350] sm:$0x1]
      %v385 = vlaneseq
      %v386 = vshrl.u32 %v385, 7
      %v387 = vsub.s32 0, %v386
      %v388 = vrot.slane %v383, %v387
      %v390 = vadd.f32 %v382, %v388
      %v391 = vmax.f32 %v390, 0.0
      %v392 = vpack.c.bf16 %v391, %v391
      %v393 = vld [vmem:[%s355] sm:$0xf]
      %v394 = vld [vmem:[%s355 + $0x4] sm:$0xf]
      %v395 = vld [vmem:[%s355 + $0x8] sm:$0xf]
      %v396 = vld [vmem:[%s355 + $0xc] sm:$0xf]
      %v397 = vld [vmem:[%s355 + $0x10] sm:$0xf]
      %v398 = vld [vmem:[%s355 + $0x14] sm:$0xf]
      %v399 = vld [vmem:[%s355 + $0x18] sm:$0xf]
      %v400 = vld [vmem:[%s355 + $0x1c] sm:$0xf]
      %v401 = vld [vmem:[%s355 + $0x20] sm:$0xf]
      %v402 = vld [vmem:[%s355 + $0x24] sm:$0xf]
      %v403 = vld [vmem:[%s355 + $0x28] sm:$0xf]
      %v404 = vld [vmem:[%s355 + $0x2c] sm:$0xf]
      %v405 = vld [vmem:[%s355 + $0x30] sm:$0xf]
      %v406 = vld [vmem:[%s355 + $0x34] sm:$0xf]
      %v407 = vld [vmem:[%s355 + $0x38] sm:$0xf]
      %v408 = vld [vmem:[%s355 + $0x3c] sm:$0xf]
      %v425 = vunpack.c.l.b16 %v393
      %v426 = vunpack.c.l.b16 %v394
      %v427 = vunpack.c.l.b16 %v395
      %v428 = vunpack.c.l.b16 %v396
      %v429 = vunpack.c.l.b16 %v397
      %v430 = vunpack.c.l.b16 %v398
      %v431 = vunpack.c.l.b16 %v399
      %v432 = vunpack.c.l.b16 %v400
      %v433 = vunpack.c.l.b16 %v401
      %v434 = vunpack.c.l.b16 %v402
      %v435 = vunpack.c.l.b16 %v403
      %v436 = vunpack.c.l.b16 %v404
      %v437 = vunpack.c.l.b16 %v405
      %v438 = vunpack.c.l.b16 %v406
      %v439 = vunpack.c.l.b16 %v407
      %v440 = vunpack.c.l.b16 %v408
      %v441 = vpack.c.b16 %v426, %v425
      %v442 = vpack.c.b16 %v428, %v427
      %v443 = vpack.c.b16 %v430, %v429
      %v444 = vpack.c.b16 %v432, %v431
      %v445 = vpack.c.b16 %v434, %v433
      %v446 = vpack.c.b16 %v436, %v435
      %v447 = vpack.c.b16 %v438, %v437
      %v448 = vpack.c.b16 %v440, %v439
      %457 = vmatprep.subr.bf16.mxu0 0
      %458 = vmatpush1.bf16.msra.mxu0 %v448
      %459 = vmatprep.subr.bf16.mxu0 0
      %460 = vmatpush1.bf16.msra.mxu0 %v447
      %461 = vmatprep.subr.bf16.mxu0 0
      %462 = vmatpush1.bf16.msra.mxu0 %v446
      %463 = vmatprep.subr.bf16.mxu0 0
      %464 = vmatpush1.bf16.msra.mxu0 %v445
      %465 = vmatprep.subr.bf16.mxu0 0
      %466 = vmatpush1.bf16.msra.mxu0 %v444
      %467 = vmatprep.subr.bf16.mxu0 0
      %468 = vmatpush1.bf16.msra.mxu0 %v443
      %469 = vmatprep.subr.bf16.mxu0 0
      %470 = vmatpush1.bf16.msra.mxu0 %v442
      %471 = vmatprep.subr.bf16.mxu0 0
      %472 = vmatpush1.bf16.msra.mxu0 %v441
      %473 = vmatprep.subr.bf16.mxu0 0
      %474 = vmatpush2.bf16.msra.mxu0 0
      %475 = vmatprep.subr.bf16.mxu0 0
      %476 = vmatpush2.bf16.msra.mxu0 0
      %477 = vmatprep.subr.bf16.mxu0 0
      %478 = vmatpush2.bf16.msra.mxu0 0
      %479 = vmatprep.subr.bf16.mxu0 0
      %480 = vmatpush2.bf16.msra.mxu0 0
      %481 = vmatprep.subr.bf16.mxu0 0
      %482 = vmatpush2.bf16.msra.mxu0 0
      %483 = vmatprep.subr.bf16.mxu0 0
      %484 = vmatpush2.bf16.msra.mxu0 0
      %485 = vmatprep.subr.bf16.mxu0 0
      %486 = vmatpush2.bf16.msra.mxu0 0
      %487 = vmatprep.subr.bf16.mxu0 0
      %488 = vmatpush2.bf16.msra.mxu0 0
      %489 = vmatprep.mubr.bf16.mxu0 0
      %490 = vmatmul.mubr.bf16.gmra.mxu0 %v392
      %v491 = vpop.f32.mrf.mxu0
      %v492 = vadd.f32 0.0, %v491
      %v493 = vpop.f32.mrf.mxu0
      %v494 = vpop.f32.mrf.mxu0
      %v495 = vpop.f32.mrf.mxu0
      %496 = vdwg.mxu0
      %v497 = vld [vmem:[%s358] sm:$0x1]
      %v499 = vlaneseq
      %v500 = vshrl.u32 %v499, 7
      %v501 = vsub.s32 0, %v500
      %v502 = vrot.slane %v497, %v501
      %v504 = vmul.f32 %v492, %v502
      %v505 = vld [vmem:[%s361] sm:$0x1]
      %v507 = vlaneseq
      %v508 = vshrl.u32 %v507, 7
      %v509 = vsub.s32 0, %v508
      %v510 = vrot.slane %v505, %v509
      %v512 = vadd.f32 %v504, %v510
      %v513 = vmax.f32 %v512, 0.0
      %514 = vst [vmem:[#allocation3] sm:$0xff] 0.0
      %515 = vst [vmem:[#allocation3 + $0x8] sm:$0xff] 0.0
      %516 = vst [vmem:[#allocation3 + $0x10] sm:$0xff] 0.0
      %517 = vst [vmem:[#allocation3 + $0x18] sm:$0xff] 0.0
      %518 = vst [vmem:[#allocation3 + $0x20] sm:$0xff] 0.0
      %519 = vst [vmem:[#allocation3 + $0x10] sm:$0xff] %v513
      %v520 = vld [vmem:[#allocation3 + $0xd] sm:$0xff]
      %v521 = vpack.c.bf16 %v520, %v520
      %v522 = vld [vmem:[%s366] sm:$0xf]
      %v523 = vld [vmem:[%s366 + $0x4] sm:$0xf]
      %v524 = vld [vmem:[%s366 + $0x8] sm:$0xf]
      %v525 = vld [vmem:[%s366 + $0xc] sm:$0xf]
      %v526 = vld [vmem:[%s366 + $0x10] sm:$0xf]
      %v527 = vld [vmem:[%s366 + $0x14] sm:$0xf]
      %v528 = vld [vmem:[%s366 + $0x18] sm:$0xf]
      %v529 = vld [vmem:[%s366 + $0x1c] sm:$0xf]
      %v530 = vld [vmem:[%s366 + $0x20] sm:$0xf]
      %v531 = vld [vmem:[%s366 + $0x24] sm:$0xf]
      %v532 = vld [vmem:[%s366 + $0x28] sm:$0xf]
      %v533 = vld [vmem:[%s366 + $0x2c] sm:$0xf]
      %v534 = vld [vmem:[%s366 + $0x30] sm:$0xf]
      %v535 = vld [vmem:[%s366 + $0x34] sm:$0xf]
      %v536 = vld [vmem:[%s366 + $0x38] sm:$0xf]
      %v537 = vld [vmem:[%s366 + $0x3c] sm:$0xf]
      %v554 = vunpack.c.l.b16 %v522
      %v555 = vunpack.c.l.b16 %v523
      %v556 = vunpack.c.l.b16 %v524
      %v557 = vunpack.c.l.b16 %v525
      %v558 = vunpack.c.l.b16 %v526
      %v559 = vunpack.c.l.b16 %v527
      %v560 = vunpack.c.l.b16 %v528
      %v561 = vunpack.c.l.b16 %v529
      %v562 = vunpack.c.l.b16 %v530
      %v563 = vunpack.c.l.b16 %v531
      %v564 = vunpack.c.l.b16 %v532
      %v565 = vunpack.c.l.b16 %v533
      %v566 = vunpack.c.l.b16 %v534
      %v567 = vunpack.c.l.b16 %v535
      %v568 = vunpack.c.l.b16 %v536
      %v569 = vunpack.c.l.b16 %v537
      %v570 = vpack.c.b16 %v555, %v554
      %v571 = vpack.c.b16 %v557, %v556
      %v572 = vpack.c.b16 %v559, %v558
      %v573 = vpack.c.b16 %v561, %v560
      %v574 = vpack.c.b16 %v563, %v562
      %v575 = vpack.c.b16 %v565, %v564
      %v576 = vpack.c.b16 %v567, %v566
      %v577 = vpack.c.b16 %v569, %v568
      %586 = vmatprep.subr.bf16.mxu0 0
      %587 = vmatpush1.bf16.msra.mxu0 %v577
      %588 = vmatprep.subr.bf16.mxu0 0
      %589 = vmatpush1.bf16.msra.mxu0 %v576
      %590 = vmatprep.subr.bf16.mxu0 0
      %591 = vmatpush1.bf16.msra.mxu0 %v575
      %592 = vmatprep.subr.bf16.mxu0 0
      %593 = vmatpush1.bf16.msra.mxu0 %v574
      %594 = vmatprep.subr.bf16.mxu0 0
      %595 = vmatpush1.bf16.msra.mxu0 %v573
      %596 = vmatprep.subr.bf16.mxu0 0
      %597 = vmatpush1.bf16.msra.mxu0 %v572
      %598 = vmatprep.subr.bf16.mxu0 0
      %599 = vmatpush1.bf16.msra.mxu0 %v571
      %600 = vmatprep.subr.bf16.mxu0 0
      %601 = vmatpush1.bf16.msra.mxu0 %v570
      %602 = vmatprep.subr.bf16.mxu0 0
      %603 = vmatpush2.bf16.msra.mxu0 0
      %604 = vmatprep.subr.bf16.mxu0 0
      %605 = vmatpush2.bf16.msra.mxu0 0
      %606 = vmatprep.subr.bf16.mxu0 0
      %607 = vmatpush2.bf16.msra.mxu0 0
      %608 = vmatprep.subr.bf16.mxu0 0
      %609 = vmatpush2.bf16.msra.mxu0 0
      %610 = vmatprep.subr.bf16.mxu0 0
      %611 = vmatpush2.bf16.msra.mxu0 0
      %612 = vmatprep.subr.bf16.mxu0 0
      %613 = vmatpush2.bf16.msra.mxu0 0
      %614 = vmatprep.subr.bf16.mxu0 0
      %615 = vmatpush2.bf16.msra.mxu0 0
      %616 = vmatprep.subr.bf16.mxu0 0
      %617 = vmatpush2.bf16.msra.mxu0 0
      %618 = vmatprep.mubr.bf16.mxu0 0
      %619 = vmatmul.mubr.bf16.gmra.mxu0 %v521
      %v620 = vpop.f32.mrf.mxu0
      %v621 = vadd.f32 0.0, %v620
      %v622 = vpop.f32.mrf.mxu0
      %v623 = vpop.f32.mrf.mxu0
      %v624 = vpop.f32.mrf.mxu0
      %625 = vdwg.mxu0
      %v626 = vld [vmem:[%s1] sm:$0xff]
      %628 = vset.pattern.permute.xlu0 0
      %629 = vperm.xlu0 %628, %v626
      %v630 = vpop.permute.xlu0 %629
      %v632 = vmul.f32 %v621, %v630
      %v633 = vadd.f32 %v632, 0.0
      %v634 = vld [vmem:[#allocation3 + $0xe] sm:$0xff]
      %v635 = vpack.c.bf16 %v634, %v634
      %s636 = scalar_lea.vmem %s366, 64
      %v637 = vld [vmem:[%s636] sm:$0xf]
      %v638 = vld [vmem:[%s636 + $0x4] sm:$0xf]
      %v639 = vld [vmem:[%s636 + $0x8] sm:$0xf]
      %v640 = vld [vmem:[%s636 + $0xc] sm:$0xf]
      %v641 = vld [vmem:[%s636 + $0x10] sm:$0xf]
      %v642 = vld [vmem:[%s636 + $0x14] sm:$0xf]
      %v643 = vld [vmem:[%s636 + $0x18] sm:$0xf]
      %v644 = vld [vmem:[%s636 + $0x1c] sm:$0xf]
      %v645 = vld [vmem:[%s636 + $0x20] sm:$0xf]
      %v646 = vld [vmem:[%s636 + $0x24] sm:$0xf]
      %v647 = vld [vmem:[%s636 + $0x28] sm:$0xf]
      %v648 = vld [vmem:[%s636 + $0x2c] sm:$0xf]
      %v649 = vld [vmem:[%s636 + $0x30] sm:$0xf]
      %v650 = vld [vmem:[%s636 + $0x34] sm:$0xf]
      %v651 = vld [vmem:[%s636 + $0x38] sm:$0xf]
      %v652 = vld [vmem:[%s636 + $0x3c] sm:$0xf]
      %v669 = vunpack.c.l.b16 %v637
      %v670 = vunpack.c.l.b16 %v638
      %v671 = vunpack.c.l.b16 %v639
      %v672 = vunpack.c.l.b16 %v640
      %v673 = vunpack.c.l.b16 %v641
      %v674 = vunpack.c.l.b16 %v642
      %v675 = vunpack.c.l.b16 %v643
      %v676 = vunpack.c.l.b16 %v644
      %v677 = vunpack.c.l.b16 %v645
      %v678 = vunpack.c.l.b16 %v646
      %v679 = vunpack.c.l.b16 %v647
      %v680 = vunpack.c.l.b16 %v648
      %v681 = vunpack.c.l.b16 %v649
      %v682 = vunpack.c.l.b16 %v650
      %v683 = vunpack.c.l.b16 %v651
      %v684 = vunpack.c.l.b16 %v652
      %v685 = vpack.c.b16 %v670, %v669
      %v686 = vpack.c.b16 %v672, %v671
      %v687 = vpack.c.b16 %v674, %v673
      %v688 = vpack.c.b16 %v676, %v675
      %v689 = vpack.c.b16 %v678, %v677
      %v690 = vpack.c.b16 %v680, %v679
      %v691 = vpack.c.b16 %v682, %v681
      %v692 = vpack.c.b16 %v684, %v683
      %701 = vmatprep.subr.bf16.mxu0 0
      %702 = vmatpush1.bf16.msra.mxu0 %v692
      %703 = vmatprep.subr.bf16.mxu0 0
      %704 = vmatpush1.bf16.msra.mxu0 %v691
      %705 = vmatprep.subr.bf16.mxu0 0
      %706 = vmatpush1.bf16.msra.mxu0 %v690
      %707 = vmatprep.subr.bf16.mxu0 0
      %708 = vmatpush1.bf16.msra.mxu0 %v689
      %709 = vmatprep.subr.bf16.mxu0 0
      %710 = vmatpush1.bf16.msra.mxu0 %v688
      %711 = vmatprep.subr.bf16.mxu0 0
      %712 = vmatpush1.bf16.msra.mxu0 %v687
      %713 = vmatprep.subr.bf16.mxu0 0
      %714 = vmatpush1.bf16.msra.mxu0 %v686
      %715 = vmatprep.subr.bf16.mxu0 0
      %716 = vmatpush1.bf16.msra.mxu0 %v685
      %717 = vmatprep.subr.bf16.mxu0 0
      %718 = vmatpush2.bf16.msra.mxu0 0
      %719 = vmatprep.subr.bf16.mxu0 0
      %720 = vmatpush2.bf16.msra.mxu0 0
      %721 = vmatprep.subr.bf16.mxu0 0
      %722 = vmatpush2.bf16.msra.mxu0 0
      %723 = vmatprep.subr.bf16.mxu0 0
      %724 = vmatpush2.bf16.msra.mxu0 0
      %725 = vmatprep.subr.bf16.mxu0 0
      %726 = vmatpush2.bf16.msra.mxu0 0
      %727 = vmatprep.subr.bf16.mxu0 0
      %728 = vmatpush2.bf16.msra.mxu0 0
      %729 = vmatprep.subr.bf16.mxu0 0
      %730 = vmatpush2.bf16.msra.mxu0 0
      %731 = vmatprep.subr.bf16.mxu0 0
      %732 = vmatpush2.bf16.msra.mxu0 0
      %733 = vmatprep.mubr.bf16.mxu0 0
      %734 = vmatmul.mubr.bf16.gmra.mxu0 %v635
      %v735 = vpop.f32.mrf.mxu0
      %v736 = vadd.f32 0.0, %v735
      %v737 = vpop.f32.mrf.mxu0
      %v738 = vpop.f32.mrf.mxu0
      %v739 = vpop.f32.mrf.mxu0
      %740 = vdwg.mxu0
      %741 = vset.pattern.permute.xlu0 1
      %742 = vperm.xlu0 %741, %v626
      %v743 = vpop.permute.xlu0 %742
      %v745 = vmul.f32 %v736, %v743
      %v746 = vadd.f32 %v633, %v745
      %v747 = vld [vmem:[#allocation3 + $0xf] sm:$0xff]
      %v748 = vpack.c.bf16 %v747, %v747
      %s749 = scalar_lea.vmem %s366, 128
      %v750 = vld [vmem:[%s749] sm:$0xf]
      %v751 = vld [vmem:[%s749 + $0x4] sm:$0xf]
      %v752 = vld [vmem:[%s749 + $0x8] sm:$0xf]
      %v753 = vld [vmem:[%s749 + $0xc] sm:$0xf]
      %v754 = vld [vmem:[%s749 + $0x10] sm:$0xf]
      %v755 = vld [vmem:[%s749 + $0x14] sm:$0xf]
      %v756 = vld [vmem:[%s749 + $0x18] sm:$0xf]
      %v757 = vld [vmem:[%s749 + $0x1c] sm:$0xf]
      %v758 = vld [vmem:[%s749 + $0x20] sm:$0xf]
      %v759 = vld [vmem:[%s749 + $0x24] sm:$0xf]
      %v760 = vld [vmem:[%s749 + $0x28] sm:$0xf]
      %v761 = vld [vmem:[%s749 + $0x2c] sm:$0xf]
      %v762 = vld [vmem:[%s749 + $0x30] sm:$0xf]
      %v763 = vld [vmem:[%s749 + $0x34] sm:$0xf]
      %v764 = vld [vmem:[%s749 + $0x38] sm:$0xf]
      %v765 = vld [vmem:[%s749 + $0x3c] sm:$0xf]
      %v782 = vunpack.c.l.b16 %v750
      %v783 = vunpack.c.l.b16 %v751
      %v784 = vunpack.c.l.b16 %v752
      %v785 = vunpack.c.l.b16 %v753
      %v786 = vunpack.c.l.b16 %v754
      %v787 = vunpack.c.l.b16 %v755
      %v788 = vunpack.c.l.b16 %v756
      %v789 = vunpack.c.l.b16 %v757
      %v790 = vunpack.c.l.b16 %v758
      %v791 = vunpack.c.l.b16 %v759
      %v792 = vunpack.c.l.b16 %v760
      %v793 = vunpack.c.l.b16 %v761
      %v794 = vunpack.c.l.b16 %v762
      %v795 = vunpack.c.l.b16 %v763
      %v796 = vunpack.c.l.b16 %v764
      %v797 = vunpack.c.l.b16 %v765
      %v798 = vpack.c.b16 %v783, %v782
      %v799 = vpack.c.b16 %v785, %v784
      %v800 = vpack.c.b16 %v787, %v786
      %v801 = vpack.c.b16 %v789, %v788
      %v802 = vpack.c.b16 %v791, %v790
      %v803 = vpack.c.b16 %v793, %v792
      %v804 = vpack.c.b16 %v795, %v794
      %v805 = vpack.c.b16 %v797, %v796
      %814 = vmatprep.subr.bf16.mxu0 0
      %815 = vmatpush1.bf16.msra.mxu0 %v805
      %816 = vmatprep.subr.bf16.mxu0 0
      %817 = vmatpush1.bf16.msra.mxu0 %v804
      %818 = vmatprep.subr.bf16.mxu0 0
      %819 = vmatpush1.bf16.msra.mxu0 %v803
      %820 = vmatprep.subr.bf16.mxu0 0
      %821 = vmatpush1.bf16.msra.mxu0 %v802
      %822 = vmatprep.subr.bf16.mxu0 0
      %823 = vmatpush1.bf16.msra.mxu0 %v801
      %824 = vmatprep.subr.bf16.mxu0 0
      %825 = vmatpush1.bf16.msra.mxu0 %v800
      %826 = vmatprep.subr.bf16.mxu0 0
      %827 = vmatpush1.bf16.msra.mxu0 %v799
      %828 = vmatprep.subr.bf16.mxu0 0
      %829 = vmatpush1.bf16.msra.mxu0 %v798
      %830 = vmatprep.subr.bf16.mxu0 0
      %831 = vmatpush2.bf16.msra.mxu0 0
      %832 = vmatprep.subr.bf16.mxu0 0
      %833 = vmatpush2.bf16.msra.mxu0 0
      %834 = vmatprep.subr.bf16.mxu0 0
      %835 = vmatpush2.bf16.msra.mxu0 0
      %836 = vmatprep.subr.bf16.mxu0 0
      %837 = vmatpush2.bf16.msra.mxu0 0
      %838 = vmatprep.subr.bf16.mxu0 0
      %839 = vmatpush2.bf16.msra.mxu0 0
      %840 = vmatprep.subr.bf16.mxu0 0
      %841 = vmatpush2.bf16.msra.mxu0 0
      %842 = vmatprep.subr.bf16.mxu0 0
      %843 = vmatpush2.bf16.msra.mxu0 0
      %844 = vmatprep.subr.bf16.mxu0 0
      %845 = vmatpush2.bf16.msra.mxu0 0
      %846 = vmatprep.mubr.bf16.mxu0 0
      %847 = vmatmul.mubr.bf16.gmra.mxu0 %v748
      %v848 = vpop.f32.mrf.mxu0
      %v849 = vadd.f32 0.0, %v848
      %v850 = vpop.f32.mrf.mxu0
      %v851 = vpop.f32.mrf.mxu0
      %v852 = vpop.f32.mrf.mxu0
      %853 = vdwg.mxu0
      %854 = vset.pattern.permute.xlu0 2
      %855 = vperm.xlu0 %854, %v626
      %v856 = vpop.permute.xlu0 %855
      %v858 = vmul.f32 %v849, %v856
      %v859 = vadd.f32 %v746, %v858
      %s860 = scalar_lea.vmem %s366, 192
      %v861 = vld [vmem:[%s860] sm:$0xf]
      %v862 = vld [vmem:[%s860 + $0x4] sm:$0xf]
      %v863 = vld [vmem:[%s860 + $0x8] sm:$0xf]
      %v864 = vld [vmem:[%s860 + $0xc] sm:$0xf]
      %v865 = vld [vmem:[%s860 + $0x10] sm:$0xf]
      %v866 = vld [vmem:[%s860 + $0x14] sm:$0xf]
      %v867 = vld [vmem:[%s860 + $0x18] sm:$0xf]
      %v868 = vld [vmem:[%s860 + $0x1c] sm:$0xf]
      %v869 = vld [vmem:[%s860 + $0x20] sm:$0xf]
      %v870 = vld [vmem:[%s860 + $0x24] sm:$0xf]
      %v871 = vld [vmem:[%s860 + $0x28] sm:$0xf]
      %v872 = vld [vmem:[%s860 + $0x2c] sm:$0xf]
      %v873 = vld [vmem:[%s860 + $0x30] sm:$0xf]
      %v874 = vld [vmem:[%s860 + $0x34] sm:$0xf]
      %v875 = vld [vmem:[%s860 + $0x38] sm:$0xf]
      %v876 = vld [vmem:[%s860 + $0x3c] sm:$0xf]
      %v893 = vunpack.c.l.b16 %v861
      %v894 = vunpack.c.l.b16 %v862
      %v895 = vunpack.c.l.b16 %v863
      %v896 = vunpack.c.l.b16 %v864
      %v897 = vunpack.c.l.b16 %v865
      %v898 = vunpack.c.l.b16 %v866
      %v899 = vunpack.c.l.b16 %v867
      %v900 = vunpack.c.l.b16 %v868
      %v901 = vunpack.c.l.b16 %v869
      %v902 = vunpack.c.l.b16 %v870
      %v903 = vunpack.c.l.b16 %v871
      %v904 = vunpack.c.l.b16 %v872
      %v905 = vunpack.c.l.b16 %v873
      %v906 = vunpack.c.l.b16 %v874
      %v907 = vunpack.c.l.b16 %v875
      %v908 = vunpack.c.l.b16 %v876
      %v909 = vpack.c.b16 %v894, %v893
      %v910 = vpack.c.b16 %v896, %v895
      %v911 = vpack.c.b16 %v898, %v897
      %v912 = vpack.c.b16 %v900, %v899
      %v913 = vpack.c.b16 %v902, %v901
      %v914 = vpack.c.b16 %v904, %v903
      %v915 = vpack.c.b16 %v906, %v905
      %v916 = vpack.c.b16 %v908, %v907
      %925 = vmatprep.subr.bf16.mxu0 0
      %926 = vmatpush1.bf16.msra.mxu0 %v916
      %927 = vmatprep.subr.bf16.mxu0 0
      %928 = vmatpush1.bf16.msra.mxu0 %v915
      %929 = vmatprep.subr.bf16.mxu0 0
      %930 = vmatpush1.bf16.msra.mxu0 %v914
      %931 = vmatprep.subr.bf16.mxu0 0
      %932 = vmatpush1.bf16.msra.mxu0 %v913
      %933 = vmatprep.subr.bf16.mxu0 0
      %934 = vmatpush1.bf16.msra.mxu0 %v912
      %935 = vmatprep.subr.bf16.mxu0 0
      %936 = vmatpush1.bf16.msra.mxu0 %v911
      %937 = vmatprep.subr.bf16.mxu0 0
      %938 = vmatpush1.bf16.msra.mxu0 %v910
      %939 = vmatprep.subr.bf16.mxu0 0
      %940 = vmatpush1.bf16.msra.mxu0 %v909
      %941 = vmatprep.subr.bf16.mxu0 0
      %942 = vmatpush2.bf16.msra.mxu0 0
      %943 = vmatprep.subr.bf16.mxu0 0
      %944 = vmatpush2.bf16.msra.mxu0 0
      %945 = vmatprep.subr.bf16.mxu0 0
      %946 = vmatpush2.bf16.msra.mxu0 0
      %947 = vmatprep.subr.bf16.mxu0 0
      %948 = vmatpush2.bf16.msra.mxu0 0
      %949 = vmatprep.subr.bf16.mxu0 0
      %950 = vmatpush2.bf16.msra.mxu0 0
      %951 = vmatprep.subr.bf16.mxu0 0
      %952 = vmatpush2.bf16.msra.mxu0 0
      %953 = vmatprep.subr.bf16.mxu0 0
      %954 = vmatpush2.bf16.msra.mxu0 0
      %955 = vmatprep.subr.bf16.mxu0 0
      %956 = vmatpush2.bf16.msra.mxu0 0
      %957 = vmatprep.mubr.bf16.mxu0 0
      %958 = vmatmul.mubr.bf16.gmra.mxu0 %v748
      %v959 = vpop.f32.mrf.mxu0
      %v960 = vadd.f32 0.0, %v959
      %v961 = vpop.f32.mrf.mxu0
      %v962 = vpop.f32.mrf.mxu0
      %v963 = vpop.f32.mrf.mxu0
      %964 = vdwg.mxu0
      %965 = vset.pattern.permute.xlu0 3
      %966 = vperm.xlu0 %965, %v626
      %v967 = vpop.permute.xlu0 %966
      %v969 = vmul.f32 %v960, %v967
      %v970 = vadd.f32 %v859, %v969
      %v971 = vld [vmem:[#allocation3 + $0x10] sm:$0xff]
      %v972 = vpack.c.bf16 %v971, %v971
      %s973 = scalar_lea.vmem %s366, 256
      %v974 = vld [vmem:[%s973] sm:$0xf]
      %v975 = vld [vmem:[%s973 + $0x4] sm:$0xf]
      %v976 = vld [vmem:[%s973 + $0x8] sm:$0xf]
      %v977 = vld [vmem:[%s973 + $0xc] sm:$0xf]
      %v978 = vld [vmem:[%s973 + $0x10] sm:$0xf]
      %v979 = vld [vmem:[%s973 + $0x14] sm:$0xf]
      %v980 = vld [vmem:[%s973 + $0x18] sm:$0xf]
      %v981 = vld [vmem:[%s973 + $0x1c] sm:$0xf]
      %v982 = vld [vmem:[%s973 + $0x20] sm:$0xf]
      %v983 = vld [vmem:[%s973 + $0x24] sm:$0xf]
      %v984 = vld [vmem:[%s973 + $0x28] sm:$0xf]
      %v985 = vld [vmem:[%s973 + $0x2c] sm:$0xf]
      %v986 = vld [vmem:[%s973 + $0x30] sm:$0xf]
      %v987 = vld [vmem:[%s973 + $0x34] sm:$0xf]
      %v988 = vld [vmem:[%s973 + $0x38] sm:$0xf]
      %v989 = vld [vmem:[%s973 + $0x3c] sm:$0xf]
      %v1006 = vunpack.c.l.b16 %v974
      %v1007 = vunpack.c.l.b16 %v975
      %v1008 = vunpack.c.l.b16 %v976
      %v1009 = vunpack.c.l.b16 %v977
      %v1010 = vunpack.c.l.b16 %v978
      %v1011 = vunpack.c.l.b16 %v979
      %v1012 = vunpack.c.l.b16 %v980
      %v1013 = vunpack.c.l.b16 %v981
      %v1014 = vunpack.c.l.b16 %v982
      %v1015 = vunpack.c.l.b16 %v983
      %v1016 = vunpack.c.l.b16 %v984
      %v1017 = vunpack.c.l.b16 %v985
      %v1018 = vunpack.c.l.b16 %v986
      %v1019 = vunpack.c.l.b16 %v987
      %v1020 = vunpack.c.l.b16 %v988
      %v1021 = vunpack.c.l.b16 %v989
      %v1022 = vpack.c.b16 %v1007, %v1006
      %v1023 = vpack.c.b16 %v1009, %v1008
      %v1024 = vpack.c.b16 %v1011, %v1010
      %v1025 = vpack.c.b16 %v1013, %v1012
      %v1026 = vpack.c.b16 %v1015, %v1014
      %v1027 = vpack.c.b16 %v1017, %v1016
      %v1028 = vpack.c.b16 %v1019, %v1018
      %v1029 = vpack.c.b16 %v1021, %v1020
      %1038 = vmatprep.subr.bf16.mxu0 0
      %1039 = vmatpush1.bf16.msra.mxu0 %v1029
      %1040 = vmatprep.subr.bf16.mxu0 0
      %1041 = vmatpush1.bf16.msra.mxu0 %v1028
      %1042 = vmatprep.subr.bf16.mxu0 0
      %1043 = vmatpush1.bf16.msra.mxu0 %v1027
      %1044 = vmatprep.subr.bf16.mxu0 0
      %1045 = vmatpush1.bf16.msra.mxu0 %v1026
      %1046 = vmatprep.subr.bf16.mxu0 0
      %1047 = vmatpush1.bf16.msra.mxu0 %v1025
      %1048 = vmatprep.subr.bf16.mxu0 0
      %1049 = vmatpush1.bf16.msra.mxu0 %v1024
      %1050 = vmatprep.subr.bf16.mxu0 0
      %1051 = vmatpush1.bf16.msra.mxu0 %v1023
      %1052 = vmatprep.subr.bf16.mxu0 0
      %1053 = vmatpush1.bf16.msra.mxu0 %v1022
      %1054 = vmatprep.subr.bf16.mxu0 0
      %1055 = vmatpush2.bf16.msra.mxu0 0
      %1056 = vmatprep.subr.bf16.mxu0 0
      %1057 = vmatpush2.bf16.msra.mxu0 0
      %1058 = vmatprep.subr.bf16.mxu0 0
      %1059 = vmatpush2.bf16.msra.mxu0 0
      %1060 = vmatprep.subr.bf16.mxu0 0
      %1061 = vmatpush2.bf16.msra.mxu0 0
      %1062 = vmatprep.subr.bf16.mxu0 0
      %1063 = vmatpush2.bf16.msra.mxu0 0
      %1064 = vmatprep.subr.bf16.mxu0 0
      %1065 = vmatpush2.bf16.msra.mxu0 0
      %1066 = vmatprep.subr.bf16.mxu0 0
      %1067 = vmatpush2.bf16.msra.mxu0 0
      %1068 = vmatprep.subr.bf16.mxu0 0
      %1069 = vmatpush2.bf16.msra.mxu0 0
      %1070 = vmatprep.mubr.bf16.mxu0 0
      %1071 = vmatmul.mubr.bf16.gmra.mxu0 %v972
      %v1072 = vpop.f32.mrf.mxu0
      %v1073 = vadd.f32 0.0, %v1072
      %v1074 = vpop.f32.mrf.mxu0
      %v1075 = vpop.f32.mrf.mxu0
      %v1076 = vpop.f32.mrf.mxu0
      %1077 = vdwg.mxu0
      %1078 = vset.pattern.permute.xlu0 4
      %1079 = vperm.xlu0 %1078, %v626
      %v1080 = vpop.permute.xlu0 %1079
      %v1082 = vmul.f32 %v1073, %v1080
      %v1083 = vadd.f32 %v970, %v1082
      %v1084 = vld [vmem:[#allocation3 + $0x11] sm:$0xff]
      %v1085 = vpack.c.bf16 %v1084, %v1084
      %s1086 = scalar_lea.vmem %s366, 320
      %v1087 = vld [vmem:[%s1086] sm:$0xf]
      %v1088 = vld [vmem:[%s1086 + $0x4] sm:$0xf]
      %v1089 = vld [vmem:[%s1086 + $0x8] sm:$0xf]
      %v1090 = vld [vmem:[%s1086 + $0xc] sm:$0xf]
      %v1091 = vld [vmem:[%s1086 + $0x10] sm:$0xf]
      %v1092 = vld [vmem:[%s1086 + $0x14] sm:$0xf]
      %v1093 = vld [vmem:[%s1086 + $0x18] sm:$0xf]
      %v1094 = vld [vmem:[%s1086 + $0x1c] sm:$0xf]
      %v1095 = vld [vmem:[%s1086 + $0x20] sm:$0xf]
      %v1096 = vld [vmem:[%s1086 + $0x24] sm:$0xf]
      %v1097 = vld [vmem:[%s1086 + $0x28] sm:$0xf]
      %v1098 = vld [vmem:[%s1086 + $0x2c] sm:$0xf]
      %v1099 = vld [vmem:[%s1086 + $0x30] sm:$0xf]
      %v1100 = vld [vmem:[%s1086 + $0x34] sm:$0xf]
      %v1101 = vld [vmem:[%s1086 + $0x38] sm:$0xf]
      %v1102 = vld [vmem:[%s1086 + $0x3c] sm:$0xf]
      %v1119 = vunpack.c.l.b16 %v1087
      %v1120 = vunpack.c.l.b16 %v1088
      %v1121 = vunpack.c.l.b16 %v1089
      %v1122 = vunpack.c.l.b16 %v1090
      %v1123 = vunpack.c.l.b16 %v1091
      %v1124 = vunpack.c.l.b16 %v1092
      %v1125 = vunpack.c.l.b16 %v1093
      %v1126 = vunpack.c.l.b16 %v1094
      %v1127 = vunpack.c.l.b16 %v1095
      %v1128 = vunpack.c.l.b16 %v1096
      %v1129 = vunpack.c.l.b16 %v1097
      %v1130 = vunpack.c.l.b16 %v1098
      %v1131 = vunpack.c.l.b16 %v1099
      %v1132 = vunpack.c.l.b16 %v1100
      %v1133 = vunpack.c.l.b16 %v1101
      %v1134 = vunpack.c.l.b16 %v1102
      %v1135 = vpack.c.b16 %v1120, %v1119
      %v1136 = vpack.c.b16 %v1122, %v1121
      %v1137 = vpack.c.b16 %v1124, %v1123
      %v1138 = vpack.c.b16 %v1126, %v1125
      %v1139 = vpack.c.b16 %v1128, %v1127
      %v1140 = vpack.c.b16 %v1130, %v1129
      %v1141 = vpack.c.b16 %v1132, %v1131
      %v1142 = vpack.c.b16 %v1134, %v1133
      %1151 = vmatprep.subr.bf16.mxu0 0
      %1152 = vmatpush1.bf16.msra.mxu0 %v1142
      %1153 = vmatprep.subr.bf16.mxu0 0
      %1154 = vmatpush1.bf16.msra.mxu0 %v1141
      %1155 = vmatprep.subr.bf16.mxu0 0
      %1156 = vmatpush1.bf16.msra.mxu0 %v1140
      %1157 = vmatprep.subr.bf16.mxu0 0
      %1158 = vmatpush1.bf16.msra.mxu0 %v1139
      %1159 = vmatprep.subr.bf16.mxu0 0
      %1160 = vmatpush1.bf16.msra.mxu0 %v1138
      %1161 = vmatprep.subr.bf16.mxu0 0
      %1162 = vmatpush1.bf16.msra.mxu0 %v1137
      %1163 = vmatprep.subr.bf16.mxu0 0
      %1164 = vmatpush1.bf16.msra.mxu0 %v1136
      %1165 = vmatprep.subr.bf16.mxu0 0
      %1166 = vmatpush1.bf16.msra.mxu0 %v1135
      %1167 = vmatprep.subr.bf16.mxu0 0
      %1168 = vmatpush2.bf16.msra.mxu0 0
      %1169 = vmatprep.subr.bf16.mxu0 0
      %1170 = vmatpush2.bf16.msra.mxu0 0
      %1171 = vmatprep.subr.bf16.mxu0 0
      %1172 = vmatpush2.bf16.msra.mxu0 0
      %1173 = vmatprep.subr.bf16.mxu0 0
      %1174 = vmatpush2.bf16.msra.mxu0 0
      %1175 = vmatprep.subr.bf16.mxu0 0
      %1176 = vmatpush2.bf16.msra.mxu0 0
      %1177 = vmatprep.subr.bf16.mxu0 0
      %1178 = vmatpush2.bf16.msra.mxu0 0
      %1179 = vmatprep.subr.bf16.mxu0 0
      %1180 = vmatpush2.bf16.msra.mxu0 0
      %1181 = vmatprep.subr.bf16.mxu0 0
      %1182 = vmatpush2.bf16.msra.mxu0 0
      %1183 = vmatprep.mubr.bf16.mxu0 0
      %1184 = vmatmul.mubr.bf16.gmra.mxu0 %v1085
      %v1185 = vpop.f32.mrf.mxu0
      %v1186 = vadd.f32 0.0, %v1185
      %v1187 = vpop.f32.mrf.mxu0
      %v1188 = vpop.f32.mrf.mxu0
      %v1189 = vpop.f32.mrf.mxu0
      %1190 = vdwg.mxu0
      %1191 = vset.pattern.permute.xlu0 5
      %1192 = vperm.xlu0 %1191, %v626
      %v1193 = vpop.permute.xlu0 %1192
      %v1195 = vmul.f32 %v1186, %v1193
      %v1196 = vadd.f32 %v1083, %v1195
      %s1197 = scalar_lea.vmem %s366, 384
      %v1198 = vld [vmem:[%s1197] sm:$0xf]
      %v1199 = vld [vmem:[%s1197 + $0x4] sm:$0xf]
      %v1200 = vld [vmem:[%s1197 + $0x8] sm:$0xf]
      %v1201 = vld [vmem:[%s1197 + $0xc] sm:$0xf]
      %v1202 = vld [vmem:[%s1197 + $0x10] sm:$0xf]
      %v1203 = vld [vmem:[%s1197 + $0x14] sm:$0xf]
      %v1204 = vld [vmem:[%s1197 + $0x18] sm:$0xf]
      %v1205 = vld [vmem:[%s1197 + $0x1c] sm:$0xf]
      %v1206 = vld [vmem:[%s1197 + $0x20] sm:$0xf]
      %v1207 = vld [vmem:[%s1197 + $0x24] sm:$0xf]
      %v1208 = vld [vmem:[%s1197 + $0x28] sm:$0xf]
      %v1209 = vld [vmem:[%s1197 + $0x2c] sm:$0xf]
      %v1210 = vld [vmem:[%s1197 + $0x30] sm:$0xf]
      %v1211 = vld [vmem:[%s1197 + $0x34] sm:$0xf]
      %v1212 = vld [vmem:[%s1197 + $0x38] sm:$0xf]
      %v1213 = vld [vmem:[%s1197 + $0x3c] sm:$0xf]
      %v1230 = vunpack.c.l.b16 %v1198
      %v1231 = vunpack.c.l.b16 %v1199
      %v1232 = vunpack.c.l.b16 %v1200
      %v1233 = vunpack.c.l.b16 %v1201
      %v1234 = vunpack.c.l.b16 %v1202
      %v1235 = vunpack.c.l.b16 %v1203
      %v1236 = vunpack.c.l.b16 %v1204
      %v1237 = vunpack.c.l.b16 %v1205
      %v1238 = vunpack.c.l.b16 %v1206
      %v1239 = vunpack.c.l.b16 %v1207
      %v1240 = vunpack.c.l.b16 %v1208
      %v1241 = vunpack.c.l.b16 %v1209
      %v1242 = vunpack.c.l.b16 %v1210
      %v1243 = vunpack.c.l.b16 %v1211
      %v1244 = vunpack.c.l.b16 %v1212
      %v1245 = vunpack.c.l.b16 %v1213
      %v1246 = vpack.c.b16 %v1231, %v1230
      %v1247 = vpack.c.b16 %v1233, %v1232
      %v1248 = vpack.c.b16 %v1235, %v1234
      %v1249 = vpack.c.b16 %v1237, %v1236
      %v1250 = vpack.c.b16 %v1239, %v1238
      %v1251 = vpack.c.b16 %v1241, %v1240
      %v1252 = vpack.c.b16 %v1243, %v1242
      %v1253 = vpack.c.b16 %v1245, %v1244
      %1262 = vmatprep.subr.bf16.mxu0 0
      %1263 = vmatpush1.bf16.msra.mxu0 %v1253
      %1264 = vmatprep.subr.bf16.mxu0 0
      %1265 = vmatpush1.bf16.msra.mxu0 %v1252
      %1266 = vmatprep.subr.bf16.mxu0 0
      %1267 = vmatpush1.bf16.msra.mxu0 %v1251
      %1268 = vmatprep.subr.bf16.mxu0 0
      %1269 = vmatpush1.bf16.msra.mxu0 %v1250
      %1270 = vmatprep.subr.bf16.mxu0 0
      %1271 = vmatpush1.bf16.msra.mxu0 %v1249
      %1272 = vmatprep.subr.bf16.mxu0 0
      %1273 = vmatpush1.bf16.msra.mxu0 %v1248
      %1274 = vmatprep.subr.bf16.mxu0 0
      %1275 = vmatpush1.bf16.msra.mxu0 %v1247
      %1276 = vmatprep.subr.bf16.mxu0 0
      %1277 = vmatpush1.bf16.msra.mxu0 %v1246
      %1278 = vmatprep.subr.bf16.mxu0 0
      %1279 = vmatpush2.bf16.msra.mxu0 0
      %1280 = vmatprep.subr.bf16.mxu0 0
      %1281 = vmatpush2.bf16.msra.mxu0 0
      %1282 = vmatprep.subr.bf16.mxu0 0
      %1283 = vmatpush2.bf16.msra.mxu0 0
      %1284 = vmatprep.subr.bf16.mxu0 0
      %1285 = vmatpush2.bf16.msra.mxu0 0
      %1286 = vmatprep.subr.bf16.mxu0 0
      %1287 = vmatpush2.bf16.msra.mxu0 0
      %1288 = vmatprep.subr.bf16.mxu0 0
      %1289 = vmatpush2.bf16.msra.mxu0 0
      %1290 = vmatprep.subr.bf16.mxu0 0
      %1291 = vmatpush2.bf16.msra.mxu0 0
      %1292 = vmatprep.subr.bf16.mxu0 0
      %1293 = vmatpush2.bf16.msra.mxu0 0
      %1294 = vmatprep.mubr.bf16.mxu0 0
      %1295 = vmatmul.mubr.bf16.gmra.mxu0 %v1085
      %v1296 = vpop.f32.mrf.mxu0
      %v1297 = vadd.f32 0.0, %v1296
      %v1298 = vpop.f32.mrf.mxu0
      %v1299 = vpop.f32.mrf.mxu0
      %v1300 = vpop.f32.mrf.mxu0
      %1301 = vdwg.mxu0
      %1302 = vset.pattern.permute.xlu0 6
      %1303 = vperm.xlu0 %1302, %v626
      %v1304 = vpop.permute.xlu0 %1303
      %v1306 = vmul.f32 %v1297, %v1304
      %v1307 = vadd.f32 %v1196, %v1306
      %v1308 = vld [vmem:[#allocation3 + $0x12] sm:$0xff]
      %v1309 = vpack.c.bf16 %v1308, %v1308
      %s1310 = scalar_lea.vmem %s366, 448
      %v1311 = vld [vmem:[%s1310] sm:$0xf]
      %v1312 = vld [vmem:[%s1310 + $0x4] sm:$0xf]
      %v1313 = vld [vmem:[%s1310 + $0x8] sm:$0xf]
      %v1314 = vld [vmem:[%s1310 + $0xc] sm:$0xf]
      %v1315 = vld [vmem:[%s1310 + $0x10] sm:$0xf]
      %v1316 = vld [vmem:[%s1310 + $0x14] sm:$0xf]
      %v1317 = vld [vmem:[%s1310 + $0x18] sm:$0xf]
      %v1318 = vld [vmem:[%s1310 + $0x1c] sm:$0xf]
      %v1319 = vld [vmem:[%s1310 + $0x20] sm:$0xf]
      %v1320 = vld [vmem:[%s1310 + $0x24] sm:$0xf]
      %v1321 = vld [vmem:[%s1310 + $0x28] sm:$0xf]
      %v1322 = vld [vmem:[%s1310 + $0x2c] sm:$0xf]
      %v1323 = vld [vmem:[%s1310 + $0x30] sm:$0xf]
      %v1324 = vld [vmem:[%s1310 + $0x34] sm:$0xf]
      %v1325 = vld [vmem:[%s1310 + $0x38] sm:$0xf]
      %v1326 = vld [vmem:[%s1310 + $0x3c] sm:$0xf]
      %v1343 = vunpack.c.l.b16 %v1311
      %v1344 = vunpack.c.l.b16 %v1312
      %v1345 = vunpack.c.l.b16 %v1313
      %v1346 = vunpack.c.l.b16 %v1314
      %v1347 = vunpack.c.l.b16 %v1315
      %v1348 = vunpack.c.l.b16 %v1316
      %v1349 = vunpack.c.l.b16 %v1317
      %v1350 = vunpack.c.l.b16 %v1318
      %v1351 = vunpack.c.l.b16 %v1319
      %v1352 = vunpack.c.l.b16 %v1320
      %v1353 = vunpack.c.l.b16 %v1321
      %v1354 = vunpack.c.l.b16 %v1322
      %v1355 = vunpack.c.l.b16 %v1323
      %v1356 = vunpack.c.l.b16 %v1324
      %v1357 = vunpack.c.l.b16 %v1325
      %v1358 = vunpack.c.l.b16 %v1326
      %v1359 = vpack.c.b16 %v1344, %v1343
      %v1360 = vpack.c.b16 %v1346, %v1345
      %v1361 = vpack.c.b16 %v1348, %v1347
      %v1362 = vpack.c.b16 %v1350, %v1349
      %v1363 = vpack.c.b16 %v1352, %v1351
      %v1364 = vpack.c.b16 %v1354, %v1353
      %v1365 = vpack.c.b16 %v1356, %v1355
      %v1366 = vpack.c.b16 %v1358, %v1357
      %1375 = vmatprep.subr.bf16.mxu0 0
      %1376 = vmatpush1.bf16.msra.mxu0 %v1366
      %1377 = vmatprep.subr.bf16.mxu0 0
      %1378 = vmatpush1.bf16.msra.mxu0 %v1365
      %1379 = vmatprep.subr.bf16.mxu0 0
      %1380 = vmatpush1.bf16.msra.mxu0 %v1364
      %1381 = vmatprep.subr.bf16.mxu0 0
      %1382 = vmatpush1.bf16.msra.mxu0 %v1363
      %1383 = vmatprep.subr.bf16.mxu0 0
      %1384 = vmatpush1.bf16.msra.mxu0 %v1362
      %1385 = vmatprep.subr.bf16.mxu0 0
      %1386 = vmatpush1.bf16.msra.mxu0 %v1361
      %1387 = vmatprep.subr.bf16.mxu0 0
      %1388 = vmatpush1.bf16.msra.mxu0 %v1360
      %1389 = vmatprep.subr.bf16.mxu0 0
      %1390 = vmatpush1.bf16.msra.mxu0 %v1359
      %1391 = vmatprep.subr.bf16.mxu0 0
      %1392 = vmatpush2.bf16.msra.mxu0 0
      %1393 = vmatprep.subr.bf16.mxu0 0
      %1394 = vmatpush2.bf16.msra.mxu0 0
      %1395 = vmatprep.subr.bf16.mxu0 0
      %1396 = vmatpush2.bf16.msra.mxu0 0
      %1397 = vmatprep.subr.bf16.mxu0 0
      %1398 = vmatpush2.bf16.msra.mxu0 0
      %1399 = vmatprep.subr.bf16.mxu0 0
      %1400 = vmatpush2.bf16.msra.mxu0 0
      %1401 = vmatprep.subr.bf16.mxu0 0
      %1402 = vmatpush2.bf16.msra.mxu0 0
      %1403 = vmatprep.subr.bf16.mxu0 0
      %1404 = vmatpush2.bf16.msra.mxu0 0
      %1405 = vmatprep.subr.bf16.mxu0 0
      %1406 = vmatpush2.bf16.msra.mxu0 0
      %1407 = vmatprep.mubr.bf16.mxu0 0
      %1408 = vmatmul.mubr.bf16.gmra.mxu0 %v1309
      %v1409 = vpop.f32.mrf.mxu0
      %v1410 = vadd.f32 0.0, %v1409
      %v1411 = vpop.f32.mrf.mxu0
      %v1412 = vpop.f32.mrf.mxu0
      %v1413 = vpop.f32.mrf.mxu0
      %1414 = vdwg.mxu0
      %1415 = vset.pattern.permute.xlu0 7
      %1416 = vperm.xlu0 %1415, %v626
      %v1417 = vpop.permute.xlu0 %1416
      %v1419 = vmul.f32 %v1410, %v1417
      %v1420 = vadd.f32 %v1307, %v1419
      %v1421 = vld [vmem:[#allocation3 + $0x13] sm:$0xff]
      %v1422 = vpack.c.bf16 %v1421, %v1421
      %s1423 = scalar_lea.vmem %s366, 512
      %v1424 = vld [vmem:[%s1423] sm:$0xf]
      %v1425 = vld [vmem:[%s1423 + $0x4] sm:$0xf]
      %v1426 = vld [vmem:[%s1423 + $0x8] sm:$0xf]
      %v1427 = vld [vmem:[%s1423 + $0xc] sm:$0xf]
      %v1428 = vld [vmem:[%s1423 + $0x10] sm:$0xf]
      %v1429 = vld [vmem:[%s1423 + $0x14] sm:$0xf]
      %v1430 = vld [vmem:[%s1423 + $0x18] sm:$0xf]
      %v1431 = vld [vmem:[%s1423 + $0x1c] sm:$0xf]
      %v1432 = vld [vmem:[%s1423 + $0x20] sm:$0xf]
      %v1433 = vld [vmem:[%s1423 + $0x24] sm:$0xf]
      %v1434 = vld [vmem:[%s1423 + $0x28] sm:$0xf]
      %v1435 = vld [vmem:[%s1423 + $0x2c] sm:$0xf]
      %v1436 = vld [vmem:[%s1423 + $0x30] sm:$0xf]
      %v1437 = vld [vmem:[%s1423 + $0x34] sm:$0xf]
      %v1438 = vld [vmem:[%s1423 + $0x38] sm:$0xf]
      %v1439 = vld [vmem:[%s1423 + $0x3c] sm:$0xf]
      %v1456 = vunpack.c.l.b16 %v1424
      %v1457 = vunpack.c.l.b16 %v1425
      %v1458 = vunpack.c.l.b16 %v1426
      %v1459 = vunpack.c.l.b16 %v1427
      %v1460 = vunpack.c.l.b16 %v1428
      %v1461 = vunpack.c.l.b16 %v1429
      %v1462 = vunpack.c.l.b16 %v1430
      %v1463 = vunpack.c.l.b16 %v1431
      %v1464 = vunpack.c.l.b16 %v1432
      %v1465 = vunpack.c.l.b16 %v1433
      %v1466 = vunpack.c.l.b16 %v1434
      %v1467 = vunpack.c.l.b16 %v1435
      %v1468 = vunpack.c.l.b16 %v1436
      %v1469 = vunpack.c.l.b16 %v1437
      %v1470 = vunpack.c.l.b16 %v1438
      %v1471 = vunpack.c.l.b16 %v1439
      %v1472 = vpack.c.b16 %v1457, %v1456
      %v1473 = vpack.c.b16 %v1459, %v1458
      %v1474 = vpack.c.b16 %v1461, %v1460
      %v1475 = vpack.c.b16 %v1463, %v1462
      %v1476 = vpack.c.b16 %v1465, %v1464
      %v1477 = vpack.c.b16 %v1467, %v1466
      %v1478 = vpack.c.b16 %v1469, %v1468
      %v1479 = vpack.c.b16 %v1471, %v1470
      %1488 = vmatprep.subr.bf16.mxu0 0
      %1489 = vmatpush1.bf16.msra.mxu0 %v1479
      %1490 = vmatprep.subr.bf16.mxu0 0
      %1491 = vmatpush1.bf16.msra.mxu0 %v1478
      %1492 = vmatprep.subr.bf16.mxu0 0
      %1493 = vmatpush1.bf16.msra.mxu0 %v1477
      %1494 = vmatprep.subr.bf16.mxu0 0
      %1495 = vmatpush1.bf16.msra.mxu0 %v1476
      %1496 = vmatprep.subr.bf16.mxu0 0
      %1497 = vmatpush1.bf16.msra.mxu0 %v1475
      %1498 = vmatprep.subr.bf16.mxu0 0
      %1499 = vmatpush1.bf16.msra.mxu0 %v1474
      %1500 = vmatprep.subr.bf16.mxu0 0
      %1501 = vmatpush1.bf16.msra.mxu0 %v1473
      %1502 = vmatprep.subr.bf16.mxu0 0
      %1503 = vmatpush1.bf16.msra.mxu0 %v1472
      %1504 = vmatprep.subr.bf16.mxu0 0
      %1505 = vmatpush2.bf16.msra.mxu0 0
      %1506 = vmatprep.subr.bf16.mxu0 0
      %1507 = vmatpush2.bf16.msra.mxu0 0
      %1508 = vmatprep.subr.bf16.mxu0 0
      %1509 = vmatpush2.bf16.msra.mxu0 0
      %1510 = vmatprep.subr.bf16.mxu0 0
      %1511 = vmatpush2.bf16.msra.mxu0 0
      %1512 = vmatprep.subr.bf16.mxu0 0
      %1513 = vmatpush2.bf16.msra.mxu0 0
      %1514 = vmatprep.subr.bf16.mxu0 0
      %1515 = vmatpush2.bf16.msra.mxu0 0
      %1516 = vmatprep.subr.bf16.mxu0 0
      %1517 = vmatpush2.bf16.msra.mxu0 0
      %1518 = vmatprep.subr.bf16.mxu0 0
      %1519 = vmatpush2.bf16.msra.mxu0 0
      %1520 = vmatprep.mubr.bf16.mxu0 0
      %1521 = vmatmul.mubr.bf16.gmra.mxu0 %v1422
      %v1522 = vpop.f32.mrf.mxu0
      %v1523 = vadd.f32 0.0, %v1522
      %v1524 = vpop.f32.mrf.mxu0
      %v1525 = vpop.f32.mrf.mxu0
      %v1526 = vpop.f32.mrf.mxu0
      %1527 = vdwg.mxu0
      %1528 = vset.pattern.permute.xlu0 8
      %1529 = vperm.xlu0 %1528, %v626
      %v1530 = vpop.permute.xlu0 %1529
      %v1532 = vmul.f32 %v1523, %v1530
      %v1533 = vadd.f32 %v1420, %v1532
      %1534 = vrot.lane.b32.xlu0 %v374, 12
      %v1535 = vpop.permute.xlu0 %1534
      %v1536 = vadd.f32 %v1533, %v1535
      %1537 = vst [vmem:[#allocation2] sm:$0xff] %v1536
      %1538 = vst [vmem:[%s8] sm:$0xff] %v1536
      // Predicated region
      $region57: #{_lambda_.11} parent=51 // pred_check
        %p1539 = pneg %p230
      $region58: #{_lambda_.11} parent=51 // pred_check_branch
        %1541 = sbr.rel (%p1539) target = $region60
      $region59: #{_lambda_.11} parent=51 // pred_region
        _
      $region60: #{_lambda_.11} parent=51 // pred_fallthru
        _
      // Predicated region
      $region61: #{_lambda_.11} parent=51 // pred_check
        %p1542 = pneg %p230
      $region62: #{_lambda_.11} parent=51 // pred_check_branch
        %1544 = sbr.rel (%p1542) target = $region64
      $region63: #{_lambda_.11} parent=51 // pred_region
        _
      $region64: #{_lambda_.11} parent=51 // pred_fallthru
        _
    $region52: #{_lambda_.11} parent=5 // pred_fallthru
      _
    %p1545 = scmp.le.s32.totalorder 2, %s14
    // Predicated region
    $region65: #{_lambda_.11} parent=5 // pred_check
      %p1546 = pneg %p1545
    $region66: #{_lambda_.11} parent=5 // pred_check_branch
      %1548 = sbr.rel (%p1546) target = $region68
    $region67: #{_lambda_.11} parent=5 // pred_region
      %s1549 = ssub.s32 %s14, 2
    $region68: #{_lambda_.11} parent=5 // pred_fallthru
      _
  $region6: #{_lambda_.11} parent=0 // loop_footer
    %s18 = sadd.s32 1, %s14
  $region7: #{_lambda_.11} parent=0 // loop_footer_branch
    %13 = sbr.rel target = $region3
  $region8: #{_lambda_.11} parent=0 // loop_exit
    _

// kernel: _lambda_.7
$region0: #{_lambda_.7}
  #allocation0 [shape = 'u32[]', space=smem, size = 0x4, offset = 0x4, fixed_abs, tag = 'smem constant byte address 0x4 - core index']
  #allocation1 [shape = 'u32[144,128]{1,0:T(1,128)}', space=vmem, size = 0x12000, scoped, tag = 'internal scratch']
  #allocation2 [shape = 'f32[200,128]{1,0:T(8,128)}', space=vmem, size = 0x19000, scoped, tag = 'scratch operand']
  #allocation3 [shape = 'f32[232,128]{1,0:T(8,128)}', space=vmem, size = 0x1d000, scoped, tag = 'scratch operand']
  %s0 = inlined_call_operand.vmem [shape: f32[200,128], index: 0, kind: input, shape index: {}]
  %s1 = inlined_call_operand.vmem [shape: f32[200,9], index: 1, kind: input, shape index: {}]
  %s2 = inlined_call_operand.vmem [shape: f32[2,1,128], index: 2, kind: input, shape index: {}]
  %s3 = inlined_call_operand.vmem [shape: f32[2,1,128], index: 3, kind: input, shape index: {}]
  %s4 = inlined_call_operand.vmem [shape: bf16[2,128,128], index: 4, kind: input, shape index: {}]
  %s5 = inlined_call_operand.vmem [shape: f32[2,1,128], index: 5, kind: input, shape index: {}]
  %s6 = inlined_call_operand.vmem [shape: f32[2,1,128], index: 6, kind: input, shape index: {}]
  %s7 = inlined_call_operand.vmem [shape: bf16[2,9,128,128], index: 7, kind: input, shape index: {}]
  %s8 = inlined_call_operand.vmem [shape: f32[200,128], index: 8, kind: output, shape index: {}]
  %s9 = sld [smem:[#allocation0]]
  $region69: #{_lambda_.7} parent=0
    _
  %s11 = ssub.s32 1, %s9
  %s12 = scalar_select 0, %s11, %s9
  loop: start=0, step=1, limit=4
  $region2: #{_lambda_.7} parent=0 // loop_pre_header
    _
  $region3: #{_lambda_.7} parent=0 // loop_header
    %s14 = sphi 0, %s18
    %p15 = scmp.ge.s32.totalorder %s14, 4
    %s22 = sphi 0, %s22
    %s24 = sphi 0, %s22
    %s25 = sphi 0, %s24
    %s39 = sphi 0, %s25
    %s43 = sphi 0, %s43
    %s45 = sphi 0, %s43
    %s46 = sphi 0, %s45
    %s60 = sphi 0, %s46
    %s66 = sphi 0, %s68
    %s69 = sphi 0, %s66
    %s70 = sphi 0, %s69
    %s86 = sphi 0, %s70
    %s92 = sphi 0, %s94
    %s95 = sphi 0, %s92
    %s96 = sphi 0, %s95
    %s112 = sphi 0, %s96
    %s118 = sphi 0, %s120
    %s121 = sphi 0, %s118
    %s122 = sphi 0, %s121
    %s138 = sphi 0, %s122
    %s144 = sphi 0, %s146
    %s147 = sphi 0, %s144
    %s148 = sphi 0, %s147
    %s164 = sphi 0, %s148
    %s170 = sphi 0, %s172
    %s173 = sphi 0, %s170
    %s174 = sphi 0, %s173
    %s190 = sphi 0, %s174
    %s196 = sphi 0, %s198
    %s199 = sphi 0, %s196
    %s200 = sphi 0, %s199
    %s216 = sphi 0, %s200
    %s220 = sphi 0, %s220
    %s222 = sphi 0, %s220
    %s223 = sphi 0, %s222
    %s237 = sphi 0, %s223
  $region4: #{_lambda_.7} parent=0 // loop_header_branch
    %17 = sbr.rel (%p15) target = $region8
  $region5: #{_lambda_.7} parent=0 // loop_body
    %s19 = ssub.s32 %s14, 1
    %s20 = ssub.s32 %s14, 2
    %s21 = sadd.s32 %s14, 1
    %s23 = sadd.s32 %s22, 1
    %p26 = scmp.eq.s32.totalorder %s14, 1
    %p27 = scmp.ne.s32.totalorder %s22, %s24
    %p28 = scmp.eq.s32.totalorder %s14, 0
    %p29 = por %p27, %p28
    %p30 = scmp.ne.s32.totalorder %s22, %s24
    %p31 = scmp.eq.s32.totalorder %s19, 1
    %p32 = por %p30, %p31
    %p33 = scmp.ne.s32.totalorder %s24, %s25
    %p34 = scmp.eq.s32.totalorder %s19, 0
    %p35 = por %p33, %p34
    %p36 = scmp.ne.s32.totalorder %s24, %s25
    %p37 = scmp.eq.s32.totalorder %s20, 1
    %p38 = por %p36, %p37
    %p40 = scmp.ne.s32.totalorder %s25, %s39
    %p41 = scmp.eq.s32.totalorder %s20, 0
    %p42 = por %p40, %p41
    %s44 = sadd.s32 %s43, 1
    %p47 = scmp.eq.s32.totalorder %s14, 1
    %p48 = scmp.ne.s32.totalorder %s43, %s45
    %p49 = scmp.eq.s32.totalorder %s14, 0
    %p50 = por %p48, %p49
    %p51 = scmp.ne.s32.totalorder %s43, %s45
    %p52 = scmp.eq.s32.totalorder %s19, 1
    %p53 = por %p51, %p52
    %p54 = scmp.ne.s32.totalorder %s45, %s46
    %p55 = scmp.eq.s32.totalorder %s19, 0
    %p56 = por %p54, %p55
    %p57 = scmp.ne.s32.totalorder %s45, %s46
    %p58 = scmp.eq.s32.totalorder %s20, 1
    %p59 = por %p57, %p58
    %p61 = scmp.ne.s32.totalorder %s46, %s60
    %p62 = scmp.eq.s32.totalorder %s20, 0
    %p63 = por %p61, %p62
    %s64 = ssub.s32 %s14, %s21
    %p65 = scmp.eq.s32.totalorder %s64, 0
    %s67 = sadd.s32 %s66, 1
    %s68 = scalar_select %p65, %s66, %s67
    %p71 = pneg %p65
    %p72 = scmp.eq.s32.totalorder %s14, 1
    %p73 = por %p71, %p72
    %p74 = scmp.ne.s32.totalorder %s66, %s69
    %p75 = scmp.eq.s32.totalorder %s14, 0
    %p76 = por %p74, %p75
    %p77 = scmp.ne.s32.totalorder %s66, %s69
    %p78 = scmp.eq.s32.totalorder %s19, 1
    %p79 = por %p77, %p78
    %p80 = scmp.ne.s32.totalorder %s69, %s70
    %p81 = scmp.eq.s32.totalorder %s19, 0
    %p82 = por %p80, %p81
    %p83 = scmp.ne.s32.totalorder %s69, %s70
    %p84 = scmp.eq.s32.totalorder %s20, 1
    %p85 = por %p83, %p84
    %p87 = scmp.ne.s32.totalorder %s70, %s86
    %p88 = scmp.eq.s32.totalorder %s20, 0
    %p89 = por %p87, %p88
    %s90 = ssub.s32 %s14, %s21
    %p91 = scmp.eq.s32.totalorder %s90, 0
    %s93 = sadd.s32 %s92, 1
    %s94 = scalar_select %p91, %s92, %s93
    %p97 = pneg %p91
    %p98 = scmp.eq.s32.totalorder %s14, 1
    %p99 = por %p97, %p98
    %p100 = scmp.ne.s32.totalorder %s92, %s95
    %p101 = scmp.eq.s32.totalorder %s14, 0
    %p102 = por %p100, %p101
    %p103 = scmp.ne.s32.totalorder %s92, %s95
    %p104 = scmp.eq.s32.totalorder %s19, 1
    %p105 = por %p103, %p104
    %p106 = scmp.ne.s32.totalorder %s95, %s96
    %p107 = scmp.eq.s32.totalorder %s19, 0
    %p108 = por %p106, %p107
    %p109 = scmp.ne.s32.totalorder %s95, %s96
    %p110 = scmp.eq.s32.totalorder %s20, 1
    %p111 = por %p109, %p110
    %p113 = scmp.ne.s32.totalorder %s96, %s112
    %p114 = scmp.eq.s32.totalorder %s20, 0
    %p115 = por %p113, %p114
    %s116 = ssub.s32 %s14, %s21
    %p117 = scmp.eq.s32.totalorder %s116, 0
    %s119 = sadd.s32 %s118, 1
    %s120 = scalar_select %p117, %s118, %s119
    %p123 = pneg %p117
    %p124 = scmp.eq.s32.totalorder %s14, 1
    %p125 = por %p123, %p124
    %p126 = scmp.ne.s32.totalorder %s118, %s121
    %p127 = scmp.eq.s32.totalorder %s14, 0
    %p128 = por %p126, %p127
    %p129 = scmp.ne.s32.totalorder %s118, %s121
    %p130 = scmp.eq.s32.totalorder %s19, 1
    %p131 = por %p129, %p130
    %p132 = scmp.ne.s32.totalorder %s121, %s122
    %p133 = scmp.eq.s32.totalorder %s19, 0
    %p134 = por %p132, %p133
    %p135 = scmp.ne.s32.totalorder %s121, %s122
    %p136 = scmp.eq.s32.totalorder %s20, 1
    %p137 = por %p135, %p136
    %p139 = scmp.ne.s32.totalorder %s122, %s138
    %p140 = scmp.eq.s32.totalorder %s20, 0
    %p141 = por %p139, %p140
    %s142 = ssub.s32 %s14, %s21
    %p143 = scmp.eq.s32.totalorder %s142, 0
    %s145 = sadd.s32 %s144, 1
    %s146 = scalar_select %p143, %s144, %s145
    %p149 = pneg %p143
    %p150 = scmp.eq.s32.totalorder %s14, 1
    %p151 = por %p149, %p150
    %p152 = scmp.ne.s32.totalorder %s144, %s147
    %p153 = scmp.eq.s32.totalorder %s14, 0
    %p154 = por %p152, %p153
    %p155 = scmp.ne.s32.totalorder %s144, %s147
    %p156 = scmp.eq.s32.totalorder %s19, 1
    %p157 = por %p155, %p156
    %p158 = scmp.ne.s32.totalorder %s147, %s148
    %p159 = scmp.eq.s32.totalorder %s19, 0
    %p160 = por %p158, %p159
    %p161 = scmp.ne.s32.totalorder %s147, %s148
    %p162 = scmp.eq.s32.totalorder %s20, 1
    %p163 = por %p161, %p162
    %p165 = scmp.ne.s32.totalorder %s148, %s164
    %p166 = scmp.eq.s32.totalorder %s20, 0
    %p167 = por %p165, %p166
    %s168 = ssub.s32 %s14, %s21
    %p169 = scmp.eq.s32.totalorder %s168, 0
    %s171 = sadd.s32 %s170, 1
    %s172 = scalar_select %p169, %s170, %s171
    %p175 = pneg %p169
    %p176 = scmp.eq.s32.totalorder %s14, 1
    %p177 = por %p175, %p176
    %p178 = scmp.ne.s32.totalorder %s170, %s173
    %p179 = scmp.eq.s32.totalorder %s14, 0
    %p180 = por %p178, %p179
    %p181 = scmp.ne.s32.totalorder %s170, %s173
    %p182 = scmp.eq.s32.totalorder %s19, 1
    %p183 = por %p181, %p182
    %p184 = scmp.ne.s32.totalorder %s173, %s174
    %p185 = scmp.eq.s32.totalorder %s19, 0
    %p186 = por %p184, %p185
    %p187 = scmp.ne.s32.totalorder %s173, %s174
    %p188 = scmp.eq.s32.totalorder %s20, 1
    %p189 = por %p187, %p188
    %p191 = scmp.ne.s32.totalorder %s174, %s190
    %p192 = scmp.eq.s32.totalorder %s20, 0
    %p193 = por %p191, %p192
    %s194 = ssub.s32 %s14, %s21
    %p195 = scmp.eq.s32.totalorder %s194, 0
    %s197 = sadd.s32 %s196, 1
    %s198 = scalar_select %p195, %s196, %s197
    %p201 = pneg %p195
    %p202 = scmp.eq.s32.totalorder %s14, 1
    %p203 = por %p201, %p202
    %p204 = scmp.ne.s32.totalorder %s196, %s199
    %p205 = scmp.eq.s32.totalorder %s14, 0
    %p206 = por %p204, %p205
    %p207 = scmp.ne.s32.totalorder %s196, %s199
    %p208 = scmp.eq.s32.totalorder %s19, 1
    %p209 = por %p207, %p208
    %p210 = scmp.ne.s32.totalorder %s199, %s200
    %p211 = scmp.eq.s32.totalorder %s19, 0
    %p212 = por %p210, %p211
    %p213 = scmp.ne.s32.totalorder %s199, %s200
    %p214 = scmp.eq.s32.totalorder %s20, 1
    %p215 = por %p213, %p214
    %p217 = scmp.ne.s32.totalorder %s200, %s216
    %p218 = scmp.eq.s32.totalorder %s20, 0
    %p219 = por %p217, %p218
    %s221 = sadd.s32 %s220, 1
    %p224 = scmp.eq.s32.totalorder %s14, 1
    %p225 = scmp.ne.s32.totalorder %s220, %s222
    %p226 = scmp.eq.s32.totalorder %s14, 0
    %p227 = por %p225, %p226
    %p228 = scmp.ne.s32.totalorder %s220, %s222
    %p229 = scmp.eq.s32.totalorder %s19, 1
    %p230 = por %p228, %p229
    %p231 = scmp.ne.s32.totalorder %s222, %s223
    %p232 = scmp.eq.s32.totalorder %s19, 0
    %p233 = por %p231, %p232
    %p234 = scmp.ne.s32.totalorder %s222, %s223
    %p235 = scmp.eq.s32.totalorder %s20, 1
    %p236 = por %p234, %p235
    %p238 = scmp.ne.s32.totalorder %s223, %s237
    %p239 = scmp.eq.s32.totalorder %s20, 0
    %p240 = por %p238, %p239
    %p241 = scmp.le.s32.totalorder 1, %s14
    %p242 = scmp.lt.s32.totalorder %s14, 3
    %p243 = pnand %p241, %p242
    %p244 = pneg %p243
    // Predicated region
    $region9: #{_lambda_.7} parent=5 // pred_check
      _
    $region10: #{_lambda_.7} parent=5 // pred_check_branch
      %246 = sbr.rel (%p243) target = $region12
    $region11: #{_lambda_.7} parent=5 // pred_region
      %s247 = ssub.s32 %s14, 1
      // Predicated region
      $region13: #{_lambda_.7} parent=11 // pred_check
        %p248 = pneg %p35
      $region14: #{_lambda_.7} parent=11 // pred_check_branch
        %250 = sbr.rel (%p248) target = $region16
      $region15: #{_lambda_.7} parent=11 // pred_region
        _
      $region16: #{_lambda_.7} parent=11 // pred_fallthru
        _
      // Predicated region
      $region17: #{_lambda_.7} parent=11 // pred_check
        %p251 = pneg %p56
      $region18: #{_lambda_.7} parent=11 // pred_check_branch
        %253 = sbr.rel (%p251) target = $region20
      $region19: #{_lambda_.7} parent=11 // pred_region
        _
      $region20: #{_lambda_.7} parent=11 // pred_fallthru
        _
    $region12: #{_lambda_.7} parent=5 // pred_fallthru
      _
    %p254 = scmp.lt.s32.totalorder %s14, 2
    // Predicated region
    $region21: #{_lambda_.7} parent=5 // pred_check
      %p255 = pneg %p254
    $region22: #{_lambda_.7} parent=5 // pred_check_branch
      %257 = sbr.rel (%p255) target = $region24
    $region23: #{_lambda_.7} parent=5 // pred_region
      // Predicated region
      $region25: #{_lambda_.7} parent=23 // pred_check
        %p258 = pneg %p76
      $region26: #{_lambda_.7} parent=23 // pred_check_branch
        %260 = sbr.rel (%p258) target = $region28
      $region27: #{_lambda_.7} parent=23 // pred_region
        %p261 = scmp.lt.s32.totalorder %s14, 1
        %s262 = scalar_select %p261, %s14, 1
        %s263 = scalar_lea.vmem %s2, %s262
      $region28: #{_lambda_.7} parent=23 // pred_fallthru
        _
      // Predicated region
      $region29: #{_lambda_.7} parent=23 // pred_check
        %p264 = pneg %p102
      $region30: #{_lambda_.7} parent=23 // pred_check_branch
        %266 = sbr.rel (%p264) target = $region32
      $region31: #{_lambda_.7} parent=23 // pred_region
        %p267 = scmp.lt.s32.totalorder %s14, 1
        %s268 = scalar_select %p267, %s14, 1
        %s269 = scalar_lea.vmem %s3, %s268
      $region32: #{_lambda_.7} parent=23 // pred_fallthru
        _
      // Predicated region
      $region33: #{_lambda_.7} parent=23 // pred_check
        %p270 = pneg %p128
      $region34: #{_lambda_.7} parent=23 // pred_check_branch
        %272 = sbr.rel (%p270) target = $region36
      $region35: #{_lambda_.7} parent=23 // pred_region
        %p273 = scmp.lt.s32.totalorder %s14, 1
        %s274 = scalar_select %p273, %s14, 1
        %s275 = smul.addr %s274, 16
        %s276 = smul.addr %s275, 4
        %s277 = scalar_lea.vmem %s4, %s276
      $region36: #{_lambda_.7} parent=23 // pred_fallthru
        _
      // Predicated region
      $region37: #{_lambda_.7} parent=23 // pred_check
        %p278 = pneg %p154
      $region38: #{_lambda_.7} parent=23 // pred_check_branch
        %280 = sbr.rel (%p278) target = $region40
      $region39: #{_lambda_.7} parent=23 // pred_region
        %p281 = scmp.lt.s32.totalorder %s14, 1
        %s282 = scalar_select %p281, %s14, 1
        %s283 = scalar_lea.vmem %s5, %s282
      $region40: #{_lambda_.7} parent=23 // pred_fallthru
        _
      // Predicated region
      $region41: #{_lambda_.7} parent=23 // pred_check
        %p284 = pneg %p180
      $region42: #{_lambda_.7} parent=23 // pred_check_branch
        %286 = sbr.rel (%p284) target = $region44
      $region43: #{_lambda_.7} parent=23 // pred_region
        %p287 = scmp.lt.s32.totalorder %s14, 1
        %s288 = scalar_select %p287, %s14, 1
        %s289 = scalar_lea.vmem %s6, %s288
      $region44: #{_lambda_.7} parent=23 // pred_fallthru
        _
      // Predicated region
      $region45: #{_lambda_.7} parent=23 // pred_check
        %p290 = pneg %p206
      $region46: #{_lambda_.7} parent=23 // pred_check_branch
        %292 = sbr.rel (%p290) target = $region48
      $region47: #{_lambda_.7} parent=23 // pred_region
        %p293 = scmp.lt.s32.totalorder %s14, 1
        %s294 = scalar_select %p293, %s14, 1
        %s295 = smul.addr %s294, 144
        %s296 = smul.addr %s295, 4
        %s297 = scalar_lea.vmem %s7, %s296
      $region48: #{_lambda_.7} parent=23 // pred_fallthru
        _
    $region24: #{_lambda_.7} parent=5 // pred_fallthru
      _
    %p298 = scmp.le.s32.totalorder 1, %s14
    %p299 = scmp.lt.s32.totalorder %s14, 3
    %p300 = pnand %p298, %p299
    %p301 = pneg %p300
    // Predicated region
    $region49: #{_lambda_.7} parent=5 // pred_check
      _
    $region50: #{_lambda_.7} parent=5 // pred_check_branch
      %303 = sbr.rel (%p300) target = $region52
    $region51: #{_lambda_.7} parent=5 // pred_region
      %s304 = ssub.s32 %s14, 1
      %p305 = pneg %p35
      %p306 = pneg %p32
      %p307 = pneg %p56
      %p308 = pneg %p53
      %p309 = scmp.lt.s32.totalorder %s19, 1
      %s310 = scalar_select %p309, %s19, 1
      %s311 = scalar_lea.vmem %s2, %s310
      %p312 = pneg %p82
      %p313 = pneg %p79
      %p314 = scmp.lt.s32.totalorder %s19, 1
      %s315 = scalar_select %p314, %s19, 1
      %s316 = scalar_lea.vmem %s3, %s315
      %p317 = pneg %p108
      %p318 = pneg %p105
      %p319 = scmp.lt.s32.totalorder %s19, 1
      %s320 = scalar_select %p319, %s19, 1
      %s321 = smul.addr %s320, 16
      %s322 = smul.addr %s321, 4
      %s323 = scalar_lea.vmem %s4, %s322
      %p324 = pneg %p134
      %p325 = pneg %p131
      %p326 = scmp.lt.s32.totalorder %s19, 1
      %s327 = scalar_select %p326, %s19, 1
      %s328 = scalar_lea.vmem %s5, %s327
      %p329 = pneg %p160
      %p330 = pneg %p157
      %p331 = scmp.lt.s32.totalorder %s19, 1
      %s332 = scalar_select %p331, %s19, 1
      %s333 = scalar_lea.vmem %s6, %s332
      %p334 = pneg %p186
      %p335 = pneg %p183
      %p336 = scmp.lt.s32.totalorder %s19, 1
      %s337 = scalar_select %p336, %s19, 1
      %s338 = smul.addr %s337, 144
      %s339 = smul.addr %s338, 4
      %s340 = scalar_lea.vmem %s7, %s339
      %p341 = pneg %p212
      %p342 = pneg %p209
      %p343 = pneg %p233
      %p344 = pneg %p230
      %p345 = scmp.lt.s32.totalorder %s19, 1
      %s346 = scalar_select %p345, %s19, 1
      %s347 = scalar_lea.vmem %s2, %s346
      %p348 = scmp.lt.s32.totalorder %s19, 1
      %s349 = scalar_select %p348, %s19, 1
      %s350 = scalar_lea.vmem %s3, %s349
      %p351 = scmp.lt.s32.totalorder %s19, 1
      %s352 = scalar_select %p351, %s19, 1
      %s353 = smul.addr %s352, 16
      %s354 = smul.addr %s353, 4
      %s355 = scalar_lea.vmem %s4, %s354
      %p356 = scmp.lt.s32.totalorder %s19, 1
      %s357 = scalar_select %p356, %s19, 1
      %s358 = scalar_lea.vmem %s5, %s357
      %p359 = scmp.lt.s32.totalorder %s19, 1
      %s360 = scalar_select %p359, %s19, 1
      %s361 = scalar_lea.vmem %s6, %s360
      %p362 = scmp.lt.s32.totalorder %s19, 1
      %s363 = scalar_select %p362, %s19, 1
      %s364 = smul.addr %s363, 144
      %s365 = smul.addr %s364, 4
      %s366 = scalar_lea.vmem %s7, %s365
      %p368 = scmp.eq.s32.totalorder %s19, 0
      // Predicated region
      $region53: #{_lambda_.7} parent=51 // pred_check
        %p369 = pneg %p368
      $region54: #{_lambda_.7} parent=51 // pred_check_branch
        %371 = sbr.rel (%p369) target = $region56
      $region55: #{_lambda_.7} parent=51 // pred_region
        %v372 = vld [vmem:[%s0] sm:$0xff]
        %v373 = vld [vmem:[%s0 + $0x8] sm:$0xff]
        %v374 = vld [vmem:[%s0 + $0x10] sm:$0xff]
        %v375 = vld [vmem:[%s0 + $0x18] sm:$0xff]
        %v376 = vld [vmem:[%s0 + $0x20] sm:$0xff]
        %v377 = vld [vmem:[%s0 + $0x28] sm:$0xff]
        %v378 = vld [vmem:[%s0 + $0x30] sm:$0xff]
        %v379 = vld [vmem:[%s0 + $0x38] sm:$0xff]
        %v380 = vld [vmem:[%s0 + $0x40] sm:$0xff]
        %v381 = vld [vmem:[%s0 + $0x48] sm:$0xff]
        %v382 = vld [vmem:[%s0 + $0x50] sm:$0xff]
        %v383 = vld [vmem:[%s0 + $0x58] sm:$0xff]
        %v384 = vld [vmem:[%s0 + $0x60] sm:$0xff]
        %v385 = vld [vmem:[%s0 + $0x68] sm:$0xff]
        %v386 = vld [vmem:[%s0 + $0x70] sm:$0xff]
        %v387 = vld [vmem:[%s0 + $0x78] sm:$0xff]
        %v388 = vld [vmem:[%s0 + $0x80] sm:$0xff]
        %v389 = vld [vmem:[%s0 + $0x88] sm:$0xff]
        %v390 = vld [vmem:[%s0 + $0x90] sm:$0xff]
        %v391 = vld [vmem:[%s0 + $0x98] sm:$0xff]
        %v392 = vld [vmem:[%s0 + $0xa0] sm:$0xff]
        %v393 = vld [vmem:[%s0 + $0xa8] sm:$0xff]
        %v394 = vld [vmem:[%s0 + $0xb0] sm:$0xff]
        %v395 = vld [vmem:[%s0 + $0xb8] sm:$0xff]
        %v396 = vld [vmem:[%s0 + $0xc0] sm:$0xff]
        %397 = vst [vmem:[#allocation2] sm:$0xff] %v372
        %398 = vst [vmem:[#allocation2 + $0x8] sm:$0xff] %v373
        %399 = vst [vmem:[#allocation2 + $0x10] sm:$0xff] %v374
        %400 = vst [vmem:[#allocation2 + $0x18] sm:$0xff] %v375
        %401 = vst [vmem:[#allocation2 + $0x20] sm:$0xff] %v376
        %402 = vst [vmem:[#allocation2 + $0x28] sm:$0xff] %v377
        %403 = vst [vmem:[#allocation2 + $0x30] sm:$0xff] %v378
        %404 = vst [vmem:[#allocation2 + $0x38] sm:$0xff] %v379
        %405 = vst [vmem:[#allocation2 + $0x40] sm:$0xff] %v380
        %406 = vst [vmem:[#allocation2 + $0x48] sm:$0xff] %v381
        %407 = vst [vmem:[#allocation2 + $0x50] sm:$0xff] %v382
        %408 = vst [vmem:[#allocation2 + $0x58] sm:$0xff] %v383
        %409 = vst [vmem:[#allocation2 + $0x60] sm:$0xff] %v384
        %410 = vst [vmem:[#allocation2 + $0x68] sm:$0xff] %v385
        %411 = vst [vmem:[#allocation2 + $0x70] sm:$0xff] %v386
        %412 = vst [vmem:[#allocation2 + $0x78] sm:$0xff] %v387
        %413 = vst [vmem:[#allocation2 + $0x80] sm:$0xff] %v388
        %414 = vst [vmem:[#allocation2 + $0x88] sm:$0xff] %v389
        %415 = vst [vmem:[#allocation2 + $0x90] sm:$0xff] %v390
        %416 = vst [vmem:[#allocation2 + $0x98] sm:$0xff] %v391
        %417 = vst [vmem:[#allocation2 + $0xa0] sm:$0xff] %v392
        %418 = vst [vmem:[#allocation2 + $0xa8] sm:$0xff] %v393
        %419 = vst [vmem:[#allocation2 + $0xb0] sm:$0xff] %v394
        %420 = vst [vmem:[#allocation2 + $0xb8] sm:$0xff] %v395
        %421 = vst [vmem:[#allocation2 + $0xc0] sm:$0xff] %v396
      $region56: #{_lambda_.7} parent=51 // pred_fallthru
        _
      %v422 = vld [vmem:[#allocation2] sm:$0xff]
      %v423 = vld [vmem:[#allocation2 + $0x8] sm:$0xff]
      %v424 = vld [vmem:[#allocation2 + $0x10] sm:$0xff]
      %v425 = vld [vmem:[#allocation2 + $0x18] sm:$0xff]
      %v426 = vld [vmem:[#allocation2 + $0x20] sm:$0xff]
      %v427 = vld [vmem:[#allocation2 + $0x28] sm:$0xff]
      %v428 = vld [vmem:[#allocation2 + $0x30] sm:$0xff]
      %v429 = vld [vmem:[#allocation2 + $0x38] sm:$0xff]
      %v430 = vld [vmem:[#allocation2 + $0x40] sm:$0xff]
      %v431 = vld [vmem:[#allocation2 + $0x48] sm:$0xff]
      %v432 = vld [vmem:[#allocation2 + $0x50] sm:$0xff]
      %v433 = vld [vmem:[#allocation2 + $0x58] sm:$0xff]
      %v434 = vld [vmem:[#allocation2 + $0x60] sm:$0xff]
      %v435 = vld [vmem:[#allocation2 + $0x68] sm:$0xff]
      %v436 = vld [vmem:[#allocation2 + $0x70] sm:$0xff]
      %v437 = vld [vmem:[#allocation2 + $0x78] sm:$0xff]
      %v438 = vld [vmem:[#allocation2 + $0x80] sm:$0xff]
      %v439 = vld [vmem:[#allocation2 + $0x88] sm:$0xff]
      %v440 = vld [vmem:[#allocation2 + $0x90] sm:$0xff]
      %v441 = vld [vmem:[#allocation2 + $0x98] sm:$0xff]
      %v442 = vld [vmem:[#allocation2 + $0xa0] sm:$0xff]
      %v443 = vld [vmem:[#allocation2 + $0xa8] sm:$0xff]
      %v444 = vld [vmem:[#allocation2 + $0xb0] sm:$0xff]
      %v445 = vld [vmem:[#allocation2 + $0xb8] sm:$0xff]
      %v446 = vld [vmem:[#allocation2 + $0xc0] sm:$0xff]
      %v447 = vld [vmem:[%s347] sm:$0x1]
      %v449 = vlaneseq
      %v450 = vshrl.u32 %v449, 7
      %v451 = vsub.s32 0, %v450
      %v452 = vrot.slane %v447, %v451
      %v454 = vmul.f32 %v422, %v452
      %v455 = vmul.f32 %v423, %v452
      %v456 = vmul.f32 %v424, %v452
      %v457 = vmul.f32 %v425, %v452
      %v458 = vmul.f32 %v426, %v452
      %v459 = vmul.f32 %v427, %v452
      %v460 = vmul.f32 %v428, %v452
      %v461 = vmul.f32 %v429, %v452
      %v462 = vmul.f32 %v430, %v452
      %v463 = vmul.f32 %v431, %v452
      %v464 = vmul.f32 %v432, %v452
      %v465 = vmul.f32 %v433, %v452
      %v466 = vmul.f32 %v434, %v452
      %v467 = vmul.f32 %v435, %v452
      %v468 = vmul.f32 %v436, %v452
      %v469 = vmul.f32 %v437, %v452
      %v470 = vmul.f32 %v438, %v452
      %v471 = vmul.f32 %v439, %v452
      %v472 = vmul.f32 %v440, %v452
      %v473 = vmul.f32 %v441, %v452
      %v474 = vmul.f32 %v442, %v452
      %v475 = vmul.f32 %v443, %v452
      %v476 = vmul.f32 %v444, %v452
      %v477 = vmul.f32 %v445, %v452
      %v478 = vmul.f32 %v446, %v452
      %v479 = vld [vmem:[%s350] sm:$0x1]
      %v481 = vlaneseq
      %v482 = vshrl.u32 %v481, 7
      %v483 = vsub.s32 0, %v482
      %v484 = vrot.slane %v479, %v483
      %v486 = vadd.f32 %v454, %v484
      %v487 = vadd.f32 %v455, %v484
      %v488 = vadd.f32 %v456, %v484
      %v489 = vadd.f32 %v457, %v484
      %v490 = vadd.f32 %v458, %v484
      %v491 = vadd.f32 %v459, %v484
      %v492 = vadd.f32 %v460, %v484
      %v493 = vadd.f32 %v461, %v484
      %v494 = vadd.f32 %v462, %v484
      %v495 = vadd.f32 %v463, %v484
      %v496 = vadd.f32 %v464, %v484
      %v497 = vadd.f32 %v465, %v484
      %v498 = vadd.f32 %v466, %v484
      %v499 = vadd.f32 %v467, %v484
      %v500 = vadd.f32 %v468, %v484
      %v501 = vadd.f32 %v469, %v484
      %v502 = vadd.f32 %v470, %v484
      %v503 = vadd.f32 %v471, %v484
      %v504 = vadd.f32 %v472, %v484
      %v505 = vadd.f32 %v473, %v484
      %v506 = vadd.f32 %v474, %v484
      %v507 = vadd.f32 %v475, %v484
      %v508 = vadd.f32 %v476, %v484
      %v509 = vadd.f32 %v477, %v484
      %v510 = vadd.f32 %v478, %v484
      %v511 = vmax.f32 %v486, 0.0
      %v512 = vmax.f32 %v487, 0.0
      %v513 = vmax.f32 %v488, 0.0
      %v514 = vmax.f32 %v489, 0.0
      %v515 = vmax.f32 %v490, 0.0
      %v516 = vmax.f32 %v491, 0.0
      %v517 = vmax.f32 %v492, 0.0
      %v518 = vmax.f32 %v493, 0.0
      %v519 = vmax.f32 %v494, 0.0
      %v520 = vmax.f32 %v495, 0.0
      %v521 = vmax.f32 %v496, 0.0
      %v522 = vmax.f32 %v497, 0.0
      %v523 = vmax.f32 %v498, 0.0
      %v524 = vmax.f32 %v499, 0.0
      %v525 = vmax.f32 %v500, 0.0
      %v526 = vmax.f32 %v501, 0.0
      %v527 = vmax.f32 %v502, 0.0
      %v528 = vmax.f32 %v503, 0.0
      %v529 = vmax.f32 %v504, 0.0
      %v530 = vmax.f32 %v505, 0.0
      %v531 = vmax.f32 %v506, 0.0
      %v532 = vmax.f32 %v507, 0.0
      %v533 = vmax.f32 %v508, 0.0
      %v534 = vmax.f32 %v509, 0.0
      %v535 = vmax.f32 %v510, 0.0
      %v536 = vpack.c.bf16 %v512, %v511
      %v537 = vpack.c.bf16 %v514, %v513
      %v538 = vpack.c.bf16 %v516, %v515
      %v539 = vpack.c.bf16 %v518, %v517
      %v540 = vpack.c.bf16 %v520, %v519
      %v541 = vpack.c.bf16 %v522, %v521
      %v542 = vpack.c.bf16 %v524, %v523
      %v543 = vpack.c.bf16 %v526, %v525
      %v544 = vpack.c.bf16 %v528, %v527
      %v545 = vpack.c.bf16 %v530, %v529
      %v546 = vpack.c.bf16 %v532, %v531
      %v547 = vpack.c.bf16 %v534, %v533
      %v548 = vpack.c.bf16 %v535, %v535
      %v549 = vld [vmem:[%s355] sm:$0xf]
      %v550 = vld [vmem:[%s355 + $0x4] sm:$0xf]
      %v551 = vld [vmem:[%s355 + $0x8] sm:$0xf]
      %v552 = vld [vmem:[%s355 + $0xc] sm:$0xf]
      %v553 = vld [vmem:[%s355 + $0x10] sm:$0xf]
      %v554 = vld [vmem:[%s355 + $0x14] sm:$0xf]
      %v555 = vld [vmem:[%s355 + $0x18] sm:$0xf]
      %v556 = vld [vmem:[%s355 + $0x1c] sm:$0xf]
      %v557 = vld [vmem:[%s355 + $0x20] sm:$0xf]
      %v558 = vld [vmem:[%s355 + $0x24] sm:$0xf]
      %v559 = vld [vmem:[%s355 + $0x28] sm:$0xf]
      %v560 = vld [vmem:[%s355 + $0x2c] sm:$0xf]
      %v561 = vld [vmem:[%s355 + $0x30] sm:$0xf]
      %v562 = vld [vmem:[%s355 + $0x34] sm:$0xf]
      %v563 = vld [vmem:[%s355 + $0x38] sm:$0xf]
      %v564 = vld [vmem:[%s355 + $0x3c] sm:$0xf]
      %v581 = vunpack.c.l.b16 %v549
      %v582 = vunpack.c.l.b16 %v550
      %v583 = vunpack.c.l.b16 %v551
      %v584 = vunpack.c.l.b16 %v552
      %v585 = vunpack.c.l.b16 %v553
      %v586 = vunpack.c.l.b16 %v554
      %v587 = vunpack.c.l.b16 %v555
      %v588 = vunpack.c.l.b16 %v556
      %v589 = vunpack.c.l.b16 %v557
      %v590 = vunpack.c.l.b16 %v558
      %v591 = vunpack.c.l.b16 %v559
      %v592 = vunpack.c.l.b16 %v560
      %v593 = vunpack.c.l.b16 %v561
      %v594 = vunpack.c.l.b16 %v562
      %v595 = vunpack.c.l.b16 %v563
      %v596 = vunpack.c.l.b16 %v564
      %v597 = vpack.c.b16 %v582, %v581
      %v598 = vpack.c.b16 %v584, %v583
      %v599 = vpack.c.b16 %v586, %v585
      %v600 = vpack.c.b16 %v588, %v587
      %v601 = vpack.c.b16 %v590, %v589
      %v602 = vpack.c.b16 %v592, %v591
      %v603 = vpack.c.b16 %v594, %v593
      %v604 = vpack.c.b16 %v596, %v595
      %613 = vmatprep.subr.bf16.mxu0 0
      %614 = vmatpush1.bf16.msra.mxu0 %v604
      %615 = vmatprep.subr.bf16.mxu0 0
      %616 = vmatpush1.bf16.msra.mxu0 %v603
      %617 = vmatprep.subr.bf16.mxu0 0
      %618 = vmatpush1.bf16.msra.mxu0 %v602
      %619 = vmatprep.subr.bf16.mxu0 0
      %620 = vmatpush1.bf16.msra.mxu0 %v601
      %621 = vmatprep.subr.bf16.mxu0 0
      %622 = vmatpush1.bf16.msra.mxu0 %v600
      %623 = vmatprep.subr.bf16.mxu0 0
      %624 = vmatpush1.bf16.msra.mxu0 %v599
      %625 = vmatprep.subr.bf16.mxu0 0
      %626 = vmatpush1.bf16.msra.mxu0 %v598
      %627 = vmatprep.subr.bf16.mxu0 0
      %628 = vmatpush1.bf16.msra.mxu0 %v597
      %629 = vmatprep.subr.bf16.mxu0 0
      %630 = vmatpush2.bf16.msra.mxu0 0
      %631 = vmatprep.subr.bf16.mxu0 0
      %632 = vmatpush2.bf16.msra.mxu0 0
      %633 = vmatprep.subr.bf16.mxu0 0
      %634 = vmatpush2.bf16.msra.mxu0 0
      %635 = vmatprep.subr.bf16.mxu0 0
      %636 = vmatpush2.bf16.msra.mxu0 0
      %637 = vmatprep.subr.bf16.mxu0 0
      %638 = vmatpush2.bf16.msra.mxu0 0
      %639 = vmatprep.subr.bf16.mxu0 0
      %640 = vmatpush2.bf16.msra.mxu0 0
      %641 = vmatprep.subr.bf16.mxu0 0
      %642 = vmatpush2.bf16.msra.mxu0 0
      %643 = vmatprep.subr.bf16.mxu0 0
      %644 = vmatpush2.bf16.msra.mxu0 0
      %645 = vmatprep.mubr.bf16.mxu0 0
      %646 = vmatmul.mubr.bf16.gmra.mxu0 %v536
      %v647 = vpop.f32.mrf.mxu0
      %v648 = vadd.f32 0.0, %v647
      %v649 = vpop.f32.mrf.mxu0
      %v650 = vpop.f32.mrf.mxu0
      %v651 = vadd.f32 0.0, %v650
      %v652 = vpop.f32.mrf.mxu0
      %653 = vmatprep.mubr.bf16.mxu0 0
      %654 = vmatmul.mubr.bf16.gmra.mxu0 %v537
      %v655 = vpop.f32.mrf.mxu0
      %v656 = vadd.f32 0.0, %v655
      %v657 = vpop.f32.mrf.mxu0
      %v658 = vpop.f32.mrf.mxu0
      %v659 = vadd.f32 0.0, %v658
      %v660 = vpop.f32.mrf.mxu0
      %661 = vmatprep.mubr.bf16.mxu0 0
      %662 = vmatmul.mubr.bf16.gmra.mxu0 %v538
      %v663 = vpop.f32.mrf.mxu0
      %v664 = vadd.f32 0.0, %v663
      %v665 = vpop.f32.mrf.mxu0
      %v666 = vpop.f32.mrf.mxu0
      %v667 = vadd.f32 0.0, %v666
      %v668 = vpop.f32.mrf.mxu0
      %669 = vmatprep.mubr.bf16.mxu0 0
      %670 = vmatmul.mubr.bf16.gmra.mxu0 %v539
      %v671 = vpop.f32.mrf.mxu0
      %v672 = vadd.f32 0.0, %v671
      %v673 = vpop.f32.mrf.mxu0
      %v674 = vpop.f32.mrf.mxu0
      %v675 = vadd.f32 0.0, %v674
      %v676 = vpop.f32.mrf.mxu0
      %677 = vmatprep.mubr.bf16.mxu0 0
      %678 = vmatmul.mubr.bf16.gmra.mxu0 %v540
      %v679 = vpop.f32.mrf.mxu0
      %v680 = vadd.f32 0.0, %v679
      %v681 = vpop.f32.mrf.mxu0
      %v682 = vpop.f32.mrf.mxu0
      %v683 = vadd.f32 0.0, %v682
      %v684 = vpop.f32.mrf.mxu0
      %685 = vmatprep.mubr.bf16.mxu0 0
      %686 = vmatmul.mubr.bf16.gmra.mxu0 %v541
      %v687 = vpop.f32.mrf.mxu0
      %v688 = vadd.f32 0.0, %v687
      %v689 = vpop.f32.mrf.mxu0
      %v690 = vpop.f32.mrf.mxu0
      %v691 = vadd.f32 0.0, %v690
      %v692 = vpop.f32.mrf.mxu0
      %693 = vmatprep.mubr.bf16.mxu0 0
      %694 = vmatmul.mubr.bf16.gmra.mxu0 %v542
      %v695 = vpop.f32.mrf.mxu0
      %v696 = vadd.f32 0.0, %v695
      %v697 = vpop.f32.mrf.mxu0
      %v698 = vpop.f32.mrf.mxu0
      %v699 = vadd.f32 0.0, %v698
      %v700 = vpop.f32.mrf.mxu0
      %701 = vmatprep.mubr.bf16.mxu0 0
      %702 = vmatmul.mubr.bf16.gmra.mxu0 %v543
      %v703 = vpop.f32.mrf.mxu0
      %v704 = vadd.f32 0.0, %v703
      %v705 = vpop.f32.mrf.mxu0
      %v706 = vpop.f32.mrf.mxu0
      %v707 = vadd.f32 0.0, %v706
      %v708 = vpop.f32.mrf.mxu0
      %709 = vmatprep.mubr.bf16.mxu0 0
      %710 = vmatmul.mubr.bf16.gmra.mxu0 %v544
      %v711 = vpop.f32.mrf.mxu0
      %v712 = vadd.f32 0.0, %v711
      %v713 = vpop.f32.mrf.mxu0
      %v714 = vpop.f32.mrf.mxu0
      %v715 = vadd.f32 0.0, %v714
      %v716 = vpop.f32.mrf.mxu0
      %717 = vmatprep.mubr.bf16.mxu0 0
      %718 = vmatmul.mubr.bf16.gmra.mxu0 %v545
      %v719 = vpop.f32.mrf.mxu0
      %v720 = vadd.f32 0.0, %v719
      %v721 = vpop.f32.mrf.mxu0
      %v722 = vpop.f32.mrf.mxu0
      %v723 = vadd.f32 0.0, %v722
      %v724 = vpop.f32.mrf.mxu0
      %725 = vmatprep.mubr.bf16.mxu0 0
      %726 = vmatmul.mubr.bf16.gmra.mxu0 %v546
      %v727 = vpop.f32.mrf.mxu0
      %v728 = vadd.f32 0.0, %v727
      %v729 = vpop.f32.mrf.mxu0
      %v730 = vpop.f32.mrf.mxu0
      %v731 = vadd.f32 0.0, %v730
      %v732 = vpop.f32.mrf.mxu0
      %733 = vmatprep.mubr.bf16.mxu0 0
      %734 = vmatmul.mubr.bf16.gmra.mxu0 %v547
      %v735 = vpop.f32.mrf.mxu0
      %v736 = vadd.f32 0.0, %v735
      %v737 = vpop.f32.mrf.mxu0
      %v738 = vpop.f32.mrf.mxu0
      %v739 = vadd.f32 0.0, %v738
      %v740 = vpop.f32.mrf.mxu0
      %741 = vmatprep.mubr.bf16.mxu0 0
      %742 = vmatmul.mubr.bf16.gmra.mxu0 %v548
      %v743 = vpop.f32.mrf.mxu0
      %v744 = vadd.f32 0.0, %v743
      %v745 = vpop.f32.mrf.mxu0
      %v746 = vpop.f32.mrf.mxu0
      %v747 = vpop.f32.mrf.mxu0
      %748 = vdwg.mxu0
      %v749 = vld [vmem:[%s358] sm:$0x1]
      %v751 = vlaneseq
      %v752 = vshrl.u32 %v751, 7
      %v753 = vsub.s32 0, %v752
      %v754 = vrot.slane %v749, %v753
      %v756 = vmul.f32 %v648, %v754
      %v757 = vmul.f32 %v651, %v754
      %v758 = vmul.f32 %v656, %v754
      %v759 = vmul.f32 %v659, %v754
      %v760 = vmul.f32 %v664, %v754
      %v761 = vmul.f32 %v667, %v754
      %v762 = vmul.f32 %v672, %v754
      %v763 = vmul.f32 %v675, %v754
      %v764 = vmul.f32 %v680, %v754
      %v765 = vmul.f32 %v683, %v754
      %v766 = vmul.f32 %v688, %v754
      %v767 = vmul.f32 %v691, %v754
      %v768 = vmul.f32 %v696, %v754
      %v769 = vmul.f32 %v699, %v754
      %v770 = vmul.f32 %v704, %v754
      %v771 = vmul.f32 %v707, %v754
      %v772 = vmul.f32 %v712, %v754
      %v773 = vmul.f32 %v715, %v754
      %v774 = vmul.f32 %v720, %v754
      %v775 = vmul.f32 %v723, %v754
      %v776 = vmul.f32 %v728, %v754
      %v777 = vmul.f32 %v731, %v754
      %v778 = vmul.f32 %v736, %v754
      %v779 = vmul.f32 %v739, %v754
      %v780 = vmul.f32 %v744, %v754
      %v781 = vld [vmem:[%s361] sm:$0x1]
      %v783 = vlaneseq
      %v784 = vshrl.u32 %v783, 7
      %v785 = vsub.s32 0, %v784
      %v786 = vrot.slane %v781, %v785
      %v788 = vadd.f32 %v756, %v786
      %v789 = vadd.f32 %v757, %v786
      %v790 = vadd.f32 %v758, %v786
      %v791 = vadd.f32 %v759, %v786
      %v792 = vadd.f32 %v760, %v786
      %v793 = vadd.f32 %v761, %v786
      %v794 = vadd.f32 %v762, %v786
      %v795 = vadd.f32 %v763, %v786
      %v796 = vadd.f32 %v764, %v786
      %v797 = vadd.f32 %v765, %v786
      %v798 = vadd.f32 %v766, %v786
      %v799 = vadd.f32 %v767, %v786
      %v800 = vadd.f32 %v768, %v786
      %v801 = vadd.f32 %v769, %v786
      %v802 = vadd.f32 %v770, %v786
      %v803 = vadd.f32 %v771, %v786
      %v804 = vadd.f32 %v772, %v786
      %v805 = vadd.f32 %v773, %v786
      %v806 = vadd.f32 %v774, %v786
      %v807 = vadd.f32 %v775, %v786
      %v808 = vadd.f32 %v776, %v786
      %v809 = vadd.f32 %v777, %v786
      %v810 = vadd.f32 %v778, %v786
      %v811 = vadd.f32 %v779, %v786
      %v812 = vadd.f32 %v780, %v786
      %v813 = vmax.f32 %v788, 0.0
      %v814 = vmax.f32 %v789, 0.0
      %v815 = vmax.f32 %v790, 0.0
      %v816 = vmax.f32 %v791, 0.0
      %v817 = vmax.f32 %v792, 0.0
      %v818 = vmax.f32 %v793, 0.0
      %v819 = vmax.f32 %v794, 0.0
      %v820 = vmax.f32 %v795, 0.0
      %v821 = vmax.f32 %v796, 0.0
      %v822 = vmax.f32 %v797, 0.0
      %v823 = vmax.f32 %v798, 0.0
      %v824 = vmax.f32 %v799, 0.0
      %v825 = vmax.f32 %v800, 0.0
      %v826 = vmax.f32 %v801, 0.0
      %v827 = vmax.f32 %v802, 0.0
      %v828 = vmax.f32 %v803, 0.0
      %v829 = vmax.f32 %v804, 0.0
      %v830 = vmax.f32 %v805, 0.0
      %v831 = vmax.f32 %v806, 0.0
      %v832 = vmax.f32 %v807, 0.0
      %v833 = vmax.f32 %v808, 0.0
      %v834 = vmax.f32 %v809, 0.0
      %v835 = vmax.f32 %v810, 0.0
      %v836 = vmax.f32 %v811, 0.0
      %v837 = vmax.f32 %v812, 0.0
      %838 = vst [vmem:[#allocation3] sm:$0xff] 0.0
      %839 = vst [vmem:[#allocation3 + $0x8] sm:$0xff] 0.0
      %840 = vst [vmem:[#allocation3 + $0x10] sm:$0xff] 0.0
      %841 = vst [vmem:[#allocation3 + $0x18] sm:$0xff] 0.0
      %842 = vst [vmem:[#allocation3 + $0x20] sm:$0xff] 0.0
      %843 = vst [vmem:[#allocation3 + $0x28] sm:$0xff] 0.0
      %844 = vst [vmem:[#allocation3 + $0x30] sm:$0xff] 0.0
      %845 = vst [vmem:[#allocation3 + $0x38] sm:$0xff] 0.0
      %846 = vst [vmem:[#allocation3 + $0x40] sm:$0xff] 0.0
      %847 = vst [vmem:[#allocation3 + $0x48] sm:$0xff] 0.0
      %848 = vst [vmem:[#allocation3 + $0x50] sm:$0xff] 0.0
      %849 = vst [vmem:[#allocation3 + $0x58] sm:$0xff] 0.0
      %850 = vst [vmem:[#allocation3 + $0x60] sm:$0xff] 0.0
      %851 = vst [vmem:[#allocation3 + $0x68] sm:$0xff] 0.0
      %852 = vst [vmem:[#allocation3 + $0x70] sm:$0xff] 0.0
      %853 = vst [vmem:[#allocation3 + $0x78] sm:$0xff] 0.0
      %854 = vst [vmem:[#allocation3 + $0x80] sm:$0xff] 0.0
      %855 = vst [vmem:[#allocation3 + $0x88] sm:$0xff] 0.0
      %856 = vst [vmem:[#allocation3 + $0x90] sm:$0xff] 0.0
      %857 = vst [vmem:[#allocation3 + $0x98] sm:$0xff] 0.0
      %858 = vst [vmem:[#allocation3 + $0xa0] sm:$0xff] 0.0
      %859 = vst [vmem:[#allocation3 + $0xa8] sm:$0xff] 0.0
      %860 = vst [vmem:[#allocation3 + $0xb0] sm:$0xff] 0.0
      %861 = vst [vmem:[#allocation3 + $0xb8] sm:$0xff] 0.0
      %862 = vst [vmem:[#allocation3 + $0xc0] sm:$0xff] 0.0
      %863 = vst [vmem:[#allocation3 + $0xc8] sm:$0xff] 0.0
      %864 = vst [vmem:[#allocation3 + $0xd0] sm:$0xff] 0.0
      %865 = vst [vmem:[#allocation3 + $0xd8] sm:$0xff] 0.0
      %866 = vst [vmem:[#allocation3 + $0xe0] sm:$0xff] 0.0
      %867 = vst [vmem:[#allocation3 + $0x10] sm:$0xff] %v813
      %868 = vst [vmem:[#allocation3 + $0x18] sm:$0xff] %v814
      %869 = vst [vmem:[#allocation3 + $0x20] sm:$0xff] %v815
      %870 = vst [vmem:[#allocation3 + $0x28] sm:$0xff] %v816
      %871 = vst [vmem:[#allocation3 + $0x30] sm:$0xff] %v817
      %872 = vst [vmem:[#allocation3 + $0x38] sm:$0xff] %v818
      %873 = vst [vmem:[#allocation3 + $0x40] sm:$0xff] %v819
      %874 = vst [vmem:[#allocation3 + $0x48] sm:$0xff] %v820
      %875 = vst [vmem:[#allocation3 + $0x50] sm:$0xff] %v821
      %876 = vst [vmem:[#allocation3 + $0x58] sm:$0xff] %v822
      %877 = vst [vmem:[#allocation3 + $0x60] sm:$0xff] %v823
      %878 = vst [vmem:[#allocation3 + $0x68] sm:$0xff] %v824
      %879 = vst [vmem:[#allocation3 + $0x70] sm:$0xff] %v825
      %880 = vst [vmem:[#allocation3 + $0x78] sm:$0xff] %v826
      %881 = vst [vmem:[#allocation3 + $0x80] sm:$0xff] %v827
      %882 = vst [vmem:[#allocation3 + $0x88] sm:$0xff] %v828
      %883 = vst [vmem:[#allocation3 + $0x90] sm:$0xff] %v829
      %884 = vst [vmem:[#allocation3 + $0x98] sm:$0xff] %v830
      %885 = vst [vmem:[#allocation3 + $0xa0] sm:$0xff] %v831
      %886 = vst [vmem:[#allocation3 + $0xa8] sm:$0xff] %v832
      %887 = vst [vmem:[#allocation3 + $0xb0] sm:$0xff] %v833
      %888 = vst [vmem:[#allocation3 + $0xb8] sm:$0xff] %v834
      %889 = vst [vmem:[#allocation3 + $0xc0] sm:$0xff] %v835
      %890 = vst [vmem:[#allocation3 + $0xc8] sm:$0xff] %v836
      %891 = vst [vmem:[#allocation3 + $0xd0] sm:$0xff] %v837
      %v892 = vld [vmem:[#allocation3 + $0x5] sm:$0xff]
      %v893 = vld [vmem:[#allocation3 + $0xd] sm:$0xff]
      %v894 = vld [vmem:[#allocation3 + $0x15] sm:$0xff]
      %v895 = vld [vmem:[#allocation3 + $0x1d] sm:$0xff]
      %v896 = vld [vmem:[#allocation3 + $0x25] sm:$0xff]
      %v897 = vld [vmem:[#allocation3 + $0x2d] sm:$0xff]
      %v898 = vld [vmem:[#allocation3 + $0x35] sm:$0xff]
      %v899 = vld [vmem:[#allocation3 + $0x3d] sm:$0xff]
      %v900 = vld [vmem:[#allocation3 + $0x45] sm:$0xff]
      %v901 = vld [vmem:[#allocation3 + $0x4d] sm:$0xff]
      %v902 = vld [vmem:[#allocation3 + $0x55] sm:$0xff]
      %v903 = vld [vmem:[#allocation3 + $0x5d] sm:$0xff]
      %v904 = vld [vmem:[#allocation3 + $0x65] sm:$0xff]
      %v905 = vld [vmem:[#allocation3 + $0x6d] sm:$0xff]
      %v906 = vld [vmem:[#allocation3 + $0x75] sm:$0xff]
      %v907 = vld [vmem:[#allocation3 + $0x7d] sm:$0xff]
      %v908 = vld [vmem:[#allocation3 + $0x85] sm:$0xff]
      %v909 = vld [vmem:[#allocation3 + $0x8d] sm:$0xff]
      %v910 = vld [vmem:[#allocation3 + $0x95] sm:$0xff]
      %v911 = vld [vmem:[#allocation3 + $0x9d] sm:$0xff]
      %v912 = vld [vmem:[#allocation3 + $0xa5] sm:$0xff]
      %v913 = vld [vmem:[#allocation3 + $0xad] sm:$0xff]
      %v914 = vld [vmem:[#allocation3 + $0xb5] sm:$0xff]
      %v915 = vld [vmem:[#allocation3 + $0xbd] sm:$0xff]
      %v916 = vld [vmem:[#allocation3 + $0xc5] sm:$0xff]
      %v917 = vpack.c.bf16 %v893, %v892
      %v918 = vpack.c.bf16 %v895, %v894
      %v919 = vpack.c.bf16 %v897, %v896
      %v920 = vpack.c.bf16 %v899, %v898
      %v921 = vpack.c.bf16 %v901, %v900
      %v922 = vpack.c.bf16 %v903, %v902
      %v923 = vpack.c.bf16 %v905, %v904
      %v924 = vpack.c.bf16 %v907, %v906
      %v925 = vpack.c.bf16 %v909, %v908
      %v926 = vpack.c.bf16 %v911, %v910
      %v927 = vpack.c.bf16 %v913, %v912
      %v928 = vpack.c.bf16 %v915, %v914
      %v929 = vpack.c.bf16 %v916, %v916
      %v930 = vld [vmem:[%s366] sm:$0xf]
      %v931 = vld [vmem:[%s366 + $0x4] sm:$0xf]
      %v932 = vld [vmem:[%s366 + $0x8] sm:$0xf]
      %v933 = vld [vmem:[%s366 + $0xc] sm:$0xf]
      %v934 = vld [vmem:[%s366 + $0x10] sm:$0xf]
      %v935 = vld [vmem:[%s366 + $0x14] sm:$0xf]
      %v936 = vld [vmem:[%s366 + $0x18] sm:$0xf]
      %v937 = vld [vmem:[%s366 + $0x1c] sm:$0xf]
      %v938 = vld [vmem:[%s366 + $0x20] sm:$0xf]
      %v939 = vld [vmem:[%s366 + $0x24] sm:$0xf]
      %v940 = vld [vmem:[%s366 + $0x28] sm:$0xf]
      %v941 = vld [vmem:[%s366 + $0x2c] sm:$0xf]
      %v942 = vld [vmem:[%s366 + $0x30] sm:$0xf]
      %v943 = vld [vmem:[%s366 + $0x34] sm:$0xf]
      %v944 = vld [vmem:[%s366 + $0x38] sm:$0xf]
      %v945 = vld [vmem:[%s366 + $0x3c] sm:$0xf]
      %v962 = vunpack.c.l.b16 %v930
      %v963 = vunpack.c.l.b16 %v931
      %v964 = vunpack.c.l.b16 %v932
      %v965 = vunpack.c.l.b16 %v933
      %v966 = vunpack.c.l.b16 %v934
      %v967 = vunpack.c.l.b16 %v935
      %v968 = vunpack.c.l.b16 %v936
      %v969 = vunpack.c.l.b16 %v937
      %v970 = vunpack.c.l.b16 %v938
      %v971 = vunpack.c.l.b16 %v939
      %v972 = vunpack.c.l.b16 %v940
      %v973 = vunpack.c.l.b16 %v941
      %v974 = vunpack.c.l.b16 %v942
      %v975 = vunpack.c.l.b16 %v943
      %v976 = vunpack.c.l.b16 %v944
      %v977 = vunpack.c.l.b16 %v945
      %v978 = vpack.c.b16 %v963, %v962
      %v979 = vpack.c.b16 %v965, %v964
      %v980 = vpack.c.b16 %v967, %v966
      %v981 = vpack.c.b16 %v969, %v968
      %v982 = vpack.c.b16 %v971, %v970
      %v983 = vpack.c.b16 %v973, %v972
      %v984 = vpack.c.b16 %v975, %v974
      %v985 = vpack.c.b16 %v977, %v976
      %994 = vmatprep.subr.bf16.mxu0 0
      %995 = vmatpush1.bf16.msra.mxu0 %v985
      %996 = vmatprep.subr.bf16.mxu0 0
      %997 = vmatpush1.bf16.msra.mxu0 %v984
      %998 = vmatprep.subr.bf16.mxu0 0
      %999 = vmatpush1.bf16.msra.mxu0 %v983
      %1000 = vmatprep.subr.bf16.mxu0 0
      %1001 = vmatpush1.bf16.msra.mxu0 %v982
      %1002 = vmatprep.subr.bf16.mxu0 0
      %1003 = vmatpush1.bf16.msra.mxu0 %v981
      %1004 = vmatprep.subr.bf16.mxu0 0
      %1005 = vmatpush1.bf16.msra.mxu0 %v980
      %1006 = vmatprep.subr.bf16.mxu0 0
      %1007 = vmatpush1.bf16.msra.mxu0 %v979
      %1008 = vmatprep.subr.bf16.mxu0 0
      %1009 = vmatpush1.bf16.msra.mxu0 %v978
      %1010 = vmatprep.subr.bf16.mxu0 0
      %1011 = vmatpush2.bf16.msra.mxu0 0
      %1012 = vmatprep.subr.bf16.mxu0 0
      %1013 = vmatpush2.bf16.msra.mxu0 0
      %1014 = vmatprep.subr.bf16.mxu0 0
      %1015 = vmatpush2.bf16.msra.mxu0 0
      %1016 = vmatprep.subr.bf16.mxu0 0
      %1017 = vmatpush2.bf16.msra.mxu0 0
      %1018 = vmatprep.subr.bf16.mxu0 0
      %1019 = vmatpush2.bf16.msra.mxu0 0
      %1020 = vmatprep.subr.bf16.mxu0 0
      %1021 = vmatpush2.bf16.msra.mxu0 0
      %1022 = vmatprep.subr.bf16.mxu0 0
      %1023 = vmatpush2.bf16.msra.mxu0 0
      %1024 = vmatprep.subr.bf16.mxu0 0
      %1025 = vmatpush2.bf16.msra.mxu0 0
      %1026 = vmatprep.mubr.bf16.mxu0 0
      %1027 = vmatmul.mubr.bf16.gmra.mxu0 %v917
      %v1028 = vpop.f32.mrf.mxu0
      %v1029 = vadd.f32 0.0, %v1028
      %v1030 = vpop.f32.mrf.mxu0
      %v1031 = vpop.f32.mrf.mxu0
      %v1032 = vadd.f32 0.0, %v1031
      %v1033 = vpop.f32.mrf.mxu0
      %1034 = vmatprep.mubr.bf16.mxu0 0
      %1035 = vmatmul.mubr.bf16.gmra.mxu0 %v918
      %v1036 = vpop.f32.mrf.mxu0
      %v1037 = vadd.f32 0.0, %v1036
      %v1038 = vpop.f32.mrf.mxu0
      %v1039 = vpop.f32.mrf.mxu0
      %v1040 = vadd.f32 0.0, %v1039
      %v1041 = vpop.f32.mrf.mxu0
      %1042 = vmatprep.mubr.bf16.mxu0 0
      %1043 = vmatmul.mubr.bf16.gmra.mxu0 %v919
      %v1044 = vpop.f32.mrf.mxu0
      %v1045 = vadd.f32 0.0, %v1044
      %v1046 = vpop.f32.mrf.mxu0
      %v1047 = vpop.f32.mrf.mxu0
      %v1048 = vadd.f32 0.0, %v1047
      %v1049 = vpop.f32.mrf.mxu0
      %1050 = vmatprep.mubr.bf16.mxu0 0
      %1051 = vmatmul.mubr.bf16.gmra.mxu0 %v920
      %v1052 = vpop.f32.mrf.mxu0
      %v1053 = vadd.f32 0.0, %v1052
      %v1054 = vpop.f32.mrf.mxu0
      %v1055 = vpop.f32.mrf.mxu0
      %v1056 = vadd.f32 0.0, %v1055
      %v1057 = vpop.f32.mrf.mxu0
      %1058 = vmatprep.mubr.bf16.mxu0 0
      %1059 = vmatmul.mubr.bf16.gmra.mxu0 %v921
      %v1060 = vpop.f32.mrf.mxu0
      %v1061 = vadd.f32 0.0, %v1060
      %v1062 = vpop.f32.mrf.mxu0
      %v1063 = vpop.f32.mrf.mxu0
      %v1064 = vadd.f32 0.0, %v1063
      %v1065 = vpop.f32.mrf.mxu0
      %1066 = vmatprep.mubr.bf16.mxu0 0
      %1067 = vmatmul.mubr.bf16.gmra.mxu0 %v922
      %v1068 = vpop.f32.mrf.mxu0
      %v1069 = vadd.f32 0.0, %v1068
      %v1070 = vpop.f32.mrf.mxu0
      %v1071 = vpop.f32.mrf.mxu0
      %v1072 = vadd.f32 0.0, %v1071
      %v1073 = vpop.f32.mrf.mxu0
      %1074 = vmatprep.mubr.bf16.mxu0 0
      %1075 = vmatmul.mubr.bf16.gmra.mxu0 %v923
      %v1076 = vpop.f32.mrf.mxu0
      %v1077 = vadd.f32 0.0, %v1076
      %v1078 = vpop.f32.mrf.mxu0
      %v1079 = vpop.f32.mrf.mxu0
      %v1080 = vadd.f32 0.0, %v1079
      %v1081 = vpop.f32.mrf.mxu0
      %1082 = vmatprep.mubr.bf16.mxu0 0
      %1083 = vmatmul.mubr.bf16.gmra.mxu0 %v924
      %v1084 = vpop.f32.mrf.mxu0
      %v1085 = vadd.f32 0.0, %v1084
      %v1086 = vpop.f32.mrf.mxu0
      %v1087 = vpop.f32.mrf.mxu0
      %v1088 = vadd.f32 0.0, %v1087
      %v1089 = vpop.f32.mrf.mxu0
      %1090 = vmatprep.mubr.bf16.mxu0 0
      %1091 = vmatmul.mubr.bf16.gmra.mxu0 %v925
      %v1092 = vpop.f32.mrf.mxu0
      %v1093 = vadd.f32 0.0, %v1092
      %v1094 = vpop.f32.mrf.mxu0
      %v1095 = vpop.f32.mrf.mxu0
      %v1096 = vadd.f32 0.0, %v1095
      %v1097 = vpop.f32.mrf.mxu0
      %1098 = vmatprep.mubr.bf16.mxu0 0
      %1099 = vmatmul.mubr.bf16.gmra.mxu0 %v926
      %v1100 = vpop.f32.mrf.mxu0
      %v1101 = vadd.f32 0.0, %v1100
      %v1102 = vpop.f32.mrf.mxu0
      %v1103 = vpop.f32.mrf.mxu0
      %v1104 = vadd.f32 0.0, %v1103
      %v1105 = vpop.f32.mrf.mxu0
      %1106 = vmatprep.mubr.bf16.mxu0 0
      %1107 = vmatmul.mubr.bf16.gmra.mxu0 %v927
      %v1108 = vpop.f32.mrf.mxu0
      %v1109 = vadd.f32 0.0, %v1108
      %v1110 = vpop.f32.mrf.mxu0
      %v1111 = vpop.f32.mrf.mxu0
      %v1112 = vadd.f32 0.0, %v1111
      %v1113 = vpop.f32.mrf.mxu0
      %1114 = vmatprep.mubr.bf16.mxu0 0
      %1115 = vmatmul.mubr.bf16.gmra.mxu0 %v928
      %v1116 = vpop.f32.mrf.mxu0
      %v1117 = vadd.f32 0.0, %v1116
      %v1118 = vpop.f32.mrf.mxu0
      %v1119 = vpop.f32.mrf.mxu0
      %v1120 = vadd.f32 0.0, %v1119
      %v1121 = vpop.f32.mrf.mxu0
      %1122 = vmatprep.mubr.bf16.mxu0 0
      %1123 = vmatmul.mubr.bf16.gmra.mxu0 %v929
      %v1124 = vpop.f32.mrf.mxu0
      %v1125 = vadd.f32 0.0, %v1124
      %v1126 = vpop.f32.mrf.mxu0
      %v1127 = vpop.f32.mrf.mxu0
      %v1128 = vpop.f32.mrf.mxu0
      %1129 = vdwg.mxu0
      %v1130 = vld [vmem:[%s1] sm:$0xff]
      %v1131 = vld [vmem:[%s1 + $0x8] sm:$0xff]
      %v1132 = vld [vmem:[%s1 + $0x10] sm:$0xff]
      %v1133 = vld [vmem:[%s1 + $0x18] sm:$0xff]
      %v1134 = vld [vmem:[%s1 + $0x20] sm:$0xff]
      %v1135 = vld [vmem:[%s1 + $0x28] sm:$0xff]
      %v1136 = vld [vmem:[%s1 + $0x30] sm:$0xff]
      %v1137 = vld [vmem:[%s1 + $0x38] sm:$0xff]
      %v1138 = vld [vmem:[%s1 + $0x40] sm:$0xff]
      %v1139 = vld [vmem:[%s1 + $0x48] sm:$0xff]
      %v1140 = vld [vmem:[%s1 + $0x50] sm:$0xff]
      %v1141 = vld [vmem:[%s1 + $0x58] sm:$0xff]
      %v1142 = vld [vmem:[%s1 + $0x60] sm:$0xff]
      %v1143 = vld [vmem:[%s1 + $0x68] sm:$0xff]
      %v1144 = vld [vmem:[%s1 + $0x70] sm:$0xff]
      %v1145 = vld [vmem:[%s1 + $0x78] sm:$0xff]
      %v1146 = vld [vmem:[%s1 + $0x80] sm:$0xff]
      %v1147 = vld [vmem:[%s1 + $0x88] sm:$0xff]
      %v1148 = vld [vmem:[%s1 + $0x90] sm:$0xff]
      %v1149 = vld [vmem:[%s1 + $0x98] sm:$0xff]
      %v1150 = vld [vmem:[%s1 + $0xa0] sm:$0xff]
      %v1151 = vld [vmem:[%s1 + $0xa8] sm:$0xff]
      %v1152 = vld [vmem:[%s1 + $0xb0] sm:$0xff]
      %v1153 = vld [vmem:[%s1 + $0xb8] sm:$0xff]
      %v1154 = vld [vmem:[%s1 + $0xc0] sm:$0xff]
      %1156 = vset.pattern.permute.xlu0 0
      %1157 = vperm.xlu0 %1156, %v1130
      %v1158 = vpop.permute.xlu0 %1157
      %1161 = vset.pattern.permute.xlu0 0
      %1162 = vperm.xlu0 %1161, %v1131
      %v1163 = vpop.permute.xlu0 %1162
      %1166 = vset.pattern.permute.xlu0 0
      %1167 = vperm.xlu0 %1166, %v1132
      %v1168 = vpop.permute.xlu0 %1167
      %1171 = vset.pattern.permute.xlu0 0
      %1172 = vperm.xlu0 %1171, %v1133
      %v1173 = vpop.permute.xlu0 %1172
      %1176 = vset.pattern.permute.xlu0 0
      %1177 = vperm.xlu0 %1176, %v1134
      %v1178 = vpop.permute.xlu0 %1177
      %1181 = vset.pattern.permute.xlu0 0
      %1182 = vperm.xlu0 %1181, %v1135
      %v1183 = vpop.permute.xlu0 %1182
      %1186 = vset.pattern.permute.xlu0 0
      %1187 = vperm.xlu0 %1186, %v1136
      %v1188 = vpop.permute.xlu0 %1187
      %1191 = vset.pattern.permute.xlu0 0
      %1192 = vperm.xlu0 %1191, %v1137
      %v1193 = vpop.permute.xlu0 %1192
      %1196 = vset.pattern.permute.xlu0 0
      %1197 = vperm.xlu0 %1196, %v1138
      %v1198 = vpop.permute.xlu0 %1197
      %1201 = vset.pattern.permute.xlu0 0
      %1202 = vperm.xlu0 %1201, %v1139
      %v1203 = vpop.permute.xlu0 %1202
      %1206 = vset.pattern.permute.xlu0 0
      %1207 = vperm.xlu0 %1206, %v1140
      %v1208 = vpop.permute.xlu0 %1207
      %1211 = vset.pattern.permute.xlu0 0
      %1212 = vperm.xlu0 %1211, %v1141
      %v1213 = vpop.permute.xlu0 %1212
      %1216 = vset.pattern.permute.xlu0 0
      %1217 = vperm.xlu0 %1216, %v1142
      %v1218 = vpop.permute.xlu0 %1217
      %1221 = vset.pattern.permute.xlu0 0
      %1222 = vperm.xlu0 %1221, %v1143
      %v1223 = vpop.permute.xlu0 %1222
      %1226 = vset.pattern.permute.xlu0 0
      %1227 = vperm.xlu0 %1226, %v1144
      %v1228 = vpop.permute.xlu0 %1227
      %1231 = vset.pattern.permute.xlu0 0
      %1232 = vperm.xlu0 %1231, %v1145
      %v1233 = vpop.permute.xlu0 %1232
      %1236 = vset.pattern.permute.xlu0 0
      %1237 = vperm.xlu0 %1236, %v1146
      %v1238 = vpop.permute.xlu0 %1237
      %1241 = vset.pattern.permute.xlu0 0
      %1242 = vperm.xlu0 %1241, %v1147
      %v1243 = vpop.permute.xlu0 %1242
      %1246 = vset.pattern.permute.xlu0 0
      %1247 = vperm.xlu0 %1246, %v1148
      %v1248 = vpop.permute.xlu0 %1247
      %1251 = vset.pattern.permute.xlu0 0
      %1252 = vperm.xlu0 %1251, %v1149
      %v1253 = vpop.permute.xlu0 %1252
      %1256 = vset.pattern.permute.xlu0 0
      %1257 = vperm.xlu0 %1256, %v1150
      %v1258 = vpop.permute.xlu0 %1257
      %1261 = vset.pattern.permute.xlu0 0
      %1262 = vperm.xlu0 %1261, %v1151
      %v1263 = vpop.permute.xlu0 %1262
      %1266 = vset.pattern.permute.xlu0 0
      %1267 = vperm.xlu0 %1266, %v1152
      %v1268 = vpop.permute.xlu0 %1267
      %1271 = vset.pattern.permute.xlu0 0
      %1272 = vperm.xlu0 %1271, %v1153
      %v1273 = vpop.permute.xlu0 %1272
      %1276 = vset.pattern.permute.xlu0 0
      %1277 = vperm.xlu0 %1276, %v1154
      %v1278 = vpop.permute.xlu0 %1277
      %v1280 = vmul.f32 %v1029, %v1158
      %v1281 = vmul.f32 %v1032, %v1163
      %v1282 = vmul.f32 %v1037, %v1168
      %v1283 = vmul.f32 %v1040, %v1173
      %v1284 = vmul.f32 %v1045, %v1178
      %v1285 = vmul.f32 %v1048, %v1183
      %v1286 = vmul.f32 %v1053, %v1188
      %v1287 = vmul.f32 %v1056, %v1193
      %v1288 = vmul.f32 %v1061, %v1198
      %v1289 = vmul.f32 %v1064, %v1203
      %v1290 = vmul.f32 %v1069, %v1208
      %v1291 = vmul.f32 %v1072, %v1213
      %v1292 = vmul.f32 %v1077, %v1218
      %v1293 = vmul.f32 %v1080, %v1223
      %v1294 = vmul.f32 %v1085, %v1228
      %v1295 = vmul.f32 %v1088, %v1233
      %v1296 = vmul.f32 %v1093, %v1238
      %v1297 = vmul.f32 %v1096, %v1243
      %v1298 = vmul.f32 %v1101, %v1248
      %v1299 = vmul.f32 %v1104, %v1253
      %v1300 = vmul.f32 %v1109, %v1258
      %v1301 = vmul.f32 %v1112, %v1263
      %v1302 = vmul.f32 %v1117, %v1268
      %v1303 = vmul.f32 %v1120, %v1273
      %v1304 = vmul.f32 %v1125, %v1278
      %v1305 = vadd.f32 %v1280, 0.0
      %v1306 = vadd.f32 %v1281, 0.0
      %v1307 = vadd.f32 %v1282, 0.0
      %v1308 = vadd.f32 %v1283, 0.0
      %v1309 = vadd.f32 %v1284, 0.0
      %v1310 = vadd.f32 %v1285, 0.0
      %v1311 = vadd.f32 %v1286, 0.0
      %v1312 = vadd.f32 %v1287, 0.0
      %v1313 = vadd.f32 %v1288, 0.0
      %v1314 = vadd.f32 %v1289, 0.0
      %v1315 = vadd.f32 %v1290, 0.0
      %v1316 = vadd.f32 %v1291, 0.0
      %v1317 = vadd.f32 %v1292, 0.0
      %v1318 = vadd.f32 %v1293, 0.0
      %v1319 = vadd.f32 %v1294, 0.0
      %v1320 = vadd.f32 %v1295, 0.0
      %v1321 = vadd.f32 %v1296, 0.0
      %v1322 = vadd.f32 %v1297, 0.0
      %v1323 = vadd.f32 %v1298, 0.0
      %v1324 = vadd.f32 %v1299, 0.0
      %v1325 = vadd.f32 %v1300, 0.0
      %v1326 = vadd.f32 %v1301, 0.0
      %v1327 = vadd.f32 %v1302, 0.0
      %v1328 = vadd.f32 %v1303, 0.0
      %v1329 = vadd.f32 %v1304, 0.0
      %v1330 = vld [vmem:[#allocation3 + $0x6] sm:$0xff]
      %v1331 = vld [vmem:[#allocation3 + $0xe] sm:$0xff]
      %v1332 = vld [vmem:[#allocation3 + $0x16] sm:$0xff]
      %v1333 = vld [vmem:[#allocation3 + $0x1e] sm:$0xff]
      %v1334 = vld [vmem:[#allocation3 + $0x26] sm:$0xff]
      %v1335 = vld [vmem:[#allocation3 + $0x2e] sm:$0xff]
      %v1336 = vld [vmem:[#allocation3 + $0x36] sm:$0xff]
      %v1337 = vld [vmem:[#allocation3 + $0x3e] sm:$0xff]
      %v1338 = vld [vmem:[#allocation3 + $0x46] sm:$0xff]
      %v1339 = vld [vmem:[#allocation3 + $0x4e] sm:$0xff]
      %v1340 = vld [vmem:[#allocation3 + $0x56] sm:$0xff]
      %v1341 = vld [vmem:[#allocation3 + $0x5e] sm:$0xff]
      %v1342 = vld [vmem:[#allocation3 + $0x66] sm:$0xff]
      %v1343 = vld [vmem:[#allocation3 + $0x6e] sm:$0xff]
      %v1344 = vld [vmem:[#allocation3 + $0x76] sm:$0xff]
      %v1345 = vld [vmem:[#allocation3 + $0x7e] sm:$0xff]
      %v1346 = vld [vmem:[#allocation3 + $0x86] sm:$0xff]
      %v1347 = vld [vmem:[#allocation3 + $0x8e] sm:$0xff]
      %v1348 = vld [vmem:[#allocation3 + $0x96] sm:$0xff]
      %v1349 = vld [vmem:[#allocation3 + $0x9e] sm:$0xff]
      %v1350 = vld [vmem:[#allocation3 + $0xa6] sm:$0xff]
      %v1351 = vld [vmem:[#allocation3 + $0xae] sm:$0xff]
      %v1352 = vld [vmem:[#allocation3 + $0xb6] sm:$0xff]
      %v1353 = vld [vmem:[#allocation3 + $0xbe] sm:$0xff]
      %v1354 = vld [vmem:[#allocation3 + $0xc6] sm:$0xff]
      %v1355 = vpack.c.bf16 %v1331, %v1330
      %v1356 = vpack.c.bf16 %v1333, %v1332
      %v1357 = vpack.c.bf16 %v1335, %v1334
      %v1358 = vpack.c.bf16 %v1337, %v1336
      %v1359 = vpack.c.bf16 %v1339, %v1338
      %v1360 = vpack.c.bf16 %v1341, %v1340
      %v1361 = vpack.c.bf16 %v1343, %v1342
      %v1362 = vpack.c.bf16 %v1345, %v1344
      %v1363 = vpack.c.bf16 %v1347, %v1346
      %v1364 = vpack.c.bf16 %v1349, %v1348
      %v1365 = vpack.c.bf16 %v1351, %v1350
      %v1366 = vpack.c.bf16 %v1353, %v1352
      %v1367 = vpack.c.bf16 %v1354, %v1354
      %s1368 = scalar_lea.vmem %s366, 64
      %v1369 = vld [vmem:[%s1368] sm:$0xf]
      %v1370 = vld [vmem:[%s1368 + $0x4] sm:$0xf]
      %v1371 = vld [vmem:[%s1368 + $0x8] sm:$0xf]
      %v1372 = vld [vmem:[%s1368 + $0xc] sm:$0xf]
      %v1373 = vld [vmem:[%s1368 + $0x10] sm:$0xf]
      %v1374 = vld [vmem:[%s1368 + $0x14] sm:$0xf]
      %v1375 = vld [vmem:[%s1368 + $0x18] sm:$0xf]
      %v1376 = vld [vmem:[%s1368 + $0x1c] sm:$0xf]
      %v1377 = vld [vmem:[%s1368 + $0x20] sm:$0xf]
      %v1378 = vld [vmem:[%s1368 + $0x24] sm:$0xf]
      %v1379 = vld [vmem:[%s1368 + $0x28] sm:$0xf]
      %v1380 = vld [vmem:[%s1368 + $0x2c] sm:$0xf]
      %v1381 = vld [vmem:[%s1368 + $0x30] sm:$0xf]
      %v1382 = vld [vmem:[%s1368 + $0x34] sm:$0xf]
      %v1383 = vld [vmem:[%s1368 + $0x38] sm:$0xf]
      %v1384 = vld [vmem:[%s1368 + $0x3c] sm:$0xf]
      %v1401 = vunpack.c.l.b16 %v1369
      %v1402 = vunpack.c.l.b16 %v1370
      %v1403 = vunpack.c.l.b16 %v1371
      %v1404 = vunpack.c.l.b16 %v1372
      %v1405 = vunpack.c.l.b16 %v1373
      %v1406 = vunpack.c.l.b16 %v1374
      %v1407 = vunpack.c.l.b16 %v1375
      %v1408 = vunpack.c.l.b16 %v1376
      %v1409 = vunpack.c.l.b16 %v1377
      %v1410 = vunpack.c.l.b16 %v1378
      %v1411 = vunpack.c.l.b16 %v1379
      %v1412 = vunpack.c.l.b16 %v1380
      %v1413 = vunpack.c.l.b16 %v1381
      %v1414 = vunpack.c.l.b16 %v1382
      %v1415 = vunpack.c.l.b16 %v1383
      %v1416 = vunpack.c.l.b16 %v1384
      %v1417 = vpack.c.b16 %v1402, %v1401
      %v1418 = vpack.c.b16 %v1404, %v1403
      %v1419 = vpack.c.b16 %v1406, %v1405
      %v1420 = vpack.c.b16 %v1408, %v1407
      %v1421 = vpack.c.b16 %v1410, %v1409
      %v1422 = vpack.c.b16 %v1412, %v1411
      %v1423 = vpack.c.b16 %v1414, %v1413
      %v1424 = vpack.c.b16 %v1416, %v1415
      %1433 = vmatprep.subr.bf16.mxu0 0
      %1434 = vmatpush1.bf16.msra.mxu0 %v1424
      %1435 = vmatprep.subr.bf16.mxu0 0
      %1436 = vmatpush1.bf16.msra.mxu0 %v1423
      %1437 = vmatprep.subr.bf16.mxu0 0
      %1438 = vmatpush1.bf16.msra.mxu0 %v1422
      %1439 = vmatprep.subr.bf16.mxu0 0
      %1440 = vmatpush1.bf16.msra.mxu0 %v1421
      %1441 = vmatprep.subr.bf16.mxu0 0
      %1442 = vmatpush1.bf16.msra.mxu0 %v1420
      %1443 = vmatprep.subr.bf16.mxu0 0
      %1444 = vmatpush1.bf16.msra.mxu0 %v1419
      %1445 = vmatprep.subr.bf16.mxu0 0
      %1446 = vmatpush1.bf16.msra.mxu0 %v1418
      %1447 = vmatprep.subr.bf16.mxu0 0
      %1448 = vmatpush1.bf16.msra.mxu0 %v1417
      %1449 = vmatprep.subr.bf16.mxu0 0
      %1450 = vmatpush2.bf16.msra.mxu0 0
      %1451 = vmatprep.subr.bf16.mxu0 0
      %1452 = vmatpush2.bf16.msra.mxu0 0
      %1453 = vmatprep.subr.bf16.mxu0 0
      %1454 = vmatpush2.bf16.msra.mxu0 0
      %1455 = vmatprep.subr.bf16.mxu0 0
      %1456 = vmatpush2.bf16.msra.mxu0 0
      %1457 = vmatprep.subr.bf16.mxu0 0
      %1458 = vmatpush2.bf16.msra.mxu0 0
      %1459 = vmatprep.subr.bf16.mxu0 0
      %1460 = vmatpush2.bf16.msra.mxu0 0
      %1461 = vmatprep.subr.bf16.mxu0 0
      %1462 = vmatpush2.bf16.msra.mxu0 0
      %1463 = vmatprep.subr.bf16.mxu0 0
      %1464 = vmatpush2.bf16.msra.mxu0 0
      %1465 = vmatprep.mubr.bf16.mxu0 0
      %1466 = vmatmul.mubr.bf16.gmra.mxu0 %v1355
      %v1467 = vpop.f32.mrf.mxu0
      %v1468 = vadd.f32 0.0, %v1467
      %v1469 = vpop.f32.mrf.mxu0
      %v1470 = vpop.f32.mrf.mxu0
      %v1471 = vadd.f32 0.0, %v1470
      %v1472 = vpop.f32.mrf.mxu0
      %1473 = vmatprep.mubr.bf16.mxu0 0
      %1474 = vmatmul.mubr.bf16.gmra.mxu0 %v1356
      %v1475 = vpop.f32.mrf.mxu0
      %v1476 = vadd.f32 0.0, %v1475
      %v1477 = vpop.f32.mrf.mxu0
      %v1478 = vpop.f32.mrf.mxu0
      %v1479 = vadd.f32 0.0, %v1478
      %v1480 = vpop.f32.mrf.mxu0
      %1481 = vmatprep.mubr.bf16.mxu0 0
      %1482 = vmatmul.mubr.bf16.gmra.mxu0 %v1357
      %v1483 = vpop.f32.mrf.mxu0
      %v1484 = vadd.f32 0.0, %v1483
      %v1485 = vpop.f32.mrf.mxu0
      %v1486 = vpop.f32.mrf.mxu0
      %v1487 = vadd.f32 0.0, %v1486
      %v1488 = vpop.f32.mrf.mxu0
      %1489 = vmatprep.mubr.bf16.mxu0 0
      %1490 = vmatmul.mubr.bf16.gmra.mxu0 %v1358
      %v1491 = vpop.f32.mrf.mxu0
      %v1492 = vadd.f32 0.0, %v1491
      %v1493 = vpop.f32.mrf.mxu0
      %v1494 = vpop.f32.mrf.mxu0
      %v1495 = vadd.f32 0.0, %v1494
      %v1496 = vpop.f32.mrf.mxu0
      %1497 = vmatprep.mubr.bf16.mxu0 0
      %1498 = vmatmul.mubr.bf16.gmra.mxu0 %v1359
      %v1499 = vpop.f32.mrf.mxu0
      %v1500 = vadd.f32 0.0, %v1499
      %v1501 = vpop.f32.mrf.mxu0
      %v1502 = vpop.f32.mrf.mxu0
      %v1503 = vadd.f32 0.0, %v1502
      %v1504 = vpop.f32.mrf.mxu0
      %1505 = vmatprep.mubr.bf16.mxu0 0
      %1506 = vmatmul.mubr.bf16.gmra.mxu0 %v1360
      %v1507 = vpop.f32.mrf.mxu0
      %v1508 = vadd.f32 0.0, %v1507
      %v1509 = vpop.f32.mrf.mxu0
      %v1510 = vpop.f32.mrf.mxu0
      %v1511 = vadd.f32 0.0, %v1510
      %v1512 = vpop.f32.mrf.mxu0
      %1513 = vmatprep.mubr.bf16.mxu0 0
      %1514 = vmatmul.mubr.bf16.gmra.mxu0 %v1361
      %v1515 = vpop.f32.mrf.mxu0
      %v1516 = vadd.f32 0.0, %v1515
      %v1517 = vpop.f32.mrf.mxu0
      %v1518 = vpop.f32.mrf.mxu0
      %v1519 = vadd.f32 0.0, %v1518
      %v1520 = vpop.f32.mrf.mxu0
      %1521 = vmatprep.mubr.bf16.mxu0 0
      %1522 = vmatmul.mubr.bf16.gmra.mxu0 %v1362
      %v1523 = vpop.f32.mrf.mxu0
      %v1524 = vadd.f32 0.0, %v1523
      %v1525 = vpop.f32.mrf.mxu0
      %v1526 = vpop.f32.mrf.mxu0
      %v1527 = vadd.f32 0.0, %v1526
      %v1528 = vpop.f32.mrf.mxu0
      %1529 = vmatprep.mubr.bf16.mxu0 0
      %1530 = vmatmul.mubr.bf16.gmra.mxu0 %v1363
      %v1531 = vpop.f32.mrf.mxu0
      %v1532 = vadd.f32 0.0, %v1531
      %v1533 = vpop.f32.mrf.mxu0
      %v1534 = vpop.f32.mrf.mxu0
      %v1535 = vadd.f32 0.0, %v1534
      %v1536 = vpop.f32.mrf.mxu0
      %1537 = vmatprep.mubr.bf16.mxu0 0
      %1538 = vmatmul.mubr.bf16.gmra.mxu0 %v1364
      %v1539 = vpop.f32.mrf.mxu0
      %v1540 = vadd.f32 0.0, %v1539
      %v1541 = vpop.f32.mrf.mxu0
      %v1542 = vpop.f32.mrf.mxu0
      %v1543 = vadd.f32 0.0, %v1542
      %v1544 = vpop.f32.mrf.mxu0
      %1545 = vmatprep.mubr.bf16.mxu0 0
      %1546 = vmatmul.mubr.bf16.gmra.mxu0 %v1365
      %v1547 = vpop.f32.mrf.mxu0
      %v1548 = vadd.f32 0.0, %v1547
      %v1549 = vpop.f32.mrf.mxu0
      %v1550 = vpop.f32.mrf.mxu0
      %v1551 = vadd.f32 0.0, %v1550
      %v1552 = vpop.f32.mrf.mxu0
      %1553 = vmatprep.mubr.bf16.mxu0 0
      %1554 = vmatmul.mubr.bf16.gmra.mxu0 %v1366
      %v1555 = vpop.f32.mrf.mxu0
      %v1556 = vadd.f32 0.0, %v1555
      %v1557 = vpop.f32.mrf.mxu0
      %v1558 = vpop.f32.mrf.mxu0
      %v1559 = vadd.f32 0.0, %v1558
      %v1560 = vpop.f32.mrf.mxu0
      %1561 = vmatprep.mubr.bf16.mxu0 0
      %1562 = vmatmul.mubr.bf16.gmra.mxu0 %v1367
      %v1563 = vpop.f32.mrf.mxu0
      %v1564 = vadd.f32 0.0, %v1563
      %v1565 = vpop.f32.mrf.mxu0
      %v1566 = vpop.f32.mrf.mxu0
      %v1567 = vpop.f32.mrf.mxu0
      %1568 = vdwg.mxu0
      %1569 = vset.pattern.permute.xlu0 1
      %1570 = vperm.xlu0 %1569, %v1130
      %v1571 = vpop.permute.xlu0 %1570
      %1573 = vset.pattern.permute.xlu0 1
      %1574 = vperm.xlu0 %1573, %v1131
      %v1575 = vpop.permute.xlu0 %1574
      %1577 = vset.pattern.permute.xlu0 1
      %1578 = vperm.xlu0 %1577, %v1132
      %v1579 = vpop.permute.xlu0 %1578
      %1581 = vset.pattern.permute.xlu0 1
      %1582 = vperm.xlu0 %1581, %v1133
      %v1583 = vpop.permute.xlu0 %1582
      %1585 = vset.pattern.permute.xlu0 1
      %1586 = vperm.xlu0 %1585, %v1134
      %v1587 = vpop.permute.xlu0 %1586
      %1589 = vset.pattern.permute.xlu0 1
      %1590 = vperm.xlu0 %1589, %v1135
      %v1591 = vpop.permute.xlu0 %1590
      %1593 = vset.pattern.permute.xlu0 1
      %1594 = vperm.xlu0 %1593, %v1136
      %v1595 = vpop.permute.xlu0 %1594
      %1597 = vset.pattern.permute.xlu0 1
      %1598 = vperm.xlu0 %1597, %v1137
      %v1599 = vpop.permute.xlu0 %1598
      %1601 = vset.pattern.permute.xlu0 1
      %1602 = vperm.xlu0 %1601, %v1138
      %v1603 = vpop.permute.xlu0 %1602
      %1605 = vset.pattern.permute.xlu0 1
      %1606 = vperm.xlu0 %1605, %v1139
      %v1607 = vpop.permute.xlu0 %1606
      %1609 = vset.pattern.permute.xlu0 1
      %1610 = vperm.xlu0 %1609, %v1140
      %v1611 = vpop.permute.xlu0 %1610
      %1613 = vset.pattern.permute.xlu0 1
      %1614 = vperm.xlu0 %1613, %v1141
      %v1615 = vpop.permute.xlu0 %1614
      %1617 = vset.pattern.permute.xlu0 1
      %1618 = vperm.xlu0 %1617, %v1142
      %v1619 = vpop.permute.xlu0 %1618
      %1621 = vset.pattern.permute.xlu0 1
      %1622 = vperm.xlu0 %1621, %v1143
      %v1623 = vpop.permute.xlu0 %1622
      %1625 = vset.pattern.permute.xlu0 1
      %1626 = vperm.xlu0 %1625, %v1144
      %v1627 = vpop.permute.xlu0 %1626
      %1629 = vset.pattern.permute.xlu0 1
      %1630 = vperm.xlu0 %1629, %v1145
      %v1631 = vpop.permute.xlu0 %1630
      %1633 = vset.pattern.permute.xlu0 1
      %1634 = vperm.xlu0 %1633, %v1146
      %v1635 = vpop.permute.xlu0 %1634
      %1637 = vset.pattern.permute.xlu0 1
      %1638 = vperm.xlu0 %1637, %v1147
      %v1639 = vpop.permute.xlu0 %1638
      %1641 = vset.pattern.permute.xlu0 1
      %1642 = vperm.xlu0 %1641, %v1148
      %v1643 = vpop.permute.xlu0 %1642
      %1645 = vset.pattern.permute.xlu0 1
      %1646 = vperm.xlu0 %1645, %v1149
      %v1647 = vpop.permute.xlu0 %1646
      %1649 = vset.pattern.permute.xlu0 1
      %1650 = vperm.xlu0 %1649, %v1150
      %v1651 = vpop.permute.xlu0 %1650
      %1653 = vset.pattern.permute.xlu0 1
      %1654 = vperm.xlu0 %1653, %v1151
      %v1655 = vpop.permute.xlu0 %1654
      %1657 = vset.pattern.permute.xlu0 1
      %1658 = vperm.xlu0 %1657, %v1152
      %v1659 = vpop.permute.xlu0 %1658
      %1661 = vset.pattern.permute.xlu0 1
      %1662 = vperm.xlu0 %1661, %v1153
      %v1663 = vpop.permute.xlu0 %1662
      %1665 = vset.pattern.permute.xlu0 1
      %1666 = vperm.xlu0 %1665, %v1154
      %v1667 = vpop.permute.xlu0 %1666
      %v1669 = vmul.f32 %v1468, %v1571
      %v1670 = vmul.f32 %v1471, %v1575
      %v1671 = vmul.f32 %v1476, %v1579
      %v1672 = vmul.f32 %v1479, %v1583
      %v1673 = vmul.f32 %v1484, %v1587
      %v1674 = vmul.f32 %v1487, %v1591
      %v1675 = vmul.f32 %v1492, %v1595
      %v1676 = vmul.f32 %v1495, %v1599
      %v1677 = vmul.f32 %v1500, %v1603
      %v1678 = vmul.f32 %v1503, %v1607
      %v1679 = vmul.f32 %v1508, %v1611
      %v1680 = vmul.f32 %v1511, %v1615
      %v1681 = vmul.f32 %v1516, %v1619
      %v1682 = vmul.f32 %v1519, %v1623
      %v1683 = vmul.f32 %v1524, %v1627
      %v1684 = vmul.f32 %v1527, %v1631
      %v1685 = vmul.f32 %v1532, %v1635
      %v1686 = vmul.f32 %v1535, %v1639
      %v1687 = vmul.f32 %v1540, %v1643
      %v1688 = vmul.f32 %v1543, %v1647
      %v1689 = vmul.f32 %v1548, %v1651
      %v1690 = vmul.f32 %v1551, %v1655
      %v1691 = vmul.f32 %v1556, %v1659
      %v1692 = vmul.f32 %v1559, %v1663
      %v1693 = vmul.f32 %v1564, %v1667
      %v1694 = vadd.f32 %v1305, %v1669
      %v1695 = vadd.f32 %v1306, %v1670
      %v1696 = vadd.f32 %v1307, %v1671
      %v1697 = vadd.f32 %v1308, %v1672
      %v1698 = vadd.f32 %v1309, %v1673
      %v1699 = vadd.f32 %v1310, %v1674
      %v1700 = vadd.f32 %v1311, %v1675
      %v1701 = vadd.f32 %v1312, %v1676
      %v1702 = vadd.f32 %v1313, %v1677
      %v1703 = vadd.f32 %v1314, %v1678
      %v1704 = vadd.f32 %v1315, %v1679
      %v1705 = vadd.f32 %v1316, %v1680
      %v1706 = vadd.f32 %v1317, %v1681
      %v1707 = vadd.f32 %v1318, %v1682
      %v1708 = vadd.f32 %v1319, %v1683
      %v1709 = vadd.f32 %v1320, %v1684
      %v1710 = vadd.f32 %v1321, %v1685
      %v1711 = vadd.f32 %v1322, %v1686
      %v1712 = vadd.f32 %v1323, %v1687
      %v1713 = vadd.f32 %v1324, %v1688
      %v1714 = vadd.f32 %v1325, %v1689
      %v1715 = vadd.f32 %v1326, %v1690
      %v1716 = vadd.f32 %v1327, %v1691
      %v1717 = vadd.f32 %v1328, %v1692
      %v1718 = vadd.f32 %v1329, %v1693
      %v1719 = vld [vmem:[#allocation3 + $0x7] sm:$0xff]
      %v1720 = vld [vmem:[#allocation3 + $0xf] sm:$0xff]
      %v1721 = vld [vmem:[#allocation3 + $0x17] sm:$0xff]
      %v1722 = vld [vmem:[#allocation3 + $0x1f] sm:$0xff]
      %v1723 = vld [vmem:[#allocation3 + $0x27] sm:$0xff]
      %v1724 = vld [vmem:[#allocation3 + $0x2f] sm:$0xff]
      %v1725 = vld [vmem:[#allocation3 + $0x37] sm:$0xff]
      %v1726 = vld [vmem:[#allocation3 + $0x3f] sm:$0xff]
      %v1727 = vld [vmem:[#allocation3 + $0x47] sm:$0xff]
      %v1728 = vld [vmem:[#allocation3 + $0x4f] sm:$0xff]
      %v1729 = vld [vmem:[#allocation3 + $0x57] sm:$0xff]
      %v1730 = vld [vmem:[#allocation3 + $0x5f] sm:$0xff]
      %v1731 = vld [vmem:[#allocation3 + $0x67] sm:$0xff]
      %v1732 = vld [vmem:[#allocation3 + $0x6f] sm:$0xff]
      %v1733 = vld [vmem:[#allocation3 + $0x77] sm:$0xff]
      %v1734 = vld [vmem:[#allocation3 + $0x7f] sm:$0xff]
      %v1735 = vld [vmem:[#allocation3 + $0x87] sm:$0xff]
      %v1736 = vld [vmem:[#allocation3 + $0x8f] sm:$0xff]
      %v1737 = vld [vmem:[#allocation3 + $0x97] sm:$0xff]
      %v1738 = vld [vmem:[#allocation3 + $0x9f] sm:$0xff]
      %v1739 = vld [vmem:[#allocation3 + $0xa7] sm:$0xff]
      %v1740 = vld [vmem:[#allocation3 + $0xaf] sm:$0xff]
      %v1741 = vld [vmem:[#allocation3 + $0xb7] sm:$0xff]
      %v1742 = vld [vmem:[#allocation3 + $0xbf] sm:$0xff]
      %v1743 = vld [vmem:[#allocation3 + $0xc7] sm:$0xff]
      %v1744 = vpack.c.bf16 %v1720, %v1719
      %v1745 = vpack.c.bf16 %v1722, %v1721
      %v1746 = vpack.c.bf16 %v1724, %v1723
      %v1747 = vpack.c.bf16 %v1726, %v1725
      %v1748 = vpack.c.bf16 %v1728, %v1727
      %v1749 = vpack.c.bf16 %v1730, %v1729
      %v1750 = vpack.c.bf16 %v1732, %v1731
      %v1751 = vpack.c.bf16 %v1734, %v1733
      %v1752 = vpack.c.bf16 %v1736, %v1735
      %v1753 = vpack.c.bf16 %v1738, %v1737
      %v1754 = vpack.c.bf16 %v1740, %v1739
      %v1755 = vpack.c.bf16 %v1742, %v1741
      %v1756 = vpack.c.bf16 %v1743, %v1743
      %s1757 = scalar_lea.vmem %s366, 128
      %v1758 = vld [vmem:[%s1757] sm:$0xf]
      %v1759 = vld [vmem:[%s1757 + $0x4] sm:$0xf]
      %v1760 = vld [vmem:[%s1757 + $0x8] sm:$0xf]
      %v1761 = vld [vmem:[%s1757 + $0xc] sm:$0xf]
      %v1762 = vld [vmem:[%s1757 + $0x10] sm:$0xf]
      %v1763 = vld [vmem:[%s1757 + $0x14] sm:$0xf]
      %v1764 = vld [vmem:[%s1757 + $0x18] sm:$0xf]
      %v1765 = vld [vmem:[%s1757 + $0x1c] sm:$0xf]
      %v1766 = vld [vmem:[%s1757 + $0x20] sm:$0xf]
      %v1767 = vld [vmem:[%s1757 + $0x24] sm:$0xf]
      %v1768 = vld [vmem:[%s1757 + $0x28] sm:$0xf]
      %v1769 = vld [vmem:[%s1757 + $0x2c] sm:$0xf]
      %v1770 = vld [vmem:[%s1757 + $0x30] sm:$0xf]
      %v1771 = vld [vmem:[%s1757 + $0x34] sm:$0xf]
      %v1772 = vld [vmem:[%s1757 + $0x38] sm:$0xf]
      %v1773 = vld [vmem:[%s1757 + $0x3c] sm:$0xf]
      %v1790 = vunpack.c.l.b16 %v1758
      %v1791 = vunpack.c.l.b16 %v1759
      %v1792 = vunpack.c.l.b16 %v1760
      %v1793 = vunpack.c.l.b16 %v1761
      %v1794 = vunpack.c.l.b16 %v1762
      %v1795 = vunpack.c.l.b16 %v1763
      %v1796 = vunpack.c.l.b16 %v1764
      %v1797 = vunpack.c.l.b16 %v1765
      %v1798 = vunpack.c.l.b16 %v1766
      %v1799 = vunpack.c.l.b16 %v1767
      %v1800 = vunpack.c.l.b16 %v1768
      %v1801 = vunpack.c.l.b16 %v1769
      %v1802 = vunpack.c.l.b16 %v1770
      %v1803 = vunpack.c.l.b16 %v1771
      %v1804 = vunpack.c.l.b16 %v1772
      %v1805 = vunpack.c.l.b16 %v1773
      %v1806 = vpack.c.b16 %v1791, %v1790
      %v1807 = vpack.c.b16 %v1793, %v1792
      %v1808 = vpack.c.b16 %v1795, %v1794
      %v1809 = vpack.c.b16 %v1797, %v1796
      %v1810 = vpack.c.b16 %v1799, %v1798
      %v1811 = vpack.c.b16 %v1801, %v1800
      %v1812 = vpack.c.b16 %v1803, %v1802
      %v1813 = vpack.c.b16 %v1805, %v1804
      %1822 = vmatprep.subr.bf16.mxu0 0
      %1823 = vmatpush1.bf16.msra.mxu0 %v1813
      %1824 = vmatprep.subr.bf16.mxu0 0
      %1825 = vmatpush1.bf16.msra.mxu0 %v1812
      %1826 = vmatprep.subr.bf16.mxu0 0
      %1827 = vmatpush1.bf16.msra.mxu0 %v1811
      %1828 = vmatprep.subr.bf16.mxu0 0
      %1829 = vmatpush1.bf16.msra.mxu0 %v1810
      %1830 = vmatprep.subr.bf16.mxu0 0
      %1831 = vmatpush1.bf16.msra.mxu0 %v1809
      %1832 = vmatprep.subr.bf16.mxu0 0
      %1833 = vmatpush1.bf16.msra.mxu0 %v1808
      %1834 = vmatprep.subr.bf16.mxu0 0
      %1835 = vmatpush1.bf16.msra.mxu0 %v1807
      %1836 = vmatprep.subr.bf16.mxu0 0
      %1837 = vmatpush1.bf16.msra.mxu0 %v1806
      %1838 = vmatprep.subr.bf16.mxu0 0
      %1839 = vmatpush2.bf16.msra.mxu0 0
      %1840 = vmatprep.subr.bf16.mxu0 0
      %1841 = vmatpush2.bf16.msra.mxu0 0
      %1842 = vmatprep.subr.bf16.mxu0 0
      %1843 = vmatpush2.bf16.msra.mxu0 0
      %1844 = vmatprep.subr.bf16.mxu0 0
      %1845 = vmatpush2.bf16.msra.mxu0 0
      %1846 = vmatprep.subr.bf16.mxu0 0
      %1847 = vmatpush2.bf16.msra.mxu0 0
      %1848 = vmatprep.subr.bf16.mxu0 0
      %1849 = vmatpush2.bf16.msra.mxu0 0
      %1850 = vmatprep.subr.bf16.mxu0 0
      %1851 = vmatpush2.bf16.msra.mxu0 0
      %1852 = vmatprep.subr.bf16.mxu0 0
      %1853 = vmatpush2.bf16.msra.mxu0 0
      %1854 = vmatprep.mubr.bf16.mxu0 0
      %1855 = vmatmul.mubr.bf16.gmra.mxu0 %v1744
      %v1856 = vpop.f32.mrf.mxu0
      %v1857 = vadd.f32 0.0, %v1856
      %v1858 = vpop.f32.mrf.mxu0
      %v1859 = vpop.f32.mrf.mxu0
      %v1860 = vadd.f32 0.0, %v1859
      %v1861 = vpop.f32.mrf.mxu0
      %1862 = vmatprep.mubr.bf16.mxu0 0
      %1863 = vmatmul.mubr.bf16.gmra.mxu0 %v1745
      %v1864 = vpop.f32.mrf.mxu0
      %v1865 = vadd.f32 0.0, %v1864
      %v1866 = vpop.f32.mrf.mxu0
      %v1867 = vpop.f32.mrf.mxu0
      %v1868 = vadd.f32 0.0, %v1867
      %v1869 = vpop.f32.mrf.mxu0
      %1870 = vmatprep.mubr.bf16.mxu0 0
      %1871 = vmatmul.mubr.bf16.gmra.mxu0 %v1746
      %v1872 = vpop.f32.mrf.mxu0
      %v1873 = vadd.f32 0.0, %v1872
      %v1874 = vpop.f32.mrf.mxu0
      %v1875 = vpop.f32.mrf.mxu0
      %v1876 = vadd.f32 0.0, %v1875
      %v1877 = vpop.f32.mrf.mxu0
      %1878 = vmatprep.mubr.bf16.mxu0 0
      %1879 = vmatmul.mubr.bf16.gmra.mxu0 %v1747
      %v1880 = vpop.f32.mrf.mxu0
      %v1881 = vadd.f32 0.0, %v1880
      %v1882 = vpop.f32.mrf.mxu0
      %v1883 = vpop.f32.mrf.mxu0
      %v1884 = vadd.f32 0.0, %v1883
      %v1885 = vpop.f32.mrf.mxu0
      %1886 = vmatprep.mubr.bf16.mxu0 0
      %1887 = vmatmul.mubr.bf16.gmra.mxu0 %v1748
      %v1888 = vpop.f32.mrf.mxu0
      %v1889 = vadd.f32 0.0, %v1888
      %v1890 = vpop.f32.mrf.mxu0
      %v1891 = vpop.f32.mrf.mxu0
      %v1892 = vadd.f32 0.0, %v1891
      %v1893 = vpop.f32.mrf.mxu0
      %1894 = vmatprep.mubr.bf16.mxu0 0
      %1895 = vmatmul.mubr.bf16.gmra.mxu0 %v1749
      %v1896 = vpop.f32.mrf.mxu0
      %v1897 = vadd.f32 0.0, %v1896
      %v1898 = vpop.f32.mrf.mxu0
      %v1899 = vpop.f32.mrf.mxu0
      %v1900 = vadd.f32 0.0, %v1899
      %v1901 = vpop.f32.mrf.mxu0
      %1902 = vmatprep.mubr.bf16.mxu0 0
      %1903 = vmatmul.mubr.bf16.gmra.mxu0 %v1750
      %v1904 = vpop.f32.mrf.mxu0
      %v1905 = vadd.f32 0.0, %v1904
      %v1906 = vpop.f32.mrf.mxu0
      %v1907 = vpop.f32.mrf.mxu0
      %v1908 = vadd.f32 0.0, %v1907
      %v1909 = vpop.f32.mrf.mxu0
      %1910 = vmatprep.mubr.bf16.mxu0 0
      %1911 = vmatmul.mubr.bf16.gmra.mxu0 %v1751
      %v1912 = vpop.f32.mrf.mxu0
      %v1913 = vadd.f32 0.0, %v1912
      %v1914 = vpop.f32.mrf.mxu0
      %v1915 = vpop.f32.mrf.mxu0
      %v1916 = vadd.f32 0.0, %v1915
      %v1917 = vpop.f32.mrf.mxu0
      %1918 = vmatprep.mubr.bf16.mxu0 0
      %1919 = vmatmul.mubr.bf16.gmra.mxu0 %v1752
      %v1920 = vpop.f32.mrf.mxu0
      %v1921 = vadd.f32 0.0, %v1920
      %v1922 = vpop.f32.mrf.mxu0
      %v1923 = vpop.f32.mrf.mxu0
      %v1924 = vadd.f32 0.0, %v1923
      %v1925 = vpop.f32.mrf.mxu0
      %1926 = vmatprep.mubr.bf16.mxu0 0
      %1927 = vmatmul.mubr.bf16.gmra.mxu0 %v1753
      %v1928 = vpop.f32.mrf.mxu0
      %v1929 = vadd.f32 0.0, %v1928
      %v1930 = vpop.f32.mrf.mxu0
      %v1931 = vpop.f32.mrf.mxu0
      %v1932 = vadd.f32 0.0, %v1931
      %v1933 = vpop.f32.mrf.mxu0
      %1934 = vmatprep.mubr.bf16.mxu0 0
      %1935 = vmatmul.mubr.bf16.gmra.mxu0 %v1754
      %v1936 = vpop.f32.mrf.mxu0
      %v1937 = vadd.f32 0.0, %v1936
      %v1938 = vpop.f32.mrf.mxu0
      %v1939 = vpop.f32.mrf.mxu0
      %v1940 = vadd.f32 0.0, %v1939
      %v1941 = vpop.f32.mrf.mxu0
      %1942 = vmatprep.mubr.bf16.mxu0 0
      %1943 = vmatmul.mubr.bf16.gmra.mxu0 %v1755
      %v1944 = vpop.f32.mrf.mxu0
      %v1945 = vadd.f32 0.0, %v1944
      %v1946 = vpop.f32.mrf.mxu0
      %v1947 = vpop.f32.mrf.mxu0
      %v1948 = vadd.f32 0.0, %v1947
      %v1949 = vpop.f32.mrf.mxu0
      %1950 = vmatprep.mubr.bf16.mxu0 0
      %1951 = vmatmul.mubr.bf16.gmra.mxu0 %v1756
      %v1952 = vpop.f32.mrf.mxu0
      %v1953 = vadd.f32 0.0, %v1952
      %v1954 = vpop.f32.mrf.mxu0
      %v1955 = vpop.f32.mrf.mxu0
      %v1956 = vpop.f32.mrf.mxu0
      %1957 = vdwg.mxu0
      %1958 = vset.pattern.permute.xlu0 2
      %1959 = vperm.xlu0 %1958, %v1130
      %v1960 = vpop.permute.xlu0 %1959
      %1962 = vset.pattern.permute.xlu0 2
      %1963 = vperm.xlu0 %1962, %v1131
      %v1964 = vpop.permute.xlu0 %1963
      %1966 = vset.pattern.permute.xlu0 2
      %1967 = vperm.xlu0 %1966, %v1132
      %v1968 = vpop.permute.xlu0 %1967
      %1970 = vset.pattern.permute.xlu0 2
      %1971 = vperm.xlu0 %1970, %v1133
      %v1972 = vpop.permute.xlu0 %1971
      %1974 = vset.pattern.permute.xlu0 2
      %1975 = vperm.xlu0 %1974, %v1134
      %v1976 = vpop.permute.xlu0 %1975
      %1978 = vset.pattern.permute.xlu0 2
      %1979 = vperm.xlu0 %1978, %v1135
      %v1980 = vpop.permute.xlu0 %1979
      %1982 = vset.pattern.permute.xlu0 2
      %1983 = vperm.xlu0 %1982, %v1136
      %v1984 = vpop.permute.xlu0 %1983
      %1986 = vset.pattern.permute.xlu0 2
      %1987 = vperm.xlu0 %1986, %v1137
      %v1988 = vpop.permute.xlu0 %1987
      %1990 = vset.pattern.permute.xlu0 2
      %1991 = vperm.xlu0 %1990, %v1138
      %v1992 = vpop.permute.xlu0 %1991
      %1994 = vset.pattern.permute.xlu0 2
      %1995 = vperm.xlu0 %1994, %v1139
      %v1996 = vpop.permute.xlu0 %1995
      %1998 = vset.pattern.permute.xlu0 2
      %1999 = vperm.xlu0 %1998, %v1140
      %v2000 = vpop.permute.xlu0 %1999
      %2002 = vset.pattern.permute.xlu0 2
      %2003 = vperm.xlu0 %2002, %v1141
      %v2004 = vpop.permute.xlu0 %2003
      %2006 = vset.pattern.permute.xlu0 2
      %2007 = vperm.xlu0 %2006, %v1142
      %v2008 = vpop.permute.xlu0 %2007
      %2010 = vset.pattern.permute.xlu0 2
      %2011 = vperm.xlu0 %2010, %v1143
      %v2012 = vpop.permute.xlu0 %2011
      %2014 = vset.pattern.permute.xlu0 2
      %2015 = vperm.xlu0 %2014, %v1144
      %v2016 = vpop.permute.xlu0 %2015
      %2018 = vset.pattern.permute.xlu0 2
      %2019 = vperm.xlu0 %2018, %v1145
      %v2020 = vpop.permute.xlu0 %2019
      %2022 = vset.pattern.permute.xlu0 2
      %2023 = vperm.xlu0 %2022, %v1146
      %v2024 = vpop.permute.xlu0 %2023
      %2026 = vset.pattern.permute.xlu0 2
      %2027 = vperm.xlu0 %2026, %v1147
      %v2028 = vpop.permute.xlu0 %2027
      %2030 = vset.pattern.permute.xlu0 2
      %2031 = vperm.xlu0 %2030, %v1148
      %v2032 = vpop.permute.xlu0 %2031
      %2034 = vset.pattern.permute.xlu0 2
      %2035 = vperm.xlu0 %2034, %v1149
      %v2036 = vpop.permute.xlu0 %2035
      %2038 = vset.pattern.permute.xlu0 2
      %2039 = vperm.xlu0 %2038, %v1150
      %v2040 = vpop.permute.xlu0 %2039
      %2042 = vset.pattern.permute.xlu0 2
      %2043 = vperm.xlu0 %2042, %v1151
      %v2044 = vpop.permute.xlu0 %2043
      %2046 = vset.pattern.permute.xlu0 2
      %2047 = vperm.xlu0 %2046, %v1152
      %v2048 = vpop.permute.xlu0 %2047
      %2050 = vset.pattern.permute.xlu0 2
      %2051 = vperm.xlu0 %2050, %v1153
      %v2052 = vpop.permute.xlu0 %2051
      %2054 = vset.pattern.permute.xlu0 2
      %2055 = vperm.xlu0 %2054, %v1154
      %v2056 = vpop.permute.xlu0 %2055
      %v2058 = vmul.f32 %v1857, %v1960
      %v2059 = vmul.f32 %v1860, %v1964
      %v2060 = vmul.f32 %v1865, %v1968
      %v2061 = vmul.f32 %v1868, %v1972
      %v2062 = vmul.f32 %v1873, %v1976
      %v2063 = vmul.f32 %v1876, %v1980
      %v2064 = vmul.f32 %v1881, %v1984
      %v2065 = vmul.f32 %v1884, %v1988
      %v2066 = vmul.f32 %v1889, %v1992
      %v2067 = vmul.f32 %v1892, %v1996
      %v2068 = vmul.f32 %v1897, %v2000
      %v2069 = vmul.f32 %v1900, %v2004
      %v2070 = vmul.f32 %v1905, %v2008
      %v2071 = vmul.f32 %v1908, %v2012
      %v2072 = vmul.f32 %v1913, %v2016
      %v2073 = vmul.f32 %v1916, %v2020
      %v2074 = vmul.f32 %v1921, %v2024
      %v2075 = vmul.f32 %v1924, %v2028
      %v2076 = vmul.f32 %v1929, %v2032
      %v2077 = vmul.f32 %v1932, %v2036
      %v2078 = vmul.f32 %v1937, %v2040
      %v2079 = vmul.f32 %v1940, %v2044
      %v2080 = vmul.f32 %v1945, %v2048
      %v2081 = vmul.f32 %v1948, %v2052
      %v2082 = vmul.f32 %v1953, %v2056
      %v2083 = vadd.f32 %v1694, %v2058
      %v2084 = vadd.f32 %v1695, %v2059
      %v2085 = vadd.f32 %v1696, %v2060
      %v2086 = vadd.f32 %v1697, %v2061
      %v2087 = vadd.f32 %v1698, %v2062
      %v2088 = vadd.f32 %v1699, %v2063
      %v2089 = vadd.f32 %v1700, %v2064
      %v2090 = vadd.f32 %v1701, %v2065
      %v2091 = vadd.f32 %v1702, %v2066
      %v2092 = vadd.f32 %v1703, %v2067
      %v2093 = vadd.f32 %v1704, %v2068
      %v2094 = vadd.f32 %v1705, %v2069
      %v2095 = vadd.f32 %v1706, %v2070
      %v2096 = vadd.f32 %v1707, %v2071
      %v2097 = vadd.f32 %v1708, %v2072
      %v2098 = vadd.f32 %v1709, %v2073
      %v2099 = vadd.f32 %v1710, %v2074
      %v2100 = vadd.f32 %v1711, %v2075
      %v2101 = vadd.f32 %v1712, %v2076
      %v2102 = vadd.f32 %v1713, %v2077
      %v2103 = vadd.f32 %v1714, %v2078
      %v2104 = vadd.f32 %v1715, %v2079
      %v2105 = vadd.f32 %v1716, %v2080
      %v2106 = vadd.f32 %v1717, %v2081
      %v2107 = vadd.f32 %v1718, %v2082
      %v2108 = vld [vmem:[#allocation3 + $0xf] sm:$0xff]
      %v2109 = vld [vmem:[#allocation3 + $0x17] sm:$0xff]
      %v2110 = vld [vmem:[#allocation3 + $0x1f] sm:$0xff]
      %v2111 = vld [vmem:[#allocation3 + $0x27] sm:$0xff]
      %v2112 = vld [vmem:[#allocation3 + $0x2f] sm:$0xff]
      %v2113 = vld [vmem:[#allocation3 + $0x37] sm:$0xff]
      %v2114 = vld [vmem:[#allocation3 + $0x3f] sm:$0xff]
      %v2115 = vld [vmem:[#allocation3 + $0x47] sm:$0xff]
      %v2116 = vld [vmem:[#allocation3 + $0x4f] sm:$0xff]
      %v2117 = vld [vmem:[#allocation3 + $0x57] sm:$0xff]
      %v2118 = vld [vmem:[#allocation3 + $0x5f] sm:$0xff]
      %v2119 = vld [vmem:[#allocation3 + $0x67] sm:$0xff]
      %v2120 = vld [vmem:[#allocation3 + $0x6f] sm:$0xff]
      %v2121 = vld [vmem:[#allocation3 + $0x77] sm:$0xff]
      %v2122 = vld [vmem:[#allocation3 + $0x7f] sm:$0xff]
      %v2123 = vld [vmem:[#allocation3 + $0x87] sm:$0xff]
      %v2124 = vld [vmem:[#allocation3 + $0x8f] sm:$0xff]
      %v2125 = vld [vmem:[#allocation3 + $0x97] sm:$0xff]
      %v2126 = vld [vmem:[#allocation3 + $0x9f] sm:$0xff]
      %v2127 = vld [vmem:[#allocation3 + $0xa7] sm:$0xff]
      %v2128 = vld [vmem:[#allocation3 + $0xaf] sm:$0xff]
      %v2129 = vld [vmem:[#allocation3 + $0xb7] sm:$0xff]
      %v2130 = vld [vmem:[#allocation3 + $0xbf] sm:$0xff]
      %v2131 = vld [vmem:[#allocation3 + $0xc7] sm:$0xff]
      %v2132 = vld [vmem:[#allocation3 + $0xcf] sm:$0xff]
      %v2133 = vpack.c.bf16 %v2109, %v2108
      %v2134 = vpack.c.bf16 %v2111, %v2110
      %v2135 = vpack.c.bf16 %v2113, %v2112
      %v2136 = vpack.c.bf16 %v2115, %v2114
      %v2137 = vpack.c.bf16 %v2117, %v2116
      %v2138 = vpack.c.bf16 %v2119, %v2118
      %v2139 = vpack.c.bf16 %v2121, %v2120
      %v2140 = vpack.c.bf16 %v2123, %v2122
      %v2141 = vpack.c.bf16 %v2125, %v2124
      %v2142 = vpack.c.bf16 %v2127, %v2126
      %v2143 = vpack.c.bf16 %v2129, %v2128
      %v2144 = vpack.c.bf16 %v2131, %v2130
      %v2145 = vpack.c.bf16 %v2132, %v2132
      %s2146 = scalar_lea.vmem %s366, 192
      %v2147 = vld [vmem:[%s2146] sm:$0xf]
      %v2148 = vld [vmem:[%s2146 + $0x4] sm:$0xf]
      %v2149 = vld [vmem:[%s2146 + $0x8] sm:$0xf]
      %v2150 = vld [vmem:[%s2146 + $0xc] sm:$0xf]
      %v2151 = vld [vmem:[%s2146 + $0x10] sm:$0xf]
      %v2152 = vld [vmem:[%s2146 + $0x14] sm:$0xf]
      %v2153 = vld [vmem:[%s2146 + $0x18] sm:$0xf]
      %v2154 = vld [vmem:[%s2146 + $0x1c] sm:$0xf]
      %v2155 = vld [vmem:[%s2146 + $0x20] sm:$0xf]
      %v2156 = vld [vmem:[%s2146 + $0x24] sm:$0xf]
      %v2157 = vld [vmem:[%s2146 + $0x28] sm:$0xf]
      %v2158 = vld [vmem:[%s2146 + $0x2c] sm:$0xf]
      %v2159 = vld [vmem:[%s2146 + $0x30] sm:$0xf]
      %v2160 = vld [vmem:[%s2146 + $0x34] sm:$0xf]
      %v2161 = vld [vmem:[%s2146 + $0x38] sm:$0xf]
      %v2162 = vld [vmem:[%s2146 + $0x3c] sm:$0xf]
      %v2179 = vunpack.c.l.b16 %v2147
      %v2180 = vunpack.c.l.b16 %v2148
      %v2181 = vunpack.c.l.b16 %v2149
      %v2182 = vunpack.c.l.b16 %v2150
      %v2183 = vunpack.c.l.b16 %v2151
      %v2184 = vunpack.c.l.b16 %v2152
      %v2185 = vunpack.c.l.b16 %v2153
      %v2186 = vunpack.c.l.b16 %v2154
      %v2187 = vunpack.c.l.b16 %v2155
      %v2188 = vunpack.c.l.b16 %v2156
      %v2189 = vunpack.c.l.b16 %v2157
      %v2190 = vunpack.c.l.b16 %v2158
      %v2191 = vunpack.c.l.b16 %v2159
      %v2192 = vunpack.c.l.b16 %v2160
      %v2193 = vunpack.c.l.b16 %v2161
      %v2194 = vunpack.c.l.b16 %v2162
      %v2195 = vpack.c.b16 %v2180, %v2179
      %v2196 = vpack.c.b16 %v2182, %v2181
      %v2197 = vpack.c.b16 %v2184, %v2183
      %v2198 = vpack.c.b16 %v2186, %v2185
      %v2199 = vpack.c.b16 %v2188, %v2187
      %v2200 = vpack.c.b16 %v2190, %v2189
      %v2201 = vpack.c.b16 %v2192, %v2191
      %v2202 = vpack.c.b16 %v2194, %v2193
      %2211 = vmatprep.subr.bf16.mxu0 0
      %2212 = vmatpush1.bf16.msra.mxu0 %v2202
      %2213 = vmatprep.subr.bf16.mxu0 0
      %2214 = vmatpush1.bf16.msra.mxu0 %v2201
      %2215 = vmatprep.subr.bf16.mxu0 0
      %2216 = vmatpush1.bf16.msra.mxu0 %v2200
      %2217 = vmatprep.subr.bf16.mxu0 0
      %2218 = vmatpush1.bf16.msra.mxu0 %v2199
      %2219 = vmatprep.subr.bf16.mxu0 0
      %2220 = vmatpush1.bf16.msra.mxu0 %v2198
      %2221 = vmatprep.subr.bf16.mxu0 0
      %2222 = vmatpush1.bf16.msra.mxu0 %v2197
      %2223 = vmatprep.subr.bf16.mxu0 0
      %2224 = vmatpush1.bf16.msra.mxu0 %v2196
      %2225 = vmatprep.subr.bf16.mxu0 0
      %2226 = vmatpush1.bf16.msra.mxu0 %v2195
      %2227 = vmatprep.subr.bf16.mxu0 0
      %2228 = vmatpush2.bf16.msra.mxu0 0
      %2229 = vmatprep.subr.bf16.mxu0 0
      %2230 = vmatpush2.bf16.msra.mxu0 0
      %2231 = vmatprep.subr.bf16.mxu0 0
      %2232 = vmatpush2.bf16.msra.mxu0 0
      %2233 = vmatprep.subr.bf16.mxu0 0
      %2234 = vmatpush2.bf16.msra.mxu0 0
      %2235 = vmatprep.subr.bf16.mxu0 0
      %2236 = vmatpush2.bf16.msra.mxu0 0
      %2237 = vmatprep.subr.bf16.mxu0 0
      %2238 = vmatpush2.bf16.msra.mxu0 0
      %2239 = vmatprep.subr.bf16.mxu0 0
      %2240 = vmatpush2.bf16.msra.mxu0 0
      %2241 = vmatprep.subr.bf16.mxu0 0
      %2242 = vmatpush2.bf16.msra.mxu0 0
      %2243 = vmatprep.mubr.bf16.mxu0 0
      %2244 = vmatmul.mubr.bf16.gmra.mxu0 %v2133
      %v2245 = vpop.f32.mrf.mxu0
      %v2246 = vadd.f32 0.0, %v2245
      %v2247 = vpop.f32.mrf.mxu0
      %v2248 = vpop.f32.mrf.mxu0
      %v2249 = vadd.f32 0.0, %v2248
      %v2250 = vpop.f32.mrf.mxu0
      %2251 = vmatprep.mubr.bf16.mxu0 0
      %2252 = vmatmul.mubr.bf16.gmra.mxu0 %v2134
      %v2253 = vpop.f32.mrf.mxu0
      %v2254 = vadd.f32 0.0, %v2253
      %v2255 = vpop.f32.mrf.mxu0
      %v2256 = vpop.f32.mrf.mxu0
      %v2257 = vadd.f32 0.0, %v2256
      %v2258 = vpop.f32.mrf.mxu0
      %2259 = vmatprep.mubr.bf16.mxu0 0
      %2260 = vmatmul.mubr.bf16.gmra.mxu0 %v2135
      %v2261 = vpop.f32.mrf.mxu0
      %v2262 = vadd.f32 0.0, %v2261
      %v2263 = vpop.f32.mrf.mxu0
      %v2264 = vpop.f32.mrf.mxu0
      %v2265 = vadd.f32 0.0, %v2264
      %v2266 = vpop.f32.mrf.mxu0
      %2267 = vmatprep.mubr.bf16.mxu0 0
      %2268 = vmatmul.mubr.bf16.gmra.mxu0 %v2136
      %v2269 = vpop.f32.mrf.mxu0
      %v2270 = vadd.f32 0.0, %v2269
      %v2271 = vpop.f32.mrf.mxu0
      %v2272 = vpop.f32.mrf.mxu0
      %v2273 = vadd.f32 0.0, %v2272
      %v2274 = vpop.f32.mrf.mxu0
      %2275 = vmatprep.mubr.bf16.mxu0 0
      %2276 = vmatmul.mubr.bf16.gmra.mxu0 %v2137
      %v2277 = vpop.f32.mrf.mxu0
      %v2278 = vadd.f32 0.0, %v2277
      %v2279 = vpop.f32.mrf.mxu0
      %v2280 = vpop.f32.mrf.mxu0
      %v2281 = vadd.f32 0.0, %v2280
      %v2282 = vpop.f32.mrf.mxu0
      %2283 = vmatprep.mubr.bf16.mxu0 0
      %2284 = vmatmul.mubr.bf16.gmra.mxu0 %v2138
      %v2285 = vpop.f32.mrf.mxu0
      %v2286 = vadd.f32 0.0, %v2285
      %v2287 = vpop.f32.mrf.mxu0
      %v2288 = vpop.f32.mrf.mxu0
      %v2289 = vadd.f32 0.0, %v2288
      %v2290 = vpop.f32.mrf.mxu0
      %2291 = vmatprep.mubr.bf16.mxu0 0
      %2292 = vmatmul.mubr.bf16.gmra.mxu0 %v2139
      %v2293 = vpop.f32.mrf.mxu0
      %v2294 = vadd.f32 0.0, %v2293
      %v2295 = vpop.f32.mrf.mxu0
      %v2296 = vpop.f32.mrf.mxu0
      %v2297 = vadd.f32 0.0, %v2296
      %v2298 = vpop.f32.mrf.mxu0
      %2299 = vmatprep.mubr.bf16.mxu0 0
      %2300 = vmatmul.mubr.bf16.gmra.mxu0 %v2140
      %v2301 = vpop.f32.mrf.mxu0
      %v2302 = vadd.f32 0.0, %v2301
      %v2303 = vpop.f32.mrf.mxu0
      %v2304 = vpop.f32.mrf.mxu0
      %v2305 = vadd.f32 0.0, %v2304
      %v2306 = vpop.f32.mrf.mxu0
      %2307 = vmatprep.mubr.bf16.mxu0 0
      %2308 = vmatmul.mubr.bf16.gmra.mxu0 %v2141
      %v2309 = vpop.f32.mrf.mxu0
      %v2310 = vadd.f32 0.0, %v2309
      %v2311 = vpop.f32.mrf.mxu0
      %v2312 = vpop.f32.mrf.mxu0
      %v2313 = vadd.f32 0.0, %v2312
      %v2314 = vpop.f32.mrf.mxu0
      %2315 = vmatprep.mubr.bf16.mxu0 0
      %2316 = vmatmul.mubr.bf16.gmra.mxu0 %v2142
      %v2317 = vpop.f32.mrf.mxu0
      %v2318 = vadd.f32 0.0, %v2317
      %v2319 = vpop.f32.mrf.mxu0
      %v2320 = vpop.f32.mrf.mxu0
      %v2321 = vadd.f32 0.0, %v2320
      %v2322 = vpop.f32.mrf.mxu0
      %2323 = vmatprep.mubr.bf16.mxu0 0
      %2324 = vmatmul.mubr.bf16.gmra.mxu0 %v2143
      %v2325 = vpop.f32.mrf.mxu0
      %v2326 = vadd.f32 0.0, %v2325
      %v2327 = vpop.f32.mrf.mxu0
      %v2328 = vpop.f32.mrf.mxu0
      %v2329 = vadd.f32 0.0, %v2328
      %v2330 = vpop.f32.mrf.mxu0
      %2331 = vmatprep.mubr.bf16.mxu0 0
      %2332 = vmatmul.mubr.bf16.gmra.mxu0 %v2144
      %v2333 = vpop.f32.mrf.mxu0
      %v2334 = vadd.f32 0.0, %v2333
      %v2335 = vpop.f32.mrf.mxu0
      %v2336 = vpop.f32.mrf.mxu0
      %v2337 = vadd.f32 0.0, %v2336
      %v2338 = vpop.f32.mrf.mxu0
      %2339 = vmatprep.mubr.bf16.mxu0 0
      %2340 = vmatmul.mubr.bf16.gmra.mxu0 %v2145
      %v2341 = vpop.f32.mrf.mxu0
      %v2342 = vadd.f32 0.0, %v2341
      %v2343 = vpop.f32.mrf.mxu0
      %v2344 = vpop.f32.mrf.mxu0
      %v2345 = vpop.f32.mrf.mxu0
      %2346 = vdwg.mxu0
      %2347 = vset.pattern.permute.xlu0 3
      %2348 = vperm.xlu0 %2347, %v1130
      %v2349 = vpop.permute.xlu0 %2348
      %2351 = vset.pattern.permute.xlu0 3
      %2352 = vperm.xlu0 %2351, %v1131
      %v2353 = vpop.permute.xlu0 %2352
      %2355 = vset.pattern.permute.xlu0 3
      %2356 = vperm.xlu0 %2355, %v1132
      %v2357 = vpop.permute.xlu0 %2356
      %2359 = vset.pattern.permute.xlu0 3
      %2360 = vperm.xlu0 %2359, %v1133
      %v2361 = vpop.permute.xlu0 %2360
      %2363 = vset.pattern.permute.xlu0 3
      %2364 = vperm.xlu0 %2363, %v1134
      %v2365 = vpop.permute.xlu0 %2364
      %2367 = vset.pattern.permute.xlu0 3
      %2368 = vperm.xlu0 %2367, %v1135
      %v2369 = vpop.permute.xlu0 %2368
      %2371 = vset.pattern.permute.xlu0 3
      %2372 = vperm.xlu0 %2371, %v1136
      %v2373 = vpop.permute.xlu0 %2372
      %2375 = vset.pattern.permute.xlu0 3
      %2376 = vperm.xlu0 %2375, %v1137
      %v2377 = vpop.permute.xlu0 %2376
      %2379 = vset.pattern.permute.xlu0 3
      %2380 = vperm.xlu0 %2379, %v1138
      %v2381 = vpop.permute.xlu0 %2380
      %2383 = vset.pattern.permute.xlu0 3
      %2384 = vperm.xlu0 %2383, %v1139
      %v2385 = vpop.permute.xlu0 %2384
      %2387 = vset.pattern.permute.xlu0 3
      %2388 = vperm.xlu0 %2387, %v1140
      %v2389 = vpop.permute.xlu0 %2388
      %2391 = vset.pattern.permute.xlu0 3
      %2392 = vperm.xlu0 %2391, %v1141
      %v2393 = vpop.permute.xlu0 %2392
      %2395 = vset.pattern.permute.xlu0 3
      %2396 = vperm.xlu0 %2395, %v1142
      %v2397 = vpop.permute.xlu0 %2396
      %2399 = vset.pattern.permute.xlu0 3
      %2400 = vperm.xlu0 %2399, %v1143
      %v2401 = vpop.permute.xlu0 %2400
      %2403 = vset.pattern.permute.xlu0 3
      %2404 = vperm.xlu0 %2403, %v1144
      %v2405 = vpop.permute.xlu0 %2404
      %2407 = vset.pattern.permute.xlu0 3
      %2408 = vperm.xlu0 %2407, %v1145
      %v2409 = vpop.permute.xlu0 %2408
      %2411 = vset.pattern.permute.xlu0 3
      %2412 = vperm.xlu0 %2411, %v1146
      %v2413 = vpop.permute.xlu0 %2412
      %2415 = vset.pattern.permute.xlu0 3
      %2416 = vperm.xlu0 %2415, %v1147
      %v2417 = vpop.permute.xlu0 %2416
      %2419 = vset.pattern.permute.xlu0 3
      %2420 = vperm.xlu0 %2419, %v1148
      %v2421 = vpop.permute.xlu0 %2420
      %2423 = vset.pattern.permute.xlu0 3
      %2424 = vperm.xlu0 %2423, %v1149
      %v2425 = vpop.permute.xlu0 %2424
      %2427 = vset.pattern.permute.xlu0 3
      %2428 = vperm.xlu0 %2427, %v1150
      %v2429 = vpop.permute.xlu0 %2428
      %2431 = vset.pattern.permute.xlu0 3
      %2432 = vperm.xlu0 %2431, %v1151
      %v2433 = vpop.permute.xlu0 %2432
      %2435 = vset.pattern.permute.xlu0 3
      %2436 = vperm.xlu0 %2435, %v1152
      %v2437 = vpop.permute.xlu0 %2436
      %2439 = vset.pattern.permute.xlu0 3
      %2440 = vperm.xlu0 %2439, %v1153
      %v2441 = vpop.permute.xlu0 %2440
      %2443 = vset.pattern.permute.xlu0 3
      %2444 = vperm.xlu0 %2443, %v1154
      %v2445 = vpop.permute.xlu0 %2444
      %v2447 = vmul.f32 %v2246, %v2349
      %v2448 = vmul.f32 %v2249, %v2353
      %v2449 = vmul.f32 %v2254, %v2357
      %v2450 = vmul.f32 %v2257, %v2361
      %v2451 = vmul.f32 %v2262, %v2365
      %v2452 = vmul.f32 %v2265, %v2369
      %v2453 = vmul.f32 %v2270, %v2373
      %v2454 = vmul.f32 %v2273, %v2377
      %v2455 = vmul.f32 %v2278, %v2381
      %v2456 = vmul.f32 %v2281, %v2385
      %v2457 = vmul.f32 %v2286, %v2389
      %v2458 = vmul.f32 %v2289, %v2393
      %v2459 = vmul.f32 %v2294, %v2397
      %v2460 = vmul.f32 %v2297, %v2401
      %v2461 = vmul.f32 %v2302, %v2405
      %v2462 = vmul.f32 %v2305, %v2409
      %v2463 = vmul.f32 %v2310, %v2413
      %v2464 = vmul.f32 %v2313, %v2417
      %v2465 = vmul.f32 %v2318, %v2421
      %v2466 = vmul.f32 %v2321, %v2425
      %v2467 = vmul.f32 %v2326, %v2429
      %v2468 = vmul.f32 %v2329, %v2433
      %v2469 = vmul.f32 %v2334, %v2437
      %v2470 = vmul.f32 %v2337, %v2441
      %v2471 = vmul.f32 %v2342, %v2445
      %v2472 = vadd.f32 %v2083, %v2447
      %v2473 = vadd.f32 %v2084, %v2448
      %v2474 = vadd.f32 %v2085, %v2449
      %v2475 = vadd.f32 %v2086, %v2450
      %v2476 = vadd.f32 %v2087, %v2451
      %v2477 = vadd.f32 %v2088, %v2452
      %v2478 = vadd.f32 %v2089, %v2453
      %v2479 = vadd.f32 %v2090, %v2454
      %v2480 = vadd.f32 %v2091, %v2455
      %v2481 = vadd.f32 %v2092, %v2456
      %v2482 = vadd.f32 %v2093, %v2457
      %v2483 = vadd.f32 %v2094, %v2458
      %v2484 = vadd.f32 %v2095, %v2459
      %v2485 = vadd.f32 %v2096, %v2460
      %v2486 = vadd.f32 %v2097, %v2461
      %v2487 = vadd.f32 %v2098, %v2462
      %v2488 = vadd.f32 %v2099, %v2463
      %v2489 = vadd.f32 %v2100, %v2464
      %v2490 = vadd.f32 %v2101, %v2465
      %v2491 = vadd.f32 %v2102, %v2466
      %v2492 = vadd.f32 %v2103, %v2467
      %v2493 = vadd.f32 %v2104, %v2468
      %v2494 = vadd.f32 %v2105, %v2469
      %v2495 = vadd.f32 %v2106, %v2470
      %v2496 = vadd.f32 %v2107, %v2471
      %v2497 = vld [vmem:[#allocation3 + $0x10] sm:$0xff]
      %v2498 = vld [vmem:[#allocation3 + $0x18] sm:$0xff]
      %v2499 = vld [vmem:[#allocation3 + $0x20] sm:$0xff]
      %v2500 = vld [vmem:[#allocation3 + $0x28] sm:$0xff]
      %v2501 = vld [vmem:[#allocation3 + $0x30] sm:$0xff]
      %v2502 = vld [vmem:[#allocation3 + $0x38] sm:$0xff]
      %v2503 = vld [vmem:[#allocation3 + $0x40] sm:$0xff]
      %v2504 = vld [vmem:[#allocation3 + $0x48] sm:$0xff]
      %v2505 = vld [vmem:[#allocation3 + $0x50] sm:$0xff]
      %v2506 = vld [vmem:[#allocation3 + $0x58] sm:$0xff]
      %v2507 = vld [vmem:[#allocation3 + $0x60] sm:$0xff]
      %v2508 = vld [vmem:[#allocation3 + $0x68] sm:$0xff]
      %v2509 = vld [vmem:[#allocation3 + $0x70] sm:$0xff]
      %v2510 = vld [vmem:[#allocation3 + $0x78] sm:$0xff]
      %v2511 = vld [vmem:[#allocation3 + $0x80] sm:$0xff]
      %v2512 = vld [vmem:[#allocation3 + $0x88] sm:$0xff]
      %v2513 = vld [vmem:[#allocation3 + $0x90] sm:$0xff]
      %v2514 = vld [vmem:[#allocation3 + $0x98] sm:$0xff]
      %v2515 = vld [vmem:[#allocation3 + $0xa0] sm:$0xff]
      %v2516 = vld [vmem:[#allocation3 + $0xa8] sm:$0xff]
      %v2517 = vld [vmem:[#allocation3 + $0xb0] sm:$0xff]
      %v2518 = vld [vmem:[#allocation3 + $0xb8] sm:$0xff]
      %v2519 = vld [vmem:[#allocation3 + $0xc0] sm:$0xff]
      %v2520 = vld [vmem:[#allocation3 + $0xc8] sm:$0xff]
      %v2521 = vld [vmem:[#allocation3 + $0xd0] sm:$0xff]
      %v2522 = vpack.c.bf16 %v2498, %v2497
      %v2523 = vpack.c.bf16 %v2500, %v2499
      %v2524 = vpack.c.bf16 %v2502, %v2501
      %v2525 = vpack.c.bf16 %v2504, %v2503
      %v2526 = vpack.c.bf16 %v2506, %v2505
      %v2527 = vpack.c.bf16 %v2508, %v2507
      %v2528 = vpack.c.bf16 %v2510, %v2509
      %v2529 = vpack.c.bf16 %v2512, %v2511
      %v2530 = vpack.c.bf16 %v2514, %v2513
      %v2531 = vpack.c.bf16 %v2516, %v2515
      %v2532 = vpack.c.bf16 %v2518, %v2517
      %v2533 = vpack.c.bf16 %v2520, %v2519
      %v2534 = vpack.c.bf16 %v2521, %v2521
      %s2535 = scalar_lea.vmem %s366, 256
      %v2536 = vld [vmem:[%s2535] sm:$0xf]
      %v2537 = vld [vmem:[%s2535 + $0x4] sm:$0xf]
      %v2538 = vld [vmem:[%s2535 + $0x8] sm:$0xf]
      %v2539 = vld [vmem:[%s2535 + $0xc] sm:$0xf]
      %v2540 = vld [vmem:[%s2535 + $0x10] sm:$0xf]
      %v2541 = vld [vmem:[%s2535 + $0x14] sm:$0xf]
      %v2542 = vld [vmem:[%s2535 + $0x18] sm:$0xf]
      %v2543 = vld [vmem:[%s2535 + $0x1c] sm:$0xf]
      %v2544 = vld [vmem:[%s2535 + $0x20] sm:$0xf]
      %v2545 = vld [vmem:[%s2535 + $0x24] sm:$0xf]
      %v2546 = vld [vmem:[%s2535 + $0x28] sm:$0xf]
      %v2547 = vld [vmem:[%s2535 + $0x2c] sm:$0xf]
      %v2548 = vld [vmem:[%s2535 + $0x30] sm:$0xf]
      %v2549 = vld [vmem:[%s2535 + $0x34] sm:$0xf]
      %v2550 = vld [vmem:[%s2535 + $0x38] sm:$0xf]
      %v2551 = vld [vmem:[%s2535 + $0x3c] sm:$0xf]
      %v2568 = vunpack.c.l.b16 %v2536
      %v2569 = vunpack.c.l.b16 %v2537
      %v2570 = vunpack.c.l.b16 %v2538
      %v2571 = vunpack.c.l.b16 %v2539
      %v2572 = vunpack.c.l.b16 %v2540
      %v2573 = vunpack.c.l.b16 %v2541
      %v2574 = vunpack.c.l.b16 %v2542
      %v2575 = vunpack.c.l.b16 %v2543
      %v2576 = vunpack.c.l.b16 %v2544
      %v2577 = vunpack.c.l.b16 %v2545
      %v2578 = vunpack.c.l.b16 %v2546
      %v2579 = vunpack.c.l.b16 %v2547
      %v2580 = vunpack.c.l.b16 %v2548
      %v2581 = vunpack.c.l.b16 %v2549
      %v2582 = vunpack.c.l.b16 %v2550
      %v2583 = vunpack.c.l.b16 %v2551
      %v2584 = vpack.c.b16 %v2569, %v2568
      %v2585 = vpack.c.b16 %v2571, %v2570
      %v2586 = vpack.c.b16 %v2573, %v2572
      %v2587 = vpack.c.b16 %v2575, %v2574
      %v2588 = vpack.c.b16 %v2577, %v2576
      %v2589 = vpack.c.b16 %v2579, %v2578
      %v2590 = vpack.c.b16 %v2581, %v2580
      %v2591 = vpack.c.b16 %v2583, %v2582
      %2600 = vmatprep.subr.bf16.mxu0 0
      %2601 = vmatpush1.bf16.msra.mxu0 %v2591
      %2602 = vmatprep.subr.bf16.mxu0 0
      %2603 = vmatpush1.bf16.msra.mxu0 %v2590
      %2604 = vmatprep.subr.bf16.mxu0 0
      %2605 = vmatpush1.bf16.msra.mxu0 %v2589
      %2606 = vmatprep.subr.bf16.mxu0 0
      %2607 = vmatpush1.bf16.msra.mxu0 %v2588
      %2608 = vmatprep.subr.bf16.mxu0 0
      %2609 = vmatpush1.bf16.msra.mxu0 %v2587
      %2610 = vmatprep.subr.bf16.mxu0 0
      %2611 = vmatpush1.bf16.msra.mxu0 %v2586
      %2612 = vmatprep.subr.bf16.mxu0 0
      %2613 = vmatpush1.bf16.msra.mxu0 %v2585
      %2614 = vmatprep.subr.bf16.mxu0 0
      %2615 = vmatpush1.bf16.msra.mxu0 %v2584
      %2616 = vmatprep.subr.bf16.mxu0 0
      %2617 = vmatpush2.bf16.msra.mxu0 0
      %2618 = vmatprep.subr.bf16.mxu0 0
      %2619 = vmatpush2.bf16.msra.mxu0 0
      %2620 = vmatprep.subr.bf16.mxu0 0
      %2621 = vmatpush2.bf16.msra.mxu0 0
      %2622 = vmatprep.subr.bf16.mxu0 0
      %2623 = vmatpush2.bf16.msra.mxu0 0
      %2624 = vmatprep.subr.bf16.mxu0 0
      %2625 = vmatpush2.bf16.msra.mxu0 0
      %2626 = vmatprep.subr.bf16.mxu0 0
      %2627 = vmatpush2.bf16.msra.mxu0 0
      %2628 = vmatprep.subr.bf16.mxu0 0
      %2629 = vmatpush2.bf16.msra.mxu0 0
      %2630 = vmatprep.subr.bf16.mxu0 0
      %2631 = vmatpush2.bf16.msra.mxu0 0
      %2632 = vmatprep.mubr.bf16.mxu0 0
      %2633 = vmatmul.mubr.bf16.gmra.mxu0 %v2522
      %v2634 = vpop.f32.mrf.mxu0
      %v2635 = vadd.f32 0.0, %v2634
      %v2636 = vpop.f32.mrf.mxu0
      %v2637 = vpop.f32.mrf.mxu0
      %v2638 = vadd.f32 0.0, %v2637
      %v2639 = vpop.f32.mrf.mxu0
      %2640 = vmatprep.mubr.bf16.mxu0 0
      %2641 = vmatmul.mubr.bf16.gmra.mxu0 %v2523
      %v2642 = vpop.f32.mrf.mxu0
      %v2643 = vadd.f32 0.0, %v2642
      %v2644 = vpop.f32.mrf.mxu0
      %v2645 = vpop.f32.mrf.mxu0
      %v2646 = vadd.f32 0.0, %v2645
      %v2647 = vpop.f32.mrf.mxu0
      %2648 = vmatprep.mubr.bf16.mxu0 0
      %2649 = vmatmul.mubr.bf16.gmra.mxu0 %v2524
      %v2650 = vpop.f32.mrf.mxu0
      %v2651 = vadd.f32 0.0, %v2650
      %v2652 = vpop.f32.mrf.mxu0
      %v2653 = vpop.f32.mrf.mxu0
      %v2654 = vadd.f32 0.0, %v2653
      %v2655 = vpop.f32.mrf.mxu0
      %2656 = vmatprep.mubr.bf16.mxu0 0
      %2657 = vmatmul.mubr.bf16.gmra.mxu0 %v2525
      %v2658 = vpop.f32.mrf.mxu0
      %v2659 = vadd.f32 0.0, %v2658
      %v2660 = vpop.f32.mrf.mxu0
      %v2661 = vpop.f32.mrf.mxu0
      %v2662 = vadd.f32 0.0, %v2661
      %v2663 = vpop.f32.mrf.mxu0
      %2664 = vmatprep.mubr.bf16.mxu0 0
      %2665 = vmatmul.mubr.bf16.gmra.mxu0 %v2526
      %v2666 = vpop.f32.mrf.mxu0
      %v2667 = vadd.f32 0.0, %v2666
      %v2668 = vpop.f32.mrf.mxu0
      %v2669 = vpop.f32.mrf.mxu0
      %v2670 = vadd.f32 0.0, %v2669
      %v2671 = vpop.f32.mrf.mxu0
      %2672 = vmatprep.mubr.bf16.mxu0 0
      %2673 = vmatmul.mubr.bf16.gmra.mxu0 %v2527
      %v2674 = vpop.f32.mrf.mxu0
      %v2675 = vadd.f32 0.0, %v2674
      %v2676 = vpop.f32.mrf.mxu0
      %v2677 = vpop.f32.mrf.mxu0
      %v2678 = vadd.f32 0.0, %v2677
      %v2679 = vpop.f32.mrf.mxu0
      %2680 = vmatprep.mubr.bf16.mxu0 0
      %2681 = vmatmul.mubr.bf16.gmra.mxu0 %v2528
      %v2682 = vpop.f32.mrf.mxu0
      %v2683 = vadd.f32 0.0, %v2682
      %v2684 = vpop.f32.mrf.mxu0
      %v2685 = vpop.f32.mrf.mxu0
      %v2686 = vadd.f32 0.0, %v2685
      %v2687 = vpop.f32.mrf.mxu0
      %2688 = vmatprep.mubr.bf16.mxu0 0
      %2689 = vmatmul.mubr.bf16.gmra.mxu0 %v2529
      %v2690 = vpop.f32.mrf.mxu0
      %v2691 = vadd.f32 0.0, %v2690
      %v2692 = vpop.f32.mrf.mxu0
      %v2693 = vpop.f32.mrf.mxu0
      %v2694 = vadd.f32 0.0, %v2693
      %v2695 = vpop.f32.mrf.mxu0
      %2696 = vmatprep.mubr.bf16.mxu0 0
      %2697 = vmatmul.mubr.bf16.gmra.mxu0 %v2530
      %v2698 = vpop.f32.mrf.mxu0
      %v2699 = vadd.f32 0.0, %v2698
      %v2700 = vpop.f32.mrf.mxu0
      %v2701 = vpop.f32.mrf.mxu0
      %v2702 = vadd.f32 0.0, %v2701
      %v2703 = vpop.f32.mrf.mxu0
      %2704 = vmatprep.mubr.bf16.mxu0 0
      %2705 = vmatmul.mubr.bf16.gmra.mxu0 %v2531
      %v2706 = vpop.f32.mrf.mxu0
      %v2707 = vadd.f32 0.0, %v2706
      %v2708 = vpop.f32.mrf.mxu0
      %v2709 = vpop.f32.mrf.mxu0
      %v2710 = vadd.f32 0.0, %v2709
      %v2711 = vpop.f32.mrf.mxu0
      %2712 = vmatprep.mubr.bf16.mxu0 0
      %2713 = vmatmul.mubr.bf16.gmra.mxu0 %v2532
      %v2714 = vpop.f32.mrf.mxu0
      %v2715 = vadd.f32 0.0, %v2714
      %v2716 = vpop.f32.mrf.mxu0
      %v2717 = vpop.f32.mrf.mxu0
      %v2718 = vadd.f32 0.0, %v2717
      %v2719 = vpop.f32.mrf.mxu0
      %2720 = vmatprep.mubr.bf16.mxu0 0
      %2721 = vmatmul.mubr.bf16.gmra.mxu0 %v2533
      %v2722 = vpop.f32.mrf.mxu0
      %v2723 = vadd.f32 0.0, %v2722
      %v2724 = vpop.f32.mrf.mxu0
      %v2725 = vpop.f32.mrf.mxu0
      %v2726 = vadd.f32 0.0, %v2725
      %v2727 = vpop.f32.mrf.mxu0
      %2728 = vmatprep.mubr.bf16.mxu0 0
      %2729 = vmatmul.mubr.bf16.gmra.mxu0 %v2534
      %v2730 = vpop.f32.mrf.mxu0
      %v2731 = vadd.f32 0.0, %v2730
      %v2732 = vpop.f32.mrf.mxu0
      %v2733 = vpop.f32.mrf.mxu0
      %v2734 = vpop.f32.mrf.mxu0
      %2735 = vdwg.mxu0
      %2736 = vset.pattern.permute.xlu0 4
      %2737 = vperm.xlu0 %2736, %v1130
      %v2738 = vpop.permute.xlu0 %2737
      %2740 = vset.pattern.permute.xlu0 4
      %2741 = vperm.xlu0 %2740, %v1131
      %v2742 = vpop.permute.xlu0 %2741
      %2744 = vset.pattern.permute.xlu0 4
      %2745 = vperm.xlu0 %2744, %v1132
      %v2746 = vpop.permute.xlu0 %2745
      %2748 = vset.pattern.permute.xlu0 4
      %2749 = vperm.xlu0 %2748, %v1133
      %v2750 = vpop.permute.xlu0 %2749
      %2752 = vset.pattern.permute.xlu0 4
      %2753 = vperm.xlu0 %2752, %v1134
      %v2754 = vpop.permute.xlu0 %2753
      %2756 = vset.pattern.permute.xlu0 4
      %2757 = vperm.xlu0 %2756, %v1135
      %v2758 = vpop.permute.xlu0 %2757
      %2760 = vset.pattern.permute.xlu0 4
      %2761 = vperm.xlu0 %2760, %v1136
      %v2762 = vpop.permute.xlu0 %2761
      %2764 = vset.pattern.permute.xlu0 4
      %2765 = vperm.xlu0 %2764, %v1137
      %v2766 = vpop.permute.xlu0 %2765
      %2768 = vset.pattern.permute.xlu0 4
      %2769 = vperm.xlu0 %2768, %v1138
      %v2770 = vpop.permute.xlu0 %2769
      %2772 = vset.pattern.permute.xlu0 4
      %2773 = vperm.xlu0 %2772, %v1139
      %v2774 = vpop.permute.xlu0 %2773
      %2776 = vset.pattern.permute.xlu0 4
      %2777 = vperm.xlu0 %2776, %v1140
      %v2778 = vpop.permute.xlu0 %2777
      %2780 = vset.pattern.permute.xlu0 4
      %2781 = vperm.xlu0 %2780, %v1141
      %v2782 = vpop.permute.xlu0 %2781
      %2784 = vset.pattern.permute.xlu0 4
      %2785 = vperm.xlu0 %2784, %v1142
      %v2786 = vpop.permute.xlu0 %2785
      %2788 = vset.pattern.permute.xlu0 4
      %2789 = vperm.xlu0 %2788, %v1143
      %v2790 = vpop.permute.xlu0 %2789
      %2792 = vset.pattern.permute.xlu0 4
      %2793 = vperm.xlu0 %2792, %v1144
      %v2794 = vpop.permute.xlu0 %2793
      %2796 = vset.pattern.permute.xlu0 4
      %2797 = vperm.xlu0 %2796, %v1145
      %v2798 = vpop.permute.xlu0 %2797
      %2800 = vset.pattern.permute.xlu0 4
      %2801 = vperm.xlu0 %2800, %v1146
      %v2802 = vpop.permute.xlu0 %2801
      %2804 = vset.pattern.permute.xlu0 4
      %2805 = vperm.xlu0 %2804, %v1147
      %v2806 = vpop.permute.xlu0 %2805
      %2808 = vset.pattern.permute.xlu0 4
      %2809 = vperm.xlu0 %2808, %v1148
      %v2810 = vpop.permute.xlu0 %2809
      %2812 = vset.pattern.permute.xlu0 4
      %2813 = vperm.xlu0 %2812, %v1149
      %v2814 = vpop.permute.xlu0 %2813
      %2816 = vset.pattern.permute.xlu0 4
      %2817 = vperm.xlu0 %2816, %v1150
      %v2818 = vpop.permute.xlu0 %2817
      %2820 = vset.pattern.permute.xlu0 4
      %2821 = vperm.xlu0 %2820, %v1151
      %v2822 = vpop.permute.xlu0 %2821
      %2824 = vset.pattern.permute.xlu0 4
      %2825 = vperm.xlu0 %2824, %v1152
      %v2826 = vpop.permute.xlu0 %2825
      %2828 = vset.pattern.permute.xlu0 4
      %2829 = vperm.xlu0 %2828, %v1153
      %v2830 = vpop.permute.xlu0 %2829
      %2832 = vset.pattern.permute.xlu0 4
      %2833 = vperm.xlu0 %2832, %v1154
      %v2834 = vpop.permute.xlu0 %2833
      %v2836 = vmul.f32 %v2635, %v2738
      %v2837 = vmul.f32 %v2638, %v2742
      %v2838 = vmul.f32 %v2643, %v2746
      %v2839 = vmul.f32 %v2646, %v2750
      %v2840 = vmul.f32 %v2651, %v2754
      %v2841 = vmul.f32 %v2654, %v2758
      %v2842 = vmul.f32 %v2659, %v2762
      %v2843 = vmul.f32 %v2662, %v2766
      %v2844 = vmul.f32 %v2667, %v2770
      %v2845 = vmul.f32 %v2670, %v2774
      %v2846 = vmul.f32 %v2675, %v2778
      %v2847 = vmul.f32 %v2678, %v2782
      %v2848 = vmul.f32 %v2683, %v2786
      %v2849 = vmul.f32 %v2686, %v2790
      %v2850 = vmul.f32 %v2691, %v2794
      %v2851 = vmul.f32 %v2694, %v2798
      %v2852 = vmul.f32 %v2699, %v2802
      %v2853 = vmul.f32 %v2702, %v2806
      %v2854 = vmul.f32 %v2707, %v2810
      %v2855 = vmul.f32 %v2710, %v2814
      %v2856 = vmul.f32 %v2715, %v2818
      %v2857 = vmul.f32 %v2718, %v2822
      %v2858 = vmul.f32 %v2723, %v2826
      %v2859 = vmul.f32 %v2726, %v2830
      %v2860 = vmul.f32 %v2731, %v2834
      %v2861 = vadd.f32 %v2472, %v2836
      %v2862 = vadd.f32 %v2473, %v2837
      %v2863 = vadd.f32 %v2474, %v2838
      %v2864 = vadd.f32 %v2475, %v2839
      %v2865 = vadd.f32 %v2476, %v2840
      %v2866 = vadd.f32 %v2477, %v2841
      %v2867 = vadd.f32 %v2478, %v2842
      %v2868 = vadd.f32 %v2479, %v2843
      %v2869 = vadd.f32 %v2480, %v2844
      %v2870 = vadd.f32 %v2481, %v2845
      %v2871 = vadd.f32 %v2482, %v2846
      %v2872 = vadd.f32 %v2483, %v2847
      %v2873 = vadd.f32 %v2484, %v2848
      %v2874 = vadd.f32 %v2485, %v2849
      %v2875 = vadd.f32 %v2486, %v2850
      %v2876 = vadd.f32 %v2487, %v2851
      %v2877 = vadd.f32 %v2488, %v2852
      %v2878 = vadd.f32 %v2489, %v2853
      %v2879 = vadd.f32 %v2490, %v2854
      %v2880 = vadd.f32 %v2491, %v2855
      %v2881 = vadd.f32 %v2492, %v2856
      %v2882 = vadd.f32 %v2493, %v2857
      %v2883 = vadd.f32 %v2494, %v2858
      %v2884 = vadd.f32 %v2495, %v2859
      %v2885 = vadd.f32 %v2496, %v2860
      %v2886 = vld [vmem:[#allocation3 + $0x11] sm:$0xff]
      %v2887 = vld [vmem:[#allocation3 + $0x19] sm:$0xff]
      %v2888 = vld [vmem:[#allocation3 + $0x21] sm:$0xff]
      %v2889 = vld [vmem:[#allocation3 + $0x29] sm:$0xff]
      %v2890 = vld [vmem:[#allocation3 + $0x31] sm:$0xff]
      %v2891 = vld [vmem:[#allocation3 + $0x39] sm:$0xff]
      %v2892 = vld [vmem:[#allocation3 + $0x41] sm:$0xff]
      %v2893 = vld [vmem:[#allocation3 + $0x49] sm:$0xff]
      %v2894 = vld [vmem:[#allocation3 + $0x51] sm:$0xff]
      %v2895 = vld [vmem:[#allocation3 + $0x59] sm:$0xff]
      %v2896 = vld [vmem:[#allocation3 + $0x61] sm:$0xff]
      %v2897 = vld [vmem:[#allocation3 + $0x69] sm:$0xff]
      %v2898 = vld [vmem:[#allocation3 + $0x71] sm:$0xff]
      %v2899 = vld [vmem:[#allocation3 + $0x79] sm:$0xff]
      %v2900 = vld [vmem:[#allocation3 + $0x81] sm:$0xff]
      %v2901 = vld [vmem:[#allocation3 + $0x89] sm:$0xff]
      %v2902 = vld [vmem:[#allocation3 + $0x91] sm:$0xff]
      %v2903 = vld [vmem:[#allocation3 + $0x99] sm:$0xff]
      %v2904 = vld [vmem:[#allocation3 + $0xa1] sm:$0xff]
      %v2905 = vld [vmem:[#allocation3 + $0xa9] sm:$0xff]
      %v2906 = vld [vmem:[#allocation3 + $0xb1] sm:$0xff]
      %v2907 = vld [vmem:[#allocation3 + $0xb9] sm:$0xff]
      %v2908 = vld [vmem:[#allocation3 + $0xc1] sm:$0xff]
      %v2909 = vld [vmem:[#allocation3 + $0xc9] sm:$0xff]
      %v2910 = vld [vmem:[#allocation3 + $0xd1] sm:$0xff]
      %v2911 = vpack.c.bf16 %v2887, %v2886
      %v2912 = vpack.c.bf16 %v2889, %v2888
      %v2913 = vpack.c.bf16 %v2891, %v2890
      %v2914 = vpack.c.bf16 %v2893, %v2892
      %v2915 = vpack.c.bf16 %v2895, %v2894
      %v2916 = vpack.c.bf16 %v2897, %v2896
      %v2917 = vpack.c.bf16 %v2899, %v2898
      %v2918 = vpack.c.bf16 %v2901, %v2900
      %v2919 = vpack.c.bf16 %v2903, %v2902
      %v2920 = vpack.c.bf16 %v2905, %v2904
      %v2921 = vpack.c.bf16 %v2907, %v2906
      %v2922 = vpack.c.bf16 %v2909, %v2908
      %v2923 = vpack.c.bf16 %v2910, %v2910
      %s2924 = scalar_lea.vmem %s366, 320
      %v2925 = vld [vmem:[%s2924] sm:$0xf]
      %v2926 = vld [vmem:[%s2924 + $0x4] sm:$0xf]
      %v2927 = vld [vmem:[%s2924 + $0x8] sm:$0xf]
      %v2928 = vld [vmem:[%s2924 + $0xc] sm:$0xf]
      %v2929 = vld [vmem:[%s2924 + $0x10] sm:$0xf]
      %v2930 = vld [vmem:[%s2924 + $0x14] sm:$0xf]
      %v2931 = vld [vmem:[%s2924 + $0x18] sm:$0xf]
      %v2932 = vld [vmem:[%s2924 + $0x1c] sm:$0xf]
      %v2933 = vld [vmem:[%s2924 + $0x20] sm:$0xf]
      %v2934 = vld [vmem:[%s2924 + $0x24] sm:$0xf]
      %v2935 = vld [vmem:[%s2924 + $0x28] sm:$0xf]
      %v2936 = vld [vmem:[%s2924 + $0x2c] sm:$0xf]
      %v2937 = vld [vmem:[%s2924 + $0x30] sm:$0xf]
      %v2938 = vld [vmem:[%s2924 + $0x34] sm:$0xf]
      %v2939 = vld [vmem:[%s2924 + $0x38] sm:$0xf]
      %v2940 = vld [vmem:[%s2924 + $0x3c] sm:$0xf]
      %v2957 = vunpack.c.l.b16 %v2925
      %v2958 = vunpack.c.l.b16 %v2926
      %v2959 = vunpack.c.l.b16 %v2927
      %v2960 = vunpack.c.l.b16 %v2928
      %v2961 = vunpack.c.l.b16 %v2929
      %v2962 = vunpack.c.l.b16 %v2930
      %v2963 = vunpack.c.l.b16 %v2931
      %v2964 = vunpack.c.l.b16 %v2932
      %v2965 = vunpack.c.l.b16 %v2933
      %v2966 = vunpack.c.l.b16 %v2934
      %v2967 = vunpack.c.l.b16 %v2935
      %v2968 = vunpack.c.l.b16 %v2936
      %v2969 = vunpack.c.l.b16 %v2937
      %v2970 = vunpack.c.l.b16 %v2938
      %v2971 = vunpack.c.l.b16 %v2939
      %v2972 = vunpack.c.l.b16 %v2940
      %v2973 = vpack.c.b16 %v2958, %v2957
      %v2974 = vpack.c.b16 %v2960, %v2959
      %v2975 = vpack.c.b16 %v2962, %v2961
      %v2976 = vpack.c.b16 %v2964, %v2963
      %v2977 = vpack.c.b16 %v2966, %v2965
      %v2978 = vpack.c.b16 %v2968, %v2967
      %v2979 = vpack.c.b16 %v2970, %v2969
      %v2980 = vpack.c.b16 %v2972, %v2971
      %2989 = vmatprep.subr.bf16.mxu0 0
      %2990 = vmatpush1.bf16.msra.mxu0 %v2980
      %2991 = vmatprep.subr.bf16.mxu0 0
      %2992 = vmatpush1.bf16.msra.mxu0 %v2979
      %2993 = vmatprep.subr.bf16.mxu0 0
      %2994 = vmatpush1.bf16.msra.mxu0 %v2978
      %2995 = vmatprep.subr.bf16.mxu0 0
      %2996 = vmatpush1.bf16.msra.mxu0 %v2977
      %2997 = vmatprep.subr.bf16.mxu0 0
      %2998 = vmatpush1.bf16.msra.mxu0 %v2976
      %2999 = vmatprep.subr.bf16.mxu0 0
      %3000 = vmatpush1.bf16.msra.mxu0 %v2975
      %3001 = vmatprep.subr.bf16.mxu0 0
      %3002 = vmatpush1.bf16.msra.mxu0 %v2974
      %3003 = vmatprep.subr.bf16.mxu0 0
      %3004 = vmatpush1.bf16.msra.mxu0 %v2973
      %3005 = vmatprep.subr.bf16.mxu0 0
      %3006 = vmatpush2.bf16.msra.mxu0 0
      %3007 = vmatprep.subr.bf16.mxu0 0
      %3008 = vmatpush2.bf16.msra.mxu0 0
      %3009 = vmatprep.subr.bf16.mxu0 0
      %3010 = vmatpush2.bf16.msra.mxu0 0
      %3011 = vmatprep.subr.bf16.mxu0 0
      %3012 = vmatpush2.bf16.msra.mxu0 0
      %3013 = vmatprep.subr.bf16.mxu0 0
      %3014 = vmatpush2.bf16.msra.mxu0 0
      %3015 = vmatprep.subr.bf16.mxu0 0
      %3016 = vmatpush2.bf16.msra.mxu0 0
      %3017 = vmatprep.subr.bf16.mxu0 0
      %3018 = vmatpush2.bf16.msra.mxu0 0
      %3019 = vmatprep.subr.bf16.mxu0 0
      %3020 = vmatpush2.bf16.msra.mxu0 0
      %3021 = vmatprep.mubr.bf16.mxu0 0
      %3022 = vmatmul.mubr.bf16.gmra.mxu0 %v2911
      %v3023 = vpop.f32.mrf.mxu0
      %v3024 = vadd.f32 0.0, %v3023
      %v3025 = vpop.f32.mrf.mxu0
      %v3026 = vpop.f32.mrf.mxu0
      %v3027 = vadd.f32 0.0, %v3026
      %v3028 = vpop.f32.mrf.mxu0
      %3029 = vmatprep.mubr.bf16.mxu0 0
      %3030 = vmatmul.mubr.bf16.gmra.mxu0 %v2912
      %v3031 = vpop.f32.mrf.mxu0
      %v3032 = vadd.f32 0.0, %v3031
      %v3033 = vpop.f32.mrf.mxu0
      %v3034 = vpop.f32.mrf.mxu0
      %v3035 = vadd.f32 0.0, %v3034
      %v3036 = vpop.f32.mrf.mxu0
      %3037 = vmatprep.mubr.bf16.mxu0 0
      %3038 = vmatmul.mubr.bf16.gmra.mxu0 %v2913
      %v3039 = vpop.f32.mrf.mxu0
      %v3040 = vadd.f32 0.0, %v3039
      %v3041 = vpop.f32.mrf.mxu0
      %v3042 = vpop.f32.mrf.mxu0
      %v3043 = vadd.f32 0.0, %v3042
      %v3044 = vpop.f32.mrf.mxu0
      %3045 = vmatprep.mubr.bf16.mxu0 0
      %3046 = vmatmul.mubr.bf16.gmra.mxu0 %v2914
      %v3047 = vpop.f32.mrf.mxu0
      %v3048 = vadd.f32 0.0, %v3047
      %v3049 = vpop.f32.mrf.mxu0
      %v3050 = vpop.f32.mrf.mxu0
      %v3051 = vadd.f32 0.0, %v3050
      %v3052 = vpop.f32.mrf.mxu0
      %3053 = vmatprep.mubr.bf16.mxu0 0
      %3054 = vmatmul.mubr.bf16.gmra.mxu0 %v2915
      %v3055 = vpop.f32.mrf.mxu0
      %v3056 = vadd.f32 0.0, %v3055
      %v3057 = vpop.f32.mrf.mxu0
      %v3058 = vpop.f32.mrf.mxu0
      %v3059 = vadd.f32 0.0, %v3058
      %v3060 = vpop.f32.mrf.mxu0
      %3061 = vmatprep.mubr.bf16.mxu0 0
      %3062 = vmatmul.mubr.bf16.gmra.mxu0 %v2916
      %v3063 = vpop.f32.mrf.mxu0
      %v3064 = vadd.f32 0.0, %v3063
      %v3065 = vpop.f32.mrf.mxu0
      %v3066 = vpop.f32.mrf.mxu0
      %v3067 = vadd.f32 0.0, %v3066
      %v3068 = vpop.f32.mrf.mxu0
      %3069 = vmatprep.mubr.bf16.mxu0 0
      %3070 = vmatmul.mubr.bf16.gmra.mxu0 %v2917
      %v3071 = vpop.f32.mrf.mxu0
      %v3072 = vadd.f32 0.0, %v3071
      %v3073 = vpop.f32.mrf.mxu0
      %v3074 = vpop.f32.mrf.mxu0
      %v3075 = vadd.f32 0.0, %v3074
      %v3076 = vpop.f32.mrf.mxu0
      %3077 = vmatprep.mubr.bf16.mxu0 0
      %3078 = vmatmul.mubr.bf16.gmra.mxu0 %v2918
      %v3079 = vpop.f32.mrf.mxu0
      %v3080 = vadd.f32 0.0, %v3079
      %v3081 = vpop.f32.mrf.mxu0
      %v3082 = vpop.f32.mrf.mxu0
      %v3083 = vadd.f32 0.0, %v3082
      %v3084 = vpop.f32.mrf.mxu0
      %3085 = vmatprep.mubr.bf16.mxu0 0
      %3086 = vmatmul.mubr.bf16.gmra.mxu0 %v2919
      %v3087 = vpop.f32.mrf.mxu0
      %v3088 = vadd.f32 0.0, %v3087
      %v3089 = vpop.f32.mrf.mxu0
      %v3090 = vpop.f32.mrf.mxu0
      %v3091 = vadd.f32 0.0, %v3090
      %v3092 = vpop.f32.mrf.mxu0
      %3093 = vmatprep.mubr.bf16.mxu0 0
      %3094 = vmatmul.mubr.bf16.gmra.mxu0 %v2920
      %v3095 = vpop.f32.mrf.mxu0
      %v3096 = vadd.f32 0.0, %v3095
      %v3097 = vpop.f32.mrf.mxu0
      %v3098 = vpop.f32.mrf.mxu0
      %v3099 = vadd.f32 0.0, %v3098
      %v3100 = vpop.f32.mrf.mxu0
      %3101 = vmatprep.mubr.bf16.mxu0 0
      %3102 = vmatmul.mubr.bf16.gmra.mxu0 %v2921
      %v3103 = vpop.f32.mrf.mxu0
      %v3104 = vadd.f32 0.0, %v3103
      %v3105 = vpop.f32.mrf.mxu0
      %v3106 = vpop.f32.mrf.mxu0
      %v3107 = vadd.f32 0.0, %v3106
      %v3108 = vpop.f32.mrf.mxu0
      %3109 = vmatprep.mubr.bf16.mxu0 0
      %3110 = vmatmul.mubr.bf16.gmra.mxu0 %v2922
      %v3111 = vpop.f32.mrf.mxu0
      %v3112 = vadd.f32 0.0, %v3111
      %v3113 = vpop.f32.mrf.mxu0
      %v3114 = vpop.f32.mrf.mxu0
      %v3115 = vadd.f32 0.0, %v3114
      %v3116 = vpop.f32.mrf.mxu0
      %3117 = vmatprep.mubr.bf16.mxu0 0
      %3118 = vmatmul.mubr.bf16.gmra.mxu0 %v2923
      %v3119 = vpop.f32.mrf.mxu0
      %v3120 = vadd.f32 0.0, %v3119
      %v3121 = vpop.f32.mrf.mxu0
      %v3122 = vpop.f32.mrf.mxu0
      %v3123 = vpop.f32.mrf.mxu0
      %3124 = vdwg.mxu0
      %3125 = vset.pattern.permute.xlu0 5
      %3126 = vperm.xlu0 %3125, %v1130
      %v3127 = vpop.permute.xlu0 %3126
      %3129 = vset.pattern.permute.xlu0 5
      %3130 = vperm.xlu0 %3129, %v1131
      %v3131 = vpop.permute.xlu0 %3130
      %3133 = vset.pattern.permute.xlu0 5
      %3134 = vperm.xlu0 %3133, %v1132
      %v3135 = vpop.permute.xlu0 %3134
      %3137 = vset.pattern.permute.xlu0 5
      %3138 = vperm.xlu0 %3137, %v1133
      %v3139 = vpop.permute.xlu0 %3138
      %3141 = vset.pattern.permute.xlu0 5
      %3142 = vperm.xlu0 %3141, %v1134
      %v3143 = vpop.permute.xlu0 %3142
      %3145 = vset.pattern.permute.xlu0 5
      %3146 = vperm.xlu0 %3145, %v1135
      %v3147 = vpop.permute.xlu0 %3146
      %3149 = vset.pattern.permute.xlu0 5
      %3150 = vperm.xlu0 %3149, %v1136
      %v3151 = vpop.permute.xlu0 %3150
      %3153 = vset.pattern.permute.xlu0 5
      %3154 = vperm.xlu0 %3153, %v1137
      %v3155 = vpop.permute.xlu0 %3154
      %3157 = vset.pattern.permute.xlu0 5
      %3158 = vperm.xlu0 %3157, %v1138
      %v3159 = vpop.permute.xlu0 %3158
      %3161 = vset.pattern.permute.xlu0 5
      %3162 = vperm.xlu0 %3161, %v1139
      %v3163 = vpop.permute.xlu0 %3162
      %3165 = vset.pattern.permute.xlu0 5
      %3166 = vperm.xlu0 %3165, %v1140
      %v3167 = vpop.permute.xlu0 %3166
      %3169 = vset.pattern.permute.xlu0 5
      %3170 = vperm.xlu0 %3169, %v1141
      %v3171 = vpop.permute.xlu0 %3170
      %3173 = vset.pattern.permute.xlu0 5
      %3174 = vperm.xlu0 %3173, %v1142
      %v3175 = vpop.permute.xlu0 %3174
      %3177 = vset.pattern.permute.xlu0 5
      %3178 = vperm.xlu0 %3177, %v1143
      %v3179 = vpop.permute.xlu0 %3178
      %3181 = vset.pattern.permute.xlu0 5
      %3182 = vperm.xlu0 %3181, %v1144
      %v3183 = vpop.permute.xlu0 %3182
      %3185 = vset.pattern.permute.xlu0 5
      %3186 = vperm.xlu0 %3185, %v1145
      %v3187 = vpop.permute.xlu0 %3186
      %3189 = vset.pattern.permute.xlu0 5
      %3190 = vperm.xlu0 %3189, %v1146
      %v3191 = vpop.permute.xlu0 %3190
      %3193 = vset.pattern.permute.xlu0 5
      %3194 = vperm.xlu0 %3193, %v1147
      %v3195 = vpop.permute.xlu0 %3194
      %3197 = vset.pattern.permute.xlu0 5
      %3198 = vperm.xlu0 %3197, %v1148
      %v3199 = vpop.permute.xlu0 %3198
      %3201 = vset.pattern.permute.xlu0 5
      %3202 = vperm.xlu0 %3201, %v1149
      %v3203 = vpop.permute.xlu0 %3202
      %3205 = vset.pattern.permute.xlu0 5
      %3206 = vperm.xlu0 %3205, %v1150
      %v3207 = vpop.permute.xlu0 %3206
      %3209 = vset.pattern.permute.xlu0 5
      %3210 = vperm.xlu0 %3209, %v1151
      %v3211 = vpop.permute.xlu0 %3210
      %3213 = vset.pattern.permute.xlu0 5
      %3214 = vperm.xlu0 %3213, %v1152
      %v3215 = vpop.permute.xlu0 %3214
      %3217 = vset.pattern.permute.xlu0 5
      %3218 = vperm.xlu0 %3217, %v1153
      %v3219 = vpop.permute.xlu0 %3218
      %3221 = vset.pattern.permute.xlu0 5
      %3222 = vperm.xlu0 %3221, %v1154
      %v3223 = vpop.permute.xlu0 %3222
      %v3225 = vmul.f32 %v3024, %v3127
      %v3226 = vmul.f32 %v3027, %v3131
      %v3227 = vmul.f32 %v3032, %v3135
      %v3228 = vmul.f32 %v3035, %v3139
      %v3229 = vmul.f32 %v3040, %v3143
      %v3230 = vmul.f32 %v3043, %v3147
      %v3231 = vmul.f32 %v3048, %v3151
      %v3232 = vmul.f32 %v3051, %v3155
      %v3233 = vmul.f32 %v3056, %v3159
      %v3234 = vmul.f32 %v3059, %v3163
      %v3235 = vmul.f32 %v3064, %v3167
      %v3236 = vmul.f32 %v3067, %v3171
      %v3237 = vmul.f32 %v3072, %v3175
      %v3238 = vmul.f32 %v3075, %v3179
      %v3239 = vmul.f32 %v3080, %v3183
      %v3240 = vmul.f32 %v3083, %v3187
      %v3241 = vmul.f32 %v3088, %v3191
      %v3242 = vmul.f32 %v3091, %v3195
      %v3243 = vmul.f32 %v3096, %v3199
      %v3244 = vmul.f32 %v3099, %v3203
      %v3245 = vmul.f32 %v3104, %v3207
      %v3246 = vmul.f32 %v3107, %v3211
      %v3247 = vmul.f32 %v3112, %v3215
      %v3248 = vmul.f32 %v3115, %v3219
      %v3249 = vmul.f32 %v3120, %v3223
      %v3250 = vadd.f32 %v2861, %v3225
      %v3251 = vadd.f32 %v2862, %v3226
      %v3252 = vadd.f32 %v2863, %v3227
      %v3253 = vadd.f32 %v2864, %v3228
      %v3254 = vadd.f32 %v2865, %v3229
      %v3255 = vadd.f32 %v2866, %v3230
      %v3256 = vadd.f32 %v2867, %v3231
      %v3257 = vadd.f32 %v2868, %v3232
      %v3258 = vadd.f32 %v2869, %v3233
      %v3259 = vadd.f32 %v2870, %v3234
      %v3260 = vadd.f32 %v2871, %v3235
      %v3261 = vadd.f32 %v2872, %v3236
      %v3262 = vadd.f32 %v2873, %v3237
      %v3263 = vadd.f32 %v2874, %v3238
      %v3264 = vadd.f32 %v2875, %v3239
      %v3265 = vadd.f32 %v2876, %v3240
      %v3266 = vadd.f32 %v2877, %v3241
      %v3267 = vadd.f32 %v2878, %v3242
      %v3268 = vadd.f32 %v2879, %v3243
      %v3269 = vadd.f32 %v2880, %v3244
      %v3270 = vadd.f32 %v2881, %v3245
      %v3271 = vadd.f32 %v2882, %v3246
      %v3272 = vadd.f32 %v2883, %v3247
      %v3273 = vadd.f32 %v2884, %v3248
      %v3274 = vadd.f32 %v2885, %v3249
      %v3275 = vld [vmem:[#allocation3 + $0x19] sm:$0xff]
      %v3276 = vld [vmem:[#allocation3 + $0x21] sm:$0xff]
      %v3277 = vld [vmem:[#allocation3 + $0x29] sm:$0xff]
      %v3278 = vld [vmem:[#allocation3 + $0x31] sm:$0xff]
      %v3279 = vld [vmem:[#allocation3 + $0x39] sm:$0xff]
      %v3280 = vld [vmem:[#allocation3 + $0x41] sm:$0xff]
      %v3281 = vld [vmem:[#allocation3 + $0x49] sm:$0xff]
      %v3282 = vld [vmem:[#allocation3 + $0x51] sm:$0xff]
      %v3283 = vld [vmem:[#allocation3 + $0x59] sm:$0xff]
      %v3284 = vld [vmem:[#allocation3 + $0x61] sm:$0xff]
      %v3285 = vld [vmem:[#allocation3 + $0x69] sm:$0xff]
      %v3286 = vld [vmem:[#allocation3 + $0x71] sm:$0xff]
      %v3287 = vld [vmem:[#allocation3 + $0x79] sm:$0xff]
      %v3288 = vld [vmem:[#allocation3 + $0x81] sm:$0xff]
      %v3289 = vld [vmem:[#allocation3 + $0x89] sm:$0xff]
      %v3290 = vld [vmem:[#allocation3 + $0x91] sm:$0xff]
      %v3291 = vld [vmem:[#allocation3 + $0x99] sm:$0xff]
      %v3292 = vld [vmem:[#allocation3 + $0xa1] sm:$0xff]
      %v3293 = vld [vmem:[#allocation3 + $0xa9] sm:$0xff]
      %v3294 = vld [vmem:[#allocation3 + $0xb1] sm:$0xff]
      %v3295 = vld [vmem:[#allocation3 + $0xb9] sm:$0xff]
      %v3296 = vld [vmem:[#allocation3 + $0xc1] sm:$0xff]
      %v3297 = vld [vmem:[#allocation3 + $0xc9] sm:$0xff]
      %v3298 = vld [vmem:[#allocation3 + $0xd1] sm:$0xff]
      %v3299 = vld [vmem:[#allocation3 + $0xd9] sm:$0xff]
      %v3300 = vpack.c.bf16 %v3276, %v3275
      %v3301 = vpack.c.bf16 %v3278, %v3277
      %v3302 = vpack.c.bf16 %v3280, %v3279
      %v3303 = vpack.c.bf16 %v3282, %v3281
      %v3304 = vpack.c.bf16 %v3284, %v3283
      %v3305 = vpack.c.bf16 %v3286, %v3285
      %v3306 = vpack.c.bf16 %v3288, %v3287
      %v3307 = vpack.c.bf16 %v3290, %v3289
      %v3308 = vpack.c.bf16 %v3292, %v3291
      %v3309 = vpack.c.bf16 %v3294, %v3293
      %v3310 = vpack.c.bf16 %v3296, %v3295
      %v3311 = vpack.c.bf16 %v3298, %v3297
      %v3312 = vpack.c.bf16 %v3299, %v3299
      %s3313 = scalar_lea.vmem %s366, 384
      %v3314 = vld [vmem:[%s3313] sm:$0xf]
      %v3315 = vld [vmem:[%s3313 + $0x4] sm:$0xf]
      %v3316 = vld [vmem:[%s3313 + $0x8] sm:$0xf]
      %v3317 = vld [vmem:[%s3313 + $0xc] sm:$0xf]
      %v3318 = vld [vmem:[%s3313 + $0x10] sm:$0xf]
      %v3319 = vld [vmem:[%s3313 + $0x14] sm:$0xf]
      %v3320 = vld [vmem:[%s3313 + $0x18] sm:$0xf]
      %v3321 = vld [vmem:[%s3313 + $0x1c] sm:$0xf]
      %v3322 = vld [vmem:[%s3313 + $0x20] sm:$0xf]
      %v3323 = vld [vmem:[%s3313 + $0x24] sm:$0xf]
      %v3324 = vld [vmem:[%s3313 + $0x28] sm:$0xf]
      %v3325 = vld [vmem:[%s3313 + $0x2c] sm:$0xf]
      %v3326 = vld [vmem:[%s3313 + $0x30] sm:$0xf]
      %v3327 = vld [vmem:[%s3313 + $0x34] sm:$0xf]
      %v3328 = vld [vmem:[%s3313 + $0x38] sm:$0xf]
      %v3329 = vld [vmem:[%s3313 + $0x3c] sm:$0xf]
      %v3346 = vunpack.c.l.b16 %v3314
      %v3347 = vunpack.c.l.b16 %v3315
      %v3348 = vunpack.c.l.b16 %v3316
      %v3349 = vunpack.c.l.b16 %v3317
      %v3350 = vunpack.c.l.b16 %v3318
      %v3351 = vunpack.c.l.b16 %v3319
      %v3352 = vunpack.c.l.b16 %v3320
      %v3353 = vunpack.c.l.b16 %v3321
      %v3354 = vunpack.c.l.b16 %v3322
      %v3355 = vunpack.c.l.b16 %v3323
      %v3356 = vunpack.c.l.b16 %v3324
      %v3357 = vunpack.c.l.b16 %v3325
      %v3358 = vunpack.c.l.b16 %v3326
      %v3359 = vunpack.c.l.b16 %v3327
      %v3360 = vunpack.c.l.b16 %v3328
      %v3361 = vunpack.c.l.b16 %v3329
      %v3362 = vpack.c.b16 %v3347, %v3346
      %v3363 = vpack.c.b16 %v3349, %v3348
      %v3364 = vpack.c.b16 %v3351, %v3350
      %v3365 = vpack.c.b16 %v3353, %v3352
      %v3366 = vpack.c.b16 %v3355, %v3354
      %v3367 = vpack.c.b16 %v3357, %v3356
      %v3368 = vpack.c.b16 %v3359, %v3358
      %v3369 = vpack.c.b16 %v3361, %v3360
      %3378 = vmatprep.subr.bf16.mxu0 0
      %3379 = vmatpush1.bf16.msra.mxu0 %v3369
      %3380 = vmatprep.subr.bf16.mxu0 0
      %3381 = vmatpush1.bf16.msra.mxu0 %v3368
      %3382 = vmatprep.subr.bf16.mxu0 0
      %3383 = vmatpush1.bf16.msra.mxu0 %v3367
      %3384 = vmatprep.subr.bf16.mxu0 0
      %3385 = vmatpush1.bf16.msra.mxu0 %v3366
      %3386 = vmatprep.subr.bf16.mxu0 0
      %3387 = vmatpush1.bf16.msra.mxu0 %v3365
      %3388 = vmatprep.subr.bf16.mxu0 0
      %3389 = vmatpush1.bf16.msra.mxu0 %v3364
      %3390 = vmatprep.subr.bf16.mxu0 0
      %3391 = vmatpush1.bf16.msra.mxu0 %v3363
      %3392 = vmatprep.subr.bf16.mxu0 0
      %3393 = vmatpush1.bf16.msra.mxu0 %v3362
      %3394 = vmatprep.subr.bf16.mxu0 0
      %3395 = vmatpush2.bf16.msra.mxu0 0
      %3396 = vmatprep.subr.bf16.mxu0 0
      %3397 = vmatpush2.bf16.msra.mxu0 0
      %3398 = vmatprep.subr.bf16.mxu0 0
      %3399 = vmatpush2.bf16.msra.mxu0 0
      %3400 = vmatprep.subr.bf16.mxu0 0
      %3401 = vmatpush2.bf16.msra.mxu0 0
      %3402 = vmatprep.subr.bf16.mxu0 0
      %3403 = vmatpush2.bf16.msra.mxu0 0
      %3404 = vmatprep.subr.bf16.mxu0 0
      %3405 = vmatpush2.bf16.msra.mxu0 0
      %3406 = vmatprep.subr.bf16.mxu0 0
      %3407 = vmatpush2.bf16.msra.mxu0 0
      %3408 = vmatprep.subr.bf16.mxu0 0
      %3409 = vmatpush2.bf16.msra.mxu0 0
      %3410 = vmatprep.mubr.bf16.mxu0 0
      %3411 = vmatmul.mubr.bf16.gmra.mxu0 %v3300
      %v3412 = vpop.f32.mrf.mxu0
      %v3413 = vadd.f32 0.0, %v3412
      %v3414 = vpop.f32.mrf.mxu0
      %v3415 = vpop.f32.mrf.mxu0
      %v3416 = vadd.f32 0.0, %v3415
      %v3417 = vpop.f32.mrf.mxu0
      %3418 = vmatprep.mubr.bf16.mxu0 0
      %3419 = vmatmul.mubr.bf16.gmra.mxu0 %v3301
      %v3420 = vpop.f32.mrf.mxu0
      %v3421 = vadd.f32 0.0, %v3420
      %v3422 = vpop.f32.mrf.mxu0
      %v3423 = vpop.f32.mrf.mxu0
      %v3424 = vadd.f32 0.0, %v3423
      %v3425 = vpop.f32.mrf.mxu0
      %3426 = vmatprep.mubr.bf16.mxu0 0
      %3427 = vmatmul.mubr.bf16.gmra.mxu0 %v3302
      %v3428 = vpop.f32.mrf.mxu0
      %v3429 = vadd.f32 0.0, %v3428
      %v3430 = vpop.f32.mrf.mxu0
      %v3431 = vpop.f32.mrf.mxu0
      %v3432 = vadd.f32 0.0, %v3431
      %v3433 = vpop.f32.mrf.mxu0
      %3434 = vmatprep.mubr.bf16.mxu0 0
      %3435 = vmatmul.mubr.bf16.gmra.mxu0 %v3303
      %v3436 = vpop.f32.mrf.mxu0
      %v3437 = vadd.f32 0.0, %v3436
      %v3438 = vpop.f32.mrf.mxu0
      %v3439 = vpop.f32.mrf.mxu0
      %v3440 = vadd.f32 0.0, %v3439
      %v3441 = vpop.f32.mrf.mxu0
      %3442 = vmatprep.mubr.bf16.mxu0 0
      %3443 = vmatmul.mubr.bf16.gmra.mxu0 %v3304
      %v3444 = vpop.f32.mrf.mxu0
      %v3445 = vadd.f32 0.0, %v3444
      %v3446 = vpop.f32.mrf.mxu0
      %v3447 = vpop.f32.mrf.mxu0
      %v3448 = vadd.f32 0.0, %v3447
      %v3449 = vpop.f32.mrf.mxu0
      %3450 = vmatprep.mubr.bf16.mxu0 0
      %3451 = vmatmul.mubr.bf16.gmra.mxu0 %v3305
      %v3452 = vpop.f32.mrf.mxu0
      %v3453 = vadd.f32 0.0, %v3452
      %v3454 = vpop.f32.mrf.mxu0
      %v3455 = vpop.f32.mrf.mxu0
      %v3456 = vadd.f32 0.0, %v3455
      %v3457 = vpop.f32.mrf.mxu0
      %3458 = vmatprep.mubr.bf16.mxu0 0
      %3459 = vmatmul.mubr.bf16.gmra.mxu0 %v3306
      %v3460 = vpop.f32.mrf.mxu0
      %v3461 = vadd.f32 0.0, %v3460
      %v3462 = vpop.f32.mrf.mxu0
      %v3463 = vpop.f32.mrf.mxu0
      %v3464 = vadd.f32 0.0, %v3463
      %v3465 = vpop.f32.mrf.mxu0
      %3466 = vmatprep.mubr.bf16.mxu0 0
      %3467 = vmatmul.mubr.bf16.gmra.mxu0 %v3307
      %v3468 = vpop.f32.mrf.mxu0
      %v3469 = vadd.f32 0.0, %v3468
      %v3470 = vpop.f32.mrf.mxu0
      %v3471 = vpop.f32.mrf.mxu0
      %v3472 = vadd.f32 0.0, %v3471
      %v3473 = vpop.f32.mrf.mxu0
      %3474 = vmatprep.mubr.bf16.mxu0 0
      %3475 = vmatmul.mubr.bf16.gmra.mxu0 %v3308
      %v3476 = vpop.f32.mrf.mxu0
      %v3477 = vadd.f32 0.0, %v3476
      %v3478 = vpop.f32.mrf.mxu0
      %v3479 = vpop.f32.mrf.mxu0
      %v3480 = vadd.f32 0.0, %v3479
      %v3481 = vpop.f32.mrf.mxu0
      %3482 = vmatprep.mubr.bf16.mxu0 0
      %3483 = vmatmul.mubr.bf16.gmra.mxu0 %v3309
      %v3484 = vpop.f32.mrf.mxu0
      %v3485 = vadd.f32 0.0, %v3484
      %v3486 = vpop.f32.mrf.mxu0
      %v3487 = vpop.f32.mrf.mxu0
      %v3488 = vadd.f32 0.0, %v3487
      %v3489 = vpop.f32.mrf.mxu0
      %3490 = vmatprep.mubr.bf16.mxu0 0
      %3491 = vmatmul.mubr.bf16.gmra.mxu0 %v3310
      %v3492 = vpop.f32.mrf.mxu0
      %v3493 = vadd.f32 0.0, %v3492
      %v3494 = vpop.f32.mrf.mxu0
      %v3495 = vpop.f32.mrf.mxu0
      %v3496 = vadd.f32 0.0, %v3495
      %v3497 = vpop.f32.mrf.mxu0
      %3498 = vmatprep.mubr.bf16.mxu0 0
      %3499 = vmatmul.mubr.bf16.gmra.mxu0 %v3311
      %v3500 = vpop.f32.mrf.mxu0
      %v3501 = vadd.f32 0.0, %v3500
      %v3502 = vpop.f32.mrf.mxu0
      %v3503 = vpop.f32.mrf.mxu0
      %v3504 = vadd.f32 0.0, %v3503
      %v3505 = vpop.f32.mrf.mxu0
      %3506 = vmatprep.mubr.bf16.mxu0 0
      %3507 = vmatmul.mubr.bf16.gmra.mxu0 %v3312
      %v3508 = vpop.f32.mrf.mxu0
      %v3509 = vadd.f32 0.0, %v3508
      %v3510 = vpop.f32.mrf.mxu0
      %v3511 = vpop.f32.mrf.mxu0
      %v3512 = vpop.f32.mrf.mxu0
      %3513 = vdwg.mxu0
      %3514 = vset.pattern.permute.xlu0 6
      %3515 = vperm.xlu0 %3514, %v1130
      %v3516 = vpop.permute.xlu0 %3515
      %3518 = vset.pattern.permute.xlu0 6
      %3519 = vperm.xlu0 %3518, %v1131
      %v3520 = vpop.permute.xlu0 %3519
      %3522 = vset.pattern.permute.xlu0 6
      %3523 = vperm.xlu0 %3522, %v1132
      %v3524 = vpop.permute.xlu0 %3523
      %3526 = vset.pattern.permute.xlu0 6
      %3527 = vperm.xlu0 %3526, %v1133
      %v3528 = vpop.permute.xlu0 %3527
      %3530 = vset.pattern.permute.xlu0 6
      %3531 = vperm.xlu0 %3530, %v1134
      %v3532 = vpop.permute.xlu0 %3531
      %3534 = vset.pattern.permute.xlu0 6
      %3535 = vperm.xlu0 %3534, %v1135
      %v3536 = vpop.permute.xlu0 %3535
      %3538 = vset.pattern.permute.xlu0 6
      %3539 = vperm.xlu0 %3538, %v1136
      %v3540 = vpop.permute.xlu0 %3539
      %3542 = vset.pattern.permute.xlu0 6
      %3543 = vperm.xlu0 %3542, %v1137
      %v3544 = vpop.permute.xlu0 %3543
      %3546 = vset.pattern.permute.xlu0 6
      %3547 = vperm.xlu0 %3546, %v1138
      %v3548 = vpop.permute.xlu0 %3547
      %3550 = vset.pattern.permute.xlu0 6
      %3551 = vperm.xlu0 %3550, %v1139
      %v3552 = vpop.permute.xlu0 %3551
      %3554 = vset.pattern.permute.xlu0 6
      %3555 = vperm.xlu0 %3554, %v1140
      %v3556 = vpop.permute.xlu0 %3555
      %3558 = vset.pattern.permute.xlu0 6
      %3559 = vperm.xlu0 %3558, %v1141
      %v3560 = vpop.permute.xlu0 %3559
      %3562 = vset.pattern.permute.xlu0 6
      %3563 = vperm.xlu0 %3562, %v1142
      %v3564 = vpop.permute.xlu0 %3563
      %3566 = vset.pattern.permute.xlu0 6
      %3567 = vperm.xlu0 %3566, %v1143
      %v3568 = vpop.permute.xlu0 %3567
      %3570 = vset.pattern.permute.xlu0 6
      %3571 = vperm.xlu0 %3570, %v1144
      %v3572 = vpop.permute.xlu0 %3571
      %3574 = vset.pattern.permute.xlu0 6
      %3575 = vperm.xlu0 %3574, %v1145
      %v3576 = vpop.permute.xlu0 %3575
      %3578 = vset.pattern.permute.xlu0 6
      %3579 = vperm.xlu0 %3578, %v1146
      %v3580 = vpop.permute.xlu0 %3579
      %3582 = vset.pattern.permute.xlu0 6
      %3583 = vperm.xlu0 %3582, %v1147
      %v3584 = vpop.permute.xlu0 %3583
      %3586 = vset.pattern.permute.xlu0 6
      %3587 = vperm.xlu0 %3586, %v1148
      %v3588 = vpop.permute.xlu0 %3587
      %3590 = vset.pattern.permute.xlu0 6
      %3591 = vperm.xlu0 %3590, %v1149
      %v3592 = vpop.permute.xlu0 %3591
      %3594 = vset.pattern.permute.xlu0 6
      %3595 = vperm.xlu0 %3594, %v1150
      %v3596 = vpop.permute.xlu0 %3595
      %3598 = vset.pattern.permute.xlu0 6
      %3599 = vperm.xlu0 %3598, %v1151
      %v3600 = vpop.permute.xlu0 %3599
      %3602 = vset.pattern.permute.xlu0 6
      %3603 = vperm.xlu0 %3602, %v1152
      %v3604 = vpop.permute.xlu0 %3603
      %3606 = vset.pattern.permute.xlu0 6
      %3607 = vperm.xlu0 %3606, %v1153
      %v3608 = vpop.permute.xlu0 %3607
      %3610 = vset.pattern.permute.xlu0 6
      %3611 = vperm.xlu0 %3610, %v1154
      %v3612 = vpop.permute.xlu0 %3611
      %v3614 = vmul.f32 %v3413, %v3516
      %v3615 = vmul.f32 %v3416, %v3520
      %v3616 = vmul.f32 %v3421, %v3524
      %v3617 = vmul.f32 %v3424, %v3528
      %v3618 = vmul.f32 %v3429, %v3532
      %v3619 = vmul.f32 %v3432, %v3536
      %v3620 = vmul.f32 %v3437, %v3540
      %v3621 = vmul.f32 %v3440, %v3544
      %v3622 = vmul.f32 %v3445, %v3548
      %v3623 = vmul.f32 %v3448, %v3552
      %v3624 = vmul.f32 %v3453, %v3556
      %v3625 = vmul.f32 %v3456, %v3560
      %v3626 = vmul.f32 %v3461, %v3564
      %v3627 = vmul.f32 %v3464, %v3568
      %v3628 = vmul.f32 %v3469, %v3572
      %v3629 = vmul.f32 %v3472, %v3576
      %v3630 = vmul.f32 %v3477, %v3580
      %v3631 = vmul.f32 %v3480, %v3584
      %v3632 = vmul.f32 %v3485, %v3588
      %v3633 = vmul.f32 %v3488, %v3592
      %v3634 = vmul.f32 %v3493, %v3596
      %v3635 = vmul.f32 %v3496, %v3600
      %v3636 = vmul.f32 %v3501, %v3604
      %v3637 = vmul.f32 %v3504, %v3608
      %v3638 = vmul.f32 %v3509, %v3612
      %v3639 = vadd.f32 %v3250, %v3614
      %v3640 = vadd.f32 %v3251, %v3615
      %v3641 = vadd.f32 %v3252, %v3616
      %v3642 = vadd.f32 %v3253, %v3617
      %v3643 = vadd.f32 %v3254, %v3618
      %v3644 = vadd.f32 %v3255, %v3619
      %v3645 = vadd.f32 %v3256, %v3620
      %v3646 = vadd.f32 %v3257, %v3621
      %v3647 = vadd.f32 %v3258, %v3622
      %v3648 = vadd.f32 %v3259, %v3623
      %v3649 = vadd.f32 %v3260, %v3624
      %v3650 = vadd.f32 %v3261, %v3625
      %v3651 = vadd.f32 %v3262, %v3626
      %v3652 = vadd.f32 %v3263, %v3627
      %v3653 = vadd.f32 %v3264, %v3628
      %v3654 = vadd.f32 %v3265, %v3629
      %v3655 = vadd.f32 %v3266, %v3630
      %v3656 = vadd.f32 %v3267, %v3631
      %v3657 = vadd.f32 %v3268, %v3632
      %v3658 = vadd.f32 %v3269, %v3633
      %v3659 = vadd.f32 %v3270, %v3634
      %v3660 = vadd.f32 %v3271, %v3635
      %v3661 = vadd.f32 %v3272, %v3636
      %v3662 = vadd.f32 %v3273, %v3637
      %v3663 = vadd.f32 %v3274, %v3638
      %v3664 = vld [vmem:[#allocation3 + $0x1a] sm:$0xff]
      %v3665 = vld [vmem:[#allocation3 + $0x22] sm:$0xff]
      %v3666 = vld [vmem:[#allocation3 + $0x2a] sm:$0xff]
      %v3667 = vld [vmem:[#allocation3 + $0x32] sm:$0xff]
      %v3668 = vld [vmem:[#allocation3 + $0x3a] sm:$0xff]
      %v3669 = vld [vmem:[#allocation3 + $0x42] sm:$0xff]
      %v3670 = vld [vmem:[#allocation3 + $0x4a] sm:$0xff]
      %v3671 = vld [vmem:[#allocation3 + $0x52] sm:$0xff]
      %v3672 = vld [vmem:[#allocation3 + $0x5a] sm:$0xff]
      %v3673 = vld [vmem:[#allocation3 + $0x62] sm:$0xff]
      %v3674 = vld [vmem:[#allocation3 + $0x6a] sm:$0xff]
      %v3675 = vld [vmem:[#allocation3 + $0x72] sm:$0xff]
      %v3676 = vld [vmem:[#allocation3 + $0x7a] sm:$0xff]
      %v3677 = vld [vmem:[#allocation3 + $0x82] sm:$0xff]
      %v3678 = vld [vmem:[#allocation3 + $0x8a] sm:$0xff]
      %v3679 = vld [vmem:[#allocation3 + $0x92] sm:$0xff]
      %v3680 = vld [vmem:[#allocation3 + $0x9a] sm:$0xff]
      %v3681 = vld [vmem:[#allocation3 + $0xa2] sm:$0xff]
      %v3682 = vld [vmem:[#allocation3 + $0xaa] sm:$0xff]
      %v3683 = vld [vmem:[#allocation3 + $0xb2] sm:$0xff]
      %v3684 = vld [vmem:[#allocation3 + $0xba] sm:$0xff]
      %v3685 = vld [vmem:[#allocation3 + $0xc2] sm:$0xff]
      %v3686 = vld [vmem:[#allocation3 + $0xca] sm:$0xff]
      %v3687 = vld [vmem:[#allocation3 + $0xd2] sm:$0xff]
      %v3688 = vld [vmem:[#allocation3 + $0xda] sm:$0xff]
      %v3689 = vpack.c.bf16 %v3665, %v3664
      %v3690 = vpack.c.bf16 %v3667, %v3666
      %v3691 = vpack.c.bf16 %v3669, %v3668
      %v3692 = vpack.c.bf16 %v3671, %v3670
      %v3693 = vpack.c.bf16 %v3673, %v3672
      %v3694 = vpack.c.bf16 %v3675, %v3674
      %v3695 = vpack.c.bf16 %v3677, %v3676
      %v3696 = vpack.c.bf16 %v3679, %v3678
      %v3697 = vpack.c.bf16 %v3681, %v3680
      %v3698 = vpack.c.bf16 %v3683, %v3682
      %v3699 = vpack.c.bf16 %v3685, %v3684
      %v3700 = vpack.c.bf16 %v3687, %v3686
      %v3701 = vpack.c.bf16 %v3688, %v3688
      %s3702 = scalar_lea.vmem %s366, 448
      %v3703 = vld [vmem:[%s3702] sm:$0xf]
      %v3704 = vld [vmem:[%s3702 + $0x4] sm:$0xf]
      %v3705 = vld [vmem:[%s3702 + $0x8] sm:$0xf]
      %v3706 = vld [vmem:[%s3702 + $0xc] sm:$0xf]
      %v3707 = vld [vmem:[%s3702 + $0x10] sm:$0xf]
      %v3708 = vld [vmem:[%s3702 + $0x14] sm:$0xf]
      %v3709 = vld [vmem:[%s3702 + $0x18] sm:$0xf]
      %v3710 = vld [vmem:[%s3702 + $0x1c] sm:$0xf]
      %v3711 = vld [vmem:[%s3702 + $0x20] sm:$0xf]
      %v3712 = vld [vmem:[%s3702 + $0x24] sm:$0xf]
      %v3713 = vld [vmem:[%s3702 + $0x28] sm:$0xf]
      %v3714 = vld [vmem:[%s3702 + $0x2c] sm:$0xf]
      %v3715 = vld [vmem:[%s3702 + $0x30] sm:$0xf]
      %v3716 = vld [vmem:[%s3702 + $0x34] sm:$0xf]
      %v3717 = vld [vmem:[%s3702 + $0x38] sm:$0xf]
      %v3718 = vld [vmem:[%s3702 + $0x3c] sm:$0xf]
      %v3735 = vunpack.c.l.b16 %v3703
      %v3736 = vunpack.c.l.b16 %v3704
      %v3737 = vunpack.c.l.b16 %v3705
      %v3738 = vunpack.c.l.b16 %v3706
      %v3739 = vunpack.c.l.b16 %v3707
      %v3740 = vunpack.c.l.b16 %v3708
      %v3741 = vunpack.c.l.b16 %v3709
      %v3742 = vunpack.c.l.b16 %v3710
      %v3743 = vunpack.c.l.b16 %v3711
      %v3744 = vunpack.c.l.b16 %v3712
      %v3745 = vunpack.c.l.b16 %v3713
      %v3746 = vunpack.c.l.b16 %v3714
      %v3747 = vunpack.c.l.b16 %v3715
      %v3748 = vunpack.c.l.b16 %v3716
      %v3749 = vunpack.c.l.b16 %v3717
      %v3750 = vunpack.c.l.b16 %v3718
      %v3751 = vpack.c.b16 %v3736, %v3735
      %v3752 = vpack.c.b16 %v3738, %v3737
      %v3753 = vpack.c.b16 %v3740, %v3739
      %v3754 = vpack.c.b16 %v3742, %v3741
      %v3755 = vpack.c.b16 %v3744, %v3743
      %v3756 = vpack.c.b16 %v3746, %v3745
      %v3757 = vpack.c.b16 %v3748, %v3747
      %v3758 = vpack.c.b16 %v3750, %v3749
      %3767 = vmatprep.subr.bf16.mxu0 0
      %3768 = vmatpush1.bf16.msra.mxu0 %v3758
      %3769 = vmatprep.subr.bf16.mxu0 0
      %3770 = vmatpush1.bf16.msra.mxu0 %v3757
      %3771 = vmatprep.subr.bf16.mxu0 0
      %3772 = vmatpush1.bf16.msra.mxu0 %v3756
      %3773 = vmatprep.subr.bf16.mxu0 0
      %3774 = vmatpush1.bf16.msra.mxu0 %v3755
      %3775 = vmatprep.subr.bf16.mxu0 0
      %3776 = vmatpush1.bf16.msra.mxu0 %v3754
      %3777 = vmatprep.subr.bf16.mxu0 0
      %3778 = vmatpush1.bf16.msra.mxu0 %v3753
      %3779 = vmatprep.subr.bf16.mxu0 0
      %3780 = vmatpush1.bf16.msra.mxu0 %v3752
      %3781 = vmatprep.subr.bf16.mxu0 0
      %3782 = vmatpush1.bf16.msra.mxu0 %v3751
      %3783 = vmatprep.subr.bf16.mxu0 0
      %3784 = vmatpush2.bf16.msra.mxu0 0
      %3785 = vmatprep.subr.bf16.mxu0 0
      %3786 = vmatpush2.bf16.msra.mxu0 0
      %3787 = vmatprep.subr.bf16.mxu0 0
      %3788 = vmatpush2.bf16.msra.mxu0 0
      %3789 = vmatprep.subr.bf16.mxu0 0
      %3790 = vmatpush2.bf16.msra.mxu0 0
      %3791 = vmatprep.subr.bf16.mxu0 0
      %3792 = vmatpush2.bf16.msra.mxu0 0
      %3793 = vmatprep.subr.bf16.mxu0 0
      %3794 = vmatpush2.bf16.msra.mxu0 0
      %3795 = vmatprep.subr.bf16.mxu0 0
      %3796 = vmatpush2.bf16.msra.mxu0 0
      %3797 = vmatprep.subr.bf16.mxu0 0
      %3798 = vmatpush2.bf16.msra.mxu0 0
      %3799 = vmatprep.mubr.bf16.mxu0 0
      %3800 = vmatmul.mubr.bf16.gmra.mxu0 %v3689
      %v3801 = vpop.f32.mrf.mxu0
      %v3802 = vadd.f32 0.0, %v3801
      %v3803 = vpop.f32.mrf.mxu0
      %v3804 = vpop.f32.mrf.mxu0
      %v3805 = vadd.f32 0.0, %v3804
      %v3806 = vpop.f32.mrf.mxu0
      %3807 = vmatprep.mubr.bf16.mxu0 0
      %3808 = vmatmul.mubr.bf16.gmra.mxu0 %v3690
      %v3809 = vpop.f32.mrf.mxu0
      %v3810 = vadd.f32 0.0, %v3809
      %v3811 = vpop.f32.mrf.mxu0
      %v3812 = vpop.f32.mrf.mxu0
      %v3813 = vadd.f32 0.0, %v3812
      %v3814 = vpop.f32.mrf.mxu0
      %3815 = vmatprep.mubr.bf16.mxu0 0
      %3816 = vmatmul.mubr.bf16.gmra.mxu0 %v3691
      %v3817 = vpop.f32.mrf.mxu0
      %v3818 = vadd.f32 0.0, %v3817
      %v3819 = vpop.f32.mrf.mxu0
      %v3820 = vpop.f32.mrf.mxu0
      %v3821 = vadd.f32 0.0, %v3820
      %v3822 = vpop.f32.mrf.mxu0
      %3823 = vmatprep.mubr.bf16.mxu0 0
      %3824 = vmatmul.mubr.bf16.gmra.mxu0 %v3692
      %v3825 = vpop.f32.mrf.mxu0
      %v3826 = vadd.f32 0.0, %v3825
      %v3827 = vpop.f32.mrf.mxu0
      %v3828 = vpop.f32.mrf.mxu0
      %v3829 = vadd.f32 0.0, %v3828
      %v3830 = vpop.f32.mrf.mxu0
      %3831 = vmatprep.mubr.bf16.mxu0 0
      %3832 = vmatmul.mubr.bf16.gmra.mxu0 %v3693
      %v3833 = vpop.f32.mrf.mxu0
      %v3834 = vadd.f32 0.0, %v3833
      %v3835 = vpop.f32.mrf.mxu0
      %v3836 = vpop.f32.mrf.mxu0
      %v3837 = vadd.f32 0.0, %v3836
      %v3838 = vpop.f32.mrf.mxu0
      %3839 = vmatprep.mubr.bf16.mxu0 0
      %3840 = vmatmul.mubr.bf16.gmra.mxu0 %v3694
      %v3841 = vpop.f32.mrf.mxu0
      %v3842 = vadd.f32 0.0, %v3841
      %v3843 = vpop.f32.mrf.mxu0
      %v3844 = vpop.f32.mrf.mxu0
      %v3845 = vadd.f32 0.0, %v3844
      %v3846 = vpop.f32.mrf.mxu0
      %3847 = vmatprep.mubr.bf16.mxu0 0
      %3848 = vmatmul.mubr.bf16.gmra.mxu0 %v3695
      %v3849 = vpop.f32.mrf.mxu0
      %v3850 = vadd.f32 0.0, %v3849
      %v3851 = vpop.f32.mrf.mxu0
      %v3852 = vpop.f32.mrf.mxu0
      %v3853 = vadd.f32 0.0, %v3852
      %v3854 = vpop.f32.mrf.mxu0
      %3855 = vmatprep.mubr.bf16.mxu0 0
      %3856 = vmatmul.mubr.bf16.gmra.mxu0 %v3696
      %v3857 = vpop.f32.mrf.mxu0
      %v3858 = vadd.f32 0.0, %v3857
      %v3859 = vpop.f32.mrf.mxu0
      %v3860 = vpop.f32.mrf.mxu0
      %v3861 = vadd.f32 0.0, %v3860
      %v3862 = vpop.f32.mrf.mxu0
      %3863 = vmatprep.mubr.bf16.mxu0 0
      %3864 = vmatmul.mubr.bf16.gmra.mxu0 %v3697
      %v3865 = vpop.f32.mrf.mxu0
      %v3866 = vadd.f32 0.0, %v3865
      %v3867 = vpop.f32.mrf.mxu0
      %v3868 = vpop.f32.mrf.mxu0
      %v3869 = vadd.f32 0.0, %v3868
      %v3870 = vpop.f32.mrf.mxu0
      %3871 = vmatprep.mubr.bf16.mxu0 0
      %3872 = vmatmul.mubr.bf16.gmra.mxu0 %v3698
      %v3873 = vpop.f32.mrf.mxu0
      %v3874 = vadd.f32 0.0, %v3873
      %v3875 = vpop.f32.mrf.mxu0
      %v3876 = vpop.f32.mrf.mxu0
      %v3877 = vadd.f32 0.0, %v3876
      %v3878 = vpop.f32.mrf.mxu0
      %3879 = vmatprep.mubr.bf16.mxu0 0
      %3880 = vmatmul.mubr.bf16.gmra.mxu0 %v3699
      %v3881 = vpop.f32.mrf.mxu0
      %v3882 = vadd.f32 0.0, %v3881
      %v3883 = vpop.f32.mrf.mxu0
      %v3884 = vpop.f32.mrf.mxu0
      %v3885 = vadd.f32 0.0, %v3884
      %v3886 = vpop.f32.mrf.mxu0
      %3887 = vmatprep.mubr.bf16.mxu0 0
      %3888 = vmatmul.mubr.bf16.gmra.mxu0 %v3700
      %v3889 = vpop.f32.mrf.mxu0
      %v3890 = vadd.f32 0.0, %v3889
      %v3891 = vpop.f32.mrf.mxu0
      %v3892 = vpop.f32.mrf.mxu0
      %v3893 = vadd.f32 0.0, %v3892
      %v3894 = vpop.f32.mrf.mxu0
      %3895 = vmatprep.mubr.bf16.mxu0 0
      %3896 = vmatmul.mubr.bf16.gmra.mxu0 %v3701
      %v3897 = vpop.f32.mrf.mxu0
      %v3898 = vadd.f32 0.0, %v3897
      %v3899 = vpop.f32.mrf.mxu0
      %v3900 = vpop.f32.mrf.mxu0
      %v3901 = vpop.f32.mrf.mxu0
      %3902 = vdwg.mxu0
      %3903 = vset.pattern.permute.xlu0 7
      %3904 = vperm.xlu0 %3903, %v1130
      %v3905 = vpop.permute.xlu0 %3904
      %3907 = vset.pattern.permute.xlu0 7
      %3908 = vperm.xlu0 %3907, %v1131
      %v3909 = vpop.permute.xlu0 %3908
      %3911 = vset.pattern.permute.xlu0 7
      %3912 = vperm.xlu0 %3911, %v1132
      %v3913 = vpop.permute.xlu0 %3912
      %3915 = vset.pattern.permute.xlu0 7
      %3916 = vperm.xlu0 %3915, %v1133
      %v3917 = vpop.permute.xlu0 %3916
      %3919 = vset.pattern.permute.xlu0 7
      %3920 = vperm.xlu0 %3919, %v1134
      %v3921 = vpop.permute.xlu0 %3920
      %3923 = vset.pattern.permute.xlu0 7
      %3924 = vperm.xlu0 %3923, %v1135
      %v3925 = vpop.permute.xlu0 %3924
      %3927 = vset.pattern.permute.xlu0 7
      %3928 = vperm.xlu0 %3927, %v1136
      %v3929 = vpop.permute.xlu0 %3928
      %3931 = vset.pattern.permute.xlu0 7
      %3932 = vperm.xlu0 %3931, %v1137
      %v3933 = vpop.permute.xlu0 %3932
      %3935 = vset.pattern.permute.xlu0 7
      %3936 = vperm.xlu0 %3935, %v1138
      %v3937 = vpop.permute.xlu0 %3936
      %3939 = vset.pattern.permute.xlu0 7
      %3940 = vperm.xlu0 %3939, %v1139
      %v3941 = vpop.permute.xlu0 %3940
      %3943 = vset.pattern.permute.xlu0 7
      %3944 = vperm.xlu0 %3943, %v1140
      %v3945 = vpop.permute.xlu0 %3944
      %3947 = vset.pattern.permute.xlu0 7
      %3948 = vperm.xlu0 %3947, %v1141
      %v3949 = vpop.permute.xlu0 %3948
      %3951 = vset.pattern.permute.xlu0 7
      %3952 = vperm.xlu0 %3951, %v1142
      %v3953 = vpop.permute.xlu0 %3952
      %3955 = vset.pattern.permute.xlu0 7
      %3956 = vperm.xlu0 %3955, %v1143
      %v3957 = vpop.permute.xlu0 %3956
      %3959 = vset.pattern.permute.xlu0 7
      %3960 = vperm.xlu0 %3959, %v1144
      %v3961 = vpop.permute.xlu0 %3960
      %3963 = vset.pattern.permute.xlu0 7
      %3964 = vperm.xlu0 %3963, %v1145
      %v3965 = vpop.permute.xlu0 %3964
      %3967 = vset.pattern.permute.xlu0 7
      %3968 = vperm.xlu0 %3967, %v1146
      %v3969 = vpop.permute.xlu0 %3968
      %3971 = vset.pattern.permute.xlu0 7
      %3972 = vperm.xlu0 %3971, %v1147
      %v3973 = vpop.permute.xlu0 %3972
      %3975 = vset.pattern.permute.xlu0 7
      %3976 = vperm.xlu0 %3975, %v1148
      %v3977 = vpop.permute.xlu0 %3976
      %3979 = vset.pattern.permute.xlu0 7
      %3980 = vperm.xlu0 %3979, %v1149
      %v3981 = vpop.permute.xlu0 %3980
      %3983 = vset.pattern.permute.xlu0 7
      %3984 = vperm.xlu0 %3983, %v1150
      %v3985 = vpop.permute.xlu0 %3984
      %3987 = vset.pattern.permute.xlu0 7
      %3988 = vperm.xlu0 %3987, %v1151
      %v3989 = vpop.permute.xlu0 %3988
      %3991 = vset.pattern.permute.xlu0 7
      %3992 = vperm.xlu0 %3991, %v1152
      %v3993 = vpop.permute.xlu0 %3992
      %3995 = vset.pattern.permute.xlu0 7
      %3996 = vperm.xlu0 %3995, %v1153
      %v3997 = vpop.permute.xlu0 %3996
      %3999 = vset.pattern.permute.xlu0 7
      %4000 = vperm.xlu0 %3999, %v1154
      %v4001 = vpop.permute.xlu0 %4000
      %v4003 = vmul.f32 %v3802, %v3905
      %v4004 = vmul.f32 %v3805, %v3909
      %v4005 = vmul.f32 %v3810, %v3913
      %v4006 = vmul.f32 %v3813, %v3917
      %v4007 = vmul.f32 %v3818, %v3921
      %v4008 = vmul.f32 %v3821, %v3925
      %v4009 = vmul.f32 %v3826, %v3929
      %v4010 = vmul.f32 %v3829, %v3933
      %v4011 = vmul.f32 %v3834, %v3937
      %v4012 = vmul.f32 %v3837, %v3941
      %v4013 = vmul.f32 %v3842, %v3945
      %v4014 = vmul.f32 %v3845, %v3949
      %v4015 = vmul.f32 %v3850, %v3953
      %v4016 = vmul.f32 %v3853, %v3957
      %v4017 = vmul.f32 %v3858, %v3961
      %v4018 = vmul.f32 %v3861, %v3965
      %v4019 = vmul.f32 %v3866, %v3969
      %v4020 = vmul.f32 %v3869, %v3973
      %v4021 = vmul.f32 %v3874, %v3977
      %v4022 = vmul.f32 %v3877, %v3981
      %v4023 = vmul.f32 %v3882, %v3985
      %v4024 = vmul.f32 %v3885, %v3989
      %v4025 = vmul.f32 %v3890, %v3993
      %v4026 = vmul.f32 %v3893, %v3997
      %v4027 = vmul.f32 %v3898, %v4001
      %v4028 = vadd.f32 %v3639, %v4003
      %v4029 = vadd.f32 %v3640, %v4004
      %v4030 = vadd.f32 %v3641, %v4005
      %v4031 = vadd.f32 %v3642, %v4006
      %v4032 = vadd.f32 %v3643, %v4007
      %v4033 = vadd.f32 %v3644, %v4008
      %v4034 = vadd.f32 %v3645, %v4009
      %v4035 = vadd.f32 %v3646, %v4010
      %v4036 = vadd.f32 %v3647, %v4011
      %v4037 = vadd.f32 %v3648, %v4012
      %v4038 = vadd.f32 %v3649, %v4013
      %v4039 = vadd.f32 %v3650, %v4014
      %v4040 = vadd.f32 %v3651, %v4015
      %v4041 = vadd.f32 %v3652, %v4016
      %v4042 = vadd.f32 %v3653, %v4017
      %v4043 = vadd.f32 %v3654, %v4018
      %v4044 = vadd.f32 %v3655, %v4019
      %v4045 = vadd.f32 %v3656, %v4020
      %v4046 = vadd.f32 %v3657, %v4021
      %v4047 = vadd.f32 %v3658, %v4022
      %v4048 = vadd.f32 %v3659, %v4023
      %v4049 = vadd.f32 %v3660, %v4024
      %v4050 = vadd.f32 %v3661, %v4025
      %v4051 = vadd.f32 %v3662, %v4026
      %v4052 = vadd.f32 %v3663, %v4027
      %v4053 = vld [vmem:[#allocation3 + $0x1b] sm:$0xff]
      %v4054 = vld [vmem:[#allocation3 + $0x23] sm:$0xff]
      %v4055 = vld [vmem:[#allocation3 + $0x2b] sm:$0xff]
      %v4056 = vld [vmem:[#allocation3 + $0x33] sm:$0xff]
      %v4057 = vld [vmem:[#allocation3 + $0x3b] sm:$0xff]
      %v4058 = vld [vmem:[#allocation3 + $0x43] sm:$0xff]
      %v4059 = vld [vmem:[#allocation3 + $0x4b] sm:$0xff]
      %v4060 = vld [vmem:[#allocation3 + $0x53] sm:$0xff]
      %v4061 = vld [vmem:[#allocation3 + $0x5b] sm:$0xff]
      %v4062 = vld [vmem:[#allocation3 + $0x63] sm:$0xff]
      %v4063 = vld [vmem:[#allocation3 + $0x6b] sm:$0xff]
      %v4064 = vld [vmem:[#allocation3 + $0x73] sm:$0xff]
      %v4065 = vld [vmem:[#allocation3 + $0x7b] sm:$0xff]
      %v4066 = vld [vmem:[#allocation3 + $0x83] sm:$0xff]
      %v4067 = vld [vmem:[#allocation3 + $0x8b] sm:$0xff]
      %v4068 = vld [vmem:[#allocation3 + $0x93] sm:$0xff]
      %v4069 = vld [vmem:[#allocation3 + $0x9b] sm:$0xff]
      %v4070 = vld [vmem:[#allocation3 + $0xa3] sm:$0xff]
      %v4071 = vld [vmem:[#allocation3 + $0xab] sm:$0xff]
      %v4072 = vld [vmem:[#allocation3 + $0xb3] sm:$0xff]
      %v4073 = vld [vmem:[#allocation3 + $0xbb] sm:$0xff]
      %v4074 = vld [vmem:[#allocation3 + $0xc3] sm:$0xff]
      %v4075 = vld [vmem:[#allocation3 + $0xcb] sm:$0xff]
      %v4076 = vld [vmem:[#allocation3 + $0xd3] sm:$0xff]
      %v4077 = vld [vmem:[#allocation3 + $0xdb] sm:$0xff]
      %v4078 = vpack.c.bf16 %v4054, %v4053
      %v4079 = vpack.c.bf16 %v4056, %v4055
      %v4080 = vpack.c.bf16 %v4058, %v4057
      %v4081 = vpack.c.bf16 %v4060, %v4059
      %v4082 = vpack.c.bf16 %v4062, %v4061
      %v4083 = vpack.c.bf16 %v4064, %v4063
      %v4084 = vpack.c.bf16 %v4066, %v4065
      %v4085 = vpack.c.bf16 %v4068, %v4067
      %v4086 = vpack.c.bf16 %v4070, %v4069
      %v4087 = vpack.c.bf16 %v4072, %v4071
      %v4088 = vpack.c.bf16 %v4074, %v4073
      %v4089 = vpack.c.bf16 %v4076, %v4075
      %v4090 = vpack.c.bf16 %v4077, %v4077
      %s4091 = scalar_lea.vmem %s366, 512
      %v4092 = vld [vmem:[%s4091] sm:$0xf]
      %v4093 = vld [vmem:[%s4091 + $0x4] sm:$0xf]
      %v4094 = vld [vmem:[%s4091 + $0x8] sm:$0xf]
      %v4095 = vld [vmem:[%s4091 + $0xc] sm:$0xf]
      %v4096 = vld [vmem:[%s4091 + $0x10] sm:$0xf]
      %v4097 = vld [vmem:[%s4091 + $0x14] sm:$0xf]
      %v4098 = vld [vmem:[%s4091 + $0x18] sm:$0xf]
      %v4099 = vld [vmem:[%s4091 + $0x1c] sm:$0xf]
      %v4100 = vld [vmem:[%s4091 + $0x20] sm:$0xf]
      %v4101 = vld [vmem:[%s4091 + $0x24] sm:$0xf]
      %v4102 = vld [vmem:[%s4091 + $0x28] sm:$0xf]
      %v4103 = vld [vmem:[%s4091 + $0x2c] sm:$0xf]
      %v4104 = vld [vmem:[%s4091 + $0x30] sm:$0xf]
      %v4105 = vld [vmem:[%s4091 + $0x34] sm:$0xf]
      %v4106 = vld [vmem:[%s4091 + $0x38] sm:$0xf]
      %v4107 = vld [vmem:[%s4091 + $0x3c] sm:$0xf]
      %v4124 = vunpack.c.l.b16 %v4092
      %v4125 = vunpack.c.l.b16 %v4093
      %v4126 = vunpack.c.l.b16 %v4094
      %v4127 = vunpack.c.l.b16 %v4095
      %v4128 = vunpack.c.l.b16 %v4096
      %v4129 = vunpack.c.l.b16 %v4097
      %v4130 = vunpack.c.l.b16 %v4098
      %v4131 = vunpack.c.l.b16 %v4099
      %v4132 = vunpack.c.l.b16 %v4100
      %v4133 = vunpack.c.l.b16 %v4101
      %v4134 = vunpack.c.l.b16 %v4102
      %v4135 = vunpack.c.l.b16 %v4103
      %v4136 = vunpack.c.l.b16 %v4104
      %v4137 = vunpack.c.l.b16 %v4105
      %v4138 = vunpack.c.l.b16 %v4106
      %v4139 = vunpack.c.l.b16 %v4107
      %v4140 = vpack.c.b16 %v4125, %v4124
      %v4141 = vpack.c.b16 %v4127, %v4126
      %v4142 = vpack.c.b16 %v4129, %v4128
      %v4143 = vpack.c.b16 %v4131, %v4130
      %v4144 = vpack.c.b16 %v4133, %v4132
      %v4145 = vpack.c.b16 %v4135, %v4134
      %v4146 = vpack.c.b16 %v4137, %v4136
      %v4147 = vpack.c.b16 %v4139, %v4138
      %4156 = vmatprep.subr.bf16.mxu0 0
      %4157 = vmatpush1.bf16.msra.mxu0 %v4147
      %4158 = vmatprep.subr.bf16.mxu0 0
      %4159 = vmatpush1.bf16.msra.mxu0 %v4146
      %4160 = vmatprep.subr.bf16.mxu0 0
      %4161 = vmatpush1.bf16.msra.mxu0 %v4145
      %4162 = vmatprep.subr.bf16.mxu0 0
      %4163 = vmatpush1.bf16.msra.mxu0 %v4144
      %4164 = vmatprep.subr.bf16.mxu0 0
      %4165 = vmatpush1.bf16.msra.mxu0 %v4143
      %4166 = vmatprep.subr.bf16.mxu0 0
      %4167 = vmatpush1.bf16.msra.mxu0 %v4142
      %4168 = vmatprep.subr.bf16.mxu0 0
      %4169 = vmatpush1.bf16.msra.mxu0 %v4141
      %4170 = vmatprep.subr.bf16.mxu0 0
      %4171 = vmatpush1.bf16.msra.mxu0 %v4140
      %4172 = vmatprep.subr.bf16.mxu0 0
      %4173 = vmatpush2.bf16.msra.mxu0 0
      %4174 = vmatprep.subr.bf16.mxu0 0
      %4175 = vmatpush2.bf16.msra.mxu0 0
      %4176 = vmatprep.subr.bf16.mxu0 0
      %4177 = vmatpush2.bf16.msra.mxu0 0
      %4178 = vmatprep.subr.bf16.mxu0 0
      %4179 = vmatpush2.bf16.msra.mxu0 0
      %4180 = vmatprep.subr.bf16.mxu0 0
      %4181 = vmatpush2.bf16.msra.mxu0 0
      %4182 = vmatprep.subr.bf16.mxu0 0
      %4183 = vmatpush2.bf16.msra.mxu0 0
      %4184 = vmatprep.subr.bf16.mxu0 0
      %4185 = vmatpush2.bf16.msra.mxu0 0
      %4186 = vmatprep.subr.bf16.mxu0 0
      %4187 = vmatpush2.bf16.msra.mxu0 0
      %4188 = vmatprep.mubr.bf16.mxu0 0
      %4189 = vmatmul.mubr.bf16.gmra.mxu0 %v4078
      %v4190 = vpop.f32.mrf.mxu0
      %v4191 = vadd.f32 0.0, %v4190
      %v4192 = vpop.f32.mrf.mxu0
      %v4193 = vpop.f32.mrf.mxu0
      %v4194 = vadd.f32 0.0, %v4193
      %v4195 = vpop.f32.mrf.mxu0
      %4196 = vmatprep.mubr.bf16.mxu0 0
      %4197 = vmatmul.mubr.bf16.gmra.mxu0 %v4079
      %v4198 = vpop.f32.mrf.mxu0
      %v4199 = vadd.f32 0.0, %v4198
      %v4200 = vpop.f32.mrf.mxu0
      %v4201 = vpop.f32.mrf.mxu0
      %v4202 = vadd.f32 0.0, %v4201
      %v4203 = vpop.f32.mrf.mxu0
      %4204 = vmatprep.mubr.bf16.mxu0 0
      %4205 = vmatmul.mubr.bf16.gmra.mxu0 %v4080
      %v4206 = vpop.f32.mrf.mxu0
      %v4207 = vadd.f32 0.0, %v4206
      %v4208 = vpop.f32.mrf.mxu0
      %v4209 = vpop.f32.mrf.mxu0
      %v4210 = vadd.f32 0.0, %v4209
      %v4211 = vpop.f32.mrf.mxu0
      %4212 = vmatprep.mubr.bf16.mxu0 0
      %4213 = vmatmul.mubr.bf16.gmra.mxu0 %v4081
      %v4214 = vpop.f32.mrf.mxu0
      %v4215 = vadd.f32 0.0, %v4214
      %v4216 = vpop.f32.mrf.mxu0
      %v4217 = vpop.f32.mrf.mxu0
      %v4218 = vadd.f32 0.0, %v4217
      %v4219 = vpop.f32.mrf.mxu0
      %4220 = vmatprep.mubr.bf16.mxu0 0
      %4221 = vmatmul.mubr.bf16.gmra.mxu0 %v4082
      %v4222 = vpop.f32.mrf.mxu0
      %v4223 = vadd.f32 0.0, %v4222
      %v4224 = vpop.f32.mrf.mxu0
      %v4225 = vpop.f32.mrf.mxu0
      %v4226 = vadd.f32 0.0, %v4225
      %v4227 = vpop.f32.mrf.mxu0
      %4228 = vmatprep.mubr.bf16.mxu0 0
      %4229 = vmatmul.mubr.bf16.gmra.mxu0 %v4083
      %v4230 = vpop.f32.mrf.mxu0
      %v4231 = vadd.f32 0.0, %v4230
      %v4232 = vpop.f32.mrf.mxu0
      %v4233 = vpop.f32.mrf.mxu0
      %v4234 = vadd.f32 0.0, %v4233
      %v4235 = vpop.f32.mrf.mxu0
      %4236 = vmatprep.mubr.bf16.mxu0 0
      %4237 = vmatmul.mubr.bf16.gmra.mxu0 %v4084
      %v4238 = vpop.f32.mrf.mxu0
      %v4239 = vadd.f32 0.0, %v4238
      %v4240 = vpop.f32.mrf.mxu0
      %v4241 = vpop.f32.mrf.mxu0
      %v4242 = vadd.f32 0.0, %v4241
      %v4243 = vpop.f32.mrf.mxu0
      %4244 = vmatprep.mubr.bf16.mxu0 0
      %4245 = vmatmul.mubr.bf16.gmra.mxu0 %v4085
      %v4246 = vpop.f32.mrf.mxu0
      %v4247 = vadd.f32 0.0, %v4246
      %v4248 = vpop.f32.mrf.mxu0
      %v4249 = vpop.f32.mrf.mxu0
      %v4250 = vadd.f32 0.0, %v4249
      %v4251 = vpop.f32.mrf.mxu0
      %4252 = vmatprep.mubr.bf16.mxu0 0
      %4253 = vmatmul.mubr.bf16.gmra.mxu0 %v4086
      %v4254 = vpop.f32.mrf.mxu0
      %v4255 = vadd.f32 0.0, %v4254
      %v4256 = vpop.f32.mrf.mxu0
      %v4257 = vpop.f32.mrf.mxu0
      %v4258 = vadd.f32 0.0, %v4257
      %v4259 = vpop.f32.mrf.mxu0
      %4260 = vmatprep.mubr.bf16.mxu0 0
      %4261 = vmatmul.mubr.bf16.gmra.mxu0 %v4087
      %v4262 = vpop.f32.mrf.mxu0
      %v4263 = vadd.f32 0.0, %v4262
      %v4264 = vpop.f32.mrf.mxu0
      %v4265 = vpop.f32.mrf.mxu0
      %v4266 = vadd.f32 0.0, %v4265
      %v4267 = vpop.f32.mrf.mxu0
      %4268 = vmatprep.mubr.bf16.mxu0 0
      %4269 = vmatmul.mubr.bf16.gmra.mxu0 %v4088
      %v4270 = vpop.f32.mrf.mxu0
      %v4271 = vadd.f32 0.0, %v4270
      %v4272 = vpop.f32.mrf.mxu0
      %v4273 = vpop.f32.mrf.mxu0
      %v4274 = vadd.f32 0.0, %v4273
      %v4275 = vpop.f32.mrf.mxu0
      %4276 = vmatprep.mubr.bf16.mxu0 0
      %4277 = vmatmul.mubr.bf16.gmra.mxu0 %v4089
      %v4278 = vpop.f32.mrf.mxu0
      %v4279 = vadd.f32 0.0, %v4278
      %v4280 = vpop.f32.mrf.mxu0
      %v4281 = vpop.f32.mrf.mxu0
      %v4282 = vadd.f32 0.0, %v4281
      %v4283 = vpop.f32.mrf.mxu0
      %4284 = vmatprep.mubr.bf16.mxu0 0
      %4285 = vmatmul.mubr.bf16.gmra.mxu0 %v4090
      %v4286 = vpop.f32.mrf.mxu0
      %v4287 = vadd.f32 0.0, %v4286
      %v4288 = vpop.f32.mrf.mxu0
      %v4289 = vpop.f32.mrf.mxu0
      %v4290 = vpop.f32.mrf.mxu0
      %4291 = vdwg.mxu0
      %4292 = vset.pattern.permute.xlu0 8
      %4293 = vperm.xlu0 %4292, %v1130
      %v4294 = vpop.permute.xlu0 %4293
      %4296 = vset.pattern.permute.xlu0 8
      %4297 = vperm.xlu0 %4296, %v1131
      %v4298 = vpop.permute.xlu0 %4297
      %4300 = vset.pattern.permute.xlu0 8
      %4301 = vperm.xlu0 %4300, %v1132
      %v4302 = vpop.permute.xlu0 %4301
      %4304 = vset.pattern.permute.xlu0 8
      %4305 = vperm.xlu0 %4304, %v1133
      %v4306 = vpop.permute.xlu0 %4305
      %4308 = vset.pattern.permute.xlu0 8
      %4309 = vperm.xlu0 %4308, %v1134
      %v4310 = vpop.permute.xlu0 %4309
      %4312 = vset.pattern.permute.xlu0 8
      %4313 = vperm.xlu0 %4312, %v1135
      %v4314 = vpop.permute.xlu0 %4313
      %4316 = vset.pattern.permute.xlu0 8
      %4317 = vperm.xlu0 %4316, %v1136
      %v4318 = vpop.permute.xlu0 %4317
      %4320 = vset.pattern.permute.xlu0 8
      %4321 = vperm.xlu0 %4320, %v1137
      %v4322 = vpop.permute.xlu0 %4321
      %4324 = vset.pattern.permute.xlu0 8
      %4325 = vperm.xlu0 %4324, %v1138
      %v4326 = vpop.permute.xlu0 %4325
      %4328 = vset.pattern.permute.xlu0 8
      %4329 = vperm.xlu0 %4328, %v1139
      %v4330 = vpop.permute.xlu0 %4329
      %4332 = vset.pattern.permute.xlu0 8
      %4333 = vperm.xlu0 %4332, %v1140
      %v4334 = vpop.permute.xlu0 %4333
      %4336 = vset.pattern.permute.xlu0 8
      %4337 = vperm.xlu0 %4336, %v1141
      %v4338 = vpop.permute.xlu0 %4337
      %4340 = vset.pattern.permute.xlu0 8
      %4341 = vperm.xlu0 %4340, %v1142
      %v4342 = vpop.permute.xlu0 %4341
      %4344 = vset.pattern.permute.xlu0 8
      %4345 = vperm.xlu0 %4344, %v1143
      %v4346 = vpop.permute.xlu0 %4345
      %4348 = vset.pattern.permute.xlu0 8
      %4349 = vperm.xlu0 %4348, %v1144
      %v4350 = vpop.permute.xlu0 %4349
      %4352 = vset.pattern.permute.xlu0 8
      %4353 = vperm.xlu0 %4352, %v1145
      %v4354 = vpop.permute.xlu0 %4353
      %4356 = vset.pattern.permute.xlu0 8
      %4357 = vperm.xlu0 %4356, %v1146
      %v4358 = vpop.permute.xlu0 %4357
      %4360 = vset.pattern.permute.xlu0 8
      %4361 = vperm.xlu0 %4360, %v1147
      %v4362 = vpop.permute.xlu0 %4361
      %4364 = vset.pattern.permute.xlu0 8
      %4365 = vperm.xlu0 %4364, %v1148
      %v4366 = vpop.permute.xlu0 %4365
      %4368 = vset.pattern.permute.xlu0 8
      %4369 = vperm.xlu0 %4368, %v1149
      %v4370 = vpop.permute.xlu0 %4369
      %4372 = vset.pattern.permute.xlu0 8
      %4373 = vperm.xlu0 %4372, %v1150
      %v4374 = vpop.permute.xlu0 %4373
      %4376 = vset.pattern.permute.xlu0 8
      %4377 = vperm.xlu0 %4376, %v1151
      %v4378 = vpop.permute.xlu0 %4377
      %4380 = vset.pattern.permute.xlu0 8
      %4381 = vperm.xlu0 %4380, %v1152
      %v4382 = vpop.permute.xlu0 %4381
      %4384 = vset.pattern.permute.xlu0 8
      %4385 = vperm.xlu0 %4384, %v1153
      %v4386 = vpop.permute.xlu0 %4385
      %4388 = vset.pattern.permute.xlu0 8
      %4389 = vperm.xlu0 %4388, %v1154
      %v4390 = vpop.permute.xlu0 %4389
      %v4392 = vmul.f32 %v4191, %v4294
      %v4393 = vmul.f32 %v4194, %v4298
      %v4394 = vmul.f32 %v4199, %v4302
      %v4395 = vmul.f32 %v4202, %v4306
      %v4396 = vmul.f32 %v4207, %v4310
      %v4397 = vmul.f32 %v4210, %v4314
      %v4398 = vmul.f32 %v4215, %v4318
      %v4399 = vmul.f32 %v4218, %v4322
      %v4400 = vmul.f32 %v4223, %v4326
      %v4401 = vmul.f32 %v4226, %v4330
      %v4402 = vmul.f32 %v4231, %v4334
      %v4403 = vmul.f32 %v4234, %v4338
      %v4404 = vmul.f32 %v4239, %v4342
      %v4405 = vmul.f32 %v4242, %v4346
      %v4406 = vmul.f32 %v4247, %v4350
      %v4407 = vmul.f32 %v4250, %v4354
      %v4408 = vmul.f32 %v4255, %v4358
      %v4409 = vmul.f32 %v4258, %v4362
      %v4410 = vmul.f32 %v4263, %v4366
      %v4411 = vmul.f32 %v4266, %v4370
      %v4412 = vmul.f32 %v4271, %v4374
      %v4413 = vmul.f32 %v4274, %v4378
      %v4414 = vmul.f32 %v4279, %v4382
      %v4415 = vmul.f32 %v4282, %v4386
      %v4416 = vmul.f32 %v4287, %v4390
      %v4417 = vadd.f32 %v4028, %v4392
      %v4418 = vadd.f32 %v4029, %v4393
      %v4419 = vadd.f32 %v4030, %v4394
      %v4420 = vadd.f32 %v4031, %v4395
      %v4421 = vadd.f32 %v4032, %v4396
      %v4422 = vadd.f32 %v4033, %v4397
      %v4423 = vadd.f32 %v4034, %v4398
      %v4424 = vadd.f32 %v4035, %v4399
      %v4425 = vadd.f32 %v4036, %v4400
      %v4426 = vadd.f32 %v4037, %v4401
      %v4427 = vadd.f32 %v4038, %v4402
      %v4428 = vadd.f32 %v4039, %v4403
      %v4429 = vadd.f32 %v4040, %v4404
      %v4430 = vadd.f32 %v4041, %v4405
      %v4431 = vadd.f32 %v4042, %v4406
      %v4432 = vadd.f32 %v4043, %v4407
      %v4433 = vadd.f32 %v4044, %v4408
      %v4434 = vadd.f32 %v4045, %v4409
      %v4435 = vadd.f32 %v4046, %v4410
      %v4436 = vadd.f32 %v4047, %v4411
      %v4437 = vadd.f32 %v4048, %v4412
      %v4438 = vadd.f32 %v4049, %v4413
      %v4439 = vadd.f32 %v4050, %v4414
      %v4440 = vadd.f32 %v4051, %v4415
      %v4441 = vadd.f32 %v4052, %v4416
      %4442 = vrot.lane.b32.xlu0 %v422, 12
      %v4443 = vpop.permute.xlu0 %4442
      %4444 = vrot.lane.b32.xlu0 %v423, 12
      %v4445 = vpop.permute.xlu0 %4444
      %4446 = vrot.lane.b32.xlu0 %v424, 12
      %v4447 = vpop.permute.xlu0 %4446
      %4448 = vrot.lane.b32.xlu0 %v425, 12
      %v4449 = vpop.permute.xlu0 %4448
      %4450 = vrot.lane.b32.xlu0 %v426, 12
      %v4451 = vpop.permute.xlu0 %4450
      %4452 = vrot.lane.b32.xlu0 %v427, 12
      %v4453 = vpop.permute.xlu0 %4452
      %4454 = vrot.lane.b32.xlu0 %v428, 12
      %v4455 = vpop.permute.xlu0 %4454
      %4456 = vrot.lane.b32.xlu0 %v429, 12
      %v4457 = vpop.permute.xlu0 %4456
      %4458 = vrot.lane.b32.xlu0 %v430, 12
      %v4459 = vpop.permute.xlu0 %4458
      %4460 = vrot.lane.b32.xlu0 %v431, 12
      %v4461 = vpop.permute.xlu0 %4460
      %4462 = vrot.lane.b32.xlu0 %v432, 12
      %v4463 = vpop.permute.xlu0 %4462
      %4464 = vrot.lane.b32.xlu0 %v433, 12
      %v4465 = vpop.permute.xlu0 %4464
      %4466 = vrot.lane.b32.xlu0 %v434, 12
      %v4467 = vpop.permute.xlu0 %4466
      %4468 = vrot.lane.b32.xlu0 %v435, 12
      %v4469 = vpop.permute.xlu0 %4468
      %4470 = vrot.lane.b32.xlu0 %v436, 12
      %v4471 = vpop.permute.xlu0 %4470
      %4472 = vrot.lane.b32.xlu0 %v437, 12
      %v4473 = vpop.permute.xlu0 %4472
      %4474 = vrot.lane.b32.xlu0 %v438, 12
      %v4475 = vpop.permute.xlu0 %4474
      %4476 = vrot.lane.b32.xlu0 %v439, 12
      %v4477 = vpop.permute.xlu0 %4476
      %4478 = vrot.lane.b32.xlu0 %v440, 12
      %v4479 = vpop.permute.xlu0 %4478
      %4480 = vrot.lane.b32.xlu0 %v441, 12
      %v4481 = vpop.permute.xlu0 %4480
      %4482 = vrot.lane.b32.xlu0 %v442, 12
      %v4483 = vpop.permute.xlu0 %4482
      %4484 = vrot.lane.b32.xlu0 %v443, 12
      %v4485 = vpop.permute.xlu0 %4484
      %4486 = vrot.lane.b32.xlu0 %v444, 12
      %v4487 = vpop.permute.xlu0 %4486
      %4488 = vrot.lane.b32.xlu0 %v445, 12
      %v4489 = vpop.permute.xlu0 %4488
      %4490 = vrot.lane.b32.xlu0 %v446, 12
      %v4491 = vpop.permute.xlu0 %4490
      %v4492 = vadd.f32 %v4417, %v4443
      %v4493 = vadd.f32 %v4418, %v4445
      %v4494 = vadd.f32 %v4419, %v4447
      %v4495 = vadd.f32 %v4420, %v4449
      %v4496 = vadd.f32 %v4421, %v4451
      %v4497 = vadd.f32 %v4422, %v4453
      %v4498 = vadd.f32 %v4423, %v4455
      %v4499 = vadd.f32 %v4424, %v4457
      %v4500 = vadd.f32 %v4425, %v4459
      %v4501 = vadd.f32 %v4426, %v4461
      %v4502 = vadd.f32 %v4427, %v4463
      %v4503 = vadd.f32 %v4428, %v4465
      %v4504 = vadd.f32 %v4429, %v4467
      %v4505 = vadd.f32 %v4430, %v4469
      %v4506 = vadd.f32 %v4431, %v4471
      %v4507 = vadd.f32 %v4432, %v4473
      %v4508 = vadd.f32 %v4433, %v4475
      %v4509 = vadd.f32 %v4434, %v4477
      %v4510 = vadd.f32 %v4435, %v4479
      %v4511 = vadd.f32 %v4436, %v4481
      %v4512 = vadd.f32 %v4437, %v4483
      %v4513 = vadd.f32 %v4438, %v4485
      %v4514 = vadd.f32 %v4439, %v4487
      %v4515 = vadd.f32 %v4440, %v4489
      %v4516 = vadd.f32 %v4441, %v4491
      %4517 = vst [vmem:[#allocation2] sm:$0xff] %v4492
      %4518 = vst [vmem:[#allocation2 + $0x8] sm:$0xff] %v4493
      %4519 = vst [vmem:[#allocation2 + $0x10] sm:$0xff] %v4494
      %4520 = vst [vmem:[#allocation2 + $0x18] sm:$0xff] %v4495
      %4521 = vst [vmem:[#allocation2 + $0x20] sm:$0xff] %v4496
      %4522 = vst [vmem:[#allocation2 + $0x28] sm:$0xff] %v4497
      %4523 = vst [vmem:[#allocation2 + $0x30] sm:$0xff] %v4498
      %4524 = vst [vmem:[#allocation2 + $0x38] sm:$0xff] %v4499
      %4525 = vst [vmem:[#allocation2 + $0x40] sm:$0xff] %v4500
      %4526 = vst [vmem:[#allocation2 + $0x48] sm:$0xff] %v4501
      %4527 = vst [vmem:[#allocation2 + $0x50] sm:$0xff] %v4502
      %4528 = vst [vmem:[#allocation2 + $0x58] sm:$0xff] %v4503
      %4529 = vst [vmem:[#allocation2 + $0x60] sm:$0xff] %v4504
      %4530 = vst [vmem:[#allocation2 + $0x68] sm:$0xff] %v4505
      %4531 = vst [vmem:[#allocation2 + $0x70] sm:$0xff] %v4506
      %4532 = vst [vmem:[#allocation2 + $0x78] sm:$0xff] %v4507
      %4533 = vst [vmem:[#allocation2 + $0x80] sm:$0xff] %v4508
      %4534 = vst [vmem:[#allocation2 + $0x88] sm:$0xff] %v4509
      %4535 = vst [vmem:[#allocation2 + $0x90] sm:$0xff] %v4510
      %4536 = vst [vmem:[#allocation2 + $0x98] sm:$0xff] %v4511
      %4537 = vst [vmem:[#allocation2 + $0xa0] sm:$0xff] %v4512
      %4538 = vst [vmem:[#allocation2 + $0xa8] sm:$0xff] %v4513
      %4539 = vst [vmem:[#allocation2 + $0xb0] sm:$0xff] %v4514
      %4540 = vst [vmem:[#allocation2 + $0xb8] sm:$0xff] %v4515
      %4541 = vst [vmem:[#allocation2 + $0xc0] sm:$0xff] %v4516
      %4542 = vst [vmem:[%s8] sm:$0xff] %v4492
      %4543 = vst [vmem:[%s8 + $0x8] sm:$0xff] %v4493
      %4544 = vst [vmem:[%s8 + $0x10] sm:$0xff] %v4494
      %4545 = vst [vmem:[%s8 + $0x18] sm:$0xff] %v4495
      %4546 = vst [vmem:[%s8 + $0x20] sm:$0xff] %v4496
      %4547 = vst [vmem:[%s8 + $0x28] sm:$0xff] %v4497
      %4548 = vst [vmem:[%s8 + $0x30] sm:$0xff] %v4498
      %4549 = vst [vmem:[%s8 + $0x38] sm:$0xff] %v4499
      %4550 = vst [vmem:[%s8 + $0x40] sm:$0xff] %v4500
      %4551 = vst [vmem:[%s8 + $0x48] sm:$0xff] %v4501
      %4552 = vst [vmem:[%s8 + $0x50] sm:$0xff] %v4502
      %4553 = vst [vmem:[%s8 + $0x58] sm:$0xff] %v4503
      %4554 = vst [vmem:[%s8 + $0x60] sm:$0xff] %v4504
      %4555 = vst [vmem:[%s8 + $0x68] sm:$0xff] %v4505
      %4556 = vst [vmem:[%s8 + $0x70] sm:$0xff] %v4506
      %4557 = vst [vmem:[%s8 + $0x78] sm:$0xff] %v4507
      %4558 = vst [vmem:[%s8 + $0x80] sm:$0xff] %v4508
      %4559 = vst [vmem:[%s8 + $0x88] sm:$0xff] %v4509
      %4560 = vst [vmem:[%s8 + $0x90] sm:$0xff] %v4510
      %4561 = vst [vmem:[%s8 + $0x98] sm:$0xff] %v4511
      %4562 = vst [vmem:[%s8 + $0xa0] sm:$0xff] %v4512
      %4563 = vst [vmem:[%s8 + $0xa8] sm:$0xff] %v4513
      %4564 = vst [vmem:[%s8 + $0xb0] sm:$0xff] %v4514
      %4565 = vst [vmem:[%s8 + $0xb8] sm:$0xff] %v4515
      %4566 = vst [vmem:[%s8 + $0xc0] sm:$0xff] %v4516
      // Predicated region
      $region57: #{_lambda_.7} parent=51 // pred_check
        %p4567 = pneg %p230
      $region58: #{_lambda_.7} parent=51 // pred_check_branch
        %4569 = sbr.rel (%p4567) target = $region60
      $region59: #{_lambda_.7} parent=51 // pred_region
        _
      $region60: #{_lambda_.7} parent=51 // pred_fallthru
        _
      // Predicated region
      $region61: #{_lambda_.7} parent=51 // pred_check
        %p4570 = pneg %p230
      $region62: #{_lambda_.7} parent=51 // pred_check_branch
        %4572 = sbr.rel (%p4570) target = $region64
      $region63: #{_lambda_.7} parent=51 // pred_region
        _
      $region64: #{_lambda_.7} parent=51 // pred_fallthru
        _
    $region52: #{_lambda_.7} parent=5 // pred_fallthru
      _
    %p4573 = scmp.le.s32.totalorder 2, %s14
    // Predicated region
    $region65: #{_lambda_.7} parent=5 // pred_check
      %p4574 = pneg %p4573
    $region66: #{_lambda_.7} parent=5 // pred_check_branch
      %4576 = sbr.rel (%p4574) target = $region68
    $region67: #{_lambda_.7} parent=5 // pred_region
      %s4577 = ssub.s32 %s14, 2
    $region68: #{_lambda_.7} parent=5 // pred_fallthru
      _
  $region6: #{_lambda_.7} parent=0 // loop_footer
    %s18 = sadd.s32 1, %s14
  $region7: #{_lambda_.7} parent=0 // loop_footer_branch
    %13 = sbr.rel target = $region3
  $region8: #{_lambda_.7} parent=0 // loop_exit
    _

// kernel: _lambda_.9
$region0: #{_lambda_.9}
  #allocation0 [shape = 'u32[]', space=smem, size = 0x4, offset = 0x4, fixed_abs, tag = 'smem constant byte address 0x4 - core index']
  #allocation1 [shape = 'u32[144,128]{1,0:T(1,128)}', space=vmem, size = 0x12000, scoped, tag = 'internal scratch']
  #allocation2 [shape = 'f32[50,128]{1,0:T(8,128)}', space=vmem, size = 0x7000, scoped, tag = 'scratch operand']
  #allocation3 [shape = 'f32[82,128]{1,0:T(8,128)}', space=vmem, size = 0xb000, scoped, tag = 'scratch operand']
  %s0 = inlined_call_operand.vmem [shape: f32[50,128], index: 0, kind: input, shape index: {}]
  %s1 = inlined_call_operand.vmem [shape: f32[50,9], index: 1, kind: input, shape index: {}]
  %s2 = inlined_call_operand.vmem [shape: f32[2,1,128], index: 2, kind: input, shape index: {}]
  %s3 = inlined_call_operand.vmem [shape: f32[2,1,128], index: 3, kind: input, shape index: {}]
  %s4 = inlined_call_operand.vmem [shape: bf16[2,128,128], index: 4, kind: input, shape index: {}]
  %s5 = inlined_call_operand.vmem [shape: f32[2,1,128], index: 5, kind: input, shape index: {}]
  %s6 = inlined_call_operand.vmem [shape: f32[2,1,128], index: 6, kind: input, shape index: {}]
  %s7 = inlined_call_operand.vmem [shape: bf16[2,9,128,128], index: 7, kind: input, shape index: {}]
  %s8 = inlined_call_operand.vmem [shape: f32[50,128], index: 8, kind: output, shape index: {}]
  %s9 = sld [smem:[#allocation0]]
  $region69: #{_lambda_.9} parent=0
    _
  %s11 = ssub.s32 1, %s9
  %s12 = scalar_select 0, %s11, %s9
  loop: start=0, step=1, limit=4
  $region2: #{_lambda_.9} parent=0 // loop_pre_header
    _
  $region3: #{_lambda_.9} parent=0 // loop_header
    %s14 = sphi 0, %s18
    %p15 = scmp.ge.s32.totalorder %s14, 4
    %s22 = sphi 0, %s22
    %s24 = sphi 0, %s22
    %s25 = sphi 0, %s24
    %s39 = sphi 0, %s25
    %s43 = sphi 0, %s43
    %s45 = sphi 0, %s43
    %s46 = sphi 0, %s45
    %s60 = sphi 0, %s46
    %s66 = sphi 0, %s68
    %s69 = sphi 0, %s66
    %s70 = sphi 0, %s69
    %s86 = sphi 0, %s70
    %s92 = sphi 0, %s94
    %s95 = sphi 0, %s92
    %s96 = sphi 0, %s95
    %s112 = sphi 0, %s96
    %s118 = sphi 0, %s120
    %s121 = sphi 0, %s118
    %s122 = sphi 0, %s121
    %s138 = sphi 0, %s122
    %s144 = sphi 0, %s146
    %s147 = sphi 0, %s144
    %s148 = sphi 0, %s147
    %s164 = sphi 0, %s148
    %s170 = sphi 0, %s172
    %s173 = sphi 0, %s170
    %s174 = sphi 0, %s173
    %s190 = sphi 0, %s174
    %s196 = sphi 0, %s198
    %s199 = sphi 0, %s196
    %s200 = sphi 0, %s199
    %s216 = sphi 0, %s200
    %s220 = sphi 0, %s220
    %s222 = sphi 0, %s220
    %s223 = sphi 0, %s222
    %s237 = sphi 0, %s223
  $region4: #{_lambda_.9} parent=0 // loop_header_branch
    %17 = sbr.rel (%p15) target = $region8
  $region5: #{_lambda_.9} parent=0 // loop_body
    %s19 = ssub.s32 %s14, 1
    %s20 = ssub.s32 %s14, 2
    %s21 = sadd.s32 %s14, 1
    %s23 = sadd.s32 %s22, 1
    %p26 = scmp.eq.s32.totalorder %s14, 1
    %p27 = scmp.ne.s32.totalorder %s22, %s24
    %p28 = scmp.eq.s32.totalorder %s14, 0
    %p29 = por %p27, %p28
    %p30 = scmp.ne.s32.totalorder %s22, %s24
    %p31 = scmp.eq.s32.totalorder %s19, 1
    %p32 = por %p30, %p31
    %p33 = scmp.ne.s32.totalorder %s24, %s25
    %p34 = scmp.eq.s32.totalorder %s19, 0
    %p35 = por %p33, %p34
    %p36 = scmp.ne.s32.totalorder %s24, %s25
    %p37 = scmp.eq.s32.totalorder %s20, 1
    %p38 = por %p36, %p37
    %p40 = scmp.ne.s32.totalorder %s25, %s39
    %p41 = scmp.eq.s32.totalorder %s20, 0
    %p42 = por %p40, %p41
    %s44 = sadd.s32 %s43, 1
    %p47 = scmp.eq.s32.totalorder %s14, 1
    %p48 = scmp.ne.s32.totalorder %s43, %s45
    %p49 = scmp.eq.s32.totalorder %s14, 0
    %p50 = por %p48, %p49
    %p51 = scmp.ne.s32.totalorder %s43, %s45
    %p52 = scmp.eq.s32.totalorder %s19, 1
    %p53 = por %p51, %p52
    %p54 = scmp.ne.s32.totalorder %s45, %s46
    %p55 = scmp.eq.s32.totalorder %s19, 0
    %p56 = por %p54, %p55
    %p57 = scmp.ne.s32.totalorder %s45, %s46
    %p58 = scmp.eq.s32.totalorder %s20, 1
    %p59 = por %p57, %p58
    %p61 = scmp.ne.s32.totalorder %s46, %s60
    %p62 = scmp.eq.s32.totalorder %s20, 0
    %p63 = por %p61, %p62
    %s64 = ssub.s32 %s14, %s21
    %p65 = scmp.eq.s32.totalorder %s64, 0
    %s67 = sadd.s32 %s66, 1
    %s68 = scalar_select %p65, %s66, %s67
    %p71 = pneg %p65
    %p72 = scmp.eq.s32.totalorder %s14, 1
    %p73 = por %p71, %p72
    %p74 = scmp.ne.s32.totalorder %s66, %s69
    %p75 = scmp.eq.s32.totalorder %s14, 0
    %p76 = por %p74, %p75
    %p77 = scmp.ne.s32.totalorder %s66, %s69
    %p78 = scmp.eq.s32.totalorder %s19, 1
    %p79 = por %p77, %p78
    %p80 = scmp.ne.s32.totalorder %s69, %s70
    %p81 = scmp.eq.s32.totalorder %s19, 0
    %p82 = por %p80, %p81
    %p83 = scmp.ne.s32.totalorder %s69, %s70
    %p84 = scmp.eq.s32.totalorder %s20, 1
    %p85 = por %p83, %p84
    %p87 = scmp.ne.s32.totalorder %s70, %s86
    %p88 = scmp.eq.s32.totalorder %s20, 0
    %p89 = por %p87, %p88
    %s90 = ssub.s32 %s14, %s21
    %p91 = scmp.eq.s32.totalorder %s90, 0
    %s93 = sadd.s32 %s92, 1
    %s94 = scalar_select %p91, %s92, %s93
    %p97 = pneg %p91
    %p98 = scmp.eq.s32.totalorder %s14, 1
    %p99 = por %p97, %p98
    %p100 = scmp.ne.s32.totalorder %s92, %s95
    %p101 = scmp.eq.s32.totalorder %s14, 0
    %p102 = por %p100, %p101
    %p103 = scmp.ne.s32.totalorder %s92, %s95
    %p104 = scmp.eq.s32.totalorder %s19, 1
    %p105 = por %p103, %p104
    %p106 = scmp.ne.s32.totalorder %s95, %s96
    %p107 = scmp.eq.s32.totalorder %s19, 0
    %p108 = por %p106, %p107
    %p109 = scmp.ne.s32.totalorder %s95, %s96
    %p110 = scmp.eq.s32.totalorder %s20, 1
    %p111 = por %p109, %p110
    %p113 = scmp.ne.s32.totalorder %s96, %s112
    %p114 = scmp.eq.s32.totalorder %s20, 0
    %p115 = por %p113, %p114
    %s116 = ssub.s32 %s14, %s21
    %p117 = scmp.eq.s32.totalorder %s116, 0
    %s119 = sadd.s32 %s118, 1
    %s120 = scalar_select %p117, %s118, %s119
    %p123 = pneg %p117
    %p124 = scmp.eq.s32.totalorder %s14, 1
    %p125 = por %p123, %p124
    %p126 = scmp.ne.s32.totalorder %s118, %s121
    %p127 = scmp.eq.s32.totalorder %s14, 0
    %p128 = por %p126, %p127
    %p129 = scmp.ne.s32.totalorder %s118, %s121
    %p130 = scmp.eq.s32.totalorder %s19, 1
    %p131 = por %p129, %p130
    %p132 = scmp.ne.s32.totalorder %s121, %s122
    %p133 = scmp.eq.s32.totalorder %s19, 0
    %p134 = por %p132, %p133
    %p135 = scmp.ne.s32.totalorder %s121, %s122
    %p136 = scmp.eq.s32.totalorder %s20, 1
    %p137 = por %p135, %p136
    %p139 = scmp.ne.s32.totalorder %s122, %s138
    %p140 = scmp.eq.s32.totalorder %s20, 0
    %p141 = por %p139, %p140
    %s142 = ssub.s32 %s14, %s21
    %p143 = scmp.eq.s32.totalorder %s142, 0
    %s145 = sadd.s32 %s144, 1
    %s146 = scalar_select %p143, %s144, %s145
    %p149 = pneg %p143
    %p150 = scmp.eq.s32.totalorder %s14, 1
    %p151 = por %p149, %p150
    %p152 = scmp.ne.s32.totalorder %s144, %s147
    %p153 = scmp.eq.s32.totalorder %s14, 0
    %p154 = por %p152, %p153
    %p155 = scmp.ne.s32.totalorder %s144, %s147
    %p156 = scmp.eq.s32.totalorder %s19, 1
    %p157 = por %p155, %p156
    %p158 = scmp.ne.s32.totalorder %s147, %s148
    %p159 = scmp.eq.s32.totalorder %s19, 0
    %p160 = por %p158, %p159
    %p161 = scmp.ne.s32.totalorder %s147, %s148
    %p162 = scmp.eq.s32.totalorder %s20, 1
    %p163 = por %p161, %p162
    %p165 = scmp.ne.s32.totalorder %s148, %s164
    %p166 = scmp.eq.s32.totalorder %s20, 0
    %p167 = por %p165, %p166
    %s168 = ssub.s32 %s14, %s21
    %p169 = scmp.eq.s32.totalorder %s168, 0
    %s171 = sadd.s32 %s170, 1
    %s172 = scalar_select %p169, %s170, %s171
    %p175 = pneg %p169
    %p176 = scmp.eq.s32.totalorder %s14, 1
    %p177 = por %p175, %p176
    %p178 = scmp.ne.s32.totalorder %s170, %s173
    %p179 = scmp.eq.s32.totalorder %s14, 0
    %p180 = por %p178, %p179
    %p181 = scmp.ne.s32.totalorder %s170, %s173
    %p182 = scmp.eq.s32.totalorder %s19, 1
    %p183 = por %p181, %p182
    %p184 = scmp.ne.s32.totalorder %s173, %s174
    %p185 = scmp.eq.s32.totalorder %s19, 0
    %p186 = por %p184, %p185
    %p187 = scmp.ne.s32.totalorder %s173, %s174
    %p188 = scmp.eq.s32.totalorder %s20, 1
    %p189 = por %p187, %p188
    %p191 = scmp.ne.s32.totalorder %s174, %s190
    %p192 = scmp.eq.s32.totalorder %s20, 0
    %p193 = por %p191, %p192
    %s194 = ssub.s32 %s14, %s21
    %p195 = scmp.eq.s32.totalorder %s194, 0
    %s197 = sadd.s32 %s196, 1
    %s198 = scalar_select %p195, %s196, %s197
    %p201 = pneg %p195
    %p202 = scmp.eq.s32.totalorder %s14, 1
    %p203 = por %p201, %p202
    %p204 = scmp.ne.s32.totalorder %s196, %s199
    %p205 = scmp.eq.s32.totalorder %s14, 0
    %p206 = por %p204, %p205
    %p207 = scmp.ne.s32.totalorder %s196, %s199
    %p208 = scmp.eq.s32.totalorder %s19, 1
    %p209 = por %p207, %p208
    %p210 = scmp.ne.s32.totalorder %s199, %s200
    %p211 = scmp.eq.s32.totalorder %s19, 0
    %p212 = por %p210, %p211
    %p213 = scmp.ne.s32.totalorder %s199, %s200
    %p214 = scmp.eq.s32.totalorder %s20, 1
    %p215 = por %p213, %p214
    %p217 = scmp.ne.s32.totalorder %s200, %s216
    %p218 = scmp.eq.s32.totalorder %s20, 0
    %p219 = por %p217, %p218
    %s221 = sadd.s32 %s220, 1
    %p224 = scmp.eq.s32.totalorder %s14, 1
    %p225 = scmp.ne.s32.totalorder %s220, %s222
    %p226 = scmp.eq.s32.totalorder %s14, 0
    %p227 = por %p225, %p226
    %p228 = scmp.ne.s32.totalorder %s220, %s222
    %p229 = scmp.eq.s32.totalorder %s19, 1
    %p230 = por %p228, %p229
    %p231 = scmp.ne.s32.totalorder %s222, %s223
    %p232 = scmp.eq.s32.totalorder %s19, 0
    %p233 = por %p231, %p232
    %p234 = scmp.ne.s32.totalorder %s222, %s223
    %p235 = scmp.eq.s32.totalorder %s20, 1
    %p236 = por %p234, %p235
    %p238 = scmp.ne.s32.totalorder %s223, %s237
    %p239 = scmp.eq.s32.totalorder %s20, 0
    %p240 = por %p238, %p239
    %p241 = scmp.le.s32.totalorder 1, %s14
    %p242 = scmp.lt.s32.totalorder %s14, 3
    %p243 = pnand %p241, %p242
    %p244 = pneg %p243
    // Predicated region
    $region9: #{_lambda_.9} parent=5 // pred_check
      _
    $region10: #{_lambda_.9} parent=5 // pred_check_branch
      %246 = sbr.rel (%p243) target = $region12
    $region11: #{_lambda_.9} parent=5 // pred_region
      %s247 = ssub.s32 %s14, 1
      // Predicated region
      $region13: #{_lambda_.9} parent=11 // pred_check
        %p248 = pneg %p35
      $region14: #{_lambda_.9} parent=11 // pred_check_branch
        %250 = sbr.rel (%p248) target = $region16
      $region15: #{_lambda_.9} parent=11 // pred_region
        _
      $region16: #{_lambda_.9} parent=11 // pred_fallthru
        _
      // Predicated region
      $region17: #{_lambda_.9} parent=11 // pred_check
        %p251 = pneg %p56
      $region18: #{_lambda_.9} parent=11 // pred_check_branch
        %253 = sbr.rel (%p251) target = $region20
      $region19: #{_lambda_.9} parent=11 // pred_region
        _
      $region20: #{_lambda_.9} parent=11 // pred_fallthru
        _
    $region12: #{_lambda_.9} parent=5 // pred_fallthru
      _
    %p254 = scmp.lt.s32.totalorder %s14, 2
    // Predicated region
    $region21: #{_lambda_.9} parent=5 // pred_check
      %p255 = pneg %p254
    $region22: #{_lambda_.9} parent=5 // pred_check_branch
      %257 = sbr.rel (%p255) target = $region24
    $region23: #{_lambda_.9} parent=5 // pred_region
      // Predicated region
      $region25: #{_lambda_.9} parent=23 // pred_check
        %p258 = pneg %p76
      $region26: #{_lambda_.9} parent=23 // pred_check_branch
        %260 = sbr.rel (%p258) target = $region28
      $region27: #{_lambda_.9} parent=23 // pred_region
        %p261 = scmp.lt.s32.totalorder %s14, 1
        %s262 = scalar_select %p261, %s14, 1
        %s263 = scalar_lea.vmem %s2, %s262
      $region28: #{_lambda_.9} parent=23 // pred_fallthru
        _
      // Predicated region
      $region29: #{_lambda_.9} parent=23 // pred_check
        %p264 = pneg %p102
      $region30: #{_lambda_.9} parent=23 // pred_check_branch
        %266 = sbr.rel (%p264) target = $region32
      $region31: #{_lambda_.9} parent=23 // pred_region
        %p267 = scmp.lt.s32.totalorder %s14, 1
        %s268 = scalar_select %p267, %s14, 1
        %s269 = scalar_lea.vmem %s3, %s268
      $region32: #{_lambda_.9} parent=23 // pred_fallthru
        _
      // Predicated region
      $region33: #{_lambda_.9} parent=23 // pred_check
        %p270 = pneg %p128
      $region34: #{_lambda_.9} parent=23 // pred_check_branch
        %272 = sbr.rel (%p270) target = $region36
      $region35: #{_lambda_.9} parent=23 // pred_region
        %p273 = scmp.lt.s32.totalorder %s14, 1
        %s274 = scalar_select %p273, %s14, 1
        %s275 = smul.addr %s274, 16
        %s276 = smul.addr %s275, 4
        %s277 = scalar_lea.vmem %s4, %s276
      $region36: #{_lambda_.9} parent=23 // pred_fallthru
        _
      // Predicated region
      $region37: #{_lambda_.9} parent=23 // pred_check
        %p278 = pneg %p154
      $region38: #{_lambda_.9} parent=23 // pred_check_branch
        %280 = sbr.rel (%p278) target = $region40
      $region39: #{_lambda_.9} parent=23 // pred_region
        %p281 = scmp.lt.s32.totalorder %s14, 1
        %s282 = scalar_select %p281, %s14, 1
        %s283 = scalar_lea.vmem %s5, %s282
      $region40: #{_lambda_.9} parent=23 // pred_fallthru
        _
      // Predicated region
      $region41: #{_lambda_.9} parent=23 // pred_check
        %p284 = pneg %p180
      $region42: #{_lambda_.9} parent=23 // pred_check_branch
        %286 = sbr.rel (%p284) target = $region44
      $region43: #{_lambda_.9} parent=23 // pred_region
        %p287 = scmp.lt.s32.totalorder %s14, 1
        %s288 = scalar_select %p287, %s14, 1
        %s289 = scalar_lea.vmem %s6, %s288
      $region44: #{_lambda_.9} parent=23 // pred_fallthru
        _
      // Predicated region
      $region45: #{_lambda_.9} parent=23 // pred_check
        %p290 = pneg %p206
      $region46: #{_lambda_.9} parent=23 // pred_check_branch
        %292 = sbr.rel (%p290) target = $region48
      $region47: #{_lambda_.9} parent=23 // pred_region
        %p293 = scmp.lt.s32.totalorder %s14, 1
        %s294 = scalar_select %p293, %s14, 1
        %s295 = smul.addr %s294, 144
        %s296 = smul.addr %s295, 4
        %s297 = scalar_lea.vmem %s7, %s296
      $region48: #{_lambda_.9} parent=23 // pred_fallthru
        _
    $region24: #{_lambda_.9} parent=5 // pred_fallthru
      _
    %p298 = scmp.le.s32.totalorder 1, %s14
    %p299 = scmp.lt.s32.totalorder %s14, 3
    %p300 = pnand %p298, %p299
    %p301 = pneg %p300
    // Predicated region
    $region49: #{_lambda_.9} parent=5 // pred_check
      _
    $region50: #{_lambda_.9} parent=5 // pred_check_branch
      %303 = sbr.rel (%p300) target = $region52
    $region51: #{_lambda_.9} parent=5 // pred_region
      %s304 = ssub.s32 %s14, 1
      %p305 = pneg %p35
      %p306 = pneg %p32
      %p307 = pneg %p56
      %p308 = pneg %p53
      %p309 = scmp.lt.s32.totalorder %s19, 1
      %s310 = scalar_select %p309, %s19, 1
      %s311 = scalar_lea.vmem %s2, %s310
      %p312 = pneg %p82
      %p313 = pneg %p79
      %p314 = scmp.lt.s32.totalorder %s19, 1
      %s315 = scalar_select %p314, %s19, 1
      %s316 = scalar_lea.vmem %s3, %s315
      %p317 = pneg %p108
      %p318 = pneg %p105
      %p319 = scmp.lt.s32.totalorder %s19, 1
      %s320 = scalar_select %p319, %s19, 1
      %s321 = smul.addr %s320, 16
      %s322 = smul.addr %s321, 4
      %s323 = scalar_lea.vmem %s4, %s322
      %p324 = pneg %p134
      %p325 = pneg %p131
      %p326 = scmp.lt.s32.totalorder %s19, 1
      %s327 = scalar_select %p326, %s19, 1
      %s328 = scalar_lea.vmem %s5, %s327
      %p329 = pneg %p160
      %p330 = pneg %p157
      %p331 = scmp.lt.s32.totalorder %s19, 1
      %s332 = scalar_select %p331, %s19, 1
      %s333 = scalar_lea.vmem %s6, %s332
      %p334 = pneg %p186
      %p335 = pneg %p183
      %p336 = scmp.lt.s32.totalorder %s19, 1
      %s337 = scalar_select %p336, %s19, 1
      %s338 = smul.addr %s337, 144
      %s339 = smul.addr %s338, 4
      %s340 = scalar_lea.vmem %s7, %s339
      %p341 = pneg %p212
      %p342 = pneg %p209
      %p343 = pneg %p233
      %p344 = pneg %p230
      %p345 = scmp.lt.s32.totalorder %s19, 1
      %s346 = scalar_select %p345, %s19, 1
      %s347 = scalar_lea.vmem %s2, %s346
      %p348 = scmp.lt.s32.totalorder %s19, 1
      %s349 = scalar_select %p348, %s19, 1
      %s350 = scalar_lea.vmem %s3, %s349
      %p351 = scmp.lt.s32.totalorder %s19, 1
      %s352 = scalar_select %p351, %s19, 1
      %s353 = smul.addr %s352, 16
      %s354 = smul.addr %s353, 4
      %s355 = scalar_lea.vmem %s4, %s354
      %p356 = scmp.lt.s32.totalorder %s19, 1
      %s357 = scalar_select %p356, %s19, 1
      %s358 = scalar_lea.vmem %s5, %s357
      %p359 = scmp.lt.s32.totalorder %s19, 1
      %s360 = scalar_select %p359, %s19, 1
      %s361 = scalar_lea.vmem %s6, %s360
      %p362 = scmp.lt.s32.totalorder %s19, 1
      %s363 = scalar_select %p362, %s19, 1
      %s364 = smul.addr %s363, 144
      %s365 = smul.addr %s364, 4
      %s366 = scalar_lea.vmem %s7, %s365
      %p368 = scmp.eq.s32.totalorder %s19, 0
      // Predicated region
      $region53: #{_lambda_.9} parent=51 // pred_check
        %p369 = pneg %p368
      $region54: #{_lambda_.9} parent=51 // pred_check_branch
        %371 = sbr.rel (%p369) target = $region56
      $region55: #{_lambda_.9} parent=51 // pred_region
        %v372 = vld [vmem:[%s0] sm:$0xff]
        %v373 = vld [vmem:[%s0 + $0x8] sm:$0xff]
        %v374 = vld [vmem:[%s0 + $0x10] sm:$0xff]
        %v375 = vld [vmem:[%s0 + $0x18] sm:$0xff]
        %v376 = vld [vmem:[%s0 + $0x20] sm:$0xff]
        %v377 = vld [vmem:[%s0 + $0x28] sm:$0xff]
        %v378 = vld [vmem:[%s0 + $0x30] sm:$0x3]
        %379 = vst [vmem:[#allocation2] sm:$0xff] %v372
        %380 = vst [vmem:[#allocation2 + $0x8] sm:$0xff] %v373
        %381 = vst [vmem:[#allocation2 + $0x10] sm:$0xff] %v374
        %382 = vst [vmem:[#allocation2 + $0x18] sm:$0xff] %v375
        %383 = vst [vmem:[#allocation2 + $0x20] sm:$0xff] %v376
        %384 = vst [vmem:[#allocation2 + $0x28] sm:$0xff] %v377
        %385 = vst [vmem:[#allocation2 + $0x30] sm:$0x3] %v378
      $region56: #{_lambda_.9} parent=51 // pred_fallthru
        _
      %v386 = vld [vmem:[#allocation2] sm:$0xff]
      %v387 = vld [vmem:[#allocation2 + $0x8] sm:$0xff]
      %v388 = vld [vmem:[#allocation2 + $0x10] sm:$0xff]
      %v389 = vld [vmem:[#allocation2 + $0x18] sm:$0xff]
      %v390 = vld [vmem:[#allocation2 + $0x20] sm:$0xff]
      %v391 = vld [vmem:[#allocation2 + $0x28] sm:$0xff]
      %v392 = vld [vmem:[#allocation2 + $0x30] sm:$0x3]
      %v393 = vld [vmem:[%s347] sm:$0x1]
      %v395 = vlaneseq
      %v396 = vshrl.u32 %v395, 7
      %v397 = vsub.s32 0, %v396
      %v398 = vrot.slane %v393, %v397
      %v400 = vmul.f32 %v386, %v398
      %v401 = vmul.f32 %v387, %v398
      %v402 = vmul.f32 %v388, %v398
      %v403 = vmul.f32 %v389, %v398
      %v404 = vmul.f32 %v390, %v398
      %v405 = vmul.f32 %v391, %v398
      %v406 = vmul.f32 %v392, %v398
      %v407 = vld [vmem:[%s350] sm:$0x1]
      %v409 = vlaneseq
      %v410 = vshrl.u32 %v409, 7
      %v411 = vsub.s32 0, %v410
      %v412 = vrot.slane %v407, %v411
      %v414 = vadd.f32 %v400, %v412
      %v415 = vadd.f32 %v401, %v412
      %v416 = vadd.f32 %v402, %v412
      %v417 = vadd.f32 %v403, %v412
      %v418 = vadd.f32 %v404, %v412
      %v419 = vadd.f32 %v405, %v412
      %v420 = vadd.f32 %v406, %v412
      %v421 = vmax.f32 %v414, 0.0
      %v422 = vmax.f32 %v415, 0.0
      %v423 = vmax.f32 %v416, 0.0
      %v424 = vmax.f32 %v417, 0.0
      %v425 = vmax.f32 %v418, 0.0
      %v426 = vmax.f32 %v419, 0.0
      %v427 = vmax.f32 %v420, 0.0
      %v428 = vpack.c.bf16 %v422, %v421
      %v429 = vpack.c.bf16 %v424, %v423
      %v430 = vpack.c.bf16 %v426, %v425
      %v431 = vpack.c.bf16 %v427, %v427
      %v432 = vld [vmem:[%s355] sm:$0xf]
      %v433 = vld [vmem:[%s355 + $0x4] sm:$0xf]
      %v434 = vld [vmem:[%s355 + $0x8] sm:$0xf]
      %v435 = vld [vmem:[%s355 + $0xc] sm:$0xf]
      %v436 = vld [vmem:[%s355 + $0x10] sm:$0xf]
      %v437 = vld [vmem:[%s355 + $0x14] sm:$0xf]
      %v438 = vld [vmem:[%s355 + $0x18] sm:$0xf]
      %v439 = vld [vmem:[%s355 + $0x1c] sm:$0xf]
      %v440 = vld [vmem:[%s355 + $0x20] sm:$0xf]
      %v441 = vld [vmem:[%s355 + $0x24] sm:$0xf]
      %v442 = vld [vmem:[%s355 + $0x28] sm:$0xf]
      %v443 = vld [vmem:[%s355 + $0x2c] sm:$0xf]
      %v444 = vld [vmem:[%s355 + $0x30] sm:$0xf]
      %v445 = vld [vmem:[%s355 + $0x34] sm:$0xf]
      %v446 = vld [vmem:[%s355 + $0x38] sm:$0xf]
      %v447 = vld [vmem:[%s355 + $0x3c] sm:$0xf]
      %v464 = vunpack.c.l.b16 %v432
      %v465 = vunpack.c.l.b16 %v433
      %v466 = vunpack.c.l.b16 %v434
      %v467 = vunpack.c.l.b16 %v435
      %v468 = vunpack.c.l.b16 %v436
      %v469 = vunpack.c.l.b16 %v437
      %v470 = vunpack.c.l.b16 %v438
      %v471 = vunpack.c.l.b16 %v439
      %v472 = vunpack.c.l.b16 %v440
      %v473 = vunpack.c.l.b16 %v441
      %v474 = vunpack.c.l.b16 %v442
      %v475 = vunpack.c.l.b16 %v443
      %v476 = vunpack.c.l.b16 %v444
      %v477 = vunpack.c.l.b16 %v445
      %v478 = vunpack.c.l.b16 %v446
      %v479 = vunpack.c.l.b16 %v447
      %v480 = vpack.c.b16 %v465, %v464
      %v481 = vpack.c.b16 %v467, %v466
      %v482 = vpack.c.b16 %v469, %v468
      %v483 = vpack.c.b16 %v471, %v470
      %v484 = vpack.c.b16 %v473, %v472
      %v485 = vpack.c.b16 %v475, %v474
      %v486 = vpack.c.b16 %v477, %v476
      %v487 = vpack.c.b16 %v479, %v478
      %496 = vmatprep.subr.bf16.mxu0 0
      %497 = vmatpush1.bf16.msra.mxu0 %v487
      %498 = vmatprep.subr.bf16.mxu0 0
      %499 = vmatpush1.bf16.msra.mxu0 %v486
      %500 = vmatprep.subr.bf16.mxu0 0
      %501 = vmatpush1.bf16.msra.mxu0 %v485
      %502 = vmatprep.subr.bf16.mxu0 0
      %503 = vmatpush1.bf16.msra.mxu0 %v484
      %504 = vmatprep.subr.bf16.mxu0 0
      %505 = vmatpush1.bf16.msra.mxu0 %v483
      %506 = vmatprep.subr.bf16.mxu0 0
      %507 = vmatpush1.bf16.msra.mxu0 %v482
      %508 = vmatprep.subr.bf16.mxu0 0
      %509 = vmatpush1.bf16.msra.mxu0 %v481
      %510 = vmatprep.subr.bf16.mxu0 0
      %511 = vmatpush1.bf16.msra.mxu0 %v480
      %512 = vmatprep.subr.bf16.mxu0 0
      %513 = vmatpush2.bf16.msra.mxu0 0
      %514 = vmatprep.subr.bf16.mxu0 0
      %515 = vmatpush2.bf16.msra.mxu0 0
      %516 = vmatprep.subr.bf16.mxu0 0
      %517 = vmatpush2.bf16.msra.mxu0 0
      %518 = vmatprep.subr.bf16.mxu0 0
      %519 = vmatpush2.bf16.msra.mxu0 0
      %520 = vmatprep.subr.bf16.mxu0 0
      %521 = vmatpush2.bf16.msra.mxu0 0
      %522 = vmatprep.subr.bf16.mxu0 0
      %523 = vmatpush2.bf16.msra.mxu0 0
      %524 = vmatprep.subr.bf16.mxu0 0
      %525 = vmatpush2.bf16.msra.mxu0 0
      %526 = vmatprep.subr.bf16.mxu0 0
      %527 = vmatpush2.bf16.msra.mxu0 0
      %528 = vmatprep.mubr.bf16.mxu0 0
      %529 = vmatmul.mubr.bf16.gmra.mxu0 %v428
      %v530 = vpop.f32.mrf.mxu0
      %v531 = vadd.f32 0.0, %v530
      %v532 = vpop.f32.mrf.mxu0
      %v533 = vpop.f32.mrf.mxu0
      %v534 = vadd.f32 0.0, %v533
      %v535 = vpop.f32.mrf.mxu0
      %536 = vmatprep.mubr.bf16.mxu0 0
      %537 = vmatmul.mubr.bf16.gmra.mxu0 %v429
      %v538 = vpop.f32.mrf.mxu0
      %v539 = vadd.f32 0.0, %v538
      %v540 = vpop.f32.mrf.mxu0
      %v541 = vpop.f32.mrf.mxu0
      %v542 = vadd.f32 0.0, %v541
      %v543 = vpop.f32.mrf.mxu0
      %544 = vmatprep.mubr.bf16.mxu0 0
      %545 = vmatmul.mubr.bf16.gmra.mxu0 %v430
      %v546 = vpop.f32.mrf.mxu0
      %v547 = vadd.f32 0.0, %v546
      %v548 = vpop.f32.mrf.mxu0
      %v549 = vpop.f32.mrf.mxu0
      %v550 = vadd.f32 0.0, %v549
      %v551 = vpop.f32.mrf.mxu0
      %552 = vmatprep.mubr.bf16.mxu0 0
      %553 = vmatmul.mubr.bf16.gmra.mxu0 %v431
      %v554 = vpop.f32.mrf.mxu0
      %v555 = vadd.f32 0.0, %v554
      %v556 = vpop.f32.mrf.mxu0
      %v557 = vpop.f32.mrf.mxu0
      %v558 = vpop.f32.mrf.mxu0
      %559 = vdwg.mxu0
      %v560 = vld [vmem:[%s358] sm:$0x1]
      %v562 = vlaneseq
      %v563 = vshrl.u32 %v562, 7
      %v564 = vsub.s32 0, %v563
      %v565 = vrot.slane %v560, %v564
      %v567 = vmul.f32 %v531, %v565
      %v568 = vmul.f32 %v534, %v565
      %v569 = vmul.f32 %v539, %v565
      %v570 = vmul.f32 %v542, %v565
      %v571 = vmul.f32 %v547, %v565
      %v572 = vmul.f32 %v550, %v565
      %v573 = vmul.f32 %v555, %v565
      %v574 = vld [vmem:[%s361] sm:$0x1]
      %v576 = vlaneseq
      %v577 = vshrl.u32 %v576, 7
      %v578 = vsub.s32 0, %v577
      %v579 = vrot.slane %v574, %v578
      %v581 = vadd.f32 %v567, %v579
      %v582 = vadd.f32 %v568, %v579
      %v583 = vadd.f32 %v569, %v579
      %v584 = vadd.f32 %v570, %v579
      %v585 = vadd.f32 %v571, %v579
      %v586 = vadd.f32 %v572, %v579
      %v587 = vadd.f32 %v573, %v579
      %v588 = vmax.f32 %v581, 0.0
      %v589 = vmax.f32 %v582, 0.0
      %v590 = vmax.f32 %v583, 0.0
      %v591 = vmax.f32 %v584, 0.0
      %v592 = vmax.f32 %v585, 0.0
      %v593 = vmax.f32 %v586, 0.0
      %v594 = vmax.f32 %v587, 0.0
      %595 = vst [vmem:[#allocation3] sm:$0xff] 0.0
      %596 = vst [vmem:[#allocation3 + $0x8] sm:$0xff] 0.0
      %597 = vst [vmem:[#allocation3 + $0x10] sm:$0xff] 0.0
      %598 = vst [vmem:[#allocation3 + $0x18] sm:$0xff] 0.0
      %599 = vst [vmem:[#allocation3 + $0x20] sm:$0xff] 0.0
      %600 = vst [vmem:[#allocation3 + $0x28] sm:$0xff] 0.0
      %601 = vst [vmem:[#allocation3 + $0x30] sm:$0xff] 0.0
      %602 = vst [vmem:[#allocation3 + $0x38] sm:$0xff] 0.0
      %603 = vst [vmem:[#allocation3 + $0x40] sm:$0xff] 0.0
      %604 = vst [vmem:[#allocation3 + $0x48] sm:$0xff] 0.0
      %605 = vst [vmem:[#allocation3 + $0x50] sm:$0x3] 0.0
      %606 = vst [vmem:[#allocation3 + $0x10] sm:$0xff] %v588
      %607 = vst [vmem:[#allocation3 + $0x18] sm:$0xff] %v589
      %608 = vst [vmem:[#allocation3 + $0x20] sm:$0xff] %v590
      %609 = vst [vmem:[#allocation3 + $0x28] sm:$0xff] %v591
      %610 = vst [vmem:[#allocation3 + $0x30] sm:$0xff] %v592
      %611 = vst [vmem:[#allocation3 + $0x38] sm:$0xff] %v593
      %612 = vst [vmem:[#allocation3 + $0x40] sm:$0x3] %v594
      %v613 = vld [vmem:[#allocation3 + $0xa] sm:$0xff]
      %v614 = vld [vmem:[#allocation3 + $0x12] sm:$0xff]
      %v615 = vld [vmem:[#allocation3 + $0x1a] sm:$0xff]
      %v616 = vld [vmem:[#allocation3 + $0x22] sm:$0xff]
      %v617 = vld [vmem:[#allocation3 + $0x2a] sm:$0xff]
      %v618 = vld [vmem:[#allocation3 + $0x32] sm:$0xff]
      %v619 = vld [vmem:[#allocation3 + $0x3a] sm:$0x3]
      %v620 = vpack.c.bf16 %v614, %v613
      %v621 = vpack.c.bf16 %v616, %v615
      %v622 = vpack.c.bf16 %v618, %v617
      %v623 = vpack.c.bf16 %v619, %v619
      %v624 = vld [vmem:[%s366] sm:$0xf]
      %v625 = vld [vmem:[%s366 + $0x4] sm:$0xf]
      %v626 = vld [vmem:[%s366 + $0x8] sm:$0xf]
      %v627 = vld [vmem:[%s366 + $0xc] sm:$0xf]
      %v628 = vld [vmem:[%s366 + $0x10] sm:$0xf]
      %v629 = vld [vmem:[%s366 + $0x14] sm:$0xf]
      %v630 = vld [vmem:[%s366 + $0x18] sm:$0xf]
      %v631 = vld [vmem:[%s366 + $0x1c] sm:$0xf]
      %v632 = vld [vmem:[%s366 + $0x20] sm:$0xf]
      %v633 = vld [vmem:[%s366 + $0x24] sm:$0xf]
      %v634 = vld [vmem:[%s366 + $0x28] sm:$0xf]
      %v635 = vld [vmem:[%s366 + $0x2c] sm:$0xf]
      %v636 = vld [vmem:[%s366 + $0x30] sm:$0xf]
      %v637 = vld [vmem:[%s366 + $0x34] sm:$0xf]
      %v638 = vld [vmem:[%s366 + $0x38] sm:$0xf]
      %v639 = vld [vmem:[%s366 + $0x3c] sm:$0xf]
      %v656 = vunpack.c.l.b16 %v624
      %v657 = vunpack.c.l.b16 %v625
      %v658 = vunpack.c.l.b16 %v626
      %v659 = vunpack.c.l.b16 %v627
      %v660 = vunpack.c.l.b16 %v628
      %v661 = vunpack.c.l.b16 %v629
      %v662 = vunpack.c.l.b16 %v630
      %v663 = vunpack.c.l.b16 %v631
      %v664 = vunpack.c.l.b16 %v632
      %v665 = vunpack.c.l.b16 %v633
      %v666 = vunpack.c.l.b16 %v634
      %v667 = vunpack.c.l.b16 %v635
      %v668 = vunpack.c.l.b16 %v636
      %v669 = vunpack.c.l.b16 %v637
      %v670 = vunpack.c.l.b16 %v638
      %v671 = vunpack.c.l.b16 %v639
      %v672 = vpack.c.b16 %v657, %v656
      %v673 = vpack.c.b16 %v659, %v658
      %v674 = vpack.c.b16 %v661, %v660
      %v675 = vpack.c.b16 %v663, %v662
      %v676 = vpack.c.b16 %v665, %v664
      %v677 = vpack.c.b16 %v667, %v666
      %v678 = vpack.c.b16 %v669, %v668
      %v679 = vpack.c.b16 %v671, %v670
      %688 = vmatprep.subr.bf16.mxu0 0
      %689 = vmatpush1.bf16.msra.mxu0 %v679
      %690 = vmatprep.subr.bf16.mxu0 0
      %691 = vmatpush1.bf16.msra.mxu0 %v678
      %692 = vmatprep.subr.bf16.mxu0 0
      %693 = vmatpush1.bf16.msra.mxu0 %v677
      %694 = vmatprep.subr.bf16.mxu0 0
      %695 = vmatpush1.bf16.msra.mxu0 %v676
      %696 = vmatprep.subr.bf16.mxu0 0
      %697 = vmatpush1.bf16.msra.mxu0 %v675
      %698 = vmatprep.subr.bf16.mxu0 0
      %699 = vmatpush1.bf16.msra.mxu0 %v674
      %700 = vmatprep.subr.bf16.mxu0 0
      %701 = vmatpush1.bf16.msra.mxu0 %v673
      %702 = vmatprep.subr.bf16.mxu0 0
      %703 = vmatpush1.bf16.msra.mxu0 %v672
      %704 = vmatprep.subr.bf16.mxu0 0
      %705 = vmatpush2.bf16.msra.mxu0 0
      %706 = vmatprep.subr.bf16.mxu0 0
      %707 = vmatpush2.bf16.msra.mxu0 0
      %708 = vmatprep.subr.bf16.mxu0 0
      %709 = vmatpush2.bf16.msra.mxu0 0
      %710 = vmatprep.subr.bf16.mxu0 0
      %711 = vmatpush2.bf16.msra.mxu0 0
      %712 = vmatprep.subr.bf16.mxu0 0
      %713 = vmatpush2.bf16.msra.mxu0 0
      %714 = vmatprep.subr.bf16.mxu0 0
      %715 = vmatpush2.bf16.msra.mxu0 0
      %716 = vmatprep.subr.bf16.mxu0 0
      %717 = vmatpush2.bf16.msra.mxu0 0
      %718 = vmatprep.subr.bf16.mxu0 0
      %719 = vmatpush2.bf16.msra.mxu0 0
      %720 = vmatprep.mubr.bf16.mxu0 0
      %721 = vmatmul.mubr.bf16.gmra.mxu0 %v620
      %v722 = vpop.f32.mrf.mxu0
      %v723 = vadd.f32 0.0, %v722
      %v724 = vpop.f32.mrf.mxu0
      %v725 = vpop.f32.mrf.mxu0
      %v726 = vadd.f32 0.0, %v725
      %v727 = vpop.f32.mrf.mxu0
      %728 = vmatprep.mubr.bf16.mxu0 0
      %729 = vmatmul.mubr.bf16.gmra.mxu0 %v621
      %v730 = vpop.f32.mrf.mxu0
      %v731 = vadd.f32 0.0, %v730
      %v732 = vpop.f32.mrf.mxu0
      %v733 = vpop.f32.mrf.mxu0
      %v734 = vadd.f32 0.0, %v733
      %v735 = vpop.f32.mrf.mxu0
      %736 = vmatprep.mubr.bf16.mxu0 0
      %737 = vmatmul.mubr.bf16.gmra.mxu0 %v622
      %v738 = vpop.f32.mrf.mxu0
      %v739 = vadd.f32 0.0, %v738
      %v740 = vpop.f32.mrf.mxu0
      %v741 = vpop.f32.mrf.mxu0
      %v742 = vadd.f32 0.0, %v741
      %v743 = vpop.f32.mrf.mxu0
      %744 = vmatprep.mubr.bf16.mxu0 0
      %745 = vmatmul.mubr.bf16.gmra.mxu0 %v623
      %v746 = vpop.f32.mrf.mxu0
      %v747 = vadd.f32 0.0, %v746
      %v748 = vpop.f32.mrf.mxu0
      %v749 = vpop.f32.mrf.mxu0
      %v750 = vpop.f32.mrf.mxu0
      %751 = vdwg.mxu0
      %v752 = vld [vmem:[%s1] sm:$0xff]
      %v753 = vld [vmem:[%s1 + $0x8] sm:$0xff]
      %v754 = vld [vmem:[%s1 + $0x10] sm:$0xff]
      %v755 = vld [vmem:[%s1 + $0x18] sm:$0xff]
      %v756 = vld [vmem:[%s1 + $0x20] sm:$0xff]
      %v757 = vld [vmem:[%s1 + $0x28] sm:$0xff]
      %v758 = vld [vmem:[%s1 + $0x30] sm:$0x3]
      %760 = vset.pattern.permute.xlu0 0
      %761 = vperm.xlu0 %760, %v752
      %v762 = vpop.permute.xlu0 %761
      %765 = vset.pattern.permute.xlu0 0
      %766 = vperm.xlu0 %765, %v753
      %v767 = vpop.permute.xlu0 %766
      %770 = vset.pattern.permute.xlu0 0
      %771 = vperm.xlu0 %770, %v754
      %v772 = vpop.permute.xlu0 %771
      %775 = vset.pattern.permute.xlu0 0
      %776 = vperm.xlu0 %775, %v755
      %v777 = vpop.permute.xlu0 %776
      %780 = vset.pattern.permute.xlu0 0
      %781 = vperm.xlu0 %780, %v756
      %v782 = vpop.permute.xlu0 %781
      %785 = vset.pattern.permute.xlu0 0
      %786 = vperm.xlu0 %785, %v757
      %v787 = vpop.permute.xlu0 %786
      %790 = vset.pattern.permute.xlu0 0
      %791 = vperm.xlu0 %790, %v758
      %v792 = vpop.permute.xlu0 %791
      %v794 = vmul.f32 %v723, %v762
      %v795 = vmul.f32 %v726, %v767
      %v796 = vmul.f32 %v731, %v772
      %v797 = vmul.f32 %v734, %v777
      %v798 = vmul.f32 %v739, %v782
      %v799 = vmul.f32 %v742, %v787
      %v800 = vmul.f32 %v747, %v792
      %v801 = vadd.f32 %v794, 0.0
      %v802 = vadd.f32 %v795, 0.0
      %v803 = vadd.f32 %v796, 0.0
      %v804 = vadd.f32 %v797, 0.0
      %v805 = vadd.f32 %v798, 0.0
      %v806 = vadd.f32 %v799, 0.0
      %v807 = vadd.f32 %v800, 0.0
      %v808 = vld [vmem:[#allocation3 + $0xb] sm:$0xff]
      %v809 = vld [vmem:[#allocation3 + $0x13] sm:$0xff]
      %v810 = vld [vmem:[#allocation3 + $0x1b] sm:$0xff]
      %v811 = vld [vmem:[#allocation3 + $0x23] sm:$0xff]
      %v812 = vld [vmem:[#allocation3 + $0x2b] sm:$0xff]
      %v813 = vld [vmem:[#allocation3 + $0x33] sm:$0xff]
      %v814 = vld [vmem:[#allocation3 + $0x3b] sm:$0x3]
      %v815 = vpack.c.bf16 %v809, %v808
      %v816 = vpack.c.bf16 %v811, %v810
      %v817 = vpack.c.bf16 %v813, %v812
      %v818 = vpack.c.bf16 %v814, %v814
      %s819 = scalar_lea.vmem %s366, 64
      %v820 = vld [vmem:[%s819] sm:$0xf]
      %v821 = vld [vmem:[%s819 + $0x4] sm:$0xf]
      %v822 = vld [vmem:[%s819 + $0x8] sm:$0xf]
      %v823 = vld [vmem:[%s819 + $0xc] sm:$0xf]
      %v824 = vld [vmem:[%s819 + $0x10] sm:$0xf]
      %v825 = vld [vmem:[%s819 + $0x14] sm:$0xf]
      %v826 = vld [vmem:[%s819 + $0x18] sm:$0xf]
      %v827 = vld [vmem:[%s819 + $0x1c] sm:$0xf]
      %v828 = vld [vmem:[%s819 + $0x20] sm:$0xf]
      %v829 = vld [vmem:[%s819 + $0x24] sm:$0xf]
      %v830 = vld [vmem:[%s819 + $0x28] sm:$0xf]
      %v831 = vld [vmem:[%s819 + $0x2c] sm:$0xf]
      %v832 = vld [vmem:[%s819 + $0x30] sm:$0xf]
      %v833 = vld [vmem:[%s819 + $0x34] sm:$0xf]
      %v834 = vld [vmem:[%s819 + $0x38] sm:$0xf]
      %v835 = vld [vmem:[%s819 + $0x3c] sm:$0xf]
      %v852 = vunpack.c.l.b16 %v820
      %v853 = vunpack.c.l.b16 %v821
      %v854 = vunpack.c.l.b16 %v822
      %v855 = vunpack.c.l.b16 %v823
      %v856 = vunpack.c.l.b16 %v824
      %v857 = vunpack.c.l.b16 %v825
      %v858 = vunpack.c.l.b16 %v826
      %v859 = vunpack.c.l.b16 %v827
      %v860 = vunpack.c.l.b16 %v828
      %v861 = vunpack.c.l.b16 %v829
      %v862 = vunpack.c.l.b16 %v830
      %v863 = vunpack.c.l.b16 %v831
      %v864 = vunpack.c.l.b16 %v832
      %v865 = vunpack.c.l.b16 %v833
      %v866 = vunpack.c.l.b16 %v834
      %v867 = vunpack.c.l.b16 %v835
      %v868 = vpack.c.b16 %v853, %v852
      %v869 = vpack.c.b16 %v855, %v854
      %v870 = vpack.c.b16 %v857, %v856
      %v871 = vpack.c.b16 %v859, %v858
      %v872 = vpack.c.b16 %v861, %v860
      %v873 = vpack.c.b16 %v863, %v862
      %v874 = vpack.c.b16 %v865, %v864
      %v875 = vpack.c.b16 %v867, %v866
      %884 = vmatprep.subr.bf16.mxu0 0
      %885 = vmatpush1.bf16.msra.mxu0 %v875
      %886 = vmatprep.subr.bf16.mxu0 0
      %887 = vmatpush1.bf16.msra.mxu0 %v874
      %888 = vmatprep.subr.bf16.mxu0 0
      %889 = vmatpush1.bf16.msra.mxu0 %v873
      %890 = vmatprep.subr.bf16.mxu0 0
      %891 = vmatpush1.bf16.msra.mxu0 %v872
      %892 = vmatprep.subr.bf16.mxu0 0
      %893 = vmatpush1.bf16.msra.mxu0 %v871
      %894 = vmatprep.subr.bf16.mxu0 0
      %895 = vmatpush1.bf16.msra.mxu0 %v870
      %896 = vmatprep.subr.bf16.mxu0 0
      %897 = vmatpush1.bf16.msra.mxu0 %v869
      %898 = vmatprep.subr.bf16.mxu0 0
      %899 = vmatpush1.bf16.msra.mxu0 %v868
      %900 = vmatprep.subr.bf16.mxu0 0
      %901 = vmatpush2.bf16.msra.mxu0 0
      %902 = vmatprep.subr.bf16.mxu0 0
      %903 = vmatpush2.bf16.msra.mxu0 0
      %904 = vmatprep.subr.bf16.mxu0 0
      %905 = vmatpush2.bf16.msra.mxu0 0
      %906 = vmatprep.subr.bf16.mxu0 0
      %907 = vmatpush2.bf16.msra.mxu0 0
      %908 = vmatprep.subr.bf16.mxu0 0
      %909 = vmatpush2.bf16.msra.mxu0 0
      %910 = vmatprep.subr.bf16.mxu0 0
      %911 = vmatpush2.bf16.msra.mxu0 0
      %912 = vmatprep.subr.bf16.mxu0 0
      %913 = vmatpush2.bf16.msra.mxu0 0
      %914 = vmatprep.subr.bf16.mxu0 0
      %915 = vmatpush2.bf16.msra.mxu0 0
      %916 = vmatprep.mubr.bf16.mxu0 0
      %917 = vmatmul.mubr.bf16.gmra.mxu0 %v815
      %v918 = vpop.f32.mrf.mxu0
      %v919 = vadd.f32 0.0, %v918
      %v920 = vpop.f32.mrf.mxu0
      %v921 = vpop.f32.mrf.mxu0
      %v922 = vadd.f32 0.0, %v921
      %v923 = vpop.f32.mrf.mxu0
      %924 = vmatprep.mubr.bf16.mxu0 0
      %925 = vmatmul.mubr.bf16.gmra.mxu0 %v816
      %v926 = vpop.f32.mrf.mxu0
      %v927 = vadd.f32 0.0, %v926
      %v928 = vpop.f32.mrf.mxu0
      %v929 = vpop.f32.mrf.mxu0
      %v930 = vadd.f32 0.0, %v929
      %v931 = vpop.f32.mrf.mxu0
      %932 = vmatprep.mubr.bf16.mxu0 0
      %933 = vmatmul.mubr.bf16.gmra.mxu0 %v817
      %v934 = vpop.f32.mrf.mxu0
      %v935 = vadd.f32 0.0, %v934
      %v936 = vpop.f32.mrf.mxu0
      %v937 = vpop.f32.mrf.mxu0
      %v938 = vadd.f32 0.0, %v937
      %v939 = vpop.f32.mrf.mxu0
      %940 = vmatprep.mubr.bf16.mxu0 0
      %941 = vmatmul.mubr.bf16.gmra.mxu0 %v818
      %v942 = vpop.f32.mrf.mxu0
      %v943 = vadd.f32 0.0, %v942
      %v944 = vpop.f32.mrf.mxu0
      %v945 = vpop.f32.mrf.mxu0
      %v946 = vpop.f32.mrf.mxu0
      %947 = vdwg.mxu0
      %948 = vset.pattern.permute.xlu0 1
      %949 = vperm.xlu0 %948, %v752
      %v950 = vpop.permute.xlu0 %949
      %952 = vset.pattern.permute.xlu0 1
      %953 = vperm.xlu0 %952, %v753
      %v954 = vpop.permute.xlu0 %953
      %956 = vset.pattern.permute.xlu0 1
      %957 = vperm.xlu0 %956, %v754
      %v958 = vpop.permute.xlu0 %957
      %960 = vset.pattern.permute.xlu0 1
      %961 = vperm.xlu0 %960, %v755
      %v962 = vpop.permute.xlu0 %961
      %964 = vset.pattern.permute.xlu0 1
      %965 = vperm.xlu0 %964, %v756
      %v966 = vpop.permute.xlu0 %965
      %968 = vset.pattern.permute.xlu0 1
      %969 = vperm.xlu0 %968, %v757
      %v970 = vpop.permute.xlu0 %969
      %972 = vset.pattern.permute.xlu0 1
      %973 = vperm.xlu0 %972, %v758
      %v974 = vpop.permute.xlu0 %973
      %v976 = vmul.f32 %v919, %v950
      %v977 = vmul.f32 %v922, %v954
      %v978 = vmul.f32 %v927, %v958
      %v979 = vmul.f32 %v930, %v962
      %v980 = vmul.f32 %v935, %v966
      %v981 = vmul.f32 %v938, %v970
      %v982 = vmul.f32 %v943, %v974
      %v983 = vadd.f32 %v801, %v976
      %v984 = vadd.f32 %v802, %v977
      %v985 = vadd.f32 %v803, %v978
      %v986 = vadd.f32 %v804, %v979
      %v987 = vadd.f32 %v805, %v980
      %v988 = vadd.f32 %v806, %v981
      %v989 = vadd.f32 %v807, %v982
      %v990 = vld [vmem:[#allocation3 + $0xc] sm:$0xff]
      %v991 = vld [vmem:[#allocation3 + $0x14] sm:$0xff]
      %v992 = vld [vmem:[#allocation3 + $0x1c] sm:$0xff]
      %v993 = vld [vmem:[#allocation3 + $0x24] sm:$0xff]
      %v994 = vld [vmem:[#allocation3 + $0x2c] sm:$0xff]
      %v995 = vld [vmem:[#allocation3 + $0x34] sm:$0xff]
      %v996 = vld [vmem:[#allocation3 + $0x3c] sm:$0x3]
      %v997 = vpack.c.bf16 %v991, %v990
      %v998 = vpack.c.bf16 %v993, %v992
      %v999 = vpack.c.bf16 %v995, %v994
      %v1000 = vpack.c.bf16 %v996, %v996
      %s1001 = scalar_lea.vmem %s366, 128
      %v1002 = vld [vmem:[%s1001] sm:$0xf]
      %v1003 = vld [vmem:[%s1001 + $0x4] sm:$0xf]
      %v1004 = vld [vmem:[%s1001 + $0x8] sm:$0xf]
      %v1005 = vld [vmem:[%s1001 + $0xc] sm:$0xf]
      %v1006 = vld [vmem:[%s1001 + $0x10] sm:$0xf]
      %v1007 = vld [vmem:[%s1001 + $0x14] sm:$0xf]
      %v1008 = vld [vmem:[%s1001 + $0x18] sm:$0xf]
      %v1009 = vld [vmem:[%s1001 + $0x1c] sm:$0xf]
      %v1010 = vld [vmem:[%s1001 + $0x20] sm:$0xf]
      %v1011 = vld [vmem:[%s1001 + $0x24] sm:$0xf]
      %v1012 = vld [vmem:[%s1001 + $0x28] sm:$0xf]
      %v1013 = vld [vmem:[%s1001 + $0x2c] sm:$0xf]
      %v1014 = vld [vmem:[%s1001 + $0x30] sm:$0xf]
      %v1015 = vld [vmem:[%s1001 + $0x34] sm:$0xf]
      %v1016 = vld [vmem:[%s1001 + $0x38] sm:$0xf]
      %v1017 = vld [vmem:[%s1001 + $0x3c] sm:$0xf]
      %v1034 = vunpack.c.l.b16 %v1002
      %v1035 = vunpack.c.l.b16 %v1003
      %v1036 = vunpack.c.l.b16 %v1004
      %v1037 = vunpack.c.l.b16 %v1005
      %v1038 = vunpack.c.l.b16 %v1006
      %v1039 = vunpack.c.l.b16 %v1007
      %v1040 = vunpack.c.l.b16 %v1008
      %v1041 = vunpack.c.l.b16 %v1009
      %v1042 = vunpack.c.l.b16 %v1010
      %v1043 = vunpack.c.l.b16 %v1011
      %v1044 = vunpack.c.l.b16 %v1012
      %v1045 = vunpack.c.l.b16 %v1013
      %v1046 = vunpack.c.l.b16 %v1014
      %v1047 = vunpack.c.l.b16 %v1015
      %v1048 = vunpack.c.l.b16 %v1016
      %v1049 = vunpack.c.l.b16 %v1017
      %v1050 = vpack.c.b16 %v1035, %v1034
      %v1051 = vpack.c.b16 %v1037, %v1036
      %v1052 = vpack.c.b16 %v1039, %v1038
      %v1053 = vpack.c.b16 %v1041, %v1040
      %v1054 = vpack.c.b16 %v1043, %v1042
      %v1055 = vpack.c.b16 %v1045, %v1044
      %v1056 = vpack.c.b16 %v1047, %v1046
      %v1057 = vpack.c.b16 %v1049, %v1048
      %1066 = vmatprep.subr.bf16.mxu0 0
      %1067 = vmatpush1.bf16.msra.mxu0 %v1057
      %1068 = vmatprep.subr.bf16.mxu0 0
      %1069 = vmatpush1.bf16.msra.mxu0 %v1056
      %1070 = vmatprep.subr.bf16.mxu0 0
      %1071 = vmatpush1.bf16.msra.mxu0 %v1055
      %1072 = vmatprep.subr.bf16.mxu0 0
      %1073 = vmatpush1.bf16.msra.mxu0 %v1054
      %1074 = vmatprep.subr.bf16.mxu0 0
      %1075 = vmatpush1.bf16.msra.mxu0 %v1053
      %1076 = vmatprep.subr.bf16.mxu0 0
      %1077 = vmatpush1.bf16.msra.mxu0 %v1052
      %1078 = vmatprep.subr.bf16.mxu0 0
      %1079 = vmatpush1.bf16.msra.mxu0 %v1051
      %1080 = vmatprep.subr.bf16.mxu0 0
      %1081 = vmatpush1.bf16.msra.mxu0 %v1050
      %1082 = vmatprep.subr.bf16.mxu0 0
      %1083 = vmatpush2.bf16.msra.mxu0 0
      %1084 = vmatprep.subr.bf16.mxu0 0
      %1085 = vmatpush2.bf16.msra.mxu0 0
      %1086 = vmatprep.subr.bf16.mxu0 0
      %1087 = vmatpush2.bf16.msra.mxu0 0
      %1088 = vmatprep.subr.bf16.mxu0 0
      %1089 = vmatpush2.bf16.msra.mxu0 0
      %1090 = vmatprep.subr.bf16.mxu0 0
      %1091 = vmatpush2.bf16.msra.mxu0 0
      %1092 = vmatprep.subr.bf16.mxu0 0
      %1093 = vmatpush2.bf16.msra.mxu0 0
      %1094 = vmatprep.subr.bf16.mxu0 0
      %1095 = vmatpush2.bf16.msra.mxu0 0
      %1096 = vmatprep.subr.bf16.mxu0 0
      %1097 = vmatpush2.bf16.msra.mxu0 0
      %1098 = vmatprep.mubr.bf16.mxu0 0
      %1099 = vmatmul.mubr.bf16.gmra.mxu0 %v997
      %v1100 = vpop.f32.mrf.mxu0
      %v1101 = vadd.f32 0.0, %v1100
      %v1102 = vpop.f32.mrf.mxu0
      %v1103 = vpop.f32.mrf.mxu0
      %v1104 = vadd.f32 0.0, %v1103
      %v1105 = vpop.f32.mrf.mxu0
      %1106 = vmatprep.mubr.bf16.mxu0 0
      %1107 = vmatmul.mubr.bf16.gmra.mxu0 %v998
      %v1108 = vpop.f32.mrf.mxu0
      %v1109 = vadd.f32 0.0, %v1108
      %v1110 = vpop.f32.mrf.mxu0
      %v1111 = vpop.f32.mrf.mxu0
      %v1112 = vadd.f32 0.0, %v1111
      %v1113 = vpop.f32.mrf.mxu0
      %1114 = vmatprep.mubr.bf16.mxu0 0
      %1115 = vmatmul.mubr.bf16.gmra.mxu0 %v999
      %v1116 = vpop.f32.mrf.mxu0
      %v1117 = vadd.f32 0.0, %v1116
      %v1118 = vpop.f32.mrf.mxu0
      %v1119 = vpop.f32.mrf.mxu0
      %v1120 = vadd.f32 0.0, %v1119
      %v1121 = vpop.f32.mrf.mxu0
      %1122 = vmatprep.mubr.bf16.mxu0 0
      %1123 = vmatmul.mubr.bf16.gmra.mxu0 %v1000
      %v1124 = vpop.f32.mrf.mxu0
      %v1125 = vadd.f32 0.0, %v1124
      %v1126 = vpop.f32.mrf.mxu0
      %v1127 = vpop.f32.mrf.mxu0
      %v1128 = vpop.f32.mrf.mxu0
      %1129 = vdwg.mxu0
      %1130 = vset.pattern.permute.xlu0 2
      %1131 = vperm.xlu0 %1130, %v752
      %v1132 = vpop.permute.xlu0 %1131
      %1134 = vset.pattern.permute.xlu0 2
      %1135 = vperm.xlu0 %1134, %v753
      %v1136 = vpop.permute.xlu0 %1135
      %1138 = vset.pattern.permute.xlu0 2
      %1139 = vperm.xlu0 %1138, %v754
      %v1140 = vpop.permute.xlu0 %1139
      %1142 = vset.pattern.permute.xlu0 2
      %1143 = vperm.xlu0 %1142, %v755
      %v1144 = vpop.permute.xlu0 %1143
      %1146 = vset.pattern.permute.xlu0 2
      %1147 = vperm.xlu0 %1146, %v756
      %v1148 = vpop.permute.xlu0 %1147
      %1150 = vset.pattern.permute.xlu0 2
      %1151 = vperm.xlu0 %1150, %v757
      %v1152 = vpop.permute.xlu0 %1151
      %1154 = vset.pattern.permute.xlu0 2
      %1155 = vperm.xlu0 %1154, %v758
      %v1156 = vpop.permute.xlu0 %1155
      %v1158 = vmul.f32 %v1101, %v1132
      %v1159 = vmul.f32 %v1104, %v1136
      %v1160 = vmul.f32 %v1109, %v1140
      %v1161 = vmul.f32 %v1112, %v1144
      %v1162 = vmul.f32 %v1117, %v1148
      %v1163 = vmul.f32 %v1120, %v1152
      %v1164 = vmul.f32 %v1125, %v1156
      %v1165 = vadd.f32 %v983, %v1158
      %v1166 = vadd.f32 %v984, %v1159
      %v1167 = vadd.f32 %v985, %v1160
      %v1168 = vadd.f32 %v986, %v1161
      %v1169 = vadd.f32 %v987, %v1162
      %v1170 = vadd.f32 %v988, %v1163
      %v1171 = vadd.f32 %v989, %v1164
      %v1172 = vld [vmem:[#allocation3 + $0xf] sm:$0xff]
      %v1173 = vld [vmem:[#allocation3 + $0x17] sm:$0xff]
      %v1174 = vld [vmem:[#allocation3 + $0x1f] sm:$0xff]
      %v1175 = vld [vmem:[#allocation3 + $0x27] sm:$0xff]
      %v1176 = vld [vmem:[#allocation3 + $0x2f] sm:$0xff]
      %v1177 = vld [vmem:[#allocation3 + $0x37] sm:$0xff]
      %v1178 = vld [vmem:[#allocation3 + $0x3f] sm:$0x3]
      %v1179 = vpack.c.bf16 %v1173, %v1172
      %v1180 = vpack.c.bf16 %v1175, %v1174
      %v1181 = vpack.c.bf16 %v1177, %v1176
      %v1182 = vpack.c.bf16 %v1178, %v1178
      %s1183 = scalar_lea.vmem %s366, 192
      %v1184 = vld [vmem:[%s1183] sm:$0xf]
      %v1185 = vld [vmem:[%s1183 + $0x4] sm:$0xf]
      %v1186 = vld [vmem:[%s1183 + $0x8] sm:$0xf]
      %v1187 = vld [vmem:[%s1183 + $0xc] sm:$0xf]
      %v1188 = vld [vmem:[%s1183 + $0x10] sm:$0xf]
      %v1189 = vld [vmem:[%s1183 + $0x14] sm:$0xf]
      %v1190 = vld [vmem:[%s1183 + $0x18] sm:$0xf]
      %v1191 = vld [vmem:[%s1183 + $0x1c] sm:$0xf]
      %v1192 = vld [vmem:[%s1183 + $0x20] sm:$0xf]
      %v1193 = vld [vmem:[%s1183 + $0x24] sm:$0xf]
      %v1194 = vld [vmem:[%s1183 + $0x28] sm:$0xf]
      %v1195 = vld [vmem:[%s1183 + $0x2c] sm:$0xf]
      %v1196 = vld [vmem:[%s1183 + $0x30] sm:$0xf]
      %v1197 = vld [vmem:[%s1183 + $0x34] sm:$0xf]
      %v1198 = vld [vmem:[%s1183 + $0x38] sm:$0xf]
      %v1199 = vld [vmem:[%s1183 + $0x3c] sm:$0xf]
      %v1216 = vunpack.c.l.b16 %v1184
      %v1217 = vunpack.c.l.b16 %v1185
      %v1218 = vunpack.c.l.b16 %v1186
      %v1219 = vunpack.c.l.b16 %v1187
      %v1220 = vunpack.c.l.b16 %v1188
      %v1221 = vunpack.c.l.b16 %v1189
      %v1222 = vunpack.c.l.b16 %v1190
      %v1223 = vunpack.c.l.b16 %v1191
      %v1224 = vunpack.c.l.b16 %v1192
      %v1225 = vunpack.c.l.b16 %v1193
      %v1226 = vunpack.c.l.b16 %v1194
      %v1227 = vunpack.c.l.b16 %v1195
      %v1228 = vunpack.c.l.b16 %v1196
      %v1229 = vunpack.c.l.b16 %v1197
      %v1230 = vunpack.c.l.b16 %v1198
      %v1231 = vunpack.c.l.b16 %v1199
      %v1232 = vpack.c.b16 %v1217, %v1216
      %v1233 = vpack.c.b16 %v1219, %v1218
      %v1234 = vpack.c.b16 %v1221, %v1220
      %v1235 = vpack.c.b16 %v1223, %v1222
      %v1236 = vpack.c.b16 %v1225, %v1224
      %v1237 = vpack.c.b16 %v1227, %v1226
      %v1238 = vpack.c.b16 %v1229, %v1228
      %v1239 = vpack.c.b16 %v1231, %v1230
      %1248 = vmatprep.subr.bf16.mxu0 0
      %1249 = vmatpush1.bf16.msra.mxu0 %v1239
      %1250 = vmatprep.subr.bf16.mxu0 0
      %1251 = vmatpush1.bf16.msra.mxu0 %v1238
      %1252 = vmatprep.subr.bf16.mxu0 0
      %1253 = vmatpush1.bf16.msra.mxu0 %v1237
      %1254 = vmatprep.subr.bf16.mxu0 0
      %1255 = vmatpush1.bf16.msra.mxu0 %v1236
      %1256 = vmatprep.subr.bf16.mxu0 0
      %1257 = vmatpush1.bf16.msra.mxu0 %v1235
      %1258 = vmatprep.subr.bf16.mxu0 0
      %1259 = vmatpush1.bf16.msra.mxu0 %v1234
      %1260 = vmatprep.subr.bf16.mxu0 0
      %1261 = vmatpush1.bf16.msra.mxu0 %v1233
      %1262 = vmatprep.subr.bf16.mxu0 0
      %1263 = vmatpush1.bf16.msra.mxu0 %v1232
      %1264 = vmatprep.subr.bf16.mxu0 0
      %1265 = vmatpush2.bf16.msra.mxu0 0
      %1266 = vmatprep.subr.bf16.mxu0 0
      %1267 = vmatpush2.bf16.msra.mxu0 0
      %1268 = vmatprep.subr.bf16.mxu0 0
      %1269 = vmatpush2.bf16.msra.mxu0 0
      %1270 = vmatprep.subr.bf16.mxu0 0
      %1271 = vmatpush2.bf16.msra.mxu0 0
      %1272 = vmatprep.subr.bf16.mxu0 0
      %1273 = vmatpush2.bf16.msra.mxu0 0
      %1274 = vmatprep.subr.bf16.mxu0 0
      %1275 = vmatpush2.bf16.msra.mxu0 0
      %1276 = vmatprep.subr.bf16.mxu0 0
      %1277 = vmatpush2.bf16.msra.mxu0 0
      %1278 = vmatprep.subr.bf16.mxu0 0
      %1279 = vmatpush2.bf16.msra.mxu0 0
      %1280 = vmatprep.mubr.bf16.mxu0 0
      %1281 = vmatmul.mubr.bf16.gmra.mxu0 %v1179
      %v1282 = vpop.f32.mrf.mxu0
      %v1283 = vadd.f32 0.0, %v1282
      %v1284 = vpop.f32.mrf.mxu0
      %v1285 = vpop.f32.mrf.mxu0
      %v1286 = vadd.f32 0.0, %v1285
      %v1287 = vpop.f32.mrf.mxu0
      %1288 = vmatprep.mubr.bf16.mxu0 0
      %1289 = vmatmul.mubr.bf16.gmra.mxu0 %v1180
      %v1290 = vpop.f32.mrf.mxu0
      %v1291 = vadd.f32 0.0, %v1290
      %v1292 = vpop.f32.mrf.mxu0
      %v1293 = vpop.f32.mrf.mxu0
      %v1294 = vadd.f32 0.0, %v1293
      %v1295 = vpop.f32.mrf.mxu0
      %1296 = vmatprep.mubr.bf16.mxu0 0
      %1297 = vmatmul.mubr.bf16.gmra.mxu0 %v1181
      %v1298 = vpop.f32.mrf.mxu0
      %v1299 = vadd.f32 0.0, %v1298
      %v1300 = vpop.f32.mrf.mxu0
      %v1301 = vpop.f32.mrf.mxu0
      %v1302 = vadd.f32 0.0, %v1301
      %v1303 = vpop.f32.mrf.mxu0
      %1304 = vmatprep.mubr.bf16.mxu0 0
      %1305 = vmatmul.mubr.bf16.gmra.mxu0 %v1182
      %v1306 = vpop.f32.mrf.mxu0
      %v1307 = vadd.f32 0.0, %v1306
      %v1308 = vpop.f32.mrf.mxu0
      %v1309 = vpop.f32.mrf.mxu0
      %v1310 = vpop.f32.mrf.mxu0
      %1311 = vdwg.mxu0
      %1312 = vset.pattern.permute.xlu0 3
      %1313 = vperm.xlu0 %1312, %v752
      %v1314 = vpop.permute.xlu0 %1313
      %1316 = vset.pattern.permute.xlu0 3
      %1317 = vperm.xlu0 %1316, %v753
      %v1318 = vpop.permute.xlu0 %1317
      %1320 = vset.pattern.permute.xlu0 3
      %1321 = vperm.xlu0 %1320, %v754
      %v1322 = vpop.permute.xlu0 %1321
      %1324 = vset.pattern.permute.xlu0 3
      %1325 = vperm.xlu0 %1324, %v755
      %v1326 = vpop.permute.xlu0 %1325
      %1328 = vset.pattern.permute.xlu0 3
      %1329 = vperm.xlu0 %1328, %v756
      %v1330 = vpop.permute.xlu0 %1329
      %1332 = vset.pattern.permute.xlu0 3
      %1333 = vperm.xlu0 %1332, %v757
      %v1334 = vpop.permute.xlu0 %1333
      %1336 = vset.pattern.permute.xlu0 3
      %1337 = vperm.xlu0 %1336, %v758
      %v1338 = vpop.permute.xlu0 %1337
      %v1340 = vmul.f32 %v1283, %v1314
      %v1341 = vmul.f32 %v1286, %v1318
      %v1342 = vmul.f32 %v1291, %v1322
      %v1343 = vmul.f32 %v1294, %v1326
      %v1344 = vmul.f32 %v1299, %v1330
      %v1345 = vmul.f32 %v1302, %v1334
      %v1346 = vmul.f32 %v1307, %v1338
      %v1347 = vadd.f32 %v1165, %v1340
      %v1348 = vadd.f32 %v1166, %v1341
      %v1349 = vadd.f32 %v1167, %v1342
      %v1350 = vadd.f32 %v1168, %v1343
      %v1351 = vadd.f32 %v1169, %v1344
      %v1352 = vadd.f32 %v1170, %v1345
      %v1353 = vadd.f32 %v1171, %v1346
      %v1354 = vld [vmem:[#allocation3 + $0x10] sm:$0xff]
      %v1355 = vld [vmem:[#allocation3 + $0x18] sm:$0xff]
      %v1356 = vld [vmem:[#allocation3 + $0x20] sm:$0xff]
      %v1357 = vld [vmem:[#allocation3 + $0x28] sm:$0xff]
      %v1358 = vld [vmem:[#allocation3 + $0x30] sm:$0xff]
      %v1359 = vld [vmem:[#allocation3 + $0x38] sm:$0xff]
      %v1360 = vld [vmem:[#allocation3 + $0x40] sm:$0x3]
      %v1361 = vpack.c.bf16 %v1355, %v1354
      %v1362 = vpack.c.bf16 %v1357, %v1356
      %v1363 = vpack.c.bf16 %v1359, %v1358
      %v1364 = vpack.c.bf16 %v1360, %v1360
      %s1365 = scalar_lea.vmem %s366, 256
      %v1366 = vld [vmem:[%s1365] sm:$0xf]
      %v1367 = vld [vmem:[%s1365 + $0x4] sm:$0xf]
      %v1368 = vld [vmem:[%s1365 + $0x8] sm:$0xf]
      %v1369 = vld [vmem:[%s1365 + $0xc] sm:$0xf]
      %v1370 = vld [vmem:[%s1365 + $0x10] sm:$0xf]
      %v1371 = vld [vmem:[%s1365 + $0x14] sm:$0xf]
      %v1372 = vld [vmem:[%s1365 + $0x18] sm:$0xf]
      %v1373 = vld [vmem:[%s1365 + $0x1c] sm:$0xf]
      %v1374 = vld [vmem:[%s1365 + $0x20] sm:$0xf]
      %v1375 = vld [vmem:[%s1365 + $0x24] sm:$0xf]
      %v1376 = vld [vmem:[%s1365 + $0x28] sm:$0xf]
      %v1377 = vld [vmem:[%s1365 + $0x2c] sm:$0xf]
      %v1378 = vld [vmem:[%s1365 + $0x30] sm:$0xf]
      %v1379 = vld [vmem:[%s1365 + $0x34] sm:$0xf]
      %v1380 = vld [vmem:[%s1365 + $0x38] sm:$0xf]
      %v1381 = vld [vmem:[%s1365 + $0x3c] sm:$0xf]
      %v1398 = vunpack.c.l.b16 %v1366
      %v1399 = vunpack.c.l.b16 %v1367
      %v1400 = vunpack.c.l.b16 %v1368
      %v1401 = vunpack.c.l.b16 %v1369
      %v1402 = vunpack.c.l.b16 %v1370
      %v1403 = vunpack.c.l.b16 %v1371
      %v1404 = vunpack.c.l.b16 %v1372
      %v1405 = vunpack.c.l.b16 %v1373
      %v1406 = vunpack.c.l.b16 %v1374
      %v1407 = vunpack.c.l.b16 %v1375
      %v1408 = vunpack.c.l.b16 %v1376
      %v1409 = vunpack.c.l.b16 %v1377
      %v1410 = vunpack.c.l.b16 %v1378
      %v1411 = vunpack.c.l.b16 %v1379
      %v1412 = vunpack.c.l.b16 %v1380
      %v1413 = vunpack.c.l.b16 %v1381
      %v1414 = vpack.c.b16 %v1399, %v1398
      %v1415 = vpack.c.b16 %v1401, %v1400
      %v1416 = vpack.c.b16 %v1403, %v1402
      %v1417 = vpack.c.b16 %v1405, %v1404
      %v1418 = vpack.c.b16 %v1407, %v1406
      %v1419 = vpack.c.b16 %v1409, %v1408
      %v1420 = vpack.c.b16 %v1411, %v1410
      %v1421 = vpack.c.b16 %v1413, %v1412
      %1430 = vmatprep.subr.bf16.mxu0 0
      %1431 = vmatpush1.bf16.msra.mxu0 %v1421
      %1432 = vmatprep.subr.bf16.mxu0 0
      %1433 = vmatpush1.bf16.msra.mxu0 %v1420
      %1434 = vmatprep.subr.bf16.mxu0 0
      %1435 = vmatpush1.bf16.msra.mxu0 %v1419
      %1436 = vmatprep.subr.bf16.mxu0 0
      %1437 = vmatpush1.bf16.msra.mxu0 %v1418
      %1438 = vmatprep.subr.bf16.mxu0 0
      %1439 = vmatpush1.bf16.msra.mxu0 %v1417
      %1440 = vmatprep.subr.bf16.mxu0 0
      %1441 = vmatpush1.bf16.msra.mxu0 %v1416
      %1442 = vmatprep.subr.bf16.mxu0 0
      %1443 = vmatpush1.bf16.msra.mxu0 %v1415
      %1444 = vmatprep.subr.bf16.mxu0 0
      %1445 = vmatpush1.bf16.msra.mxu0 %v1414
      %1446 = vmatprep.subr.bf16.mxu0 0
      %1447 = vmatpush2.bf16.msra.mxu0 0
      %1448 = vmatprep.subr.bf16.mxu0 0
      %1449 = vmatpush2.bf16.msra.mxu0 0
      %1450 = vmatprep.subr.bf16.mxu0 0
      %1451 = vmatpush2.bf16.msra.mxu0 0
      %1452 = vmatprep.subr.bf16.mxu0 0
      %1453 = vmatpush2.bf16.msra.mxu0 0
      %1454 = vmatprep.subr.bf16.mxu0 0
      %1455 = vmatpush2.bf16.msra.mxu0 0
      %1456 = vmatprep.subr.bf16.mxu0 0
      %1457 = vmatpush2.bf16.msra.mxu0 0
      %1458 = vmatprep.subr.bf16.mxu0 0
      %1459 = vmatpush2.bf16.msra.mxu0 0
      %1460 = vmatprep.subr.bf16.mxu0 0
      %1461 = vmatpush2.bf16.msra.mxu0 0
      %1462 = vmatprep.mubr.bf16.mxu0 0
      %1463 = vmatmul.mubr.bf16.gmra.mxu0 %v1361
      %v1464 = vpop.f32.mrf.mxu0
      %v1465 = vadd.f32 0.0, %v1464
      %v1466 = vpop.f32.mrf.mxu0
      %v1467 = vpop.f32.mrf.mxu0
      %v1468 = vadd.f32 0.0, %v1467
      %v1469 = vpop.f32.mrf.mxu0
      %1470 = vmatprep.mubr.bf16.mxu0 0
      %1471 = vmatmul.mubr.bf16.gmra.mxu0 %v1362
      %v1472 = vpop.f32.mrf.mxu0
      %v1473 = vadd.f32 0.0, %v1472
      %v1474 = vpop.f32.mrf.mxu0
      %v1475 = vpop.f32.mrf.mxu0
      %v1476 = vadd.f32 0.0, %v1475
      %v1477 = vpop.f32.mrf.mxu0
      %1478 = vmatprep.mubr.bf16.mxu0 0
      %1479 = vmatmul.mubr.bf16.gmra.mxu0 %v1363
      %v1480 = vpop.f32.mrf.mxu0
      %v1481 = vadd.f32 0.0, %v1480
      %v1482 = vpop.f32.mrf.mxu0
      %v1483 = vpop.f32.mrf.mxu0
      %v1484 = vadd.f32 0.0, %v1483
      %v1485 = vpop.f32.mrf.mxu0
      %1486 = vmatprep.mubr.bf16.mxu0 0
      %1487 = vmatmul.mubr.bf16.gmra.mxu0 %v1364
      %v1488 = vpop.f32.mrf.mxu0
      %v1489 = vadd.f32 0.0, %v1488
      %v1490 = vpop.f32.mrf.mxu0
      %v1491 = vpop.f32.mrf.mxu0
      %v1492 = vpop.f32.mrf.mxu0
      %1493 = vdwg.mxu0
      %1494 = vset.pattern.permute.xlu0 4
      %1495 = vperm.xlu0 %1494, %v752
      %v1496 = vpop.permute.xlu0 %1495
      %1498 = vset.pattern.permute.xlu0 4
      %1499 = vperm.xlu0 %1498, %v753
      %v1500 = vpop.permute.xlu0 %1499
      %1502 = vset.pattern.permute.xlu0 4
      %1503 = vperm.xlu0 %1502, %v754
      %v1504 = vpop.permute.xlu0 %1503
      %1506 = vset.pattern.permute.xlu0 4
      %1507 = vperm.xlu0 %1506, %v755
      %v1508 = vpop.permute.xlu0 %1507
      %1510 = vset.pattern.permute.xlu0 4
      %1511 = vperm.xlu0 %1510, %v756
      %v1512 = vpop.permute.xlu0 %1511
      %1514 = vset.pattern.permute.xlu0 4
      %1515 = vperm.xlu0 %1514, %v757
      %v1516 = vpop.permute.xlu0 %1515
      %1518 = vset.pattern.permute.xlu0 4
      %1519 = vperm.xlu0 %1518, %v758
      %v1520 = vpop.permute.xlu0 %1519
      %v1522 = vmul.f32 %v1465, %v1496
      %v1523 = vmul.f32 %v1468, %v1500
      %v1524 = vmul.f32 %v1473, %v1504
      %v1525 = vmul.f32 %v1476, %v1508
      %v1526 = vmul.f32 %v1481, %v1512
      %v1527 = vmul.f32 %v1484, %v1516
      %v1528 = vmul.f32 %v1489, %v1520
      %v1529 = vadd.f32 %v1347, %v1522
      %v1530 = vadd.f32 %v1348, %v1523
      %v1531 = vadd.f32 %v1349, %v1524
      %v1532 = vadd.f32 %v1350, %v1525
      %v1533 = vadd.f32 %v1351, %v1526
      %v1534 = vadd.f32 %v1352, %v1527
      %v1535 = vadd.f32 %v1353, %v1528
      %v1536 = vld [vmem:[#allocation3 + $0x11] sm:$0xff]
      %v1537 = vld [vmem:[#allocation3 + $0x19] sm:$0xff]
      %v1538 = vld [vmem:[#allocation3 + $0x21] sm:$0xff]
      %v1539 = vld [vmem:[#allocation3 + $0x29] sm:$0xff]
      %v1540 = vld [vmem:[#allocation3 + $0x31] sm:$0xff]
      %v1541 = vld [vmem:[#allocation3 + $0x39] sm:$0xff]
      %v1542 = vld [vmem:[#allocation3 + $0x41] sm:$0x3]
      %v1543 = vpack.c.bf16 %v1537, %v1536
      %v1544 = vpack.c.bf16 %v1539, %v1538
      %v1545 = vpack.c.bf16 %v1541, %v1540
      %v1546 = vpack.c.bf16 %v1542, %v1542
      %s1547 = scalar_lea.vmem %s366, 320
      %v1548 = vld [vmem:[%s1547] sm:$0xf]
      %v1549 = vld [vmem:[%s1547 + $0x4] sm:$0xf]
      %v1550 = vld [vmem:[%s1547 + $0x8] sm:$0xf]
      %v1551 = vld [vmem:[%s1547 + $0xc] sm:$0xf]
      %v1552 = vld [vmem:[%s1547 + $0x10] sm:$0xf]
      %v1553 = vld [vmem:[%s1547 + $0x14] sm:$0xf]
      %v1554 = vld [vmem:[%s1547 + $0x18] sm:$0xf]
      %v1555 = vld [vmem:[%s1547 + $0x1c] sm:$0xf]
      %v1556 = vld [vmem:[%s1547 + $0x20] sm:$0xf]
      %v1557 = vld [vmem:[%s1547 + $0x24] sm:$0xf]
      %v1558 = vld [vmem:[%s1547 + $0x28] sm:$0xf]
      %v1559 = vld [vmem:[%s1547 + $0x2c] sm:$0xf]
      %v1560 = vld [vmem:[%s1547 + $0x30] sm:$0xf]
      %v1561 = vld [vmem:[%s1547 + $0x34] sm:$0xf]
      %v1562 = vld [vmem:[%s1547 + $0x38] sm:$0xf]
      %v1563 = vld [vmem:[%s1547 + $0x3c] sm:$0xf]
      %v1580 = vunpack.c.l.b16 %v1548
      %v1581 = vunpack.c.l.b16 %v1549
      %v1582 = vunpack.c.l.b16 %v1550
      %v1583 = vunpack.c.l.b16 %v1551
      %v1584 = vunpack.c.l.b16 %v1552
      %v1585 = vunpack.c.l.b16 %v1553
      %v1586 = vunpack.c.l.b16 %v1554
      %v1587 = vunpack.c.l.b16 %v1555
      %v1588 = vunpack.c.l.b16 %v1556
      %v1589 = vunpack.c.l.b16 %v1557
      %v1590 = vunpack.c.l.b16 %v1558
      %v1591 = vunpack.c.l.b16 %v1559
      %v1592 = vunpack.c.l.b16 %v1560
      %v1593 = vunpack.c.l.b16 %v1561
      %v1594 = vunpack.c.l.b16 %v1562
      %v1595 = vunpack.c.l.b16 %v1563
      %v1596 = vpack.c.b16 %v1581, %v1580
      %v1597 = vpack.c.b16 %v1583, %v1582
      %v1598 = vpack.c.b16 %v1585, %v1584
      %v1599 = vpack.c.b16 %v1587, %v1586
      %v1600 = vpack.c.b16 %v1589, %v1588
      %v1601 = vpack.c.b16 %v1591, %v1590
      %v1602 = vpack.c.b16 %v1593, %v1592
      %v1603 = vpack.c.b16 %v1595, %v1594
      %1612 = vmatprep.subr.bf16.mxu0 0
      %1613 = vmatpush1.bf16.msra.mxu0 %v1603
      %1614 = vmatprep.subr.bf16.mxu0 0
      %1615 = vmatpush1.bf16.msra.mxu0 %v1602
      %1616 = vmatprep.subr.bf16.mxu0 0
      %1617 = vmatpush1.bf16.msra.mxu0 %v1601
      %1618 = vmatprep.subr.bf16.mxu0 0
      %1619 = vmatpush1.bf16.msra.mxu0 %v1600
      %1620 = vmatprep.subr.bf16.mxu0 0
      %1621 = vmatpush1.bf16.msra.mxu0 %v1599
      %1622 = vmatprep.subr.bf16.mxu0 0
      %1623 = vmatpush1.bf16.msra.mxu0 %v1598
      %1624 = vmatprep.subr.bf16.mxu0 0
      %1625 = vmatpush1.bf16.msra.mxu0 %v1597
      %1626 = vmatprep.subr.bf16.mxu0 0
      %1627 = vmatpush1.bf16.msra.mxu0 %v1596
      %1628 = vmatprep.subr.bf16.mxu0 0
      %1629 = vmatpush2.bf16.msra.mxu0 0
      %1630 = vmatprep.subr.bf16.mxu0 0
      %1631 = vmatpush2.bf16.msra.mxu0 0
      %1632 = vmatprep.subr.bf16.mxu0 0
      %1633 = vmatpush2.bf16.msra.mxu0 0
      %1634 = vmatprep.subr.bf16.mxu0 0
      %1635 = vmatpush2.bf16.msra.mxu0 0
      %1636 = vmatprep.subr.bf16.mxu0 0
      %1637 = vmatpush2.bf16.msra.mxu0 0
      %1638 = vmatprep.subr.bf16.mxu0 0
      %1639 = vmatpush2.bf16.msra.mxu0 0
      %1640 = vmatprep.subr.bf16.mxu0 0
      %1641 = vmatpush2.bf16.msra.mxu0 0
      %1642 = vmatprep.subr.bf16.mxu0 0
      %1643 = vmatpush2.bf16.msra.mxu0 0
      %1644 = vmatprep.mubr.bf16.mxu0 0
      %1645 = vmatmul.mubr.bf16.gmra.mxu0 %v1543
      %v1646 = vpop.f32.mrf.mxu0
      %v1647 = vadd.f32 0.0, %v1646
      %v1648 = vpop.f32.mrf.mxu0
      %v1649 = vpop.f32.mrf.mxu0
      %v1650 = vadd.f32 0.0, %v1649
      %v1651 = vpop.f32.mrf.mxu0
      %1652 = vmatprep.mubr.bf16.mxu0 0
      %1653 = vmatmul.mubr.bf16.gmra.mxu0 %v1544
      %v1654 = vpop.f32.mrf.mxu0
      %v1655 = vadd.f32 0.0, %v1654
      %v1656 = vpop.f32.mrf.mxu0
      %v1657 = vpop.f32.mrf.mxu0
      %v1658 = vadd.f32 0.0, %v1657
      %v1659 = vpop.f32.mrf.mxu0
      %1660 = vmatprep.mubr.bf16.mxu0 0
      %1661 = vmatmul.mubr.bf16.gmra.mxu0 %v1545
      %v1662 = vpop.f32.mrf.mxu0
      %v1663 = vadd.f32 0.0, %v1662
      %v1664 = vpop.f32.mrf.mxu0
      %v1665 = vpop.f32.mrf.mxu0
      %v1666 = vadd.f32 0.0, %v1665
      %v1667 = vpop.f32.mrf.mxu0
      %1668 = vmatprep.mubr.bf16.mxu0 0
      %1669 = vmatmul.mubr.bf16.gmra.mxu0 %v1546
      %v1670 = vpop.f32.mrf.mxu0
      %v1671 = vadd.f32 0.0, %v1670
      %v1672 = vpop.f32.mrf.mxu0
      %v1673 = vpop.f32.mrf.mxu0
      %v1674 = vpop.f32.mrf.mxu0
      %1675 = vdwg.mxu0
      %1676 = vset.pattern.permute.xlu0 5
      %1677 = vperm.xlu0 %1676, %v752
      %v1678 = vpop.permute.xlu0 %1677
      %1680 = vset.pattern.permute.xlu0 5
      %1681 = vperm.xlu0 %1680, %v753
      %v1682 = vpop.permute.xlu0 %1681
      %1684 = vset.pattern.permute.xlu0 5
      %1685 = vperm.xlu0 %1684, %v754
      %v1686 = vpop.permute.xlu0 %1685
      %1688 = vset.pattern.permute.xlu0 5
      %1689 = vperm.xlu0 %1688, %v755
      %v1690 = vpop.permute.xlu0 %1689
      %1692 = vset.pattern.permute.xlu0 5
      %1693 = vperm.xlu0 %1692, %v756
      %v1694 = vpop.permute.xlu0 %1693
      %1696 = vset.pattern.permute.xlu0 5
      %1697 = vperm.xlu0 %1696, %v757
      %v1698 = vpop.permute.xlu0 %1697
      %1700 = vset.pattern.permute.xlu0 5
      %1701 = vperm.xlu0 %1700, %v758
      %v1702 = vpop.permute.xlu0 %1701
      %v1704 = vmul.f32 %v1647, %v1678
      %v1705 = vmul.f32 %v1650, %v1682
      %v1706 = vmul.f32 %v1655, %v1686
      %v1707 = vmul.f32 %v1658, %v1690
      %v1708 = vmul.f32 %v1663, %v1694
      %v1709 = vmul.f32 %v1666, %v1698
      %v1710 = vmul.f32 %v1671, %v1702
      %v1711 = vadd.f32 %v1529, %v1704
      %v1712 = vadd.f32 %v1530, %v1705
      %v1713 = vadd.f32 %v1531, %v1706
      %v1714 = vadd.f32 %v1532, %v1707
      %v1715 = vadd.f32 %v1533, %v1708
      %v1716 = vadd.f32 %v1534, %v1709
      %v1717 = vadd.f32 %v1535, %v1710
      %v1718 = vld [vmem:[#allocation3 + $0x14] sm:$0xff]
      %v1719 = vld [vmem:[#allocation3 + $0x1c] sm:$0xff]
      %v1720 = vld [vmem:[#allocation3 + $0x24] sm:$0xff]
      %v1721 = vld [vmem:[#allocation3 + $0x2c] sm:$0xff]
      %v1722 = vld [vmem:[#allocation3 + $0x34] sm:$0xff]
      %v1723 = vld [vmem:[#allocation3 + $0x3c] sm:$0xff]
      %v1724 = vld [vmem:[#allocation3 + $0x44] sm:$0x3]
      %v1725 = vpack.c.bf16 %v1719, %v1718
      %v1726 = vpack.c.bf16 %v1721, %v1720
      %v1727 = vpack.c.bf16 %v1723, %v1722
      %v1728 = vpack.c.bf16 %v1724, %v1724
      %s1729 = scalar_lea.vmem %s366, 384
      %v1730 = vld [vmem:[%s1729] sm:$0xf]
      %v1731 = vld [vmem:[%s1729 + $0x4] sm:$0xf]
      %v1732 = vld [vmem:[%s1729 + $0x8] sm:$0xf]
      %v1733 = vld [vmem:[%s1729 + $0xc] sm:$0xf]
      %v1734 = vld [vmem:[%s1729 + $0x10] sm:$0xf]
      %v1735 = vld [vmem:[%s1729 + $0x14] sm:$0xf]
      %v1736 = vld [vmem:[%s1729 + $0x18] sm:$0xf]
      %v1737 = vld [vmem:[%s1729 + $0x1c] sm:$0xf]
      %v1738 = vld [vmem:[%s1729 + $0x20] sm:$0xf]
      %v1739 = vld [vmem:[%s1729 + $0x24] sm:$0xf]
      %v1740 = vld [vmem:[%s1729 + $0x28] sm:$0xf]
      %v1741 = vld [vmem:[%s1729 + $0x2c] sm:$0xf]
      %v1742 = vld [vmem:[%s1729 + $0x30] sm:$0xf]
      %v1743 = vld [vmem:[%s1729 + $0x34] sm:$0xf]
      %v1744 = vld [vmem:[%s1729 + $0x38] sm:$0xf]
      %v1745 = vld [vmem:[%s1729 + $0x3c] sm:$0xf]
      %v1762 = vunpack.c.l.b16 %v1730
      %v1763 = vunpack.c.l.b16 %v1731
      %v1764 = vunpack.c.l.b16 %v1732
      %v1765 = vunpack.c.l.b16 %v1733
      %v1766 = vunpack.c.l.b16 %v1734
      %v1767 = vunpack.c.l.b16 %v1735
      %v1768 = vunpack.c.l.b16 %v1736
      %v1769 = vunpack.c.l.b16 %v1737
      %v1770 = vunpack.c.l.b16 %v1738
      %v1771 = vunpack.c.l.b16 %v1739
      %v1772 = vunpack.c.l.b16 %v1740
      %v1773 = vunpack.c.l.b16 %v1741
      %v1774 = vunpack.c.l.b16 %v1742
      %v1775 = vunpack.c.l.b16 %v1743
      %v1776 = vunpack.c.l.b16 %v1744
      %v1777 = vunpack.c.l.b16 %v1745
      %v1778 = vpack.c.b16 %v1763, %v1762
      %v1779 = vpack.c.b16 %v1765, %v1764
      %v1780 = vpack.c.b16 %v1767, %v1766
      %v1781 = vpack.c.b16 %v1769, %v1768
      %v1782 = vpack.c.b16 %v1771, %v1770
      %v1783 = vpack.c.b16 %v1773, %v1772
      %v1784 = vpack.c.b16 %v1775, %v1774
      %v1785 = vpack.c.b16 %v1777, %v1776
      %1794 = vmatprep.subr.bf16.mxu0 0
      %1795 = vmatpush1.bf16.msra.mxu0 %v1785
      %1796 = vmatprep.subr.bf16.mxu0 0
      %1797 = vmatpush1.bf16.msra.mxu0 %v1784
      %1798 = vmatprep.subr.bf16.mxu0 0
      %1799 = vmatpush1.bf16.msra.mxu0 %v1783
      %1800 = vmatprep.subr.bf16.mxu0 0
      %1801 = vmatpush1.bf16.msra.mxu0 %v1782
      %1802 = vmatprep.subr.bf16.mxu0 0
      %1803 = vmatpush1.bf16.msra.mxu0 %v1781
      %1804 = vmatprep.subr.bf16.mxu0 0
      %1805 = vmatpush1.bf16.msra.mxu0 %v1780
      %1806 = vmatprep.subr.bf16.mxu0 0
      %1807 = vmatpush1.bf16.msra.mxu0 %v1779
      %1808 = vmatprep.subr.bf16.mxu0 0
      %1809 = vmatpush1.bf16.msra.mxu0 %v1778
      %1810 = vmatprep.subr.bf16.mxu0 0
      %1811 = vmatpush2.bf16.msra.mxu0 0
      %1812 = vmatprep.subr.bf16.mxu0 0
      %1813 = vmatpush2.bf16.msra.mxu0 0
      %1814 = vmatprep.subr.bf16.mxu0 0
      %1815 = vmatpush2.bf16.msra.mxu0 0
      %1816 = vmatprep.subr.bf16.mxu0 0
      %1817 = vmatpush2.bf16.msra.mxu0 0
      %1818 = vmatprep.subr.bf16.mxu0 0
      %1819 = vmatpush2.bf16.msra.mxu0 0
      %1820 = vmatprep.subr.bf16.mxu0 0
      %1821 = vmatpush2.bf16.msra.mxu0 0
      %1822 = vmatprep.subr.bf16.mxu0 0
      %1823 = vmatpush2.bf16.msra.mxu0 0
      %1824 = vmatprep.subr.bf16.mxu0 0
      %1825 = vmatpush2.bf16.msra.mxu0 0
      %1826 = vmatprep.mubr.bf16.mxu0 0
      %1827 = vmatmul.mubr.bf16.gmra.mxu0 %v1725
      %v1828 = vpop.f32.mrf.mxu0
      %v1829 = vadd.f32 0.0, %v1828
      %v1830 = vpop.f32.mrf.mxu0
      %v1831 = vpop.f32.mrf.mxu0
      %v1832 = vadd.f32 0.0, %v1831
      %v1833 = vpop.f32.mrf.mxu0
      %1834 = vmatprep.mubr.bf16.mxu0 0
      %1835 = vmatmul.mubr.bf16.gmra.mxu0 %v1726
      %v1836 = vpop.f32.mrf.mxu0
      %v1837 = vadd.f32 0.0, %v1836
      %v1838 = vpop.f32.mrf.mxu0
      %v1839 = vpop.f32.mrf.mxu0
      %v1840 = vadd.f32 0.0, %v1839
      %v1841 = vpop.f32.mrf.mxu0
      %1842 = vmatprep.mubr.bf16.mxu0 0
      %1843 = vmatmul.mubr.bf16.gmra.mxu0 %v1727
      %v1844 = vpop.f32.mrf.mxu0
      %v1845 = vadd.f32 0.0, %v1844
      %v1846 = vpop.f32.mrf.mxu0
      %v1847 = vpop.f32.mrf.mxu0
      %v1848 = vadd.f32 0.0, %v1847
      %v1849 = vpop.f32.mrf.mxu0
      %1850 = vmatprep.mubr.bf16.mxu0 0
      %1851 = vmatmul.mubr.bf16.gmra.mxu0 %v1728
      %v1852 = vpop.f32.mrf.mxu0
      %v1853 = vadd.f32 0.0, %v1852
      %v1854 = vpop.f32.mrf.mxu0
      %v1855 = vpop.f32.mrf.mxu0
      %v1856 = vpop.f32.mrf.mxu0
      %1857 = vdwg.mxu0
      %1858 = vset.pattern.permute.xlu0 6
      %1859 = vperm.xlu0 %1858, %v752
      %v1860 = vpop.permute.xlu0 %1859
      %1862 = vset.pattern.permute.xlu0 6
      %1863 = vperm.xlu0 %1862, %v753
      %v1864 = vpop.permute.xlu0 %1863
      %1866 = vset.pattern.permute.xlu0 6
      %1867 = vperm.xlu0 %1866, %v754
      %v1868 = vpop.permute.xlu0 %1867
      %1870 = vset.pattern.permute.xlu0 6
      %1871 = vperm.xlu0 %1870, %v755
      %v1872 = vpop.permute.xlu0 %1871
      %1874 = vset.pattern.permute.xlu0 6
      %1875 = vperm.xlu0 %1874, %v756
      %v1876 = vpop.permute.xlu0 %1875
      %1878 = vset.pattern.permute.xlu0 6
      %1879 = vperm.xlu0 %1878, %v757
      %v1880 = vpop.permute.xlu0 %1879
      %1882 = vset.pattern.permute.xlu0 6
      %1883 = vperm.xlu0 %1882, %v758
      %v1884 = vpop.permute.xlu0 %1883
      %v1886 = vmul.f32 %v1829, %v1860
      %v1887 = vmul.f32 %v1832, %v1864
      %v1888 = vmul.f32 %v1837, %v1868
      %v1889 = vmul.f32 %v1840, %v1872
      %v1890 = vmul.f32 %v1845, %v1876
      %v1891 = vmul.f32 %v1848, %v1880
      %v1892 = vmul.f32 %v1853, %v1884
      %v1893 = vadd.f32 %v1711, %v1886
      %v1894 = vadd.f32 %v1712, %v1887
      %v1895 = vadd.f32 %v1713, %v1888
      %v1896 = vadd.f32 %v1714, %v1889
      %v1897 = vadd.f32 %v1715, %v1890
      %v1898 = vadd.f32 %v1716, %v1891
      %v1899 = vadd.f32 %v1717, %v1892
      %v1900 = vld [vmem:[#allocation3 + $0x15] sm:$0xff]
      %v1901 = vld [vmem:[#allocation3 + $0x1d] sm:$0xff]
      %v1902 = vld [vmem:[#allocation3 + $0x25] sm:$0xff]
      %v1903 = vld [vmem:[#allocation3 + $0x2d] sm:$0xff]
      %v1904 = vld [vmem:[#allocation3 + $0x35] sm:$0xff]
      %v1905 = vld [vmem:[#allocation3 + $0x3d] sm:$0xff]
      %v1906 = vld [vmem:[#allocation3 + $0x45] sm:$0x3]
      %v1907 = vpack.c.bf16 %v1901, %v1900
      %v1908 = vpack.c.bf16 %v1903, %v1902
      %v1909 = vpack.c.bf16 %v1905, %v1904
      %v1910 = vpack.c.bf16 %v1906, %v1906
      %s1911 = scalar_lea.vmem %s366, 448
      %v1912 = vld [vmem:[%s1911] sm:$0xf]
      %v1913 = vld [vmem:[%s1911 + $0x4] sm:$0xf]
      %v1914 = vld [vmem:[%s1911 + $0x8] sm:$0xf]
      %v1915 = vld [vmem:[%s1911 + $0xc] sm:$0xf]
      %v1916 = vld [vmem:[%s1911 + $0x10] sm:$0xf]
      %v1917 = vld [vmem:[%s1911 + $0x14] sm:$0xf]
      %v1918 = vld [vmem:[%s1911 + $0x18] sm:$0xf]
      %v1919 = vld [vmem:[%s1911 + $0x1c] sm:$0xf]
      %v1920 = vld [vmem:[%s1911 + $0x20] sm:$0xf]
      %v1921 = vld [vmem:[%s1911 + $0x24] sm:$0xf]
      %v1922 = vld [vmem:[%s1911 + $0x28] sm:$0xf]
      %v1923 = vld [vmem:[%s1911 + $0x2c] sm:$0xf]
      %v1924 = vld [vmem:[%s1911 + $0x30] sm:$0xf]
      %v1925 = vld [vmem:[%s1911 + $0x34] sm:$0xf]
      %v1926 = vld [vmem:[%s1911 + $0x38] sm:$0xf]
      %v1927 = vld [vmem:[%s1911 + $0x3c] sm:$0xf]
      %v1944 = vunpack.c.l.b16 %v1912
      %v1945 = vunpack.c.l.b16 %v1913
      %v1946 = vunpack.c.l.b16 %v1914
      %v1947 = vunpack.c.l.b16 %v1915
      %v1948 = vunpack.c.l.b16 %v1916
      %v1949 = vunpack.c.l.b16 %v1917
      %v1950 = vunpack.c.l.b16 %v1918
      %v1951 = vunpack.c.l.b16 %v1919
      %v1952 = vunpack.c.l.b16 %v1920
      %v1953 = vunpack.c.l.b16 %v1921
      %v1954 = vunpack.c.l.b16 %v1922
      %v1955 = vunpack.c.l.b16 %v1923
      %v1956 = vunpack.c.l.b16 %v1924
      %v1957 = vunpack.c.l.b16 %v1925
      %v1958 = vunpack.c.l.b16 %v1926
      %v1959 = vunpack.c.l.b16 %v1927
      %v1960 = vpack.c.b16 %v1945, %v1944
      %v1961 = vpack.c.b16 %v1947, %v1946
      %v1962 = vpack.c.b16 %v1949, %v1948
      %v1963 = vpack.c.b16 %v1951, %v1950
      %v1964 = vpack.c.b16 %v1953, %v1952
      %v1965 = vpack.c.b16 %v1955, %v1954
      %v1966 = vpack.c.b16 %v1957, %v1956
      %v1967 = vpack.c.b16 %v1959, %v1958
      %1976 = vmatprep.subr.bf16.mxu0 0
      %1977 = vmatpush1.bf16.msra.mxu0 %v1967
      %1978 = vmatprep.subr.bf16.mxu0 0
      %1979 = vmatpush1.bf16.msra.mxu0 %v1966
      %1980 = vmatprep.subr.bf16.mxu0 0
      %1981 = vmatpush1.bf16.msra.mxu0 %v1965
      %1982 = vmatprep.subr.bf16.mxu0 0
      %1983 = vmatpush1.bf16.msra.mxu0 %v1964
      %1984 = vmatprep.subr.bf16.mxu0 0
      %1985 = vmatpush1.bf16.msra.mxu0 %v1963
      %1986 = vmatprep.subr.bf16.mxu0 0
      %1987 = vmatpush1.bf16.msra.mxu0 %v1962
      %1988 = vmatprep.subr.bf16.mxu0 0
      %1989 = vmatpush1.bf16.msra.mxu0 %v1961
      %1990 = vmatprep.subr.bf16.mxu0 0
      %1991 = vmatpush1.bf16.msra.mxu0 %v1960
      %1992 = vmatprep.subr.bf16.mxu0 0
      %1993 = vmatpush2.bf16.msra.mxu0 0
      %1994 = vmatprep.subr.bf16.mxu0 0
      %1995 = vmatpush2.bf16.msra.mxu0 0
      %1996 = vmatprep.subr.bf16.mxu0 0
      %1997 = vmatpush2.bf16.msra.mxu0 0
      %1998 = vmatprep.subr.bf16.mxu0 0
      %1999 = vmatpush2.bf16.msra.mxu0 0
      %2000 = vmatprep.subr.bf16.mxu0 0
      %2001 = vmatpush2.bf16.msra.mxu0 0
      %2002 = vmatprep.subr.bf16.mxu0 0
      %2003 = vmatpush2.bf16.msra.mxu0 0
      %2004 = vmatprep.subr.bf16.mxu0 0
      %2005 = vmatpush2.bf16.msra.mxu0 0
      %2006 = vmatprep.subr.bf16.mxu0 0
      %2007 = vmatpush2.bf16.msra.mxu0 0
      %2008 = vmatprep.mubr.bf16.mxu0 0
      %2009 = vmatmul.mubr.bf16.gmra.mxu0 %v1907
      %v2010 = vpop.f32.mrf.mxu0
      %v2011 = vadd.f32 0.0, %v2010
      %v2012 = vpop.f32.mrf.mxu0
      %v2013 = vpop.f32.mrf.mxu0
      %v2014 = vadd.f32 0.0, %v2013
      %v2015 = vpop.f32.mrf.mxu0
      %2016 = vmatprep.mubr.bf16.mxu0 0
      %2017 = vmatmul.mubr.bf16.gmra.mxu0 %v1908
      %v2018 = vpop.f32.mrf.mxu0
      %v2019 = vadd.f32 0.0, %v2018
      %v2020 = vpop.f32.mrf.mxu0
      %v2021 = vpop.f32.mrf.mxu0
      %v2022 = vadd.f32 0.0, %v2021
      %v2023 = vpop.f32.mrf.mxu0
      %2024 = vmatprep.mubr.bf16.mxu0 0
      %2025 = vmatmul.mubr.bf16.gmra.mxu0 %v1909
      %v2026 = vpop.f32.mrf.mxu0
      %v2027 = vadd.f32 0.0, %v2026
      %v2028 = vpop.f32.mrf.mxu0
      %v2029 = vpop.f32.mrf.mxu0
      %v2030 = vadd.f32 0.0, %v2029
      %v2031 = vpop.f32.mrf.mxu0
      %2032 = vmatprep.mubr.bf16.mxu0 0
      %2033 = vmatmul.mubr.bf16.gmra.mxu0 %v1910
      %v2034 = vpop.f32.mrf.mxu0
      %v2035 = vadd.f32 0.0, %v2034
      %v2036 = vpop.f32.mrf.mxu0
      %v2037 = vpop.f32.mrf.mxu0
      %v2038 = vpop.f32.mrf.mxu0
      %2039 = vdwg.mxu0
      %2040 = vset.pattern.permute.xlu0 7
      %2041 = vperm.xlu0 %2040, %v752
      %v2042 = vpop.permute.xlu0 %2041
      %2044 = vset.pattern.permute.xlu0 7
      %2045 = vperm.xlu0 %2044, %v753
      %v2046 = vpop.permute.xlu0 %2045
      %2048 = vset.pattern.permute.xlu0 7
      %2049 = vperm.xlu0 %2048, %v754
      %v2050 = vpop.permute.xlu0 %2049
      %2052 = vset.pattern.permute.xlu0 7
      %2053 = vperm.xlu0 %2052, %v755
      %v2054 = vpop.permute.xlu0 %2053
      %2056 = vset.pattern.permute.xlu0 7
      %2057 = vperm.xlu0 %2056, %v756
      %v2058 = vpop.permute.xlu0 %2057
      %2060 = vset.pattern.permute.xlu0 7
      %2061 = vperm.xlu0 %2060, %v757
      %v2062 = vpop.permute.xlu0 %2061
      %2064 = vset.pattern.permute.xlu0 7
      %2065 = vperm.xlu0 %2064, %v758
      %v2066 = vpop.permute.xlu0 %2065
      %v2068 = vmul.f32 %v2011, %v2042
      %v2069 = vmul.f32 %v2014, %v2046
      %v2070 = vmul.f32 %v2019, %v2050
      %v2071 = vmul.f32 %v2022, %v2054
      %v2072 = vmul.f32 %v2027, %v2058
      %v2073 = vmul.f32 %v2030, %v2062
      %v2074 = vmul.f32 %v2035, %v2066
      %v2075 = vadd.f32 %v1893, %v2068
      %v2076 = vadd.f32 %v1894, %v2069
      %v2077 = vadd.f32 %v1895, %v2070
      %v2078 = vadd.f32 %v1896, %v2071
      %v2079 = vadd.f32 %v1897, %v2072
      %v2080 = vadd.f32 %v1898, %v2073
      %v2081 = vadd.f32 %v1899, %v2074
      %v2082 = vld [vmem:[#allocation3 + $0x16] sm:$0xff]
      %v2083 = vld [vmem:[#allocation3 + $0x1e] sm:$0xff]
      %v2084 = vld [vmem:[#allocation3 + $0x26] sm:$0xff]
      %v2085 = vld [vmem:[#allocation3 + $0x2e] sm:$0xff]
      %v2086 = vld [vmem:[#allocation3 + $0x36] sm:$0xff]
      %v2087 = vld [vmem:[#allocation3 + $0x3e] sm:$0xff]
      %v2088 = vld [vmem:[#allocation3 + $0x46] sm:$0x3]
      %v2089 = vpack.c.bf16 %v2083, %v2082
      %v2090 = vpack.c.bf16 %v2085, %v2084
      %v2091 = vpack.c.bf16 %v2087, %v2086
      %v2092 = vpack.c.bf16 %v2088, %v2088
      %s2093 = scalar_lea.vmem %s366, 512
      %v2094 = vld [vmem:[%s2093] sm:$0xf]
      %v2095 = vld [vmem:[%s2093 + $0x4] sm:$0xf]
      %v2096 = vld [vmem:[%s2093 + $0x8] sm:$0xf]
      %v2097 = vld [vmem:[%s2093 + $0xc] sm:$0xf]
      %v2098 = vld [vmem:[%s2093 + $0x10] sm:$0xf]
      %v2099 = vld [vmem:[%s2093 + $0x14] sm:$0xf]
      %v2100 = vld [vmem:[%s2093 + $0x18] sm:$0xf]
      %v2101 = vld [vmem:[%s2093 + $0x1c] sm:$0xf]
      %v2102 = vld [vmem:[%s2093 + $0x20] sm:$0xf]
      %v2103 = vld [vmem:[%s2093 + $0x24] sm:$0xf]
      %v2104 = vld [vmem:[%s2093 + $0x28] sm:$0xf]
      %v2105 = vld [vmem:[%s2093 + $0x2c] sm:$0xf]
      %v2106 = vld [vmem:[%s2093 + $0x30] sm:$0xf]
      %v2107 = vld [vmem:[%s2093 + $0x34] sm:$0xf]
      %v2108 = vld [vmem:[%s2093 + $0x38] sm:$0xf]
      %v2109 = vld [vmem:[%s2093 + $0x3c] sm:$0xf]
      %v2126 = vunpack.c.l.b16 %v2094
      %v2127 = vunpack.c.l.b16 %v2095
      %v2128 = vunpack.c.l.b16 %v2096
      %v2129 = vunpack.c.l.b16 %v2097
      %v2130 = vunpack.c.l.b16 %v2098
      %v2131 = vunpack.c.l.b16 %v2099
      %v2132 = vunpack.c.l.b16 %v2100
      %v2133 = vunpack.c.l.b16 %v2101
      %v2134 = vunpack.c.l.b16 %v2102
      %v2135 = vunpack.c.l.b16 %v2103
      %v2136 = vunpack.c.l.b16 %v2104
      %v2137 = vunpack.c.l.b16 %v2105
      %v2138 = vunpack.c.l.b16 %v2106
      %v2139 = vunpack.c.l.b16 %v2107
      %v2140 = vunpack.c.l.b16 %v2108
      %v2141 = vunpack.c.l.b16 %v2109
      %v2142 = vpack.c.b16 %v2127, %v2126
      %v2143 = vpack.c.b16 %v2129, %v2128
      %v2144 = vpack.c.b16 %v2131, %v2130
      %v2145 = vpack.c.b16 %v2133, %v2132
      %v2146 = vpack.c.b16 %v2135, %v2134
      %v2147 = vpack.c.b16 %v2137, %v2136
      %v2148 = vpack.c.b16 %v2139, %v2138
      %v2149 = vpack.c.b16 %v2141, %v2140
      %2158 = vmatprep.subr.bf16.mxu0 0
      %2159 = vmatpush1.bf16.msra.mxu0 %v2149
      %2160 = vmatprep.subr.bf16.mxu0 0
      %2161 = vmatpush1.bf16.msra.mxu0 %v2148
      %2162 = vmatprep.subr.bf16.mxu0 0
      %2163 = vmatpush1.bf16.msra.mxu0 %v2147
      %2164 = vmatprep.subr.bf16.mxu0 0
      %2165 = vmatpush1.bf16.msra.mxu0 %v2146
      %2166 = vmatprep.subr.bf16.mxu0 0
      %2167 = vmatpush1.bf16.msra.mxu0 %v2145
      %2168 = vmatprep.subr.bf16.mxu0 0
      %2169 = vmatpush1.bf16.msra.mxu0 %v2144
      %2170 = vmatprep.subr.bf16.mxu0 0
      %2171 = vmatpush1.bf16.msra.mxu0 %v2143
      %2172 = vmatprep.subr.bf16.mxu0 0
      %2173 = vmatpush1.bf16.msra.mxu0 %v2142
      %2174 = vmatprep.subr.bf16.mxu0 0
      %2175 = vmatpush2.bf16.msra.mxu0 0
      %2176 = vmatprep.subr.bf16.mxu0 0
      %2177 = vmatpush2.bf16.msra.mxu0 0
      %2178 = vmatprep.subr.bf16.mxu0 0
      %2179 = vmatpush2.bf16.msra.mxu0 0
      %2180 = vmatprep.subr.bf16.mxu0 0
      %2181 = vmatpush2.bf16.msra.mxu0 0
      %2182 = vmatprep.subr.bf16.mxu0 0
      %2183 = vmatpush2.bf16.msra.mxu0 0
      %2184 = vmatprep.subr.bf16.mxu0 0
      %2185 = vmatpush2.bf16.msra.mxu0 0
      %2186 = vmatprep.subr.bf16.mxu0 0
      %2187 = vmatpush2.bf16.msra.mxu0 0
      %2188 = vmatprep.subr.bf16.mxu0 0
      %2189 = vmatpush2.bf16.msra.mxu0 0
      %2190 = vmatprep.mubr.bf16.mxu0 0
      %2191 = vmatmul.mubr.bf16.gmra.mxu0 %v2089
      %v2192 = vpop.f32.mrf.mxu0
      %v2193 = vadd.f32 0.0, %v2192
      %v2194 = vpop.f32.mrf.mxu0
      %v2195 = vpop.f32.mrf.mxu0
      %v2196 = vadd.f32 0.0, %v2195
      %v2197 = vpop.f32.mrf.mxu0
      %2198 = vmatprep.mubr.bf16.mxu0 0
      %2199 = vmatmul.mubr.bf16.gmra.mxu0 %v2090
      %v2200 = vpop.f32.mrf.mxu0
      %v2201 = vadd.f32 0.0, %v2200
      %v2202 = vpop.f32.mrf.mxu0
      %v2203 = vpop.f32.mrf.mxu0
      %v2204 = vadd.f32 0.0, %v2203
      %v2205 = vpop.f32.mrf.mxu0
      %2206 = vmatprep.mubr.bf16.mxu0 0
      %2207 = vmatmul.mubr.bf16.gmra.mxu0 %v2091
      %v2208 = vpop.f32.mrf.mxu0
      %v2209 = vadd.f32 0.0, %v2208
      %v2210 = vpop.f32.mrf.mxu0
      %v2211 = vpop.f32.mrf.mxu0
      %v2212 = vadd.f32 0.0, %v2211
      %v2213 = vpop.f32.mrf.mxu0
      %2214 = vmatprep.mubr.bf16.mxu0 0
      %2215 = vmatmul.mubr.bf16.gmra.mxu0 %v2092
      %v2216 = vpop.f32.mrf.mxu0
      %v2217 = vadd.f32 0.0, %v2216
      %v2218 = vpop.f32.mrf.mxu0
      %v2219 = vpop.f32.mrf.mxu0
      %v2220 = vpop.f32.mrf.mxu0
      %2221 = vdwg.mxu0
      %2222 = vset.pattern.permute.xlu0 8
      %2223 = vperm.xlu0 %2222, %v752
      %v2224 = vpop.permute.xlu0 %2223
      %2226 = vset.pattern.permute.xlu0 8
      %2227 = vperm.xlu0 %2226, %v753
      %v2228 = vpop.permute.xlu0 %2227
      %2230 = vset.pattern.permute.xlu0 8
      %2231 = vperm.xlu0 %2230, %v754
      %v2232 = vpop.permute.xlu0 %2231
      %2234 = vset.pattern.permute.xlu0 8
      %2235 = vperm.xlu0 %2234, %v755
      %v2236 = vpop.permute.xlu0 %2235
      %2238 = vset.pattern.permute.xlu0 8
      %2239 = vperm.xlu0 %2238, %v756
      %v2240 = vpop.permute.xlu0 %2239
      %2242 = vset.pattern.permute.xlu0 8
      %2243 = vperm.xlu0 %2242, %v757
      %v2244 = vpop.permute.xlu0 %2243
      %2246 = vset.pattern.permute.xlu0 8
      %2247 = vperm.xlu0 %2246, %v758
      %v2248 = vpop.permute.xlu0 %2247
      %v2250 = vmul.f32 %v2193, %v2224
      %v2251 = vmul.f32 %v2196, %v2228
      %v2252 = vmul.f32 %v2201, %v2232
      %v2253 = vmul.f32 %v2204, %v2236
      %v2254 = vmul.f32 %v2209, %v2240
      %v2255 = vmul.f32 %v2212, %v2244
      %v2256 = vmul.f32 %v2217, %v2248
      %v2257 = vadd.f32 %v2075, %v2250
      %v2258 = vadd.f32 %v2076, %v2251
      %v2259 = vadd.f32 %v2077, %v2252
      %v2260 = vadd.f32 %v2078, %v2253
      %v2261 = vadd.f32 %v2079, %v2254
      %v2262 = vadd.f32 %v2080, %v2255
      %v2263 = vadd.f32 %v2081, %v2256
      %2264 = vrot.lane.b32.xlu0 %v386, 12
      %v2265 = vpop.permute.xlu0 %2264
      %2266 = vrot.lane.b32.xlu0 %v387, 12
      %v2267 = vpop.permute.xlu0 %2266
      %2268 = vrot.lane.b32.xlu0 %v388, 12
      %v2269 = vpop.permute.xlu0 %2268
      %2270 = vrot.lane.b32.xlu0 %v389, 12
      %v2271 = vpop.permute.xlu0 %2270
      %2272 = vrot.lane.b32.xlu0 %v390, 12
      %v2273 = vpop.permute.xlu0 %2272
      %2274 = vrot.lane.b32.xlu0 %v391, 12
      %v2275 = vpop.permute.xlu0 %2274
      %2276 = vrot.lane.b32.xlu0 %v392, 12
      %v2277 = vpop.permute.xlu0 %2276
      %v2278 = vadd.f32 %v2257, %v2265
      %v2279 = vadd.f32 %v2258, %v2267
      %v2280 = vadd.f32 %v2259, %v2269
      %v2281 = vadd.f32 %v2260, %v2271
      %v2282 = vadd.f32 %v2261, %v2273
      %v2283 = vadd.f32 %v2262, %v2275
      %v2284 = vadd.f32 %v2263, %v2277
      %2285 = vst [vmem:[#allocation2] sm:$0xff] %v2278
      %2286 = vst [vmem:[#allocation2 + $0x8] sm:$0xff] %v2279
      %2287 = vst [vmem:[#allocation2 + $0x10] sm:$0xff] %v2280
      %2288 = vst [vmem:[#allocation2 + $0x18] sm:$0xff] %v2281
      %2289 = vst [vmem:[#allocation2 + $0x20] sm:$0xff] %v2282
      %2290 = vst [vmem:[#allocation2 + $0x28] sm:$0xff] %v2283
      %2291 = vst [vmem:[#allocation2 + $0x30] sm:$0x3] %v2284
      %2292 = vst [vmem:[%s8] sm:$0xff] %v2278
      %2293 = vst [vmem:[%s8 + $0x8] sm:$0xff] %v2279
      %2294 = vst [vmem:[%s8 + $0x10] sm:$0xff] %v2280
      %2295 = vst [vmem:[%s8 + $0x18] sm:$0xff] %v2281
      %2296 = vst [vmem:[%s8 + $0x20] sm:$0xff] %v2282
      %2297 = vst [vmem:[%s8 + $0x28] sm:$0xff] %v2283
      %2298 = vst [vmem:[%s8 + $0x30] sm:$0x3] %v2284
      // Predicated region
      $region57: #{_lambda_.9} parent=51 // pred_check
        %p2299 = pneg %p230
      $region58: #{_lambda_.9} parent=51 // pred_check_branch
        %2301 = sbr.rel (%p2299) target = $region60
      $region59: #{_lambda_.9} parent=51 // pred_region
        _
      $region60: #{_lambda_.9} parent=51 // pred_fallthru
        _
      // Predicated region
      $region61: #{_lambda_.9} parent=51 // pred_check
        %p2302 = pneg %p230
      $region62: #{_lambda_.9} parent=51 // pred_check_branch
        %2304 = sbr.rel (%p2302) target = $region64
      $region63: #{_lambda_.9} parent=51 // pred_region
        _
      $region64: #{_lambda_.9} parent=51 // pred_fallthru
        _
    $region52: #{_lambda_.9} parent=5 // pred_fallthru
      _
    %p2305 = scmp.le.s32.totalorder 2, %s14
    // Predicated region
    $region65: #{_lambda_.9} parent=5 // pred_check
      %p2306 = pneg %p2305
    $region66: #{_lambda_.9} parent=5 // pred_check_branch
      %2308 = sbr.rel (%p2306) target = $region68
    $region67: #{_lambda_.9} parent=5 // pred_region
      %s2309 = ssub.s32 %s14, 2
    $region68: #{_lambda_.9} parent=5 // pred_fallthru
      _
  $region6: #{_lambda_.9} parent=0 // loop_footer
    %s18 = sadd.s32 1, %s14
  $region7: #{_lambda_.9} parent=0 // loop_footer_branch
    %13 = sbr.rel target = $region3
  $region8: #{_lambda_.9} parent=0 // loop_exit
    _

</llo_original>
